<compile_context>
chip_gen: v7x
topology: tpu7x:2x2x1
jax: 0.10.0
libtpu: 0.0.40
codegen_flags: <defaults>
</compile_context>

<pallas_src>
import jax
import jax.numpy as jnp
from jax import lax
from jax.experimental import pallas as pl
from jax.experimental.pallas import tpu as pltpu

EPS = 1e-5


def _vmem_limit_bytes():
    try:
        cap = int(pltpu.get_tpu_info().vmem_capacity_bytes)
    except Exception:
        cap = 64 * 1024 * 1024
    return max(32 * 1024 * 1024, (cap * 3) // 4)


VMEM_LIMIT = _vmem_limit_bytes()


def _cp(sem):
    return pltpu.CompilerParams(dimension_semantics=sem,
                                vmem_limit_bytes=VMEM_LIMIT)


def _largest_divisor(n, limit):
    """Largest d | n with d <= limit (always >= 1)."""
    best = 1
    for d in range(1, n + 1):
        if n % d == 0 and d <= limit:
            best = d
    return best


def _pick_rows(n, limit):
    """Largest divisor of n that is a multiple of 8 and <= limit; else n (full dim)."""
    best = None
    for d in range(1, n + 1):
        if n % d == 0 and d <= limit and d % 8 == 0:
            best = d
    return best if best is not None else n


# ---------------------------------------------------------------------------
# ConvTranspose2d(kernel=2, stride=2): per-pixel channel matmul, tiled over rows.
# x is read from HBM once; both kh taps are computed from the same loaded block.
# Output layout [N*H, kh, W, (kw, Cmid)] reshapes for free to [N, 2H, 2W, Cmid].
# ---------------------------------------------------------------------------
def _upconv_kernel(x_ref, w_ref, b_ref, o_ref):
    # x: [TR, W, Cin]   w: [2, Cin, 2*Cmid] bf16   b: [1, 2*Cmid] f32
    # o: [TR, 2, W, 2*Cmid] bf16
    tr, w, cin = x_ref.shape
    c2 = o_ref.shape[-1]
    x = x_ref[...].astype(jnp.bfloat16).reshape(tr * w, cin)
    for kh in range(2):
        y = jnp.dot(x, w_ref[kh], preferred_element_type=jnp.float32) + b_ref[...]
        o_ref[:, kh] = y.astype(o_ref.dtype).reshape(tr, w, c2)


def conv_transpose2x2(x_nhwc, wt, bt):
    """x: [N,H,W,Cin] -> [N,2H,2W,Cmid] bf16.  wt: [Cin,Cmid,2,2], bt: [Cmid]."""
    N, H, W, Cin = x_nhwc.shape
    Cmid = wt.shape[1]
    C2 = 2 * Cmid
    R = N * H

    x = x_nhwc.reshape(R, W, Cin)
    # w_up[kh][:, kw*Cmid + c] = wt[:, c, kh, kw]  (kw-major columns -> free reshape)
    w_up = jnp.transpose(wt, (2, 0, 3, 1)).reshape(2, Cin, C2).astype(jnp.bfloat16)
    b_up = jnp.tile(bt, (2,)).reshape(1, C2).astype(jnp.float32)

    bytes_per_row = W * (Cin * 4 + 2 * C2 * 2) * 2      # in + double-buffered out, rough
    TR = _largest_divisor(R, max(1, (VMEM_LIMIT // 4) // max(1, bytes_per_row)))

    out = pl.pallas_call(
        _upconv_kernel,
        out_shape=jax.ShapeDtypeStruct((R, 2, W, C2), jnp.bfloat16),
        grid=(R // TR,),
        in_specs=[pl.BlockSpec((TR, W, Cin), lambda r: (r, 0, 0)),
                  pl.BlockSpec((2, Cin, C2), lambda r: (0, 0, 0)),
                  pl.BlockSpec((1, C2), lambda r: (0, 0))],
        out_specs=pl.BlockSpec((TR, 2, W, C2), lambda r: (r, 0, 0, 0)),
        compiler_params=_cp(("parallel",)),
    )(x, w_up, b_up)
    # free reshape: row-major [N*H, 2, W, 2*Cmid] == [N, 2H, 2W, Cmid]
    return out.reshape(N, 2 * H, 2 * W, Cmid)


# ---------------------------------------------------------------------------
# Conv3x3(pad=1) + per-image BatchNorm statistics (one full image per grid step).
# The channel concat and (optionally) the previous layer's BN+ReLU are fused in.
# ---------------------------------------------------------------------------
_TAPS = tuple((dh, dw) for dh in range(3) for dw in range(3))


def _make_conv_kernel(n_in, cks, affine_flags, H, W):
    """ref order: x*n_in, (scale, shift) per affine input, w*n_in, bias,
                  y_out, stats_out, slab*n_in (scratch)."""
    def kernel(*refs):
        pos = n_in
        x_refs = refs[:n_in]
        aff = []
        for k in range(n_in):
            if affine_flags[k]:
                aff.append((refs[pos], refs[pos + 1]))
                pos += 2
            else:
                aff.append(None)
        w_refs = refs[pos:pos + n_in]
        b_ref = refs[pos + n_in]
        y_ref = refs[pos + n_in + 1]
        st_ref = refs[pos + n_in + 2]
        slabs = refs[pos + n_in + 3:pos + n_in + 3 + n_in]

        acc = None
        for k in range(n_in):
            ck = cks[k]
            x = x_refs[k][0]                               # [H, W, ck]
            if aff[k] is not None:                         # fused BN+ReLU of prev conv
                s_ref, t_ref = aff[k]
                xf = x.astype(jnp.float32) * s_ref[...] + t_ref[...]
                x = jnp.maximum(xf, 0.0).astype(jnp.bfloat16)
            else:
                x = x.astype(jnp.bfloat16)

            slab = slabs[k]
            # im2col with the 9 taps folded into K (one deep MXU matmul per input).
            # The 1-pixel zero halo is produced here: border strips zeroed, shifted
            # interior copied -> no jnp.pad pass and no extra HBM round trip.
            # TODO(synk): for Ck that is a multiple of 128, skip the slab and accumulate
            # 9 direct matmuls on shifted views of a padded VMEM buffer instead.
            for t, (dh, dw) in enumerate(_TAPS):
                c0 = t * ck
                if dh == 0:
                    slab[0:1, :, c0:c0 + ck] = jnp.zeros((1, W, ck), jnp.bfloat16)
                if dh == 2:
                    slab[H - 1:H, :, c0:c0 + ck] = jnp.zeros((1, W, ck), jnp.bfloat16)
                if dw == 0:
                    slab[:, 0:1, c0:c0 + ck] = jnp.zeros((H, 1, ck), jnp.bfloat16)
                if dw == 2:
                    slab[:, W - 1:W, c0:c0 + ck] = jnp.zeros((H, 1, ck), jnp.bfloat16)
                oh0, oh1 = max(0, 1 - dh), min(H, H + 1 - dh)
                ow0, ow1 = max(0, 1 - dw), min(W, W + 1 - dw)
                ih0, iw0 = oh0 + dh - 1, ow0 + dw - 1
                slab[oh0:oh1, ow0:ow1, c0:c0 + ck] = x[ih0:ih0 + (oh1 - oh0),
                                                       iw0:iw0 + (ow1 - ow0), :]
            part = jnp.dot(slab[...].reshape(H * W, 9 * ck), w_refs[k][...],
                           preferred_element_type=jnp.float32)
            acc = part if acc is None else acc + part

        acc = acc + b_ref[...]                             # [H*W, Cout] f32 pre-act
        cout = acc.shape[-1]
        y_ref[0] = acc.astype(y_ref.dtype).reshape(H, W, cout)      # bf16 intermediate
        st_ref[0, 0:1, :] = jnp.sum(acc, axis=0, keepdims=True)     # per-image sum
        st_ref[0, 1:2, :] = jnp.sum(acc * acc, axis=0, keepdims=True)

    return kernel


def conv3x3_stats(xs, ws_folded, bias, in_affine=None):
    """3x3 SAME conv (channel concat of `xs` fused via per-input K-slices of the
    weights) + per-image [sum, sumsq] BatchNorm statistics.

    in_affine[k] = (scale, shift): apply ReLU(x*scale + shift) to input k while it is
    loaded (fuses the previous layer's BatchNorm+ReLU into this conv).
    Returns (y [N,H,W,Cout] bf16 pre-activation, stats [N,2,Cout] f32).
    """
    N, H, W, _ = xs[0].shape
    for x in xs:
        assert x.shape[:3] == (N, H, W)
    Cout = ws_folded[0].shape[1]
    n_in = len(xs)
    if in_affine is None:
        in_affine = [None] * n_in
    cks = [int(x.shape[-1]) for x in xs]
    affine_flags = [a is not None for a in in_affine]

    operands, in_specs = [], []
    for x in xs:
        operands.append(x)
        in_specs.append(pl.BlockSpec((1, H, W, x.shape[-1]), lambda n: (n, 0, 0, 0)))
    for k, a in enumerate(in_affine):
        if a is None:
            continue
        s, t = a
        operands += [s.astype(jnp.float32).reshape(1, cks[k]),
                     t.astype(jnp.float32).reshape(1, cks[k])]
        in_specs += [pl.BlockSpec((1, cks[k]), lambda n: (0, 0)),
                     pl.BlockSpec((1, cks[k]), lambda n: (0, 0))]
    for w in ws_folded:
        wb = w.astype(jnp.bfloat16)
        operands.append(wb)
        in_specs.append(pl.BlockSpec(wb.shape, lambda n: (0, 0)))
    operands.append(bias.astype(jnp.float32).reshape(1, Cout))
    in_specs.append(pl.BlockSpec((1, Cout), lambda n: (0, 0)))

    kernel = _make_conv_kernel(n_in, cks, affine_flags, H, W)
    # TODO(synk): for very large H*W*sum(Ck) the per-image slabs exceed VMEM (notably
    # v7x's 64 MiB); tile rows within the image with halo DMA in that regime.
    y, stats = pl.pallas_call(
        kernel,
        out_shape=(jax.ShapeDtypeStruct((N, H, W, Cout), jnp.bfloat16),
                   jax.ShapeDtypeStruct((N, 2, Cout), jnp.float32)),
        grid=(N,),
        in_specs=in_specs,
        out_specs=(pl.BlockSpec((1, H, W, Cout), lambda n: (n, 0, 0, 0)),
                   pl.BlockSpec((1, 2, Cout), lambda n: (n, 0, 0))),
        scratch_shapes=[pltpu.VMEM((H, W, 9 * ck), jnp.bfloat16) for ck in cks],
        # per-image partial stats -> row axis is truly parallel (both v7x TCs busy)
        compiler_params=_cp(("parallel",)),
    )(*operands)
    return y, stats


def _bn_affine(stats, count, gamma, beta):
    """Reduce per-image [sum, sumsq] to per-channel BN scale/shift (training stats)."""
    s = jnp.sum(stats, axis=0)                             # [2, Cout] f32
    mean = s[0] / count
    var = jnp.maximum(s[1] / count - mean * mean, 0.0)     # biased batch variance
    scale = gamma.astype(jnp.float32) * lax.rsqrt(var + EPS)
    shift = beta.astype(jnp.float32) - mean * scale
    return scale, shift


# ---------------------------------------------------------------------------
# Final BatchNorm + ReLU (only needed for the second conv's output), lane-dense view.
# ---------------------------------------------------------------------------
def _bn_relu_kernel(y_ref, s_ref, t_ref, o_ref):
    y = y_ref[...].astype(jnp.float32)
    o_ref[...] = jnp.maximum(y * s_ref[...] + t_ref[...], 0.0).astype(o_ref.dtype)


def bn_relu(y_nhwc, scale, shift, out_dtype=jnp.float32):
    N, H, W, C = y_nhwc.shape
    R, WC = N * H, W * C
    y2 = y_nhwc.reshape(R, WC)                      # free lane-dense [rows, W*C] view
    s2 = jnp.tile(scale.astype(jnp.float32), (W,)).reshape(1, WC)
    t2 = jnp.tile(shift.astype(jnp.float32), (W,)).reshape(1, WC)
    TB = _pick_rows(R, max(1, (VMEM_LIMIT // 8) // max(1, WC * 4)))

    out = pl.pallas_call(
        _bn_relu_kernel,
        out_shape=jax.ShapeDtypeStruct((R, WC), out_dtype),
        grid=(R // TB,),
        in_specs=[pl.BlockSpec((TB, WC), lambda i: (i, 0)),
                  pl.BlockSpec((1, WC), lambda i: (0, 0)),
                  pl.BlockSpec((1, WC), lambda i: (0, 0))],
        out_specs=pl.BlockSpec((TB, WC), lambda i: (i, 0)),
        compiler_params=_cp(("parallel",)),
    )(y2, s2, t2)
    return out.reshape(N, H, W, C)


# ---------------------------------------------------------------------------
# Up.forward
# ---------------------------------------------------------------------------
def _fold_conv3x3(w_oihw, lo, hi):
    # [Cout, Cin, 3, 3] -> [9*Ck, Cout], rows ordered ((kh*3+kw)*Ck + c), matching the
    # slab column order; [lo:hi] selects the input channels this operand owns
    # (torch.cat fusion).
    w = w_oihw[:, lo:hi]
    cout, ck = w.shape[0], w.shape[1]
    return jnp.transpose(w, (2, 3, 1, 0)).reshape(9 * ck, cout)


def up_forward(x1_nchw, x2_nchw, p):
    x1 = jnp.transpose(x1_nchw, (0, 2, 3, 1))              # NCHW -> NHWC
    x2 = jnp.transpose(x2_nchw, (0, 2, 3, 1))

    up = conv_transpose2x2(x1, p["wt"], p["bt"])           # [N,2H,2W,Cmid] bf16
    # TODO(synk): the transpose-conv could be fused into conv1's input path so `up` is
    # never materialized in HBM.
    N, H2, W2, _ = up.shape
    count = N * H2 * W2

    # torch.cat([x2, up], dim=1) fused: x2 owns input channels [0:Cskip), up the rest.
    c_skip = x2.shape[-1]
    w1a = _fold_conv3x3(p["w1"], 0, c_skip)
    w1b = _fold_conv3x3(p["w1"], c_skip, p["w1"].shape[1])
    y1, st1 = conv3x3_stats([x2, up], [w1a, w1b], p["b1"])
    scale1, shift1 = _bn_affine(st1, count, p["g1"], p["be1"])

    # conv2 with conv1's BN+ReLU fused into its input load.
    w2f = _fold_conv3x3(p["w2"], 0, p["w2"].shape[1])
    y2, st2 = conv3x3_stats([y1], [w2f], p["b2"], in_affine=[(scale1, shift1)])
    scale2, shift2 = _bn_affine(st2, count, p["g2"], p["be2"])

    out = bn_relu(y2, scale2, shift2, out_dtype=jnp.float32)
    return jnp.transpose(out, (0, 3, 1, 2))                # back to NCHW


# ---------------------------------------------------------------------------
# parameters + pure-JAX f32 reference
# ---------------------------------------------------------------------------
def init_params(key, in_ch, out_ch):
    ks = jax.random.split(key, 6)
    mid = in_ch // 2
    wt = 0.1 * jax.random.normal(ks[0], (in_ch, mid, 2, 2), jnp.float32)
    bt = 0.1 * jax.random.normal(ks[1], (mid,), jnp.float32)
    w1 = 0.1 * jax.random.normal(ks[2], (out_ch, in_ch, 3, 3), jnp.float32)
    b1 = 0.1 * jax.random.normal(ks[3], (out_ch,), jnp.float32)
    w2 = 0.1 * jax.random.normal(ks[4], (out_ch, out_ch, 3, 3), jnp.float32)
    b2 = 0.1 * jax.random.normal(ks[5], (out_ch,), jnp.float32)
    ones = jnp.ones((out_ch,), jnp.float32)
    zeros = jnp.zeros((out_ch,), jnp.float32)
    return dict(wt=wt, bt=bt,
                w1=w1, b1=b1, g1=ones, be1=zeros,
                w2=w2, b2=b2, g2=ones, be2=zeros)


def ref_forward(x1, x2, p):
    N, _, H, W = x1.shape
    mid = p["wt"].shape[1]
    y = jnp.einsum("nihw,iokl->nohkwl", x1, p["wt"])
    y = y.reshape(N, mid, 2 * H, 2 * W) + p["bt"][None, :, None, None]
    x = jnp.concatenate([x2, y], axis=1)

    def block(x, w, b, g, beta):
        c = lax.conv_general_dilated(
            x, w, (1, 1), "SAME", dimension_numbers=("NCHW", "OIHW", "NCHW")
        ) + b[None, :, None, None]
        m = jnp.mean(c, axis=(0, 2, 3), keepdims=True)
        v = jnp.mean((c - m) ** 2, axis=(0, 2, 3), keepdims=True)
        out = (c - m) * lax.rsqrt(v + EPS) * g[None, :, None, None] + beta[None, :, None, None]
        return jnp.maximum(out, 0.0)

    h = block(x, p["w1"], p["b1"], p["g1"], p["be1"])
    h = block(h, p["w2"], p["b2"], p["g2"], p["be2"])
    return h


if __name__ == "__main__":
    key = jax.random.PRNGKey(0)
    in_ch, out_ch = 4, 4
    N, H, W = 2, 8, 8                      # x1: [2,4,8,8], skip x2: [2,2,16,16]

    kx1, kx2, kp = jax.random.split(key, 3)
    x1 = jax.random.normal(kx1, (N, in_ch, H, W), jnp.float32)
    x2 = jax.random.normal(kx2, (N, in_ch // 2, 2 * H, 2 * W), jnp.float32)
    params = init_params(kp, in_ch, out_ch)

    fwd = jax.jit(up_forward)
    out = jax.block_until_ready(fwd(x1, x2, params))
    assert out.shape == (N, out_ch, 2 * H, 2 * W), out.shape

    ref = ref_forward(x1, x2, params)
    err = float(jnp.max(jnp.abs(out - ref)))
    # bf16 MXU operands + bf16 inter-layer intermediates -> wider tolerance than pure f32
    assert err < 1e-1, f"max abs err vs f32 reference = {err}"
    print("KERNEL_OK")
</pallas_src>

<mosaic_0001>
module attributes {stable_mosaic.version = 11 : i64} {
  func.func @_upconv_kernel(%arg0: i32, %arg1: memref<16x8x4xf32, #tpu.memory_space<vmem>>, %arg2: memref<2x4x4xbf16, #tpu.memory_space<vmem>>, %arg3: memref<1x4xf32, #tpu.memory_space<vmem>>, %arg4: memref<16x2x8x4xbf16, #tpu.memory_space<vmem>>) attributes {dimension_semantics = [#tpu.dimension_semantics<parallel>], iteration_bounds = array<i64: 1>, scalar_prefetch = 0 : i64, scratch_operands = 0 : i64, tpu.core_type = #tpu.core_type<tc>, window_params = [{transform_indices = @transform_0, window_bounds = array<i64: 16, 8, 4>}, {pipeline_mode = #tpu.pipeline_mode<synchronous>, transform_indices = @transform_1, window_bounds = array<i64: 2, 4, 4>}, {pipeline_mode = #tpu.pipeline_mode<synchronous>, transform_indices = @transform_2, window_bounds = array<i64: 1, 4>}, {transform_indices = @transform_3, window_bounds = array<i64: 16, 2, 8, 4>}]} {
    %c0 = arith.constant 0 : index
    %c0_0 = arith.constant 0 : index
    %c0_1 = arith.constant 0 : index
    %0 = vector.load %arg1[%c0, %c0_0, %c0_1] : memref<16x8x4xf32, #tpu.memory_space<vmem>>, vector<16x8x4xf32>
    %1 = arith.truncf %0 : vector<16x8x4xf32> to vector<16x8x4xbf16>
    %2 = vector.shape_cast %1 : vector<16x8x4xbf16> to vector<128x4xbf16>
    %c0_2 = arith.constant 0 : index
    %c0_3 = arith.constant 0 : index
    %c0_4 = arith.constant 0 : index
    %3 = vector.load %arg2[%c0_2, %c0_3, %c0_4] : memref<2x4x4xbf16, #tpu.memory_space<vmem>>, vector<1x4x4xbf16>
    %4 = vector.shape_cast %3 : vector<1x4x4xbf16> to vector<4x4xbf16>
    %cst = arith.constant dense<0.000000e+00> : vector<128x4xf32>
    %5 = tpu.matmul %2, %4, %cst {dimension_numbers = #tpu.dot_dimension_numbers<[1], [0], [0], [1], [0, 0, 1, 1], [], []>} : vector<128x4xbf16>, vector<4x4xbf16>, vector<128x4xf32> -> vector<128x4xf32>
    %c0_5 = arith.constant 0 : index
    %c0_6 = arith.constant 0 : index
    %6 = vector.load %arg3[%c0_5, %c0_6] : memref<1x4xf32, #tpu.memory_space<vmem>>, vector<1x4xf32>
    %7 = vector.broadcast %6 : vector<1x4xf32> to vector<128x4xf32>
    %8 = arith.addf %5, %7 : vector<128x4xf32>
    %9 = arith.truncf %8 : vector<128x4xf32> to vector<128x4xbf16>
    %10 = vector.shape_cast %9 : vector<128x4xbf16> to vector<16x8x4xbf16>
    %c0_7 = arith.constant 0 : index
    %c0_8 = arith.constant 0 : index
    %c0_9 = arith.constant 0 : index
    %c0_10 = arith.constant 0 : index
    %11 = vector.load %arg4[%c0_7, %c0_8, %c0_9, %c0_10] : memref<16x2x8x4xbf16, #tpu.memory_space<vmem>>, vector<16x1x8x4xbf16>
    %12 = vector.shape_cast %11 : vector<16x1x8x4xbf16> to vector<16x8x4xbf16>
    %13 = vector.shape_cast %10 : vector<16x8x4xbf16> to vector<16x1x8x4xbf16>
    tpu.vector_store %arg4[%c0_7, %c0_8, %c0_9, %c0_10], %13 {strides = array<i32>} : memref<16x2x8x4xbf16, #tpu.memory_space<vmem>>, vector<16x1x8x4xbf16>,
    %c1 = arith.constant 1 : index
    %c0_11 = arith.constant 0 : index
    %c0_12 = arith.constant 0 : index
    %14 = vector.load %arg2[%c1, %c0_11, %c0_12] : memref<2x4x4xbf16, #tpu.memory_space<vmem>>, vector<1x4x4xbf16>
    %15 = vector.shape_cast %14 : vector<1x4x4xbf16> to vector<4x4xbf16>
    %cst_13 = arith.constant dense<0.000000e+00> : vector<128x4xf32>
    %16 = tpu.matmul %2, %15, %cst_13 {dimension_numbers = #tpu.dot_dimension_numbers<[1], [0], [0], [1], [0, 0, 1, 1], [], []>} : vector<128x4xbf16>, vector<4x4xbf16>, vector<128x4xf32> -> vector<128x4xf32>
    %c0_14 = arith.constant 0 : index
    %c0_15 = arith.constant 0 : index
    %17 = vector.load %arg3[%c0_14, %c0_15] : memref<1x4xf32, #tpu.memory_space<vmem>>, vector<1x4xf32>
    %18 = vector.broadcast %17 : vector<1x4xf32> to vector<128x4xf32>
    %19 = arith.addf %16, %18 : vector<128x4xf32>
    %20 = arith.truncf %19 : vector<128x4xf32> to vector<128x4xbf16>
    %21 = vector.shape_cast %20 : vector<128x4xbf16> to vector<16x8x4xbf16>
    %c0_16 = arith.constant 0 : index
    %c1_17 = arith.constant 1 : index
    %c0_18 = arith.constant 0 : index
    %c0_19 = arith.constant 0 : index
    %22 = vector.load %arg4[%c0_16, %c1_17, %c0_18, %c0_19] : memref<16x2x8x4xbf16, #tpu.memory_space<vmem>>, vector<16x1x8x4xbf16>
    %23 = vector.shape_cast %22 : vector<16x1x8x4xbf16> to vector<16x8x4xbf16>
    %24 = vector.shape_cast %21 : vector<16x8x4xbf16> to vector<16x1x8x4xbf16>
    tpu.vector_store %arg4[%c0_16, %c1_17, %c0_18, %c0_19], %24 {strides = array<i32>} : memref<16x2x8x4xbf16, #tpu.memory_space<vmem>>, vector<16x1x8x4xbf16>,
    return
  }
  func.func @transform_0(%arg0: i32) -> (i32, i32, i32) {
    %c0_i32 = arith.constant 0 : i32
    %c0_i32_0 = arith.constant 0 : i32
    %c0_i32_1 = arith.constant 0 : i32
    return %arg0, %c0_i32, %c0_i32_0 : i32, i32, i32
  }
  func.func @transform_1(%arg0: i32) -> (i32, i32, i32) {
    %c0_i32 = arith.constant 0 : i32
    %c0_i32_0 = arith.constant 0 : i32
    %c0_i32_1 = arith.constant 0 : i32
    %c0_i32_2 = arith.constant 0 : i32
    return %c0_i32, %c0_i32_0, %c0_i32_1 : i32, i32, i32
  }
  func.func @transform_2(%arg0: i32) -> (i32, i32) {
    %c0_i32 = arith.constant 0 : i32
    %c0_i32_0 = arith.constant 0 : i32
    %c0_i32_1 = arith.constant 0 : i32
    return %c0_i32, %c0_i32_0 : i32, i32
  }
  func.func @transform_3(%arg0: i32) -> (i32, i32, i32, i32) {
    %c0_i32 = arith.constant 0 : i32
    %c0_i32_0 = arith.constant 0 : i32
    %c0_i32_1 = arith.constant 0 : i32
    %c0_i32_2 = arith.constant 0 : i32
    return %arg0, %c0_i32, %c0_i32_0, %c0_i32_1 : i32, i32, i32, i32
  }
}

module attributes {stable_mosaic.version = 11 : i64} {
  func.func @kernel(%arg0: i32, %arg1: memref<1x16x16x2xf32, #tpu.memory_space<vmem>>, %arg2: memref<1x16x16x2xbf16, #tpu.memory_space<vmem>>, %arg3: memref<18x4xbf16, #tpu.memory_space<vmem>>, %arg4: memref<18x4xbf16, #tpu.memory_space<vmem>>, %arg5: memref<1x4xf32, #tpu.memory_space<vmem>>, %arg6: memref<1x16x16x4xbf16, #tpu.memory_space<vmem>>, %arg7: memref<1x2x4xf32, #tpu.memory_space<vmem>>, %arg8: memref<16x16x18xbf16, #tpu.memory_space<vmem>>, %arg9: memref<16x16x18xbf16, #tpu.memory_space<vmem>>) attributes {dimension_semantics = [#tpu.dimension_semantics<parallel>], iteration_bounds = array<i64: 2>, scalar_prefetch = 0 : i64, scratch_operands = 2 : i64, tpu.core_type = #tpu.core_type<tc>, window_params = [{transform_indices = @transform_0, window_bounds = array<i64: 1, 16, 16, 2>}, {transform_indices = @transform_1, window_bounds = array<i64: 1, 16, 16, 2>}, {pipeline_mode = #tpu.pipeline_mode<synchronous>, transform_indices = @transform_2, window_bounds = array<i64: 18, 4>}, {pipeline_mode = #tpu.pipeline_mode<synchronous>, transform_indices = @transform_3, window_bounds = array<i64: 18, 4>}, {pipeline_mode = #tpu.pipeline_mode<synchronous>, transform_indices = @transform_4, window_bounds = array<i64: 1, 4>}, {transform_indices = @transform_5, window_bounds = array<i64: 1, 16, 16, 4>}, {transform_indices = @transform_6, window_bounds = array<i64: 1, 2, 4>}]} {
    %c0 = arith.constant 0 : index
    %c0_0 = arith.constant 0 : index
    %c0_1 = arith.constant 0 : index
    %c0_2 = arith.constant 0 : index
    %0 = vector.load %arg1[%c0, %c0_0, %c0_1, %c0_2] : memref<1x16x16x2xf32, #tpu.memory_space<vmem>>, vector<1x16x16x2xf32>
    %1 = vector.shape_cast %0 : vector<1x16x16x2xf32> to vector<16x16x2xf32>
    %2 = arith.truncf %1 : vector<16x16x2xf32> to vector<16x16x2xbf16>
    %cst = arith.constant 0.000000e+00 : bf16
    %3 = vector.broadcast %cst : bf16 to vector<1x16x2xbf16>
    %c0_3 = arith.constant 0 : index
    %c0_4 = arith.constant 0 : index
    %c0_5 = arith.constant 0 : index
    %4 = vector.load %arg8[%c0_3, %c0_4, %c0_5] : memref<16x16x18xbf16, #tpu.memory_space<vmem>>, vector<1x16x2xbf16>
    tpu.vector_store %arg8[%c0_3, %c0_4, %c0_5], %3 {strides = array<i32>} : memref<16x16x18xbf16, #tpu.memory_space<vmem>>, vector<1x16x2xbf16>,
    %cst_6 = arith.constant 0.000000e+00 : bf16
    %5 = vector.broadcast %cst_6 : bf16 to vector<16x1x2xbf16>
    %c0_7 = arith.constant 0 : index
    %c0_8 = arith.constant 0 : index
    %c0_9 = arith.constant 0 : index
    %6 = vector.load %arg8[%c0_7, %c0_8, %c0_9] : memref<16x16x18xbf16, #tpu.memory_space<vmem>>, vector<16x1x2xbf16>
    tpu.vector_store %arg8[%c0_7, %c0_8, %c0_9], %5 {strides = array<i32>} : memref<16x16x18xbf16, #tpu.memory_space<vmem>>, vector<16x1x2xbf16>,
    %7 = vector.extract_strided_slice %2 {offsets = [0, 0, 0], sizes = [15, 15, 2], strides = [1, 1, 1]} : vector<16x16x2xbf16> to vector<15x15x2xbf16>
    %c1 = arith.constant 1 : index
    %c1_10 = arith.constant 1 : index
    %c0_11 = arith.constant 0 : index
    %8 = vector.load %arg8[%c1, %c1_10, %c0_11] : memref<16x16x18xbf16, #tpu.memory_space<vmem>>, vector<15x15x2xbf16>
    tpu.vector_store %arg8[%c1, %c1_10, %c0_11], %7 {strides = array<i32>} : memref<16x16x18xbf16, #tpu.memory_space<vmem>>, vector<15x15x2xbf16>,
    %cst_12 = arith.constant 0.000000e+00 : bf16
    %9 = vector.broadcast %cst_12 : bf16 to vector<1x16x2xbf16>
    %c0_13 = arith.constant 0 : index
    %c0_14 = arith.constant 0 : index
    %c2 = arith.constant 2 : index
    %10 = vector.load %arg8[%c0_13, %c0_14, %c2] : memref<16x16x18xbf16, #tpu.memory_space<vmem>>, vector<1x16x2xbf16>
    tpu.vector_store %arg8[%c0_13, %c0_14, %c2], %9 {strides = array<i32>} : memref<16x16x18xbf16, #tpu.memory_space<vmem>>, vector<1x16x2xbf16>,
    %11 = vector.extract_strided_slice %2 {offsets = [0, 0, 0], sizes = [15, 16, 2], strides = [1, 1, 1]} : vector<16x16x2xbf16> to vector<15x16x2xbf16>
    %c1_15 = arith.constant 1 : index
    %c0_16 = arith.constant 0 : index
    %c2_17 = arith.constant 2 : index
    %12 = vector.load %arg8[%c1_15, %c0_16, %c2_17] : memref<16x16x18xbf16, #tpu.memory_space<vmem>>, vector<15x16x2xbf16>
    tpu.vector_store %arg8[%c1_15, %c0_16, %c2_17], %11 {strides = array<i32>} : memref<16x16x18xbf16, #tpu.memory_space<vmem>>, vector<15x16x2xbf16>,
    %cst_18 = arith.constant 0.000000e+00 : bf16
    %13 = vector.broadcast %cst_18 : bf16 to vector<1x16x2xbf16>
    %c0_19 = arith.constant 0 : index
    %c0_20 = arith.constant 0 : index
    %c4 = arith.constant 4 : index
    %14 = vector.load %arg8[%c0_19, %c0_20, %c4] : memref<16x16x18xbf16, #tpu.memory_space<vmem>>, vector<1x16x2xbf16>
    tpu.vector_store %arg8[%c0_19, %c0_20, %c4], %13 {strides = array<i32>} : memref<16x16x18xbf16, #tpu.memory_space<vmem>>, vector<1x16x2xbf16>,
    %cst_21 = arith.constant 0.000000e+00 : bf16
    %15 = vector.broadcast %cst_21 : bf16 to vector<16x1x2xbf16>
    %c0_22 = arith.constant 0 : index
    %c15 = arith.constant 15 : index
    %c4_23 = arith.constant 4 : index
    %16 = vector.load %arg8[%c0_22, %c15, %c4_23] : memref<16x16x18xbf16, #tpu.memory_space<vmem>>, vector<16x1x2xbf16>
    tpu.vector_store %arg8[%c0_22, %c15, %c4_23], %15 {strides = array<i32>} : memref<16x16x18xbf16, #tpu.memory_space<vmem>>, vector<16x1x2xbf16>,
    %17 = vector.extract_strided_slice %2 {offsets = [0, 1, 0], sizes = [15, 15, 2], strides = [1, 1, 1]} : vector<16x16x2xbf16> to vector<15x15x2xbf16>
    %c1_24 = arith.constant 1 : index
    %c0_25 = arith.constant 0 : index
    %c4_26 = arith.constant 4 : index
    %18 = vector.load %arg8[%c1_24, %c0_25, %c4_26] : memref<16x16x18xbf16, #tpu.memory_space<vmem>>, vector<15x15x2xbf16>
    tpu.vector_store %arg8[%c1_24, %c0_25, %c4_26], %17 {strides = array<i32>} : memref<16x16x18xbf16, #tpu.memory_space<vmem>>, vector<15x15x2xbf16>,
    %cst_27 = arith.constant 0.000000e+00 : bf16
    %19 = vector.broadcast %cst_27 : bf16 to vector<16x1x2xbf16>
    %c0_28 = arith.constant 0 : index
    %c0_29 = arith.constant 0 : index
    %c6 = arith.constant 6 : index
    %20 = vector.load %arg8[%c0_28, %c0_29, %c6] : memref<16x16x18xbf16, #tpu.memory_space<vmem>>, vector<16x1x2xbf16>
    tpu.vector_store %arg8[%c0_28, %c0_29, %c6], %19 {strides = array<i32>} : memref<16x16x18xbf16, #tpu.memory_space<vmem>>, vector<16x1x2xbf16>,
    %21 = vector.extract_strided_slice %2 {offsets = [0, 0, 0], sizes = [16, 15, 2], strides = [1, 1, 1]} : vector<16x16x2xbf16> to vector<16x15x2xbf16>
    %c0_30 = arith.constant 0 : index
    %c1_31 = arith.constant 1 : index
    %c6_32 = arith.constant 6 : index
    %22 = vector.load %arg8[%c0_30, %c1_31, %c6_32] : memref<16x16x18xbf16, #tpu.memory_space<vmem>>, vector<16x15x2xbf16>
    tpu.vector_store %arg8[%c0_30, %c1_31, %c6_32], %21 {strides = array<i32>} : memref<16x16x18xbf16, #tpu.memory_space<vmem>>, vector<16x15x2xbf16>,
    %c0_33 = arith.constant 0 : index
    %c0_34 = arith.constant 0 : index
    %c8 = arith.constant 8 : index
    %23 = vector.load %arg8[%c0_33, %c0_34, %c8] : memref<16x16x18xbf16, #tpu.memory_space<vmem>>, vector<16x16x2xbf16>
    tpu.vector_store %arg8[%c0_33, %c0_34, %c8], %2 {strides = array<i32>} : memref<16x16x18xbf16, #tpu.memory_space<vmem>>, vector<16x16x2xbf16>,
    %cst_35 = arith.constant 0.000000e+00 : bf16
    %24 = vector.broadcast %cst_35 : bf16 to vector<16x1x2xbf16>
    %c0_36 = arith.constant 0 : index
    %c15_37 = arith.constant 15 : index
    %c10 = arith.constant 10 : index
    %25 = vector.load %arg8[%c0_36, %c15_37, %c10] : memref<16x16x18xbf16, #tpu.memory_space<vmem>>, vector<16x1x2xbf16>
    tpu.vector_store %arg8[%c0_36, %c15_37, %c10], %24 {strides = array<i32>} : memref<16x16x18xbf16, #tpu.memory_space<vmem>>, vector<16x1x2xbf16>,
    %26 = vector.extract_strided_slice %2 {offsets = [0, 1, 0], sizes = [16, 15, 2], strides = [1, 1, 1]} : vector<16x16x2xbf16> to vector<16x15x2xbf16>
    %c0_38 = arith.constant 0 : index
    %c0_39 = arith.constant 0 : index
    %c10_40 = arith.constant 10 : index
    %27 = vector.load %arg8[%c0_38, %c0_39, %c10_40] : memref<16x16x18xbf16, #tpu.memory_space<vmem>>, vector<16x15x2xbf16>
    tpu.vector_store %arg8[%c0_38, %c0_39, %c10_40], %26 {strides = array<i32>} : memref<16x16x18xbf16, #tpu.memory_space<vmem>>, vector<16x15x2xbf16>,
    %cst_41 = arith.constant 0.000000e+00 : bf16
    %28 = vector.broadcast %cst_41 : bf16 to vector<1x16x2xbf16>
    %c15_42 = arith.constant 15 : index
    %c0_43 = arith.constant 0 : index
    %c12 = arith.constant 12 : index
    %29 = vector.load %arg8[%c15_42, %c0_43, %c12] : memref<16x16x18xbf16, #tpu.memory_space<vmem>>, vector<1x16x2xbf16>
    tpu.vector_store %arg8[%c15_42, %c0_43, %c12], %28 {strides = array<i32>} : memref<16x16x18xbf16, #tpu.memory_space<vmem>>, vector<1x16x2xbf16>,
    %cst_44 = arith.constant 0.000000e+00 : bf16
    %30 = vector.broadcast %cst_44 : bf16 to vector<16x1x2xbf16>
    %c0_45 = arith.constant 0 : index
    %c0_46 = arith.constant 0 : index
    %c12_47 = arith.constant 12 : index
    %31 = vector.load %arg8[%c0_45, %c0_46, %c12_47] : memref<16x16x18xbf16, #tpu.memory_space<vmem>>, vector<16x1x2xbf16>
    tpu.vector_store %arg8[%c0_45, %c0_46, %c12_47], %30 {strides = array<i32>} : memref<16x16x18xbf16, #tpu.memory_space<vmem>>, vector<16x1x2xbf16>,
    %32 = vector.extract_strided_slice %2 {offsets = [1, 0, 0], sizes = [15, 15, 2], strides = [1, 1, 1]} : vector<16x16x2xbf16> to vector<15x15x2xbf16>
    %c0_48 = arith.constant 0 : index
    %c1_49 = arith.constant 1 : index
    %c12_50 = arith.constant 12 : index
    %33 = vector.load %arg8[%c0_48, %c1_49, %c12_50] : memref<16x16x18xbf16, #tpu.memory_space<vmem>>, vector<15x15x2xbf16>
    tpu.vector_store %arg8[%c0_48, %c1_49, %c12_50], %32 {strides = array<i32>} : memref<16x16x18xbf16, #tpu.memory_space<vmem>>, vector<15x15x2xbf16>,
    %cst_51 = arith.constant 0.000000e+00 : bf16
    %34 = vector.broadcast %cst_51 : bf16 to vector<1x16x2xbf16>
    %c15_52 = arith.constant 15 : index
    %c0_53 = arith.constant 0 : index
    %c14 = arith.constant 14 : index
    %35 = vector.load %arg8[%c15_52, %c0_53, %c14] : memref<16x16x18xbf16, #tpu.memory_space<vmem>>, vector<1x16x2xbf16>
    tpu.vector_store %arg8[%c15_52, %c0_53, %c14], %34 {strides = array<i32>} : memref<16x16x18xbf16, #tpu.memory_space<vmem>>, vector<1x16x2xbf16>,
    %36 = vector.extract_strided_slice %2 {offsets = [1, 0, 0], sizes = [15, 16, 2], strides = [1, 1, 1]} : vector<16x16x2xbf16> to vector<15x16x2xbf16>
    %c0_54 = arith.constant 0 : index
    %c0_55 = arith.constant 0 : index
    %c14_56 = arith.constant 14 : index
    %37 = vector.load %arg8[%c0_54, %c0_55, %c14_56] : memref<16x16x18xbf16, #tpu.memory_space<vmem>>, vector<15x16x2xbf16>
    tpu.vector_store %arg8[%c0_54, %c0_55, %c14_56], %36 {strides = array<i32>} : memref<16x16x18xbf16, #tpu.memory_space<vmem>>, vector<15x16x2xbf16>,
    %cst_57 = arith.constant 0.000000e+00 : bf16
    %38 = vector.broadcast %cst_57 : bf16 to vector<1x16x2xbf16>
    %c15_58 = arith.constant 15 : index
    %c0_59 = arith.constant 0 : index
    %c16 = arith.constant 16 : index
    %39 = vector.load %arg8[%c15_58, %c0_59, %c16] : memref<16x16x18xbf16, #tpu.memory_space<vmem>>, vector<1x16x2xbf16>
    tpu.vector_store %arg8[%c15_58, %c0_59, %c16], %38 {strides = array<i32>} : memref<16x16x18xbf16, #tpu.memory_space<vmem>>, vector<1x16x2xbf16>,
    %cst_60 = arith.constant 0.000000e+00 : bf16
    %40 = vector.broadcast %cst_60 : bf16 to vector<16x1x2xbf16>
    %c0_61 = arith.constant 0 : index
    %c15_62 = arith.constant 15 : index
    %c16_63 = arith.constant 16 : index
    %41 = vector.load %arg8[%c0_61, %c15_62, %c16_63] : memref<16x16x18xbf16, #tpu.memory_space<vmem>>, vector<16x1x2xbf16>
    tpu.vector_store %arg8[%c0_61, %c15_62, %c16_63], %40 {strides = array<i32>} : memref<16x16x18xbf16, #tpu.memory_space<vmem>>, vector<16x1x2xbf16>,
    %42 = vector.extract_strided_slice %2 {offsets = [1, 1, 0], sizes = [15, 15, 2], strides = [1, 1, 1]} : vector<16x16x2xbf16> to vector<15x15x2xbf16>
    %c0_64 = arith.constant 0 : index
    %c0_65 = arith.constant 0 : index
    %c16_66 = arith.constant 16 : index
    %43 = vector.load %arg8[%c0_64, %c0_65, %c16_66] : memref<16x16x18xbf16, #tpu.memory_space<vmem>>, vector<15x15x2xbf16>
    tpu.vector_store %arg8[%c0_64, %c0_65, %c16_66], %42 {strides = array<i32>} : memref<16x16x18xbf16, #tpu.memory_space<vmem>>, vector<15x15x2xbf16>,
    %c0_67 = arith.constant 0 : index
    %c0_68 = arith.constant 0 : index
    %c0_69 = arith.constant 0 : index
    %44 = vector.load %arg8[%c0_67, %c0_68, %c0_69] : memref<16x16x18xbf16, #tpu.memory_space<vmem>>, vector<16x16x18xbf16>
    %45 = vector.shape_cast %44 : vector<16x16x18xbf16> to vector<256x18xbf16>
    %c0_70 = arith.constant 0 : index
    %c0_71 = arith.constant 0 : index
    %46 = vector.load %arg3[%c0_70, %c0_71] : memref<18x4xbf16, #tpu.memory_space<vmem>>, vector<18x4xbf16>
    %cst_72 = arith.constant dense<0.000000e+00> : vector<256x4xf32>
    %47 = tpu.matmul %45, %46, %cst_72 {dimension_numbers = #tpu.dot_dimension_numbers<[1], [0], [0], [1], [0, 0, 1, 1], [], []>} : vector<256x18xbf16>, vector<18x4xbf16>, vector<256x4xf32> -> vector<256x4xf32>
    %c0_73 = arith.constant 0 : index
    %c0_74 = arith.constant 0 : index
    %c0_75 = arith.constant 0 : index
    %c0_76 = arith.constant 0 : index
    %48 = vector.load %arg2[%c0_73, %c0_74, %c0_75, %c0_76] : memref<1x16x16x2xbf16, #tpu.memory_space<vmem>>, vector<1x16x16x2xbf16>
    %49 = vector.shape_cast %48 : vector<1x16x16x2xbf16> to vector<16x16x2xbf16>
    %cst_77 = arith.constant 0.000000e+00 : bf16
    %50 = vector.broadcast %cst_77 : bf16 to vector<1x16x2xbf16>
    %c0_78 = arith.constant 0 : index
    %c0_79 = arith.constant 0 : index
    %c0_80 = arith.constant 0 : index
    %51 = vector.load %arg9[%c0_78, %c0_79, %c0_80] : memref<16x16x18xbf16, #tpu.memory_space<vmem>>, vector<1x16x2xbf16>
    tpu.vector_store %arg9[%c0_78, %c0_79, %c0_80], %50 {strides = array<i32>} : memref<16x16x18xbf16, #tpu.memory_space<vmem>>, vector<1x16x2xbf16>,
    %cst_81 = arith.constant 0.000000e+00 : bf16
    %52 = vector.broadcast %cst_81 : bf16 to vector<16x1x2xbf16>
    %c0_82 = arith.constant 0 : index
    %c0_83 = arith.constant 0 : index
    %c0_84 = arith.constant 0 : index
    %53 = vector.load %arg9[%c0_82, %c0_83, %c0_84] : memref<16x16x18xbf16, #tpu.memory_space<vmem>>, vector<16x1x2xbf16>
    tpu.vector_store %arg9[%c0_82, %c0_83, %c0_84], %52 {strides = array<i32>} : memref<16x16x18xbf16, #tpu.memory_space<vmem>>, vector<16x1x2xbf16>,
    %54 = vector.extract_strided_slice %49 {offsets = [0, 0, 0], sizes = [15, 15, 2], strides = [1, 1, 1]} : vector<16x16x2xbf16> to vector<15x15x2xbf16>
    %c1_85 = arith.constant 1 : index
    %c1_86 = arith.constant 1 : index
    %c0_87 = arith.constant 0 : index
    %55 = vector.load %arg9[%c1_85, %c1_86, %c0_87] : memref<16x16x18xbf16, #tpu.memory_space<vmem>>, vector<15x15x2xbf16>
    tpu.vector_store %arg9[%c1_85, %c1_86, %c0_87], %54 {strides = array<i32>} : memref<16x16x18xbf16, #tpu.memory_space<vmem>>, vector<15x15x2xbf16>,
    %cst_88 = arith.constant 0.000000e+00 : bf16
    %56 = vector.broadcast %cst_88 : bf16 to vector<1x16x2xbf16>
    %c0_89 = arith.constant 0 : index
    %c0_90 = arith.constant 0 : index
    %c2_91 = arith.constant 2 : index
    %57 = vector.load %arg9[%c0_89, %c0_90, %c2_91] : memref<16x16x18xbf16, #tpu.memory_space<vmem>>, vector<1x16x2xbf16>
    tpu.vector_store %arg9[%c0_89, %c0_90, %c2_91], %56 {strides = array<i32>} : memref<16x16x18xbf16, #tpu.memory_space<vmem>>, vector<1x16x2xbf16>,
    %58 = vector.extract_strided_slice %49 {offsets = [0, 0, 0], sizes = [15, 16, 2], strides = [1, 1, 1]} : vector<16x16x2xbf16> to vector<15x16x2xbf16>
    %c1_92 = arith.constant 1 : index
    %c0_93 = arith.constant 0 : index
    %c2_94 = arith.constant 2 : index
    %59 = vector.load %arg9[%c1_92, %c0_93, %c2_94] : memref<16x16x18xbf16, #tpu.memory_space<vmem>>, vector<15x16x2xbf16>
    tpu.vector_store %arg9[%c1_92, %c0_93, %c2_94], %58 {strides = array<i32>} : memref<16x16x18xbf16, #tpu.memory_space<vmem>>, vector<15x16x2xbf16>,
    %cst_95 = arith.constant 0.000000e+00 : bf16
    %60 = vector.broadcast %cst_95 : bf16 to vector<1x16x2xbf16>
    %c0_96 = arith.constant 0 : index
    %c0_97 = arith.constant 0 : index
    %c4_98 = arith.constant 4 : index
    %61 = vector.load %arg9[%c0_96, %c0_97, %c4_98] : memref<16x16x18xbf16, #tpu.memory_space<vmem>>, vector<1x16x2xbf16>
    tpu.vector_store %arg9[%c0_96, %c0_97, %c4_98], %60 {strides = array<i32>} : memref<16x16x18xbf16, #tpu.memory_space<vmem>>, vector<1x16x2xbf16>,
    %cst_99 = arith.constant 0.000000e+00 : bf16
    %62 = vector.broadcast %cst_99 : bf16 to vector<16x1x2xbf16>
    %c0_100 = arith.constant 0 : index
    %c15_101 = arith.constant 15 : index
    %c4_102 = arith.constant 4 : index
    %63 = vector.load %arg9[%c0_100, %c15_101, %c4_102] : memref<16x16x18xbf16, #tpu.memory_space<vmem>>, vector<16x1x2xbf16>
    tpu.vector_store %arg9[%c0_100, %c15_101, %c4_102], %62 {strides = array<i32>} : memref<16x16x18xbf16, #tpu.memory_space<vmem>>, vector<16x1x2xbf16>,
    %64 = vector.extract_strided_slice %49 {offsets = [0, 1, 0], sizes = [15, 15, 2], strides = [1, 1, 1]} : vector<16x16x2xbf16> to vector<15x15x2xbf16>
    %c1_103 = arith.constant 1 : index
    %c0_104 = arith.constant 0 : index
    %c4_105 = arith.constant 4 : index
    %65 = vector.load %arg9[%c1_103, %c0_104, %c4_105] : memref<16x16x18xbf16, #tpu.memory_space<vmem>>, vector<15x15x2xbf16>
    tpu.vector_store %arg9[%c1_103, %c0_104, %c4_105], %64 {strides = array<i32>} : memref<16x16x18xbf16, #tpu.memory_space<vmem>>, vector<15x15x2xbf16>,
    %cst_106 = arith.constant 0.000000e+00 : bf16
    %66 = vector.broadcast %cst_106 : bf16 to vector<16x1x2xbf16>
    %c0_107 = arith.constant 0 : index
    %c0_108 = arith.constant 0 : index
    %c6_109 = arith.constant 6 : index
    %67 = vector.load %arg9[%c0_107, %c0_108, %c6_109] : memref<16x16x18xbf16, #tpu.memory_space<vmem>>, vector<16x1x2xbf16>
    tpu.vector_store %arg9[%c0_107, %c0_108, %c6_109], %66 {strides = array<i32>} : memref<16x16x18xbf16, #tpu.memory_space<vmem>>, vector<16x1x2xbf16>,
    %68 = vector.extract_strided_slice %49 {offsets = [0, 0, 0], sizes = [16, 15, 2], strides = [1, 1, 1]} : vector<16x16x2xbf16> to vector<16x15x2xbf16>
    %c0_110 = arith.constant 0 : index
    %c1_111 = arith.constant 1 : index
    %c6_112 = arith.constant 6 : index
    %69 = vector.load %arg9[%c0_110, %c1_111, %c6_112] : memref<16x16x18xbf16, #tpu.memory_space<vmem>>, vector<16x15x2xbf16>
    tpu.vector_store %arg9[%c0_110, %c1_111, %c6_112], %68 {strides = array<i32>} : memref<16x16x18xbf16, #tpu.memory_space<vmem>>, vector<16x15x2xbf16>,
    %c0_113 = arith.constant 0 : index
    %c0_114 = arith.constant 0 : index
    %c8_115 = arith.constant 8 : index
    %70 = vector.load %arg9[%c0_113, %c0_114, %c8_115] : memref<16x16x18xbf16, #tpu.memory_space<vmem>>, vector<16x16x2xbf16>
    tpu.vector_store %arg9[%c0_113, %c0_114, %c8_115], %49 {strides = array<i32>} : memref<16x16x18xbf16, #tpu.memory_space<vmem>>, vector<16x16x2xbf16>,
    %cst_116 = arith.constant 0.000000e+00 : bf16
    %71 = vector.broadcast %cst_116 : bf16 to vector<16x1x2xbf16>
    %c0_117 = arith.constant 0 : index
    %c15_118 = arith.constant 15 : index
    %c10_119 = arith.constant 10 : index
    %72 = vector.load %arg9[%c0_117, %c15_118, %c10_119] : memref<16x16x18xbf16, #tpu.memory_space<vmem>>, vector<16x1x2xbf16>
    tpu.vector_store %arg9[%c0_117, %c15_118, %c10_119], %71 {strides = array<i32>} : memref<16x16x18xbf16, #tpu.memory_space<vmem>>, vector<16x1x2xbf16>,
    %73 = vector.extract_strided_slice %49 {offsets = [0, 1, 0], sizes = [16, 15, 2], strides = [1, 1, 1]} : vector<16x16x2xbf16> to vector<16x15x2xbf16>
    %c0_120 = arith.constant 0 : index
    %c0_121 = arith.constant 0 : index
    %c10_122 = arith.constant 10 : index
    %74 = vector.load %arg9[%c0_120, %c0_121, %c10_122] : memref<16x16x18xbf16, #tpu.memory_space<vmem>>, vector<16x15x2xbf16>
    tpu.vector_store %arg9[%c0_120, %c0_121, %c10_122], %73 {strides = array<i32>} : memref<16x16x18xbf16, #tpu.memory_space<vmem>>, vector<16x15x2xbf16>,
    %cst_123 = arith.constant 0.000000e+00 : bf16
    %75 = vector.broadcast %cst_123 : bf16 to vector<1x16x2xbf16>
    %c15_124 = arith.constant 15 : index
    %c0_125 = arith.constant 0 : index
    %c12_126 = arith.constant 12 : index
    %76 = vector.load %arg9[%c15_124, %c0_125, %c12_126] : memref<16x16x18xbf16, #tpu.memory_space<vmem>>, vector<1x16x2xbf16>
    tpu.vector_store %arg9[%c15_124, %c0_125, %c12_126], %75 {strides = array<i32>} : memref<16x16x18xbf16, #tpu.memory_space<vmem>>, vector<1x16x2xbf16>,
    %cst_127 = arith.constant 0.000000e+00 : bf16
    %77 = vector.broadcast %cst_127 : bf16 to vector<16x1x2xbf16>
    %c0_128 = arith.constant 0 : index
    %c0_129 = arith.constant 0 : index
    %c12_130 = arith.constant 12 : index
    %78 = vector.load %arg9[%c0_128, %c0_129, %c12_130] : memref<16x16x18xbf16, #tpu.memory_space<vmem>>, vector<16x1x2xbf16>
    tpu.vector_store %arg9[%c0_128, %c0_129, %c12_130], %77 {strides = array<i32>} : memref<16x16x18xbf16, #tpu.memory_space<vmem>>, vector<16x1x2xbf16>,
    %79 = vector.extract_strided_slice %49 {offsets = [1, 0, 0], sizes = [15, 15, 2], strides = [1, 1, 1]} : vector<16x16x2xbf16> to vector<15x15x2xbf16>
    %c0_131 = arith.constant 0 : index
    %c1_132 = arith.constant 1 : index
    %c12_133 = arith.constant 12 : index
    %80 = vector.load %arg9[%c0_131, %c1_132, %c12_133] : memref<16x16x18xbf16, #tpu.memory_space<vmem>>, vector<15x15x2xbf16>
    tpu.vector_store %arg9[%c0_131, %c1_132, %c12_133], %79 {strides = array<i32>} : memref<16x16x18xbf16, #tpu.memory_space<vmem>>, vector<15x15x2xbf16>,
    %cst_134 = arith.constant 0.000000e+00 : bf16
    %81 = vector.broadcast %cst_134 : bf16 to vector<1x16x2xbf16>
    %c15_135 = arith.constant 15 : index
    %c0_136 = arith.constant 0 : index
    %c14_137 = arith.constant 14 : index
    %82 = vector.load %arg9[%c15_135, %c0_136, %c14_137] : memref<16x16x18xbf16, #tpu.memory_space<vmem>>, vector<1x16x2xbf16>
    tpu.vector_store %arg9[%c15_135, %c0_136, %c14_137], %81 {strides = array<i32>} : memref<16x16x18xbf16, #tpu.memory_space<vmem>>, vector<1x16x2xbf16>,
    %83 = vector.extract_strided_slice %49 {offsets = [1, 0, 0], sizes = [15, 16, 2], strides = [1, 1, 1]} : vector<16x16x2xbf16> to vector<15x16x2xbf16>
    %c0_138 = arith.constant 0 : index
    %c0_139 = arith.constant 0 : index
    %c14_140 = arith.constant 14 : index
    %84 = vector.load %arg9[%c0_138, %c0_139, %c14_140] : memref<16x16x18xbf16, #tpu.memory_space<vmem>>, vector<15x16x2xbf16>
    tpu.vector_store %arg9[%c0_138, %c0_139, %c14_140], %83 {strides = array<i32>} : memref<16x16x18xbf16, #tpu.memory_space<vmem>>, vector<15x16x2xbf16>,
    %cst_141 = arith.constant 0.000000e+00 : bf16
    %85 = vector.broadcast %cst_141 : bf16 to vector<1x16x2xbf16>
    %c15_142 = arith.constant 15 : index
    %c0_143 = arith.constant 0 : index
    %c16_144 = arith.constant 16 : index
    %86 = vector.load %arg9[%c15_142, %c0_143, %c16_144] : memref<16x16x18xbf16, #tpu.memory_space<vmem>>, vector<1x16x2xbf16>
    tpu.vector_store %arg9[%c15_142, %c0_143, %c16_144], %85 {strides = array<i32>} : memref<16x16x18xbf16, #tpu.memory_space<vmem>>, vector<1x16x2xbf16>,
    %cst_145 = arith.constant 0.000000e+00 : bf16
    %87 = vector.broadcast %cst_145 : bf16 to vector<16x1x2xbf16>
    %c0_146 = arith.constant 0 : index
    %c15_147 = arith.constant 15 : index
    %c16_148 = arith.constant 16 : index
    %88 = vector.load %arg9[%c0_146, %c15_147, %c16_148] : memref<16x16x18xbf16, #tpu.memory_space<vmem>>, vector<16x1x2xbf16>
    tpu.vector_store %arg9[%c0_146, %c15_147, %c16_148], %87 {strides = array<i32>} : memref<16x16x18xbf16, #tpu.memory_space<vmem>>, vector<16x1x2xbf16>,
    %89 = vector.extract_strided_slice %49 {offsets = [1, 1, 0], sizes = [15, 15, 2], strides = [1, 1, 1]} : vector<16x16x2xbf16> to vector<15x15x2xbf16>
    %c0_149 = arith.constant 0 : index
    %c0_150 = arith.constant 0 : index
    %c16_151 = arith.constant 16 : index
    %90 = vector.load %arg9[%c0_149, %c0_150, %c16_151] : memref<16x16x18xbf16, #tpu.memory_space<vmem>>, vector<15x15x2xbf16>
    tpu.vector_store %arg9[%c0_149, %c0_150, %c16_151], %89 {strides = array<i32>} : memref<16x16x18xbf16, #tpu.memory_space<vmem>>, vector<15x15x2xbf16>,
    %c0_152 = arith.constant 0 : index
    %c0_153 = arith.constant 0 : index
    %c0_154 = arith.constant 0 : index
    %91 = vector.load %arg9[%c0_152, %c0_153, %c0_154] : memref<16x16x18xbf16, #tpu.memory_space<vmem>>, vector<16x16x18xbf16>
    %92 = vector.shape_cast %91 : vector<16x16x18xbf16> to vector<256x18xbf16>
    %c0_155 = arith.constant 0 : index
    %c0_156 = arith.constant 0 : index
    %93 = vector.load %arg4[%c0_155, %c0_156] : memref<18x4xbf16, #tpu.memory_space<vmem>>, vector<18x4xbf16>
    %cst_157 = arith.constant dense<0.000000e+00> : vector<256x4xf32>
    %94 = tpu.matmul %92, %93, %cst_157 {dimension_numbers = #tpu.dot_dimension_numbers<[1], [0], [0], [1], [0, 0, 1, 1], [], []>} : vector<256x18xbf16>, vector<18x4xbf16>, vector<256x4xf32> -> vector<256x4xf32>
    %95 = arith.addf %47, %94 : vector<256x4xf32>
    %c0_158 = arith.constant 0 : index
    %c0_159 = arith.constant 0 : index
    %96 = vector.load %arg5[%c0_158, %c0_159] : memref<1x4xf32, #tpu.memory_space<vmem>>, vector<1x4xf32>
    %97 = vector.broadcast %96 : vector<1x4xf32> to vector<256x4xf32>
    %98 = arith.addf %95, %97 : vector<256x4xf32>
    %99 = arith.truncf %98 : vector<256x4xf32> to vector<256x4xbf16>
    %100 = vector.shape_cast %99 : vector<256x4xbf16> to vector<16x16x4xbf16>
    %c0_160 = arith.constant 0 : index
    %c0_161 = arith.constant 0 : index
    %c0_162 = arith.constant 0 : index
    %c0_163 = arith.constant 0 : index
    %101 = vector.load %arg6[%c0_160, %c0_161, %c0_162, %c0_163] : memref<1x16x16x4xbf16, #tpu.memory_space<vmem>>, vector<1x16x16x4xbf16>
    %102 = vector.shape_cast %101 : vector<1x16x16x4xbf16> to vector<16x16x4xbf16>
    %103 = vector.shape_cast %100 : vector<16x16x4xbf16> to vector<1x16x16x4xbf16>
    tpu.vector_store %arg6[%c0_160, %c0_161, %c0_162, %c0_163], %103 {strides = array<i32>} : memref<1x16x16x4xbf16, #tpu.memory_space<vmem>>, vector<1x16x16x4xbf16>,
    %cst_164 = arith.constant dense<0.000000e+00> : vector<4xf32>
    %104 = vector.multi_reduction <add>, %98, %cst_164 [0] : vector<256x4xf32> to vector<4xf32>
    %105 = vector.shape_cast %104 : vector<4xf32> to vector<1x4xf32>
    %c0_165 = arith.constant 0 : index
    %c0_166 = arith.constant 0 : index
    %c0_167 = arith.constant 0 : index
    %106 = vector.load %arg7[%c0_165, %c0_166, %c0_167] : memref<1x2x4xf32, #tpu.memory_space<vmem>>, vector<1x1x4xf32>
    %107 = vector.shape_cast %106 : vector<1x1x4xf32> to vector<1x4xf32>
    %108 = vector.shape_cast %105 : vector<1x4xf32> to vector<1x1x4xf32>
    tpu.vector_store %arg7[%c0_165, %c0_166, %c0_167], %108 {strides = array<i32>} : memref<1x2x4xf32, #tpu.memory_space<vmem>>, vector<1x1x4xf32>,
    %109 = arith.mulf %98, %98 : vector<256x4xf32>
    %cst_168 = arith.constant dense<0.000000e+00> : vector<4xf32>
    %110 = vector.multi_reduction <add>, %109, %cst_168 [0] : vector<256x4xf32> to vector<4xf32>
    %111 = vector.shape_cast %110 : vector<4xf32> to vector<1x4xf32>
    %c0_169 = arith.constant 0 : index
    %c1_170 = arith.constant 1 : index
    %c0_171 = arith.constant 0 : index
    %112 = vector.load %arg7[%c0_169, %c1_170, %c0_171] : memref<1x2x4xf32, #tpu.memory_space<vmem>>, vector<1x1x4xf32>
    %113 = vector.shape_cast %112 : vector<1x1x4xf32> to vector<1x4xf32>
    %114 = vector.shape_cast %111 : vector<1x4xf32> to vector<1x1x4xf32>
    tpu.vector_store %arg7[%c0_169, %c1_170, %c0_171], %114 {strides = array<i32>} : memref<1x2x4xf32, #tpu.memory_space<vmem>>, vector<1x1x4xf32>,
    return
  }
  func.func @transform_0(%arg0: i32) -> (i32, i32, i32, i32) {
    %c0_i32 = arith.constant 0 : i32
    %c0_i32_0 = arith.constant 0 : i32
    %c0_i32_1 = arith.constant 0 : i32
    %c0_i32_2 = arith.constant 0 : i32
    return %arg0, %c0_i32, %c0_i32_0, %c0_i32_1 : i32, i32, i32, i32
  }
  func.func @transform_1(%arg0: i32) -> (i32, i32, i32, i32) {
    %c0_i32 = arith.constant 0 : i32
    %c0_i32_0 = arith.constant 0 : i32
    %c0_i32_1 = arith.constant 0 : i32
    %c0_i32_2 = arith.constant 0 : i32
    return %arg0, %c0_i32, %c0_i32_0, %c0_i32_1 : i32, i32, i32, i32
  }
  func.func @transform_2(%arg0: i32) -> (i32, i32) {
    %c0_i32 = arith.constant 0 : i32
    %c0_i32_0 = arith.constant 0 : i32
    %c0_i32_1 = arith.constant 0 : i32
    return %c0_i32, %c0_i32_0 : i32, i32
  }
  func.func @transform_3(%arg0: i32) -> (i32, i32) {
    %c0_i32 = arith.constant 0 : i32
    %c0_i32_0 = arith.constant 0 : i32
    %c0_i32_1 = arith.constant 0 : i32
    return %c0_i32, %c0_i32_0 : i32, i32
  }
  func.func @transform_4(%arg0: i32) -> (i32, i32) {
    %c0_i32 = arith.constant 0 : i32
    %c0_i32_0 = arith.constant 0 : i32
    %c0_i32_1 = arith.constant 0 : i32
    return %c0_i32, %c0_i32_0 : i32, i32
  }
  func.func @transform_5(%arg0: i32) -> (i32, i32, i32, i32) {
    %c0_i32 = arith.constant 0 : i32
    %c0_i32_0 = arith.constant 0 : i32
    %c0_i32_1 = arith.constant 0 : i32
    %c0_i32_2 = arith.constant 0 : i32
    return %arg0, %c0_i32, %c0_i32_0, %c0_i32_1 : i32, i32, i32, i32
  }
  func.func @transform_6(%arg0: i32) -> (i32, i32, i32) {
    %c0_i32 = arith.constant 0 : i32
    %c0_i32_0 = arith.constant 0 : i32
    %c0_i32_1 = arith.constant 0 : i32
    return %arg0, %c0_i32, %c0_i32_0 : i32, i32, i32
  }
}

module attributes {stable_mosaic.version = 11 : i64} {
  func.func @kernel(%arg0: i32, %arg1: memref<1x16x16x4xbf16, #tpu.memory_space<vmem>>, %arg2: memref<1x4xf32, #tpu.memory_space<vmem>>, %arg3: memref<1x4xf32, #tpu.memory_space<vmem>>, %arg4: memref<36x4xbf16, #tpu.memory_space<vmem>>, %arg5: memref<1x4xf32, #tpu.memory_space<vmem>>, %arg6: memref<1x16x16x4xbf16, #tpu.memory_space<vmem>>, %arg7: memref<1x2x4xf32, #tpu.memory_space<vmem>>, %arg8: memref<16x16x36xbf16, #tpu.memory_space<vmem>>) attributes {dimension_semantics = [#tpu.dimension_semantics<parallel>], iteration_bounds = array<i64: 2>, scalar_prefetch = 0 : i64, scratch_operands = 1 : i64, tpu.core_type = #tpu.core_type<tc>, window_params = [{transform_indices = @transform_0, window_bounds = array<i64: 1, 16, 16, 4>}, {pipeline_mode = #tpu.pipeline_mode<synchronous>, transform_indices = @transform_1, window_bounds = array<i64: 1, 4>}, {pipeline_mode = #tpu.pipeline_mode<synchronous>, transform_indices = @transform_2, window_bounds = array<i64: 1, 4>}, {pipeline_mode = #tpu.pipeline_mode<synchronous>, transform_indices = @transform_3, window_bounds = array<i64: 36, 4>}, {pipeline_mode = #tpu.pipeline_mode<synchronous>, transform_indices = @transform_4, window_bounds = array<i64: 1, 4>}, {transform_indices = @transform_5, window_bounds = array<i64: 1, 16, 16, 4>}, {transform_indices = @transform_6, window_bounds = array<i64: 1, 2, 4>}]} {
    %c0 = arith.constant 0 : index
    %c0_0 = arith.constant 0 : index
    %c0_1 = arith.constant 0 : index
    %c0_2 = arith.constant 0 : index
    %0 = vector.load %arg1[%c0, %c0_0, %c0_1, %c0_2] : memref<1x16x16x4xbf16, #tpu.memory_space<vmem>>, vector<1x16x16x4xbf16>
    %1 = vector.shape_cast %0 : vector<1x16x16x4xbf16> to vector<16x16x4xbf16>
    %2 = arith.extf %1 : vector<16x16x4xbf16> to vector<16x16x4xf32>
    %c0_3 = arith.constant 0 : index
    %c0_4 = arith.constant 0 : index
    %3 = vector.load %arg2[%c0_3, %c0_4] : memref<1x4xf32, #tpu.memory_space<vmem>>, vector<1x4xf32>
    %4 = vector.shape_cast %3 : vector<1x4xf32> to vector<1x1x4xf32>
    %5 = vector.broadcast %4 : vector<1x1x4xf32> to vector<16x16x4xf32>
    %6 = arith.mulf %2, %5 : vector<16x16x4xf32>
    %c0_5 = arith.constant 0 : index
    %c0_6 = arith.constant 0 : index
    %7 = vector.load %arg3[%c0_5, %c0_6] : memref<1x4xf32, #tpu.memory_space<vmem>>, vector<1x4xf32>
    %8 = vector.shape_cast %7 : vector<1x4xf32> to vector<1x1x4xf32>
    %9 = vector.broadcast %8 : vector<1x1x4xf32> to vector<16x16x4xf32>
    %10 = arith.addf %6, %9 : vector<16x16x4xf32>
    %cst = arith.constant 0.000000e+00 : f32
    %11 = vector.broadcast %cst : f32 to vector<16x16x4xf32>
    %12 = arith.maximumf %10, %11 : vector<16x16x4xf32>
    %13 = arith.truncf %12 : vector<16x16x4xf32> to vector<16x16x4xbf16>
    %cst_7 = arith.constant 0.000000e+00 : bf16
    %14 = vector.broadcast %cst_7 : bf16 to vector<1x16x4xbf16>
    %c0_8 = arith.constant 0 : index
    %c0_9 = arith.constant 0 : index
    %c0_10 = arith.constant 0 : index
    %15 = vector.load %arg8[%c0_8, %c0_9, %c0_10] : memref<16x16x36xbf16, #tpu.memory_space<vmem>>, vector<1x16x4xbf16>
    tpu.vector_store %arg8[%c0_8, %c0_9, %c0_10], %14 {strides = array<i32>} : memref<16x16x36xbf16, #tpu.memory_space<vmem>>, vector<1x16x4xbf16>,
    %cst_11 = arith.constant 0.000000e+00 : bf16
    %16 = vector.broadcast %cst_11 : bf16 to vector<16x1x4xbf16>
    %c0_12 = arith.constant 0 : index
    %c0_13 = arith.constant 0 : index
    %c0_14 = arith.constant 0 : index
    %17 = vector.load %arg8[%c0_12, %c0_13, %c0_14] : memref<16x16x36xbf16, #tpu.memory_space<vmem>>, vector<16x1x4xbf16>
    tpu.vector_store %arg8[%c0_12, %c0_13, %c0_14], %16 {strides = array<i32>} : memref<16x16x36xbf16, #tpu.memory_space<vmem>>, vector<16x1x4xbf16>,
    %18 = vector.extract_strided_slice %13 {offsets = [0, 0, 0], sizes = [15, 15, 4], strides = [1, 1, 1]} : vector<16x16x4xbf16> to vector<15x15x4xbf16>
    %c1 = arith.constant 1 : index
    %c1_15 = arith.constant 1 : index
    %c0_16 = arith.constant 0 : index
    %19 = vector.load %arg8[%c1, %c1_15, %c0_16] : memref<16x16x36xbf16, #tpu.memory_space<vmem>>, vector<15x15x4xbf16>
    tpu.vector_store %arg8[%c1, %c1_15, %c0_16], %18 {strides = array<i32>} : memref<16x16x36xbf16, #tpu.memory_space<vmem>>, vector<15x15x4xbf16>,
    %cst_17 = arith.constant 0.000000e+00 : bf16
    %20 = vector.broadcast %cst_17 : bf16 to vector<1x16x4xbf16>
    %c0_18 = arith.constant 0 : index
    %c0_19 = arith.constant 0 : index
    %c4 = arith.constant 4 : index
    %21 = vector.load %arg8[%c0_18, %c0_19, %c4] : memref<16x16x36xbf16, #tpu.memory_space<vmem>>, vector<1x16x4xbf16>
    tpu.vector_store %arg8[%c0_18, %c0_19, %c4], %20 {strides = array<i32>} : memref<16x16x36xbf16, #tpu.memory_space<vmem>>, vector<1x16x4xbf16>,
    %22 = vector.extract_strided_slice %13 {offsets = [0, 0, 0], sizes = [15, 16, 4], strides = [1, 1, 1]} : vector<16x16x4xbf16> to vector<15x16x4xbf16>
    %c1_20 = arith.constant 1 : index
    %c0_21 = arith.constant 0 : index
    %c4_22 = arith.constant 4 : index
    %23 = vector.load %arg8[%c1_20, %c0_21, %c4_22] : memref<16x16x36xbf16, #tpu.memory_space<vmem>>, vector<15x16x4xbf16>
    tpu.vector_store %arg8[%c1_20, %c0_21, %c4_22], %22 {strides = array<i32>} : memref<16x16x36xbf16, #tpu.memory_space<vmem>>, vector<15x16x4xbf16>,
    %cst_23 = arith.constant 0.000000e+00 : bf16
    %24 = vector.broadcast %cst_23 : bf16 to vector<1x16x4xbf16>
    %c0_24 = arith.constant 0 : index
    %c0_25 = arith.constant 0 : index
    %c8 = arith.constant 8 : index
    %25 = vector.load %arg8[%c0_24, %c0_25, %c8] : memref<16x16x36xbf16, #tpu.memory_space<vmem>>, vector<1x16x4xbf16>
    tpu.vector_store %arg8[%c0_24, %c0_25, %c8], %24 {strides = array<i32>} : memref<16x16x36xbf16, #tpu.memory_space<vmem>>, vector<1x16x4xbf16>,
    %cst_26 = arith.constant 0.000000e+00 : bf16
    %26 = vector.broadcast %cst_26 : bf16 to vector<16x1x4xbf16>
    %c0_27 = arith.constant 0 : index
    %c15 = arith.constant 15 : index
    %c8_28 = arith.constant 8 : index
    %27 = vector.load %arg8[%c0_27, %c15, %c8_28] : memref<16x16x36xbf16, #tpu.memory_space<vmem>>, vector<16x1x4xbf16>
    tpu.vector_store %arg8[%c0_27, %c15, %c8_28], %26 {strides = array<i32>} : memref<16x16x36xbf16, #tpu.memory_space<vmem>>, vector<16x1x4xbf16>,
    %28 = vector.extract_strided_slice %13 {offsets = [0, 1, 0], sizes = [15, 15, 4], strides = [1, 1, 1]} : vector<16x16x4xbf16> to vector<15x15x4xbf16>
    %c1_29 = arith.constant 1 : index
    %c0_30 = arith.constant 0 : index
    %c8_31 = arith.constant 8 : index
    %29 = vector.load %arg8[%c1_29, %c0_30, %c8_31] : memref<16x16x36xbf16, #tpu.memory_space<vmem>>, vector<15x15x4xbf16>
    tpu.vector_store %arg8[%c1_29, %c0_30, %c8_31], %28 {strides = array<i32>} : memref<16x16x36xbf16, #tpu.memory_space<vmem>>, vector<15x15x4xbf16>,
    %cst_32 = arith.constant 0.000000e+00 : bf16
    %30 = vector.broadcast %cst_32 : bf16 to vector<16x1x4xbf16>
    %c0_33 = arith.constant 0 : index
    %c0_34 = arith.constant 0 : index
    %c12 = arith.constant 12 : index
    %31 = vector.load %arg8[%c0_33, %c0_34, %c12] : memref<16x16x36xbf16, #tpu.memory_space<vmem>>, vector<16x1x4xbf16>
    tpu.vector_store %arg8[%c0_33, %c0_34, %c12], %30 {strides = array<i32>} : memref<16x16x36xbf16, #tpu.memory_space<vmem>>, vector<16x1x4xbf16>,
    %32 = vector.extract_strided_slice %13 {offsets = [0, 0, 0], sizes = [16, 15, 4], strides = [1, 1, 1]} : vector<16x16x4xbf16> to vector<16x15x4xbf16>
    %c0_35 = arith.constant 0 : index
    %c1_36 = arith.constant 1 : index
    %c12_37 = arith.constant 12 : index
    %33 = vector.load %arg8[%c0_35, %c1_36, %c12_37] : memref<16x16x36xbf16, #tpu.memory_space<vmem>>, vector<16x15x4xbf16>
    tpu.vector_store %arg8[%c0_35, %c1_36, %c12_37], %32 {strides = array<i32>} : memref<16x16x36xbf16, #tpu.memory_space<vmem>>, vector<16x15x4xbf16>,
    %c0_38 = arith.constant 0 : index
    %c0_39 = arith.constant 0 : index
    %c16 = arith.constant 16 : index
    %34 = vector.load %arg8[%c0_38, %c0_39, %c16] : memref<16x16x36xbf16, #tpu.memory_space<vmem>>, vector<16x16x4xbf16>
    tpu.vector_store %arg8[%c0_38, %c0_39, %c16], %13 {strides = array<i32>} : memref<16x16x36xbf16, #tpu.memory_space<vmem>>, vector<16x16x4xbf16>,
    %cst_40 = arith.constant 0.000000e+00 : bf16
    %35 = vector.broadcast %cst_40 : bf16 to vector<16x1x4xbf16>
    %c0_41 = arith.constant 0 : index
    %c15_42 = arith.constant 15 : index
    %c20 = arith.constant 20 : index
    %36 = vector.load %arg8[%c0_41, %c15_42, %c20] : memref<16x16x36xbf16, #tpu.memory_space<vmem>>, vector<16x1x4xbf16>
    tpu.vector_store %arg8[%c0_41, %c15_42, %c20], %35 {strides = array<i32>} : memref<16x16x36xbf16, #tpu.memory_space<vmem>>, vector<16x1x4xbf16>,
    %37 = vector.extract_strided_slice %13 {offsets = [0, 1, 0], sizes = [16, 15, 4], strides = [1, 1, 1]} : vector<16x16x4xbf16> to vector<16x15x4xbf16>
    %c0_43 = arith.constant 0 : index
    %c0_44 = arith.constant 0 : index
    %c20_45 = arith.constant 20 : index
    %38 = vector.load %arg8[%c0_43, %c0_44, %c20_45] : memref<16x16x36xbf16, #tpu.memory_space<vmem>>, vector<16x15x4xbf16>
    tpu.vector_store %arg8[%c0_43, %c0_44, %c20_45], %37 {strides = array<i32>} : memref<16x16x36xbf16, #tpu.memory_space<vmem>>, vector<16x15x4xbf16>,
    %cst_46 = arith.constant 0.000000e+00 : bf16
    %39 = vector.broadcast %cst_46 : bf16 to vector<1x16x4xbf16>
    %c15_47 = arith.constant 15 : index
    %c0_48 = arith.constant 0 : index
    %c24 = arith.constant 24 : index
    %40 = vector.load %arg8[%c15_47, %c0_48, %c24] : memref<16x16x36xbf16, #tpu.memory_space<vmem>>, vector<1x16x4xbf16>
    tpu.vector_store %arg8[%c15_47, %c0_48, %c24], %39 {strides = array<i32>} : memref<16x16x36xbf16, #tpu.memory_space<vmem>>, vector<1x16x4xbf16>,
    %cst_49 = arith.constant 0.000000e+00 : bf16
    %41 = vector.broadcast %cst_49 : bf16 to vector<16x1x4xbf16>
    %c0_50 = arith.constant 0 : index
    %c0_51 = arith.constant 0 : index
    %c24_52 = arith.constant 24 : index
    %42 = vector.load %arg8[%c0_50, %c0_51, %c24_52] : memref<16x16x36xbf16, #tpu.memory_space<vmem>>, vector<16x1x4xbf16>
    tpu.vector_store %arg8[%c0_50, %c0_51, %c24_52], %41 {strides = array<i32>} : memref<16x16x36xbf16, #tpu.memory_space<vmem>>, vector<16x1x4xbf16>,
    %43 = vector.extract_strided_slice %13 {offsets = [1, 0, 0], sizes = [15, 15, 4], strides = [1, 1, 1]} : vector<16x16x4xbf16> to vector<15x15x4xbf16>
    %c0_53 = arith.constant 0 : index
    %c1_54 = arith.constant 1 : index
    %c24_55 = arith.constant 24 : index
    %44 = vector.load %arg8[%c0_53, %c1_54, %c24_55] : memref<16x16x36xbf16, #tpu.memory_space<vmem>>, vector<15x15x4xbf16>
    tpu.vector_store %arg8[%c0_53, %c1_54, %c24_55], %43 {strides = array<i32>} : memref<16x16x36xbf16, #tpu.memory_space<vmem>>, vector<15x15x4xbf16>,
    %cst_56 = arith.constant 0.000000e+00 : bf16
    %45 = vector.broadcast %cst_56 : bf16 to vector<1x16x4xbf16>
    %c15_57 = arith.constant 15 : index
    %c0_58 = arith.constant 0 : index
    %c28 = arith.constant 28 : index
    %46 = vector.load %arg8[%c15_57, %c0_58, %c28] : memref<16x16x36xbf16, #tpu.memory_space<vmem>>, vector<1x16x4xbf16>
    tpu.vector_store %arg8[%c15_57, %c0_58, %c28], %45 {strides = array<i32>} : memref<16x16x36xbf16, #tpu.memory_space<vmem>>, vector<1x16x4xbf16>,
    %47 = vector.extract_strided_slice %13 {offsets = [1, 0, 0], sizes = [15, 16, 4], strides = [1, 1, 1]} : vector<16x16x4xbf16> to vector<15x16x4xbf16>
    %c0_59 = arith.constant 0 : index
    %c0_60 = arith.constant 0 : index
    %c28_61 = arith.constant 28 : index
    %48 = vector.load %arg8[%c0_59, %c0_60, %c28_61] : memref<16x16x36xbf16, #tpu.memory_space<vmem>>, vector<15x16x4xbf16>
    tpu.vector_store %arg8[%c0_59, %c0_60, %c28_61], %47 {strides = array<i32>} : memref<16x16x36xbf16, #tpu.memory_space<vmem>>, vector<15x16x4xbf16>,
    %cst_62 = arith.constant 0.000000e+00 : bf16
    %49 = vector.broadcast %cst_62 : bf16 to vector<1x16x4xbf16>
    %c15_63 = arith.constant 15 : index
    %c0_64 = arith.constant 0 : index
    %c32 = arith.constant 32 : index
    %50 = vector.load %arg8[%c15_63, %c0_64, %c32] : memref<16x16x36xbf16, #tpu.memory_space<vmem>>, vector<1x16x4xbf16>
    tpu.vector_store %arg8[%c15_63, %c0_64, %c32], %49 {strides = array<i32>} : memref<16x16x36xbf16, #tpu.memory_space<vmem>>, vector<1x16x4xbf16>,
    %cst_65 = arith.constant 0.000000e+00 : bf16
    %51 = vector.broadcast %cst_65 : bf16 to vector<16x1x4xbf16>
    %c0_66 = arith.constant 0 : index
    %c15_67 = arith.constant 15 : index
    %c32_68 = arith.constant 32 : index
    %52 = vector.load %arg8[%c0_66, %c15_67, %c32_68] : memref<16x16x36xbf16, #tpu.memory_space<vmem>>, vector<16x1x4xbf16>
    tpu.vector_store %arg8[%c0_66, %c15_67, %c32_68], %51 {strides = array<i32>} : memref<16x16x36xbf16, #tpu.memory_space<vmem>>, vector<16x1x4xbf16>,
    %53 = vector.extract_strided_slice %13 {offsets = [1, 1, 0], sizes = [15, 15, 4], strides = [1, 1, 1]} : vector<16x16x4xbf16> to vector<15x15x4xbf16>
    %c0_69 = arith.constant 0 : index
    %c0_70 = arith.constant 0 : index
    %c32_71 = arith.constant 32 : index
    %54 = vector.load %arg8[%c0_69, %c0_70, %c32_71] : memref<16x16x36xbf16, #tpu.memory_space<vmem>>, vector<15x15x4xbf16>
    tpu.vector_store %arg8[%c0_69, %c0_70, %c32_71], %53 {strides = array<i32>} : memref<16x16x36xbf16, #tpu.memory_space<vmem>>, vector<15x15x4xbf16>,
    %c0_72 = arith.constant 0 : index
    %c0_73 = arith.constant 0 : index
    %c0_74 = arith.constant 0 : index
    %55 = vector.load %arg8[%c0_72, %c0_73, %c0_74] : memref<16x16x36xbf16, #tpu.memory_space<vmem>>, vector<16x16x36xbf16>
    %56 = vector.shape_cast %55 : vector<16x16x36xbf16> to vector<256x36xbf16>
    %c0_75 = arith.constant 0 : index
    %c0_76 = arith.constant 0 : index
    %57 = vector.load %arg4[%c0_75, %c0_76] : memref<36x4xbf16, #tpu.memory_space<vmem>>, vector<36x4xbf16>
    %cst_77 = arith.constant dense<0.000000e+00> : vector<256x4xf32>
    %58 = tpu.matmul %56, %57, %cst_77 {dimension_numbers = #tpu.dot_dimension_numbers<[1], [0], [0], [1], [0, 0, 1, 1], [], []>} : vector<256x36xbf16>, vector<36x4xbf16>, vector<256x4xf32> -> vector<256x4xf32>
    %c0_78 = arith.constant 0 : index
    %c0_79 = arith.constant 0 : index
    %59 = vector.load %arg5[%c0_78, %c0_79] : memref<1x4xf32, #tpu.memory_space<vmem>>, vector<1x4xf32>
    %60 = vector.broadcast %59 : vector<1x4xf32> to vector<256x4xf32>
    %61 = arith.addf %58, %60 : vector<256x4xf32>
    %62 = arith.truncf %61 : vector<256x4xf32> to vector<256x4xbf16>
    %63 = vector.shape_cast %62 : vector<256x4xbf16> to vector<16x16x4xbf16>
    %c0_80 = arith.constant 0 : index
    %c0_81 = arith.constant 0 : index
    %c0_82 = arith.constant 0 : index
    %c0_83 = arith.constant 0 : index
    %64 = vector.load %arg6[%c0_80, %c0_81, %c0_82, %c0_83] : memref<1x16x16x4xbf16, #tpu.memory_space<vmem>>, vector<1x16x16x4xbf16>
    %65 = vector.shape_cast %64 : vector<1x16x16x4xbf16> to vector<16x16x4xbf16>
    %66 = vector.shape_cast %63 : vector<16x16x4xbf16> to vector<1x16x16x4xbf16>
    tpu.vector_store %arg6[%c0_80, %c0_81, %c0_82, %c0_83], %66 {strides = array<i32>} : memref<1x16x16x4xbf16, #tpu.memory_space<vmem>>, vector<1x16x16x4xbf16>,
    %cst_84 = arith.constant dense<0.000000e+00> : vector<4xf32>
    %67 = vector.multi_reduction <add>, %61, %cst_84 [0] : vector<256x4xf32> to vector<4xf32>
    %68 = vector.shape_cast %67 : vector<4xf32> to vector<1x4xf32>
    %c0_85 = arith.constant 0 : index
    %c0_86 = arith.constant 0 : index
    %c0_87 = arith.constant 0 : index
    %69 = vector.load %arg7[%c0_85, %c0_86, %c0_87] : memref<1x2x4xf32, #tpu.memory_space<vmem>>, vector<1x1x4xf32>
    %70 = vector.shape_cast %69 : vector<1x1x4xf32> to vector<1x4xf32>
    %71 = vector.shape_cast %68 : vector<1x4xf32> to vector<1x1x4xf32>
    tpu.vector_store %arg7[%c0_85, %c0_86, %c0_87], %71 {strides = array<i32>} : memref<1x2x4xf32, #tpu.memory_space<vmem>>, vector<1x1x4xf32>,
    %72 = arith.mulf %61, %61 : vector<256x4xf32>
    %cst_88 = arith.constant dense<0.000000e+00> : vector<4xf32>
    %73 = vector.multi_reduction <add>, %72, %cst_88 [0] : vector<256x4xf32> to vector<4xf32>
    %74 = vector.shape_cast %73 : vector<4xf32> to vector<1x4xf32>
    %c0_89 = arith.constant 0 : index
    %c1_90 = arith.constant 1 : index
    %c0_91 = arith.constant 0 : index
    %75 = vector.load %arg7[%c0_89, %c1_90, %c0_91] : memref<1x2x4xf32, #tpu.memory_space<vmem>>, vector<1x1x4xf32>
    %76 = vector.shape_cast %75 : vector<1x1x4xf32> to vector<1x4xf32>
    %77 = vector.shape_cast %74 : vector<1x4xf32> to vector<1x1x4xf32>
    tpu.vector_store %arg7[%c0_89, %c1_90, %c0_91], %77 {strides = array<i32>} : memref<1x2x4xf32, #tpu.memory_space<vmem>>, vector<1x1x4xf32>,
    return
  }
  func.func @transform_0(%arg0: i32) -> (i32, i32, i32, i32) {
    %c0_i32 = arith.constant 0 : i32
    %c0_i32_0 = arith.constant 0 : i32
    %c0_i32_1 = arith.constant 0 : i32
    %c0_i32_2 = arith.constant 0 : i32
    return %arg0, %c0_i32, %c0_i32_0, %c0_i32_1 : i32, i32, i32, i32
  }
  func.func @transform_1(%arg0: i32) -> (i32, i32) {
    %c0_i32 = arith.constant 0 : i32
    %c0_i32_0 = arith.constant 0 : i32
    %c0_i32_1 = arith.constant 0 : i32
    return %c0_i32, %c0_i32_0 : i32, i32
  }
  func.func @transform_2(%arg0: i32) -> (i32, i32) {
    %c0_i32 = arith.constant 0 : i32
    %c0_i32_0 = arith.constant 0 : i32
    %c0_i32_1 = arith.constant 0 : i32
    return %c0_i32, %c0_i32_0 : i32, i32
  }
  func.func @transform_3(%arg0: i32) -> (i32, i32) {
    %c0_i32 = arith.constant 0 : i32
    %c0_i32_0 = arith.constant 0 : i32
    %c0_i32_1 = arith.constant 0 : i32
    return %c0_i32, %c0_i32_0 : i32, i32
  }
  func.func @transform_4(%arg0: i32) -> (i32, i32) {
    %c0_i32 = arith.constant 0 : i32
    %c0_i32_0 = arith.constant 0 : i32
    %c0_i32_1 = arith.constant 0 : i32
    return %c0_i32, %c0_i32_0 : i32, i32
  }
  func.func @transform_5(%arg0: i32) -> (i32, i32, i32, i32) {
    %c0_i32 = arith.constant 0 : i32
    %c0_i32_0 = arith.constant 0 : i32
    %c0_i32_1 = arith.constant 0 : i32
    %c0_i32_2 = arith.constant 0 : i32
    return %arg0, %c0_i32, %c0_i32_0, %c0_i32_1 : i32, i32, i32, i32
  }
  func.func @transform_6(%arg0: i32) -> (i32, i32, i32) {
    %c0_i32 = arith.constant 0 : i32
    %c0_i32_0 = arith.constant 0 : i32
    %c0_i32_1 = arith.constant 0 : i32
    return %arg0, %c0_i32, %c0_i32_0 : i32, i32, i32
  }
}

module attributes {stable_mosaic.version = 11 : i64} {
  func.func @_bn_relu_kernel(%arg0: i32, %arg1: memref<32x64xbf16, #tpu.memory_space<vmem>>, %arg2: memref<1x64xf32, #tpu.memory_space<vmem>>, %arg3: memref<1x64xf32, #tpu.memory_space<vmem>>, %arg4: memref<32x64xf32, #tpu.memory_space<vmem>>) attributes {dimension_semantics = [#tpu.dimension_semantics<parallel>], iteration_bounds = array<i64: 1>, scalar_prefetch = 0 : i64, scratch_operands = 0 : i64, tpu.core_type = #tpu.core_type<tc>, window_params = [{transform_indices = @transform_0, window_bounds = array<i64: 32, 64>}, {pipeline_mode = #tpu.pipeline_mode<synchronous>, transform_indices = @transform_1, window_bounds = array<i64: 1, 64>}, {pipeline_mode = #tpu.pipeline_mode<synchronous>, transform_indices = @transform_2, window_bounds = array<i64: 1, 64>}, {transform_indices = @transform_3, window_bounds = array<i64: 32, 64>}]} {
    %c0 = arith.constant 0 : index
    %c0_0 = arith.constant 0 : index
    %0 = vector.load %arg1[%c0, %c0_0] : memref<32x64xbf16, #tpu.memory_space<vmem>>, vector<32x64xbf16>
    %1 = arith.extf %0 : vector<32x64xbf16> to vector<32x64xf32>
    %c0_1 = arith.constant 0 : index
    %c0_2 = arith.constant 0 : index
    %2 = vector.load %arg2[%c0_1, %c0_2] : memref<1x64xf32, #tpu.memory_space<vmem>>, vector<1x64xf32>
    %3 = vector.broadcast %2 : vector<1x64xf32> to vector<32x64xf32>
    %4 = arith.mulf %1, %3 : vector<32x64xf32>
    %c0_3 = arith.constant 0 : index
    %c0_4 = arith.constant 0 : index
    %5 = vector.load %arg3[%c0_3, %c0_4] : memref<1x64xf32, #tpu.memory_space<vmem>>, vector<1x64xf32>
    %6 = vector.broadcast %5 : vector<1x64xf32> to vector<32x64xf32>
    %7 = arith.addf %4, %6 : vector<32x64xf32>
    %cst = arith.constant 0.000000e+00 : f32
    %8 = vector.broadcast %cst : f32 to vector<32x64xf32>
    %9 = arith.maximumf %7, %8 : vector<32x64xf32>
    %c0_5 = arith.constant 0 : index
    %c0_6 = arith.constant 0 : index
    %10 = vector.load %arg4[%c0_5, %c0_6] : memref<32x64xf32, #tpu.memory_space<vmem>>, vector<32x64xf32>
    tpu.vector_store %arg4[%c0_5, %c0_6], %9 {strides = array<i32>} : memref<32x64xf32, #tpu.memory_space<vmem>>, vector<32x64xf32>,
    return
  }
  func.func @transform_0(%arg0: i32) -> (i32, i32) {
    %c0_i32 = arith.constant 0 : i32
    %c0_i32_0 = arith.constant 0 : i32
    return %arg0, %c0_i32 : i32, i32
  }
  func.func @transform_1(%arg0: i32) -> (i32, i32) {
    %c0_i32 = arith.constant 0 : i32
    %c0_i32_0 = arith.constant 0 : i32
    %c0_i32_1 = arith.constant 0 : i32
    return %c0_i32, %c0_i32_0 : i32, i32
  }
  func.func @transform_2(%arg0: i32) -> (i32, i32) {
    %c0_i32 = arith.constant 0 : i32
    %c0_i32_0 = arith.constant 0 : i32
    %c0_i32_1 = arith.constant 0 : i32
    return %c0_i32, %c0_i32_0 : i32, i32
  }
  func.func @transform_3(%arg0: i32) -> (i32, i32) {
    %c0_i32 = arith.constant 0 : i32
    %c0_i32_0 = arith.constant 0 : i32
    return %arg0, %c0_i32 : i32, i32
  }
}

</mosaic_0001>

<llo_original>
// kernel: tile.18
$region0: #{tile.18}
  #allocation0 [shape = 's32[1]{0}', space=sflag, size = 0x4, scoped, tag = 'scoped memory for tile.18']
  %s0 = inlined_call_operand.vmem [shape: f32[2], index: 0, kind: input, shape index: {}]
  %s1 = inlined_call_operand.vmem [shape: f32[2,2], index: 1, kind: output, shape index: {}]
  // Predicated region
  $region2: #{tile.18} parent=0 // pred_check
    _
  $region3: #{tile.18} parent=0 // pred_check_branch
    %3 = sbr.rel (0) target = $region5
  $region4: #{tile.18} parent=0 // pred_region
    _
  $region5: #{tile.18} parent=0 // pred_fallthru
    _
  %v4 = vld [vmem:[%s0] ss:$0 sm:$0xff]
  %5 = vst [vmem:[%s1] sm:$0x3] %v4

// kernel: tile.19
$region0: #{tile.19}
  %s0 = inlined_call_operand.vmem [shape: f32[2,2], index: 0, kind: input, shape index: {}]
  %s1 = inlined_call_operand.vmem [shape: f32[1,4], index: 1, kind: output, shape index: {}]
  $region1: #{tile.19} parent=0
    #allocation0 [shape = 'u8[4096]{0}', space=vmem, size = 0x1000, scoped, tag = 'scoped mem for output reshape']
    #allocation1 [shape = 'u8[4096]{0}', space=vmem, size = 0x1000, scoped, tag = 'scoped mem for input reshape']
    %s3 = sshllo.u32 0, 2
    %v4 = vld [vmem:[%s0] sm:%s3]
    %5 = vst [vmem:[#allocation1] sm:%s3] %v4
    %v6 = vld [vmem:[#allocation1] sm:$0x1]
    %vm7 = vcmask 15360
    %8 = vst.msk [vmem:[#allocation0] sm:$0x1] %vm7, %v6
    %s9 = scalar_lea.vmem [#allocation1], 1
    %v10 = vld [vmem:[%s9] sm:$0x1]
    %11 = vrot.lane.b32.xlu0 %v10, 2
    %v12 = vpop.permute.xlu0 %11
    %vm13 = vcmask 31760
    %14 = vst.msk [vmem:[#allocation0] sm:$0x1] %vm13, %v12
    %s16 = sshllo.u32 0, 1
    %v18 = vld [vmem:[#allocation0] sm:%s16]
    %s19 = sshllo.u32 0, 1
    %20 = vst [vmem:[%s1] sm:%s19] %v18

// kernel: tile.23
$region0: #{tile.23}
  #allocation0 [shape = 's32[1]{0}', space=sflag, size = 0x4, scoped, tag = 'scoped memory for tile.23']
  %s0 = inlined_call_operand.vmem [shape: f32[4], index: 0, kind: input, shape index: {}]
  %s1 = inlined_call_operand.vmem [shape: f32[16,4], index: 1, kind: output, shape index: {}]
  // Predicated region
  $region2: #{tile.23} parent=0 // pred_check
    _
  $region3: #{tile.23} parent=0 // pred_check_branch
    %3 = sbr.rel (0) target = $region5
  $region4: #{tile.23} parent=0 // pred_region
    _
  $region5: #{tile.23} parent=0 // pred_fallthru
    _
  %v4 = vld [vmem:[%s0] ss:$0 sm:$0xff]
  %5 = vst [vmem:[%s1] sm:$0xff] %v4
  %s6 = scalar_lea.vmem %s1, 8
  %7 = vst [vmem:[%s6] sm:$0xff] %v4

// kernel: tile.24
$region0: #{tile.24}
  %s0 = inlined_call_operand.vmem [shape: f32[16,4], index: 0, kind: input, shape index: {}]
  %s1 = inlined_call_operand.vmem [shape: f32[1,64], index: 1, kind: output, shape index: {}]
  $region1: #{tile.24} parent=0
    #allocation0 [shape = 'u8[4096]{0}', space=vmem, size = 0x1000, scoped, tag = 'scoped mem for output reshape']
    %v2 = vld [vmem:[%s0] sm:$0x1]
    %vm3 = vcmask 31744
    %4 = vst.msk [vmem:[#allocation0] sm:$0x1] %vm3, %v2
    %s5 = scalar_lea.vmem %s0, 15
    %v6 = vld [vmem:[%s5] sm:$0x1]
    %7 = vrot.lane.b32.xlu0 %v6, 60
    %v8 = vpop.permute.xlu0 %7
    %vm9 = vcmask 523744
    %10 = vst.msk [vmem:[#allocation0] sm:$0x1] %vm9, %v8
    %s11 = scalar_lea.vmem %s0, 14
    %v12 = vld [vmem:[%s11] sm:$0x1]
    %13 = vrot.lane.b32.xlu0 %v12, 56
    %v14 = vpop.permute.xlu0 %13
    %vm15 = vcmask 490944
    %16 = vst.msk [vmem:[#allocation0] sm:$0x1] %vm15, %v14
    %s17 = scalar_lea.vmem %s0, 13
    %v18 = vld [vmem:[%s17] sm:$0x1]
    %19 = vrot.lane.b32.xlu0 %v18, 52
    %v20 = vpop.permute.xlu0 %19
    %vm21 = vcmask 458144
    %22 = vst.msk [vmem:[#allocation0] sm:$0x1] %vm21, %v20
    %s23 = scalar_lea.vmem %s0, 12
    %v24 = vld [vmem:[%s23] sm:$0x1]
    %25 = vrot.lane.b32.xlu0 %v24, 48
    %v26 = vpop.permute.xlu0 %25
    %vm27 = vcmask 425344
    %28 = vst.msk [vmem:[#allocation0] sm:$0x1] %vm27, %v26
    %s29 = scalar_lea.vmem %s0, 11
    %v30 = vld [vmem:[%s29] sm:$0x1]
    %31 = vrot.lane.b32.xlu0 %v30, 44
    %v32 = vpop.permute.xlu0 %31
    %vm33 = vcmask 392544
    %34 = vst.msk [vmem:[#allocation0] sm:$0x1] %vm33, %v32
    %s35 = scalar_lea.vmem %s0, 10
    %v36 = vld [vmem:[%s35] sm:$0x1]
    %37 = vrot.lane.b32.xlu0 %v36, 40
    %v38 = vpop.permute.xlu0 %37
    %vm39 = vcmask 359744
    %40 = vst.msk [vmem:[#allocation0] sm:$0x1] %vm39, %v38
    %s41 = scalar_lea.vmem %s0, 9
    %v42 = vld [vmem:[%s41] sm:$0x1]
    %43 = vrot.lane.b32.xlu0 %v42, 36
    %v44 = vpop.permute.xlu0 %43
    %vm45 = vcmask 326944
    %46 = vst.msk [vmem:[#allocation0] sm:$0x1] %vm45, %v44
    %s47 = scalar_lea.vmem %s0, 8
    %v48 = vld [vmem:[%s47] sm:$0x1]
    %49 = vrot.lane.b32.xlu0 %v48, 32
    %v50 = vpop.permute.xlu0 %49
    %vm51 = vcmask 294144
    %52 = vst.msk [vmem:[#allocation0] sm:$0x1] %vm51, %v50
    %s53 = scalar_lea.vmem %s0, 7
    %v54 = vld [vmem:[%s53] sm:$0x1]
    %55 = vrot.lane.b32.xlu0 %v54, 28
    %v56 = vpop.permute.xlu0 %55
    %vm57 = vcmask 261344
    %58 = vst.msk [vmem:[#allocation0] sm:$0x1] %vm57, %v56
    %s59 = scalar_lea.vmem %s0, 6
    %v60 = vld [vmem:[%s59] sm:$0x1]
    %61 = vrot.lane.b32.xlu0 %v60, 24
    %v62 = vpop.permute.xlu0 %61
    %vm63 = vcmask 228544
    %64 = vst.msk [vmem:[#allocation0] sm:$0x1] %vm63, %v62
    %s65 = scalar_lea.vmem %s0, 5
    %v66 = vld [vmem:[%s65] sm:$0x1]
    %67 = vrot.lane.b32.xlu0 %v66, 20
    %v68 = vpop.permute.xlu0 %67
    %vm69 = vcmask 195744
    %70 = vst.msk [vmem:[#allocation0] sm:$0x1] %vm69, %v68
    %s71 = scalar_lea.vmem %s0, 4
    %v72 = vld [vmem:[%s71] sm:$0x1]
    %73 = vrot.lane.b32.xlu0 %v72, 16
    %v74 = vpop.permute.xlu0 %73
    %vm75 = vcmask 162944
    %76 = vst.msk [vmem:[#allocation0] sm:$0x1] %vm75, %v74
    %s77 = scalar_lea.vmem %s0, 3
    %v78 = vld [vmem:[%s77] sm:$0x1]
    %79 = vrot.lane.b32.xlu0 %v78, 12
    %v80 = vpop.permute.xlu0 %79
    %vm81 = vcmask 130144
    %82 = vst.msk [vmem:[#allocation0] sm:$0x1] %vm81, %v80
    %s83 = scalar_lea.vmem %s0, 2
    %v84 = vld [vmem:[%s83] sm:$0x1]
    %85 = vrot.lane.b32.xlu0 %v84, 8
    %v86 = vpop.permute.xlu0 %85
    %vm87 = vcmask 97344
    %88 = vst.msk [vmem:[#allocation0] sm:$0x1] %vm87, %v86
    %s89 = scalar_lea.vmem %s0, 1
    %v90 = vld [vmem:[%s89] sm:$0x1]
    %91 = vrot.lane.b32.xlu0 %v90, 4
    %v92 = vpop.permute.xlu0 %91
    %vm93 = vcmask 64544
    %94 = vst.msk [vmem:[#allocation0] sm:$0x1] %vm93, %v92
    %s96 = sshllo.u32 0, 1
    %v98 = vld [vmem:[#allocation0] sm:%s96]
    %s99 = sshllo.u32 0, 1
    %100 = vst [vmem:[%s1] sm:%s99] %v98

// kernel: up_forward.4
$region0: #{up_forward.4}
  #allocation0 [shape = 'u32[]', space=smem, size = 0x4, offset = 0x4, fixed_abs, tag = 'smem constant byte address 0x4 - core index']
  #allocation1 [shape = 'u32[144,128]{1,0:T(1,128)}', space=vmem, size = 0x12000, scoped, tag = 'internal scratch']
  %s0 = inlined_call_operand.vmem [shape: f32[16,8,4], index: 0, kind: input, shape index: {}]
  %s1 = inlined_call_operand.vmem [shape: bf16[2,4,4], index: 1, kind: input, shape index: {}]
  %s2 = inlined_call_operand.vmem [shape: f32[1,4], index: 2, kind: input, shape index: {}]
  %s3 = inlined_call_operand.vmem [shape: bf16[16,2,8,4], index: 3, kind: output, shape index: {}]
  %s4 = sld [smem:[#allocation0]]
  $region22: #{up_forward.4} parent=0
    _
  %s6 = ssub.s32 1, %s4
  %s7 = scalar_select 0, %s6, %s4
  // Predicated region
  $region2: #{up_forward.4} parent=0 // pred_check
    _
  $region3: #{up_forward.4} parent=0 // pred_check_branch
    %9 = sbr.rel (0) target = $region5
  $region4: #{up_forward.4} parent=0 // pred_region
    _
  $region5: #{up_forward.4} parent=0 // pred_fallthru
    _
  // Predicated region
  $region6: #{up_forward.4} parent=0 // pred_check
    _
  $region7: #{up_forward.4} parent=0 // pred_check_branch
    %11 = sbr.rel (0) target = $region9
  $region8: #{up_forward.4} parent=0 // pred_region
    _
  $region9: #{up_forward.4} parent=0 // pred_fallthru
    _
  // Predicated region
  $region10: #{up_forward.4} parent=0 // pred_check
    _
  $region11: #{up_forward.4} parent=0 // pred_check_branch
    %13 = sbr.rel (0) target = $region13
  $region12: #{up_forward.4} parent=0 // pred_region
    _
  $region13: #{up_forward.4} parent=0 // pred_fallthru
    _
  %v15 = vld [vmem:[%s0] sm:$0xff]
  %v16 = vld [vmem:[%s0 + $0x8] sm:$0xff]
  %v17 = vld [vmem:[%s0 + $0x10] sm:$0xff]
  %v18 = vld [vmem:[%s0 + $0x18] sm:$0xff]
  %v19 = vld [vmem:[%s0 + $0x20] sm:$0xff]
  %v20 = vld [vmem:[%s0 + $0x28] sm:$0xff]
  %v21 = vld [vmem:[%s0 + $0x30] sm:$0xff]
  %v22 = vld [vmem:[%s0 + $0x38] sm:$0xff]
  %v23 = vld [vmem:[%s0 + $0x40] sm:$0xff]
  %v24 = vld [vmem:[%s0 + $0x48] sm:$0xff]
  %v25 = vld [vmem:[%s0 + $0x50] sm:$0xff]
  %v26 = vld [vmem:[%s0 + $0x58] sm:$0xff]
  %v27 = vld [vmem:[%s0 + $0x60] sm:$0xff]
  %v28 = vld [vmem:[%s0 + $0x68] sm:$0xff]
  %v29 = vld [vmem:[%s0 + $0x70] sm:$0xff]
  %v30 = vld [vmem:[%s0 + $0x78] sm:$0xff]
  %v31 = vpack.c.bf16 %v15, %v15
  %v32 = vpack.c.bf16 %v16, %v16
  %v33 = vpack.c.bf16 %v17, %v17
  %v34 = vpack.c.bf16 %v18, %v18
  %v35 = vpack.c.bf16 %v19, %v19
  %v36 = vpack.c.bf16 %v20, %v20
  %v37 = vpack.c.bf16 %v21, %v21
  %v38 = vpack.c.bf16 %v22, %v22
  %v39 = vpack.c.bf16 %v23, %v23
  %v40 = vpack.c.bf16 %v24, %v24
  %v41 = vpack.c.bf16 %v25, %v25
  %v42 = vpack.c.bf16 %v26, %v26
  %v43 = vpack.c.bf16 %v27, %v27
  %v44 = vpack.c.bf16 %v28, %v28
  %v45 = vpack.c.bf16 %v29, %v29
  %v46 = vpack.c.bf16 %v30, %v30
  %v47 = vld [vmem:[%s1] sm:$0x3]
  %v48 = vld [vmem:[%s2] sm:$0x1]
  %v50 = vlaneseq
  %v51 = vshrl.u32 %v50, 7
  %v52 = vsub.s32 0, %v51
  %v53 = vrot.slane %v48, %v52
  %v71 = vunpack.c.l.b16 %v31
  %v72 = vunpack.c.l.b16 %v32
  %v73 = vunpack.c.l.b16 %v33
  %v74 = vunpack.c.l.b16 %v34
  %v75 = vunpack.c.l.b16 %v35
  %v76 = vunpack.c.l.b16 %v36
  %v77 = vunpack.c.l.b16 %v37
  %v78 = vunpack.c.l.b16 %v38
  %v79 = vunpack.c.l.b16 %v39
  %v80 = vunpack.c.l.b16 %v40
  %v81 = vunpack.c.l.b16 %v41
  %v82 = vunpack.c.l.b16 %v42
  %v83 = vunpack.c.l.b16 %v43
  %v84 = vunpack.c.l.b16 %v44
  %v85 = vunpack.c.l.b16 %v45
  %v86 = vunpack.c.l.b16 %v46
  %v87 = vpack.c.b16 %v72, %v71
  %v88 = vpack.c.b16 %v74, %v73
  %v89 = vpack.c.b16 %v76, %v75
  %v90 = vpack.c.b16 %v78, %v77
  %v91 = vpack.c.b16 %v80, %v79
  %v92 = vpack.c.b16 %v82, %v81
  %v93 = vpack.c.b16 %v84, %v83
  %v94 = vpack.c.b16 %v86, %v85
  %vm95 = vcmask 31744
  %v97 = vsel %vm95, %v87, 0
  %v100 = vsel %vm95, %v88, 0
  %v103 = vsel %vm95, %v89, 0
  %v106 = vsel %vm95, %v90, 0
  %v109 = vsel %vm95, %v91, 0
  %v112 = vsel %vm95, %v92, 0
  %v115 = vsel %vm95, %v93, 0
  %v118 = vsel %vm95, %v94, 0
  %vm120 = vcmask 1041408
  %v122 = vsel %vm120, %v47, 0
  %124 = vmatprep.subr.bf16.mxu0 0
  %125 = vmatpush1.bf16.msra.mxu0 %v122
  %126 = vmatprep.subr.bf16.mxu0 0
  %127 = vmatpush1.bf16.msra.mxu0 0
  %128 = vmatprep.subr.bf16.mxu0 0
  %129 = vmatpush1.bf16.msra.mxu0 0
  %130 = vmatprep.subr.bf16.mxu0 0
  %131 = vmatpush1.bf16.msra.mxu0 0
  %132 = vmatprep.subr.bf16.mxu0 0
  %133 = vmatpush1.bf16.msra.mxu0 0
  %134 = vmatprep.subr.bf16.mxu0 0
  %135 = vmatpush1.bf16.msra.mxu0 0
  %136 = vmatprep.subr.bf16.mxu0 0
  %137 = vmatpush1.bf16.msra.mxu0 0
  %138 = vmatprep.subr.bf16.mxu0 0
  %139 = vmatpush1.bf16.msra.mxu0 0
  %140 = vmatprep.subr.bf16.mxu0 0
  %141 = vmatpush1.bf16.msra.mxu0 0
  %142 = vmatprep.subr.bf16.mxu0 0
  %143 = vmatpush1.bf16.msra.mxu0 0
  %144 = vmatprep.subr.bf16.mxu0 0
  %145 = vmatpush1.bf16.msra.mxu0 0
  %146 = vmatprep.subr.bf16.mxu0 0
  %147 = vmatpush1.bf16.msra.mxu0 0
  %148 = vmatprep.subr.bf16.mxu0 0
  %149 = vmatpush1.bf16.msra.mxu0 0
  %150 = vmatprep.subr.bf16.mxu0 0
  %151 = vmatpush1.bf16.msra.mxu0 0
  %152 = vmatprep.subr.bf16.mxu0 0
  %153 = vmatpush1.bf16.msra.mxu0 0
  %154 = vmatprep.subr.bf16.mxu0 0
  %155 = vmatpush1.bf16.msra.mxu0 0
  %156 = vmatprep.mubr.bf16.mxu0 0
  %157 = vmatmul.mubr.bf16.gmra.mrb[0].mxu0 %v97
  %v158 = vpop.f32.mrb[0].mxu0
  %v159 = vadd.f32 %v53, %v158
  %v160 = vpop.f32.mrb[0].mxu0
  %v161 = vpop.f32.mrb[0].mxu0
  %v162 = vadd.f32 %v53, %v161
  %v163 = vpop.f32.mrb[0].mxu0
  %164 = vmatprep.mubr.bf16.mxu0 0
  %165 = vmatmul.mubr.bf16.gmra.mrb[0].mxu0 %v100
  %v166 = vpop.f32.mrb[0].mxu0
  %v167 = vadd.f32 %v53, %v166
  %v168 = vpop.f32.mrb[0].mxu0
  %v169 = vpop.f32.mrb[0].mxu0
  %v170 = vadd.f32 %v53, %v169
  %v171 = vpop.f32.mrb[0].mxu0
  %172 = vmatprep.mubr.bf16.mxu0 0
  %173 = vmatmul.mubr.bf16.gmra.mrb[0].mxu0 %v103
  %v174 = vpop.f32.mrb[0].mxu0
  %v175 = vadd.f32 %v53, %v174
  %v176 = vpop.f32.mrb[0].mxu0
  %v177 = vpop.f32.mrb[0].mxu0
  %v178 = vadd.f32 %v53, %v177
  %v179 = vpop.f32.mrb[0].mxu0
  %180 = vmatprep.mubr.bf16.mxu0 0
  %181 = vmatmul.mubr.bf16.gmra.mrb[0].mxu0 %v106
  %v182 = vpop.f32.mrb[0].mxu0
  %v183 = vadd.f32 %v53, %v182
  %v184 = vpop.f32.mrb[0].mxu0
  %v185 = vpop.f32.mrb[0].mxu0
  %v186 = vadd.f32 %v53, %v185
  %v187 = vpop.f32.mrb[0].mxu0
  %188 = vmatprep.mubr.bf16.mxu0 0
  %189 = vmatmul.mubr.bf16.gmra.mrb[0].mxu0 %v109
  %v190 = vpop.f32.mrb[0].mxu0
  %v191 = vadd.f32 %v53, %v190
  %v192 = vpop.f32.mrb[0].mxu0
  %v193 = vpop.f32.mrb[0].mxu0
  %v194 = vadd.f32 %v53, %v193
  %v195 = vpop.f32.mrb[0].mxu0
  %196 = vmatprep.mubr.bf16.mxu0 0
  %197 = vmatmul.mubr.bf16.gmra.mrb[0].mxu0 %v112
  %v198 = vpop.f32.mrb[0].mxu0
  %v199 = vadd.f32 %v53, %v198
  %v200 = vpop.f32.mrb[0].mxu0
  %v201 = vpop.f32.mrb[0].mxu0
  %v202 = vadd.f32 %v53, %v201
  %v203 = vpop.f32.mrb[0].mxu0
  %204 = vmatprep.mubr.bf16.mxu0 0
  %205 = vmatmul.mubr.bf16.gmra.mrb[0].mxu0 %v115
  %v206 = vpop.f32.mrb[0].mxu0
  %v207 = vadd.f32 %v53, %v206
  %v208 = vpop.f32.mrb[0].mxu0
  %v209 = vpop.f32.mrb[0].mxu0
  %v210 = vadd.f32 %v53, %v209
  %v211 = vpop.f32.mrb[0].mxu0
  %212 = vmatprep.mubr.bf16.mxu0 0
  %213 = vmatmul.mubr.bf16.gmra.mrb[0].mxu0 %v118
  %v214 = vpop.f32.mrb[0].mxu0
  %v215 = vadd.f32 %v53, %v214
  %v216 = vpop.f32.mrb[0].mxu0
  %v217 = vpop.f32.mrb[0].mxu0
  %v218 = vadd.f32 %v53, %v217
  %v219 = vpop.f32.mrb[0].mxu0
  %220 = vdwg.mxu0
  %v221 = vpack.c.bf16 %v162, %v159
  %v222 = vpack.c.bf16 %v170, %v167
  %v223 = vpack.c.bf16 %v178, %v175
  %v224 = vpack.c.bf16 %v186, %v183
  %v225 = vpack.c.bf16 %v194, %v191
  %v226 = vpack.c.bf16 %v202, %v199
  %v227 = vpack.c.bf16 %v210, %v207
  %v228 = vpack.c.bf16 %v218, %v215
  %v237 = vunpack.c.l.b16 %v221
  %v238 = vunpack.c.h.b16 %v221
  %v239 = vunpack.c.l.b16 %v222
  %v240 = vunpack.c.h.b16 %v222
  %v241 = vunpack.c.l.b16 %v223
  %v242 = vunpack.c.h.b16 %v223
  %v243 = vunpack.c.l.b16 %v224
  %v244 = vunpack.c.h.b16 %v224
  %v245 = vunpack.c.l.b16 %v225
  %v246 = vunpack.c.h.b16 %v225
  %v247 = vunpack.c.l.b16 %v226
  %v248 = vunpack.c.h.b16 %v226
  %v249 = vunpack.c.l.b16 %v227
  %v250 = vunpack.c.h.b16 %v227
  %v251 = vunpack.c.l.b16 %v228
  %v252 = vunpack.c.h.b16 %v228
  %v253 = vpack.c.b16 %v237, %v237
  %v254 = vpack.c.b16 %v238, %v238
  %v255 = vpack.c.b16 %v239, %v239
  %v256 = vpack.c.b16 %v240, %v240
  %v257 = vpack.c.b16 %v241, %v241
  %v258 = vpack.c.b16 %v242, %v242
  %v259 = vpack.c.b16 %v243, %v243
  %v260 = vpack.c.b16 %v244, %v244
  %v261 = vpack.c.b16 %v245, %v245
  %v262 = vpack.c.b16 %v246, %v246
  %v263 = vpack.c.b16 %v247, %v247
  %v264 = vpack.c.b16 %v248, %v248
  %v265 = vpack.c.b16 %v249, %v249
  %v266 = vpack.c.b16 %v250, %v250
  %v267 = vpack.c.b16 %v251, %v251
  %v268 = vpack.c.b16 %v252, %v252
  %vm285 = vcmask 27648
  %286 = vst.msk [vmem:[%s3] sm:$0xf] %vm285, %v253
  %287 = vst.msk [vmem:[%s3 + $0x8] sm:$0xf] %vm285, %v254
  %288 = vst.msk [vmem:[%s3 + $0x10] sm:$0xf] %vm285, %v255
  %289 = vst.msk [vmem:[%s3 + $0x18] sm:$0xf] %vm285, %v256
  %290 = vst.msk [vmem:[%s3 + $0x20] sm:$0xf] %vm285, %v257
  %291 = vst.msk [vmem:[%s3 + $0x28] sm:$0xf] %vm285, %v258
  %292 = vst.msk [vmem:[%s3 + $0x30] sm:$0xf] %vm285, %v259
  %293 = vst.msk [vmem:[%s3 + $0x38] sm:$0xf] %vm285, %v260
  %294 = vst.msk [vmem:[%s3 + $0x40] sm:$0xf] %vm285, %v261
  %295 = vst.msk [vmem:[%s3 + $0x48] sm:$0xf] %vm285, %v262
  %296 = vst.msk [vmem:[%s3 + $0x50] sm:$0xf] %vm285, %v263
  %297 = vst.msk [vmem:[%s3 + $0x58] sm:$0xf] %vm285, %v264
  %298 = vst.msk [vmem:[%s3 + $0x60] sm:$0xf] %vm285, %v265
  %299 = vst.msk [vmem:[%s3 + $0x68] sm:$0xf] %vm285, %v266
  %300 = vst.msk [vmem:[%s3 + $0x70] sm:$0xf] %vm285, %v267
  %301 = vst.msk [vmem:[%s3 + $0x78] sm:$0xf] %vm285, %v268
  %s302 = scalar_lea.vmem %s1, 2
  %v303 = vld [vmem:[%s302] sm:$0x3]
  %v304 = vld [vmem:[%s2] sm:$0x1]
  %v306 = vlaneseq
  %v307 = vshrl.u32 %v306, 7
  %v308 = vsub.s32 0, %v307
  %v309 = vrot.slane %v304, %v308
  %v312 = vsel %vm120, %v303, 0
  %314 = vmatprep.subr.bf16.mxu0 0
  %315 = vmatpush1.bf16.msra.mxu0 %v312
  %316 = vmatprep.subr.bf16.mxu0 0
  %317 = vmatpush1.bf16.msra.mxu0 0
  %318 = vmatprep.subr.bf16.mxu0 0
  %319 = vmatpush1.bf16.msra.mxu0 0
  %320 = vmatprep.subr.bf16.mxu0 0
  %321 = vmatpush1.bf16.msra.mxu0 0
  %322 = vmatprep.subr.bf16.mxu0 0
  %323 = vmatpush1.bf16.msra.mxu0 0
  %324 = vmatprep.subr.bf16.mxu0 0
  %325 = vmatpush1.bf16.msra.mxu0 0
  %326 = vmatprep.subr.bf16.mxu0 0
  %327 = vmatpush1.bf16.msra.mxu0 0
  %328 = vmatprep.subr.bf16.mxu0 0
  %329 = vmatpush1.bf16.msra.mxu0 0
  %330 = vmatprep.subr.bf16.mxu0 0
  %331 = vmatpush1.bf16.msra.mxu0 0
  %332 = vmatprep.subr.bf16.mxu0 0
  %333 = vmatpush1.bf16.msra.mxu0 0
  %334 = vmatprep.subr.bf16.mxu0 0
  %335 = vmatpush1.bf16.msra.mxu0 0
  %336 = vmatprep.subr.bf16.mxu0 0
  %337 = vmatpush1.bf16.msra.mxu0 0
  %338 = vmatprep.subr.bf16.mxu0 0
  %339 = vmatpush1.bf16.msra.mxu0 0
  %340 = vmatprep.subr.bf16.mxu0 0
  %341 = vmatpush1.bf16.msra.mxu0 0
  %342 = vmatprep.subr.bf16.mxu0 0
  %343 = vmatpush1.bf16.msra.mxu0 0
  %344 = vmatprep.subr.bf16.mxu0 0
  %345 = vmatpush1.bf16.msra.mxu0 0
  %346 = vmatprep.mubr.bf16.mxu0 0
  %347 = vmatmul.mubr.bf16.gmra.mrb[0].mxu0 %v97
  %v348 = vpop.f32.mrb[0].mxu0
  %v349 = vadd.f32 %v309, %v348
  %v350 = vpop.f32.mrb[0].mxu0
  %v351 = vpop.f32.mrb[0].mxu0
  %v352 = vadd.f32 %v309, %v351
  %v353 = vpop.f32.mrb[0].mxu0
  %354 = vmatprep.mubr.bf16.mxu0 0
  %355 = vmatmul.mubr.bf16.gmra.mrb[0].mxu0 %v100
  %v356 = vpop.f32.mrb[0].mxu0
  %v357 = vadd.f32 %v309, %v356
  %v358 = vpop.f32.mrb[0].mxu0
  %v359 = vpop.f32.mrb[0].mxu0
  %v360 = vadd.f32 %v309, %v359
  %v361 = vpop.f32.mrb[0].mxu0
  %362 = vmatprep.mubr.bf16.mxu0 0
  %363 = vmatmul.mubr.bf16.gmra.mrb[0].mxu0 %v103
  %v364 = vpop.f32.mrb[0].mxu0
  %v365 = vadd.f32 %v309, %v364
  %v366 = vpop.f32.mrb[0].mxu0
  %v367 = vpop.f32.mrb[0].mxu0
  %v368 = vadd.f32 %v309, %v367
  %v369 = vpop.f32.mrb[0].mxu0
  %370 = vmatprep.mubr.bf16.mxu0 0
  %371 = vmatmul.mubr.bf16.gmra.mrb[0].mxu0 %v106
  %v372 = vpop.f32.mrb[0].mxu0
  %v373 = vadd.f32 %v309, %v372
  %v374 = vpop.f32.mrb[0].mxu0
  %v375 = vpop.f32.mrb[0].mxu0
  %v376 = vadd.f32 %v309, %v375
  %v377 = vpop.f32.mrb[0].mxu0
  %378 = vmatprep.mubr.bf16.mxu0 0
  %379 = vmatmul.mubr.bf16.gmra.mrb[0].mxu0 %v109
  %v380 = vpop.f32.mrb[0].mxu0
  %v381 = vadd.f32 %v309, %v380
  %v382 = vpop.f32.mrb[0].mxu0
  %v383 = vpop.f32.mrb[0].mxu0
  %v384 = vadd.f32 %v309, %v383
  %v385 = vpop.f32.mrb[0].mxu0
  %386 = vmatprep.mubr.bf16.mxu0 0
  %387 = vmatmul.mubr.bf16.gmra.mrb[0].mxu0 %v112
  %v388 = vpop.f32.mrb[0].mxu0
  %v389 = vadd.f32 %v309, %v388
  %v390 = vpop.f32.mrb[0].mxu0
  %v391 = vpop.f32.mrb[0].mxu0
  %v392 = vadd.f32 %v309, %v391
  %v393 = vpop.f32.mrb[0].mxu0
  %394 = vmatprep.mubr.bf16.mxu0 0
  %395 = vmatmul.mubr.bf16.gmra.mrb[0].mxu0 %v115
  %v396 = vpop.f32.mrb[0].mxu0
  %v397 = vadd.f32 %v309, %v396
  %v398 = vpop.f32.mrb[0].mxu0
  %v399 = vpop.f32.mrb[0].mxu0
  %v400 = vadd.f32 %v309, %v399
  %v401 = vpop.f32.mrb[0].mxu0
  %402 = vmatprep.mubr.bf16.mxu0 0
  %403 = vmatmul.mubr.bf16.gmra.mrb[0].mxu0 %v118
  %v404 = vpop.f32.mrb[0].mxu0
  %v405 = vadd.f32 %v309, %v404
  %v406 = vpop.f32.mrb[0].mxu0
  %v407 = vpop.f32.mrb[0].mxu0
  %v408 = vadd.f32 %v309, %v407
  %v409 = vpop.f32.mrb[0].mxu0
  %410 = vdwg.mxu0
  %v411 = vpack.c.bf16 %v352, %v349
  %v412 = vpack.c.bf16 %v360, %v357
  %v413 = vpack.c.bf16 %v368, %v365
  %v414 = vpack.c.bf16 %v376, %v373
  %v415 = vpack.c.bf16 %v384, %v381
  %v416 = vpack.c.bf16 %v392, %v389
  %v417 = vpack.c.bf16 %v400, %v397
  %v418 = vpack.c.bf16 %v408, %v405
  %v427 = vunpack.c.l.b16 %v411
  %v428 = vunpack.c.h.b16 %v411
  %v429 = vunpack.c.l.b16 %v412
  %v430 = vunpack.c.h.b16 %v412
  %v431 = vunpack.c.l.b16 %v413
  %v432 = vunpack.c.h.b16 %v413
  %v433 = vunpack.c.l.b16 %v414
  %v434 = vunpack.c.h.b16 %v414
  %v435 = vunpack.c.l.b16 %v415
  %v436 = vunpack.c.h.b16 %v415
  %v437 = vunpack.c.l.b16 %v416
  %v438 = vunpack.c.h.b16 %v416
  %v439 = vunpack.c.l.b16 %v417
  %v440 = vunpack.c.h.b16 %v417
  %v441 = vunpack.c.l.b16 %v418
  %v442 = vunpack.c.h.b16 %v418
  %v443 = vpack.c.b16 %v427, %v427
  %v444 = vpack.c.b16 %v428, %v428
  %v445 = vpack.c.b16 %v429, %v429
  %v446 = vpack.c.b16 %v430, %v430
  %v447 = vpack.c.b16 %v431, %v431
  %v448 = vpack.c.b16 %v432, %v432
  %v449 = vpack.c.b16 %v433, %v433
  %v450 = vpack.c.b16 %v434, %v434
  %v451 = vpack.c.b16 %v435, %v435
  %v452 = vpack.c.b16 %v436, %v436
  %v453 = vpack.c.b16 %v437, %v437
  %v454 = vpack.c.b16 %v438, %v438
  %v455 = vpack.c.b16 %v439, %v439
  %v456 = vpack.c.b16 %v440, %v440
  %v457 = vpack.c.b16 %v441, %v441
  %v458 = vpack.c.b16 %v442, %v442
  %s475 = scalar_lea.vmem %s3, 4
  %476 = vst.msk [vmem:[%s475] sm:$0xf] %vm285, %v443
  %477 = vst.msk [vmem:[%s475 + $0x8] sm:$0xf] %vm285, %v444
  %478 = vst.msk [vmem:[%s475 + $0x10] sm:$0xf] %vm285, %v445
  %479 = vst.msk [vmem:[%s475 + $0x18] sm:$0xf] %vm285, %v446
  %480 = vst.msk [vmem:[%s475 + $0x20] sm:$0xf] %vm285, %v447
  %481 = vst.msk [vmem:[%s475 + $0x28] sm:$0xf] %vm285, %v448
  %482 = vst.msk [vmem:[%s475 + $0x30] sm:$0xf] %vm285, %v449
  %483 = vst.msk [vmem:[%s475 + $0x38] sm:$0xf] %vm285, %v450
  %484 = vst.msk [vmem:[%s475 + $0x40] sm:$0xf] %vm285, %v451
  %485 = vst.msk [vmem:[%s475 + $0x48] sm:$0xf] %vm285, %v452
  %486 = vst.msk [vmem:[%s475 + $0x50] sm:$0xf] %vm285, %v453
  %487 = vst.msk [vmem:[%s475 + $0x58] sm:$0xf] %vm285, %v454
  %488 = vst.msk [vmem:[%s475 + $0x60] sm:$0xf] %vm285, %v455
  %489 = vst.msk [vmem:[%s475 + $0x68] sm:$0xf] %vm285, %v456
  %490 = vst.msk [vmem:[%s475 + $0x70] sm:$0xf] %vm285, %v457
  %491 = vst.msk [vmem:[%s475 + $0x78] sm:$0xf] %vm285, %v458
  // Predicated region
  $region14: #{up_forward.4} parent=0 // pred_check
    _
  $region15: #{up_forward.4} parent=0 // pred_check_branch
    %493 = sbr.rel (0) target = $region17
  $region16: #{up_forward.4} parent=0 // pred_region
    _
  $region17: #{up_forward.4} parent=0 // pred_fallthru
    _
  // Predicated region
  $region18: #{up_forward.4} parent=0 // pred_check
    _
  $region19: #{up_forward.4} parent=0 // pred_check_branch
    %495 = sbr.rel (0) target = $region21
  $region20: #{up_forward.4} parent=0 // pred_region
    _
  $region21: #{up_forward.4} parent=0 // pred_fallthru
    _

// kernel: up_forward.7
$region0: #{up_forward.7}
  #allocation0 [shape = 'u32[]', space=smem, size = 0x4, offset = 0x4, fixed_abs, tag = 'smem constant byte address 0x4 - core index']
  #allocation1 [shape = 'u32[144,128]{1,0:T(1,128)}', space=vmem, size = 0x12000, scoped, tag = 'internal scratch']
  %s0 = inlined_call_operand.vmem [shape: bf16[32,64], index: 0, kind: input, shape index: {}]
  %s1 = inlined_call_operand.vmem [shape: f32[1,64], index: 1, kind: input, shape index: {}]
  %s2 = inlined_call_operand.vmem [shape: f32[1,64], index: 2, kind: input, shape index: {}]
  %s3 = inlined_call_operand.vmem [shape: f32[32,64], index: 3, kind: output, shape index: {}]
  %s4 = sld [smem:[#allocation0]]
  $region22: #{up_forward.7} parent=0
    _
  %s6 = ssub.s32 1, %s4
  %s7 = scalar_select 0, %s6, %s4
  // Predicated region
  $region2: #{up_forward.7} parent=0 // pred_check
    _
  $region3: #{up_forward.7} parent=0 // pred_check_branch
    %9 = sbr.rel (0) target = $region5
  $region4: #{up_forward.7} parent=0 // pred_region
    _
  $region5: #{up_forward.7} parent=0 // pred_fallthru
    _
  // Predicated region
  $region6: #{up_forward.7} parent=0 // pred_check
    _
  $region7: #{up_forward.7} parent=0 // pred_check_branch
    %11 = sbr.rel (0) target = $region9
  $region8: #{up_forward.7} parent=0 // pred_region
    _
  $region9: #{up_forward.7} parent=0 // pred_fallthru
    _
  // Predicated region
  $region10: #{up_forward.7} parent=0 // pred_check
    _
  $region11: #{up_forward.7} parent=0 // pred_check_branch
    %13 = sbr.rel (0) target = $region13
  $region12: #{up_forward.7} parent=0 // pred_region
    _
  $region13: #{up_forward.7} parent=0 // pred_fallthru
    _
  %v14 = vld [vmem:[%s0] sm:$0xf]
  %v15 = vld [vmem:[%s0 + $0x4] sm:$0xf]
  %v16 = vld [vmem:[%s0 + $0x8] sm:$0xf]
  %v17 = vld [vmem:[%s0 + $0xc] sm:$0xf]
  %v18 = vunpack.c.l.bf16 %v14
  %v19 = vunpack.c.l.bf16 %v15
  %v20 = vunpack.c.l.bf16 %v16
  %v21 = vunpack.c.l.bf16 %v17
  %v22 = vld [vmem:[%s1] sm:$0x1]
  %v24 = vlaneseq
  %v25 = vshrl.u32 %v24, 7
  %v26 = vsub.s32 0, %v25
  %v27 = vrot.slane %v22, %v26
  %v29 = vmul.f32 %v18, %v27
  %v30 = vmul.f32 %v19, %v27
  %v31 = vmul.f32 %v20, %v27
  %v32 = vmul.f32 %v21, %v27
  %v33 = vld [vmem:[%s2] sm:$0x1]
  %v35 = vlaneseq
  %v36 = vshrl.u32 %v35, 7
  %v37 = vsub.s32 0, %v36
  %v38 = vrot.slane %v33, %v37
  %v40 = vadd.f32 %v29, %v38
  %v41 = vadd.f32 %v30, %v38
  %v42 = vadd.f32 %v31, %v38
  %v43 = vadd.f32 %v32, %v38
  %v44 = vmax.f32 %v40, 0.0
  %v45 = vmax.f32 %v41, 0.0
  %v46 = vmax.f32 %v42, 0.0
  %v47 = vmax.f32 %v43, 0.0
  %vm48 = vcmask 523264
  %49 = vst.msk [vmem:[%s3] sm:$0xff] %vm48, %v44
  %50 = vst.msk [vmem:[%s3 + $0x8] sm:$0xff] %vm48, %v45
  %51 = vst.msk [vmem:[%s3 + $0x10] sm:$0xff] %vm48, %v46
  %52 = vst.msk [vmem:[%s3 + $0x18] sm:$0xff] %vm48, %v47
  // Predicated region
  $region14: #{up_forward.7} parent=0 // pred_check
    _
  $region15: #{up_forward.7} parent=0 // pred_check_branch
    %54 = sbr.rel (0) target = $region17
  $region16: #{up_forward.7} parent=0 // pred_region
    _
  $region17: #{up_forward.7} parent=0 // pred_fallthru
    _
  // Predicated region
  $region18: #{up_forward.7} parent=0 // pred_check
    _
  $region19: #{up_forward.7} parent=0 // pred_check_branch
    %56 = sbr.rel (0) target = $region21
  $region20: #{up_forward.7} parent=0 // pred_region
    _
  $region21: #{up_forward.7} parent=0 // pred_fallthru
    _

// kernel: up_forward.6
$region0: #{up_forward.6}
  #allocation0 [shape = 'u32[]', space=smem, size = 0x4, offset = 0x4, fixed_abs, tag = 'smem constant byte address 0x4 - core index']
  #allocation1 [shape = 'u32[144,128]{1,0:T(1,128)}', space=vmem, size = 0x12000, scoped, tag = 'internal scratch']
  #allocation2 [shape = 'bf16[16,16,36]{2,1,0:T(16,128)(2,1)}', space=vmem, size = 0x10000, scoped, tag = 'scratch operand']
  %s0 = inlined_call_operand.vmem [shape: bf16[2,16,16,4], index: 0, kind: input, shape index: {}]
  %s1 = inlined_call_operand.vmem [shape: f32[1,4], index: 1, kind: input, shape index: {}]
  %s2 = inlined_call_operand.vmem [shape: f32[1,4], index: 2, kind: input, shape index: {}]
  %s3 = inlined_call_operand.vmem [shape: bf16[36,4], index: 3, kind: input, shape index: {}]
  %s4 = inlined_call_operand.vmem [shape: f32[1,4], index: 4, kind: input, shape index: {}]
  %s5 = inlined_call_operand.vmem [shape: bf16[2,16,16,4], index: 5, kind: output, shape index: {0}]
  %s6 = inlined_call_operand.vmem [shape: f32[2,2,4], index: 6, kind: output, shape index: {1}]
  %7 = xla_tuple %s5, %s6
  %s8 = sld [smem:[#allocation0]]
  $region61: #{up_forward.6} parent=0
    _
  %s10 = ssub.s32 1, %s8
  %s11 = scalar_select 0, %s10, %s8
  loop: start=0, step=1, limit=4
  $region2: #{up_forward.6} parent=0 // loop_pre_header
    _
  $region3: #{up_forward.6} parent=0 // loop_header
    %s13 = sphi 0, %s17
    %p14 = scmp.ge.s32.totalorder %s13, 4
    %s23 = sphi 0, %s25
    %s26 = sphi 0, %s23
    %s27 = sphi 0, %s26
    %s43 = sphi 0, %s27
    %s47 = sphi 0, %s47
    %s49 = sphi 0, %s47
    %s50 = sphi 0, %s49
    %s64 = sphi 0, %s50
    %s68 = sphi 0, %s68
    %s70 = sphi 0, %s68
    %s71 = sphi 0, %s70
    %s85 = sphi 0, %s71
    %s89 = sphi 0, %s89
    %s91 = sphi 0, %s89
    %s92 = sphi 0, %s91
    %s106 = sphi 0, %s92
    %s110 = sphi 0, %s110
    %s112 = sphi 0, %s110
    %s113 = sphi 0, %s112
    %s127 = sphi 0, %s113
    %s133 = sphi 0, %s135
    %s136 = sphi 0, %s133
    %s137 = sphi 0, %s136
    %s153 = sphi 0, %s137
    %s159 = sphi 0, %s161
    %s162 = sphi 0, %s159
    %s163 = sphi 0, %s162
    %s179 = sphi 0, %s163
  $region4: #{up_forward.6} parent=0 // loop_header_branch
    %16 = sbr.rel (%p14) target = $region8
  $region5: #{up_forward.6} parent=0 // loop_body
    %s18 = ssub.s32 %s13, 1
    %s19 = ssub.s32 %s13, 2
    %s20 = sadd.s32 %s13, 1
    %s21 = ssub.s32 %s13, %s20
    %p22 = scmp.eq.s32.totalorder %s21, 0
    %s24 = sadd.s32 %s23, 1
    %s25 = scalar_select %p22, %s23, %s24
    %p28 = pneg %p22
    %p29 = scmp.eq.s32.totalorder %s13, 1
    %p30 = por %p28, %p29
    %p31 = scmp.ne.s32.totalorder %s23, %s26
    %p32 = scmp.eq.s32.totalorder %s13, 0
    %p33 = por %p31, %p32
    %p34 = scmp.ne.s32.totalorder %s23, %s26
    %p35 = scmp.eq.s32.totalorder %s18, 1
    %p36 = por %p34, %p35
    %p37 = scmp.ne.s32.totalorder %s26, %s27
    %p38 = scmp.eq.s32.totalorder %s18, 0
    %p39 = por %p37, %p38
    %p40 = scmp.ne.s32.totalorder %s26, %s27
    %p41 = scmp.eq.s32.totalorder %s19, 1
    %p42 = por %p40, %p41
    %p44 = scmp.ne.s32.totalorder %s27, %s43
    %p45 = scmp.eq.s32.totalorder %s19, 0
    %p46 = por %p44, %p45
    %s48 = sadd.s32 %s47, 1
    %p51 = scmp.eq.s32.totalorder %s13, 1
    %p52 = scmp.ne.s32.totalorder %s47, %s49
    %p53 = scmp.eq.s32.totalorder %s13, 0
    %p54 = por %p52, %p53
    %p55 = scmp.ne.s32.totalorder %s47, %s49
    %p56 = scmp.eq.s32.totalorder %s18, 1
    %p57 = por %p55, %p56
    %p58 = scmp.ne.s32.totalorder %s49, %s50
    %p59 = scmp.eq.s32.totalorder %s18, 0
    %p60 = por %p58, %p59
    %p61 = scmp.ne.s32.totalorder %s49, %s50
    %p62 = scmp.eq.s32.totalorder %s19, 1
    %p63 = por %p61, %p62
    %p65 = scmp.ne.s32.totalorder %s50, %s64
    %p66 = scmp.eq.s32.totalorder %s19, 0
    %p67 = por %p65, %p66
    %s69 = sadd.s32 %s68, 1
    %p72 = scmp.eq.s32.totalorder %s13, 1
    %p73 = scmp.ne.s32.totalorder %s68, %s70
    %p74 = scmp.eq.s32.totalorder %s13, 0
    %p75 = por %p73, %p74
    %p76 = scmp.ne.s32.totalorder %s68, %s70
    %p77 = scmp.eq.s32.totalorder %s18, 1
    %p78 = por %p76, %p77
    %p79 = scmp.ne.s32.totalorder %s70, %s71
    %p80 = scmp.eq.s32.totalorder %s18, 0
    %p81 = por %p79, %p80
    %p82 = scmp.ne.s32.totalorder %s70, %s71
    %p83 = scmp.eq.s32.totalorder %s19, 1
    %p84 = por %p82, %p83
    %p86 = scmp.ne.s32.totalorder %s71, %s85
    %p87 = scmp.eq.s32.totalorder %s19, 0
    %p88 = por %p86, %p87
    %s90 = sadd.s32 %s89, 1
    %p93 = scmp.eq.s32.totalorder %s13, 1
    %p94 = scmp.ne.s32.totalorder %s89, %s91
    %p95 = scmp.eq.s32.totalorder %s13, 0
    %p96 = por %p94, %p95
    %p97 = scmp.ne.s32.totalorder %s89, %s91
    %p98 = scmp.eq.s32.totalorder %s18, 1
    %p99 = por %p97, %p98
    %p100 = scmp.ne.s32.totalorder %s91, %s92
    %p101 = scmp.eq.s32.totalorder %s18, 0
    %p102 = por %p100, %p101
    %p103 = scmp.ne.s32.totalorder %s91, %s92
    %p104 = scmp.eq.s32.totalorder %s19, 1
    %p105 = por %p103, %p104
    %p107 = scmp.ne.s32.totalorder %s92, %s106
    %p108 = scmp.eq.s32.totalorder %s19, 0
    %p109 = por %p107, %p108
    %s111 = sadd.s32 %s110, 1
    %p114 = scmp.eq.s32.totalorder %s13, 1
    %p115 = scmp.ne.s32.totalorder %s110, %s112
    %p116 = scmp.eq.s32.totalorder %s13, 0
    %p117 = por %p115, %p116
    %p118 = scmp.ne.s32.totalorder %s110, %s112
    %p119 = scmp.eq.s32.totalorder %s18, 1
    %p120 = por %p118, %p119
    %p121 = scmp.ne.s32.totalorder %s112, %s113
    %p122 = scmp.eq.s32.totalorder %s18, 0
    %p123 = por %p121, %p122
    %p124 = scmp.ne.s32.totalorder %s112, %s113
    %p125 = scmp.eq.s32.totalorder %s19, 1
    %p126 = por %p124, %p125
    %p128 = scmp.ne.s32.totalorder %s113, %s127
    %p129 = scmp.eq.s32.totalorder %s19, 0
    %p130 = por %p128, %p129
    %s131 = ssub.s32 %s13, %s20
    %p132 = scmp.eq.s32.totalorder %s131, 0
    %s134 = sadd.s32 %s133, 1
    %s135 = scalar_select %p132, %s133, %s134
    %p138 = pneg %p132
    %p139 = scmp.eq.s32.totalorder %s13, 1
    %p140 = por %p138, %p139
    %p141 = scmp.ne.s32.totalorder %s133, %s136
    %p142 = scmp.eq.s32.totalorder %s13, 0
    %p143 = por %p141, %p142
    %p144 = scmp.ne.s32.totalorder %s133, %s136
    %p145 = scmp.eq.s32.totalorder %s18, 1
    %p146 = por %p144, %p145
    %p147 = scmp.ne.s32.totalorder %s136, %s137
    %p148 = scmp.eq.s32.totalorder %s18, 0
    %p149 = por %p147, %p148
    %p150 = scmp.ne.s32.totalorder %s136, %s137
    %p151 = scmp.eq.s32.totalorder %s19, 1
    %p152 = por %p150, %p151
    %p154 = scmp.ne.s32.totalorder %s137, %s153
    %p155 = scmp.eq.s32.totalorder %s19, 0
    %p156 = por %p154, %p155
    %s157 = ssub.s32 %s13, %s20
    %p158 = scmp.eq.s32.totalorder %s157, 0
    %s160 = sadd.s32 %s159, 1
    %s161 = scalar_select %p158, %s159, %s160
    %p164 = pneg %p158
    %p165 = scmp.eq.s32.totalorder %s13, 1
    %p166 = por %p164, %p165
    %p167 = scmp.ne.s32.totalorder %s159, %s162
    %p168 = scmp.eq.s32.totalorder %s13, 0
    %p169 = por %p167, %p168
    %p170 = scmp.ne.s32.totalorder %s159, %s162
    %p171 = scmp.eq.s32.totalorder %s18, 1
    %p172 = por %p170, %p171
    %p173 = scmp.ne.s32.totalorder %s162, %s163
    %p174 = scmp.eq.s32.totalorder %s18, 0
    %p175 = por %p173, %p174
    %p176 = scmp.ne.s32.totalorder %s162, %s163
    %p177 = scmp.eq.s32.totalorder %s19, 1
    %p178 = por %p176, %p177
    %p180 = scmp.ne.s32.totalorder %s163, %s179
    %p181 = scmp.eq.s32.totalorder %s19, 0
    %p182 = por %p180, %p181
    %p183 = scmp.le.s32.totalorder 1, %s13
    %p184 = scmp.lt.s32.totalorder %s13, 3
    %p185 = pnand %p183, %p184
    %p186 = pneg %p185
    // Predicated region
    $region9: #{up_forward.6} parent=5 // pred_check
      _
    $region10: #{up_forward.6} parent=5 // pred_check_branch
      %188 = sbr.rel (%p185) target = $region12
    $region11: #{up_forward.6} parent=5 // pred_region
      %s189 = ssub.s32 %s13, 1
      // Predicated region
      $region13: #{up_forward.6} parent=11 // pred_check
        %p190 = pneg %p60
      $region14: #{up_forward.6} parent=11 // pred_check_branch
        %192 = sbr.rel (%p190) target = $region16
      $region15: #{up_forward.6} parent=11 // pred_region
        _
      $region16: #{up_forward.6} parent=11 // pred_fallthru
        _
      // Predicated region
      $region17: #{up_forward.6} parent=11 // pred_check
        %p193 = pneg %p81
      $region18: #{up_forward.6} parent=11 // pred_check_branch
        %195 = sbr.rel (%p193) target = $region20
      $region19: #{up_forward.6} parent=11 // pred_region
        _
      $region20: #{up_forward.6} parent=11 // pred_fallthru
        _
      // Predicated region
      $region21: #{up_forward.6} parent=11 // pred_check
        %p196 = pneg %p102
      $region22: #{up_forward.6} parent=11 // pred_check_branch
        %198 = sbr.rel (%p196) target = $region24
      $region23: #{up_forward.6} parent=11 // pred_region
        _
      $region24: #{up_forward.6} parent=11 // pred_fallthru
        _
      // Predicated region
      $region25: #{up_forward.6} parent=11 // pred_check
        %p199 = pneg %p123
      $region26: #{up_forward.6} parent=11 // pred_check_branch
        %201 = sbr.rel (%p199) target = $region28
      $region27: #{up_forward.6} parent=11 // pred_region
        _
      $region28: #{up_forward.6} parent=11 // pred_fallthru
        _
    $region12: #{up_forward.6} parent=5 // pred_fallthru
      _
    %p202 = scmp.lt.s32.totalorder %s13, 2
    // Predicated region
    $region29: #{up_forward.6} parent=5 // pred_check
      %p203 = pneg %p202
    $region30: #{up_forward.6} parent=5 // pred_check_branch
      %205 = sbr.rel (%p203) target = $region32
    $region31: #{up_forward.6} parent=5 // pred_region
      // Predicated region
      $region33: #{up_forward.6} parent=31 // pred_check
        %p206 = pneg %p33
      $region34: #{up_forward.6} parent=31 // pred_check_branch
        %208 = sbr.rel (%p206) target = $region36
      $region35: #{up_forward.6} parent=31 // pred_region
        %p209 = scmp.lt.s32.totalorder %s13, 1
        %s210 = scalar_select %p209, %s13, 1
        %s211 = smul.addr %s210, 32
        %s212 = smul.addr %s211, 4
        %s213 = scalar_lea.vmem %s0, %s212
      $region36: #{up_forward.6} parent=31 // pred_fallthru
        _
    $region32: #{up_forward.6} parent=5 // pred_fallthru
      _
    %p214 = scmp.le.s32.totalorder 1, %s13
    %p215 = scmp.lt.s32.totalorder %s13, 3
    %p216 = pnand %p214, %p215
    %p217 = pneg %p216
    // Predicated region
    $region37: #{up_forward.6} parent=5 // pred_check
      _
    $region38: #{up_forward.6} parent=5 // pred_check_branch
      %219 = sbr.rel (%p216) target = $region40
    $region39: #{up_forward.6} parent=5 // pred_region
      %s220 = ssub.s32 %s13, 1
      %p221 = scmp.lt.s32.totalorder %s18, 1
      %s222 = scalar_select %p221, %s18, 1
      %s223 = smul.addr %s222, 32
      %s224 = smul.addr %s223, 4
      %s225 = scalar_lea.vmem %s0, %s224
      %p226 = pneg %p39
      %p227 = pneg %p36
      %p228 = pneg %p60
      %p229 = pneg %p57
      %p230 = pneg %p81
      %p231 = pneg %p78
      %p232 = pneg %p102
      %p233 = pneg %p99
      %p234 = pneg %p123
      %p235 = pneg %p120
      %p236 = pneg %p149
      %p237 = pneg %p146
      %p238 = scmp.lt.s32.totalorder %s18, 1
      %s239 = scalar_select %p238, %s18, 1
      %s240 = smul.addr %s239, 32
      %s241 = smul.addr %s240, 4
      %s242 = scalar_lea.vmem %s5, %s241
      %p243 = pneg %p175
      %p244 = pneg %p172
      %p245 = scmp.lt.s32.totalorder %s18, 1
      %s246 = scalar_select %p245, %s18, 1
      %s247 = smul.addr %s246, 2
      %s248 = scalar_lea.vmem %s6, %s247
      %p249 = scmp.lt.s32.totalorder %s18, 1
      %s250 = scalar_select %p249, %s18, 1
      %s251 = smul.addr %s250, 32
      %s252 = smul.addr %s251, 4
      %s253 = scalar_lea.vmem %s0, %s252
      %p254 = scmp.lt.s32.totalorder %s18, 1
      %s255 = scalar_select %p254, %s18, 1
      %s256 = smul.addr %s255, 32
      %s257 = smul.addr %s256, 4
      %s258 = scalar_lea.vmem %s5, %s257
      %p259 = scmp.lt.s32.totalorder %s18, 1
      %s260 = scalar_select %p259, %s18, 1
      %s261 = smul.addr %s260, 2
      %s262 = scalar_lea.vmem %s6, %s261
      %v264 = vld [vmem:[%s253] sm:$0xf]
      %v265 = vld [vmem:[%s253 + $0x4] sm:$0xf]
      %v266 = vld [vmem:[%s253 + $0x8] sm:$0xf]
      %v267 = vld [vmem:[%s253 + $0xc] sm:$0xf]
      %v268 = vld [vmem:[%s253 + $0x10] sm:$0xf]
      %v269 = vld [vmem:[%s253 + $0x14] sm:$0xf]
      %v270 = vld [vmem:[%s253 + $0x18] sm:$0xf]
      %v271 = vld [vmem:[%s253 + $0x1c] sm:$0xf]
      %v272 = vld [vmem:[%s253 + $0x20] sm:$0xf]
      %v273 = vld [vmem:[%s253 + $0x24] sm:$0xf]
      %v274 = vld [vmem:[%s253 + $0x28] sm:$0xf]
      %v275 = vld [vmem:[%s253 + $0x2c] sm:$0xf]
      %v276 = vld [vmem:[%s253 + $0x30] sm:$0xf]
      %v277 = vld [vmem:[%s253 + $0x34] sm:$0xf]
      %v278 = vld [vmem:[%s253 + $0x38] sm:$0xf]
      %v279 = vld [vmem:[%s253 + $0x3c] sm:$0xf]
      %v280 = vld [vmem:[%s253 + $0x40] sm:$0xf]
      %v281 = vld [vmem:[%s253 + $0x44] sm:$0xf]
      %v282 = vld [vmem:[%s253 + $0x48] sm:$0xf]
      %v283 = vld [vmem:[%s253 + $0x4c] sm:$0xf]
      %v284 = vld [vmem:[%s253 + $0x50] sm:$0xf]
      %v285 = vld [vmem:[%s253 + $0x54] sm:$0xf]
      %v286 = vld [vmem:[%s253 + $0x58] sm:$0xf]
      %v287 = vld [vmem:[%s253 + $0x5c] sm:$0xf]
      %v288 = vld [vmem:[%s253 + $0x60] sm:$0xf]
      %v289 = vld [vmem:[%s253 + $0x64] sm:$0xf]
      %v290 = vld [vmem:[%s253 + $0x68] sm:$0xf]
      %v291 = vld [vmem:[%s253 + $0x6c] sm:$0xf]
      %v292 = vld [vmem:[%s253 + $0x70] sm:$0xf]
      %v293 = vld [vmem:[%s253 + $0x74] sm:$0xf]
      %v294 = vld [vmem:[%s253 + $0x78] sm:$0xf]
      %v295 = vld [vmem:[%s253 + $0x7c] sm:$0xf]
      %v296 = vunpack.c.l.bf16 %v264
      %v297 = vunpack.c.l.bf16 %v265
      %v298 = vunpack.c.l.bf16 %v266
      %v299 = vunpack.c.l.bf16 %v267
      %v300 = vunpack.c.l.bf16 %v268
      %v301 = vunpack.c.l.bf16 %v269
      %v302 = vunpack.c.l.bf16 %v270
      %v303 = vunpack.c.l.bf16 %v271
      %v304 = vunpack.c.l.bf16 %v272
      %v305 = vunpack.c.l.bf16 %v273
      %v306 = vunpack.c.l.bf16 %v274
      %v307 = vunpack.c.l.bf16 %v275
      %v308 = vunpack.c.l.bf16 %v276
      %v309 = vunpack.c.l.bf16 %v277
      %v310 = vunpack.c.l.bf16 %v278
      %v311 = vunpack.c.l.bf16 %v279
      %v312 = vunpack.c.l.bf16 %v280
      %v313 = vunpack.c.l.bf16 %v281
      %v314 = vunpack.c.l.bf16 %v282
      %v315 = vunpack.c.l.bf16 %v283
      %v316 = vunpack.c.l.bf16 %v284
      %v317 = vunpack.c.l.bf16 %v285
      %v318 = vunpack.c.l.bf16 %v286
      %v319 = vunpack.c.l.bf16 %v287
      %v320 = vunpack.c.l.bf16 %v288
      %v321 = vunpack.c.l.bf16 %v289
      %v322 = vunpack.c.l.bf16 %v290
      %v323 = vunpack.c.l.bf16 %v291
      %v324 = vunpack.c.l.bf16 %v292
      %v325 = vunpack.c.l.bf16 %v293
      %v326 = vunpack.c.l.bf16 %v294
      %v327 = vunpack.c.l.bf16 %v295
      %v328 = vld [vmem:[%s1] sm:$0x1]
      %v330 = vlaneseq
      %v331 = vshrl.u32 %v330, 7
      %v332 = vsub.s32 0, %v331
      %v333 = vrot.slane %v328, %v332
      %v335 = vmul.f32 %v296, %v333
      %v336 = vmul.f32 %v297, %v333
      %v337 = vmul.f32 %v298, %v333
      %v338 = vmul.f32 %v299, %v333
      %v339 = vmul.f32 %v300, %v333
      %v340 = vmul.f32 %v301, %v333
      %v341 = vmul.f32 %v302, %v333
      %v342 = vmul.f32 %v303, %v333
      %v343 = vmul.f32 %v304, %v333
      %v344 = vmul.f32 %v305, %v333
      %v345 = vmul.f32 %v306, %v333
      %v346 = vmul.f32 %v307, %v333
      %v347 = vmul.f32 %v308, %v333
      %v348 = vmul.f32 %v309, %v333
      %v349 = vmul.f32 %v310, %v333
      %v350 = vmul.f32 %v311, %v333
      %v351 = vmul.f32 %v312, %v333
      %v352 = vmul.f32 %v313, %v333
      %v353 = vmul.f32 %v314, %v333
      %v354 = vmul.f32 %v315, %v333
      %v355 = vmul.f32 %v316, %v333
      %v356 = vmul.f32 %v317, %v333
      %v357 = vmul.f32 %v318, %v333
      %v358 = vmul.f32 %v319, %v333
      %v359 = vmul.f32 %v320, %v333
      %v360 = vmul.f32 %v321, %v333
      %v361 = vmul.f32 %v322, %v333
      %v362 = vmul.f32 %v323, %v333
      %v363 = vmul.f32 %v324, %v333
      %v364 = vmul.f32 %v325, %v333
      %v365 = vmul.f32 %v326, %v333
      %v366 = vmul.f32 %v327, %v333
      %v367 = vld [vmem:[%s2] sm:$0x1]
      %v369 = vlaneseq
      %v370 = vshrl.u32 %v369, 7
      %v371 = vsub.s32 0, %v370
      %v372 = vrot.slane %v367, %v371
      %v374 = vadd.f32 %v335, %v372
      %v375 = vadd.f32 %v336, %v372
      %v376 = vadd.f32 %v337, %v372
      %v377 = vadd.f32 %v338, %v372
      %v378 = vadd.f32 %v339, %v372
      %v379 = vadd.f32 %v340, %v372
      %v380 = vadd.f32 %v341, %v372
      %v381 = vadd.f32 %v342, %v372
      %v382 = vadd.f32 %v343, %v372
      %v383 = vadd.f32 %v344, %v372
      %v384 = vadd.f32 %v345, %v372
      %v385 = vadd.f32 %v346, %v372
      %v386 = vadd.f32 %v347, %v372
      %v387 = vadd.f32 %v348, %v372
      %v388 = vadd.f32 %v349, %v372
      %v389 = vadd.f32 %v350, %v372
      %v390 = vadd.f32 %v351, %v372
      %v391 = vadd.f32 %v352, %v372
      %v392 = vadd.f32 %v353, %v372
      %v393 = vadd.f32 %v354, %v372
      %v394 = vadd.f32 %v355, %v372
      %v395 = vadd.f32 %v356, %v372
      %v396 = vadd.f32 %v357, %v372
      %v397 = vadd.f32 %v358, %v372
      %v398 = vadd.f32 %v359, %v372
      %v399 = vadd.f32 %v360, %v372
      %v400 = vadd.f32 %v361, %v372
      %v401 = vadd.f32 %v362, %v372
      %v402 = vadd.f32 %v363, %v372
      %v403 = vadd.f32 %v364, %v372
      %v404 = vadd.f32 %v365, %v372
      %v405 = vadd.f32 %v366, %v372
      %v406 = vmax.f32 %v374, 0.0
      %v407 = vmax.f32 %v375, 0.0
      %v408 = vmax.f32 %v376, 0.0
      %v409 = vmax.f32 %v377, 0.0
      %v410 = vmax.f32 %v378, 0.0
      %v411 = vmax.f32 %v379, 0.0
      %v412 = vmax.f32 %v380, 0.0
      %v413 = vmax.f32 %v381, 0.0
      %v414 = vmax.f32 %v382, 0.0
      %v415 = vmax.f32 %v383, 0.0
      %v416 = vmax.f32 %v384, 0.0
      %v417 = vmax.f32 %v385, 0.0
      %v418 = vmax.f32 %v386, 0.0
      %v419 = vmax.f32 %v387, 0.0
      %v420 = vmax.f32 %v388, 0.0
      %v421 = vmax.f32 %v389, 0.0
      %v422 = vmax.f32 %v390, 0.0
      %v423 = vmax.f32 %v391, 0.0
      %v424 = vmax.f32 %v392, 0.0
      %v425 = vmax.f32 %v393, 0.0
      %v426 = vmax.f32 %v394, 0.0
      %v427 = vmax.f32 %v395, 0.0
      %v428 = vmax.f32 %v396, 0.0
      %v429 = vmax.f32 %v397, 0.0
      %v430 = vmax.f32 %v398, 0.0
      %v431 = vmax.f32 %v399, 0.0
      %v432 = vmax.f32 %v400, 0.0
      %v433 = vmax.f32 %v401, 0.0
      %v434 = vmax.f32 %v402, 0.0
      %v435 = vmax.f32 %v403, 0.0
      %v436 = vmax.f32 %v404, 0.0
      %v437 = vmax.f32 %v405, 0.0
      %v438 = vpack.c.bf16 %v407, %v406
      %v439 = vpack.c.bf16 %v409, %v408
      %v440 = vpack.c.bf16 %v411, %v410
      %v441 = vpack.c.bf16 %v413, %v412
      %v442 = vpack.c.bf16 %v415, %v414
      %v443 = vpack.c.bf16 %v417, %v416
      %v444 = vpack.c.bf16 %v419, %v418
      %v445 = vpack.c.bf16 %v421, %v420
      %v446 = vpack.c.bf16 %v423, %v422
      %v447 = vpack.c.bf16 %v425, %v424
      %v448 = vpack.c.bf16 %v427, %v426
      %v449 = vpack.c.bf16 %v429, %v428
      %v450 = vpack.c.bf16 %v431, %v430
      %v451 = vpack.c.bf16 %v433, %v432
      %v452 = vpack.c.bf16 %v435, %v434
      %v453 = vpack.c.bf16 %v437, %v436
      %vm454 = vcmask 31744
      %455 = vst.msk [vmem:[#allocation2] sm:$0xff] %vm454, 0
      %vm456 = vcmask 24576
      %vm457 = vsmask.f32 256
      %vm458 = vmand %vm456, %vm457
      %v459 = vld [vmem:[#allocation2] sm:$0x1]
      %v460 = vsel %vm458, 0, %v459
      %461 = vst [vmem:[#allocation2] sm:$0x1] %v460
      %v462 = vld [vmem:[#allocation2 + $0x8] sm:$0x1]
      %v463 = vsel %vm458, 0, %v462
      %464 = vst [vmem:[#allocation2 + $0x8] sm:$0x1] %v463
      %v465 = vld [vmem:[#allocation2 + $0x10] sm:$0x1]
      %v466 = vsel %vm458, 0, %v465
      %467 = vst [vmem:[#allocation2 + $0x10] sm:$0x1] %v466
      %v468 = vld [vmem:[#allocation2 + $0x18] sm:$0x1]
      %v469 = vsel %vm458, 0, %v468
      %470 = vst [vmem:[#allocation2 + $0x18] sm:$0x1] %v469
      %v471 = vld [vmem:[#allocation2 + $0x20] sm:$0x1]
      %v472 = vsel %vm458, 0, %v471
      %473 = vst [vmem:[#allocation2 + $0x20] sm:$0x1] %v472
      %v474 = vld [vmem:[#allocation2 + $0x28] sm:$0x1]
      %v475 = vsel %vm458, 0, %v474
      %476 = vst [vmem:[#allocation2 + $0x28] sm:$0x1] %v475
      %v477 = vld [vmem:[#allocation2 + $0x30] sm:$0x1]
      %v478 = vsel %vm458, 0, %v477
      %479 = vst [vmem:[#allocation2 + $0x30] sm:$0x1] %v478
      %v480 = vld [vmem:[#allocation2 + $0x38] sm:$0x1]
      %v481 = vsel %vm458, 0, %v480
      %482 = vst [vmem:[#allocation2 + $0x38] sm:$0x1] %v481
      %v483 = vld [vmem:[#allocation2 + $0x40] sm:$0x1]
      %v484 = vsel %vm458, 0, %v483
      %485 = vst [vmem:[#allocation2 + $0x40] sm:$0x1] %v484
      %v486 = vld [vmem:[#allocation2 + $0x48] sm:$0x1]
      %v487 = vsel %vm458, 0, %v486
      %488 = vst [vmem:[#allocation2 + $0x48] sm:$0x1] %v487
      %v489 = vld [vmem:[#allocation2 + $0x50] sm:$0x1]
      %v490 = vsel %vm458, 0, %v489
      %491 = vst [vmem:[#allocation2 + $0x50] sm:$0x1] %v490
      %v492 = vld [vmem:[#allocation2 + $0x58] sm:$0x1]
      %v493 = vsel %vm458, 0, %v492
      %494 = vst [vmem:[#allocation2 + $0x58] sm:$0x1] %v493
      %v495 = vld [vmem:[#allocation2 + $0x60] sm:$0x1]
      %v496 = vsel %vm458, 0, %v495
      %497 = vst [vmem:[#allocation2 + $0x60] sm:$0x1] %v496
      %v498 = vld [vmem:[#allocation2 + $0x68] sm:$0x1]
      %v499 = vsel %vm458, 0, %v498
      %500 = vst [vmem:[#allocation2 + $0x68] sm:$0x1] %v499
      %v501 = vld [vmem:[#allocation2 + $0x70] sm:$0x1]
      %v502 = vsel %vm458, 0, %v501
      %503 = vst [vmem:[#allocation2 + $0x70] sm:$0x1] %v502
      %v504 = vld [vmem:[#allocation2 + $0x78] sm:$0x1]
      %v505 = vsel %vm458, 0, %v504
      %506 = vst [vmem:[#allocation2 + $0x78] sm:$0x1] %v505
      %v508 = vshrl.u32 %v438, 16
      %v510 = vrot.slane %v508, 7
      %v511 = vshll.u32 %v438, 16
      %v513 = vor.u32 %v510, %v511
      %v515 = vshrl.u32 %v439, 16
      %v517 = vrot.slane %v515, 7
      %v518 = vshll.u32 %v439, 16
      %v520 = vor.u32 %v517, %v518
      %v522 = vshrl.u32 %v440, 16
      %v524 = vrot.slane %v522, 7
      %v525 = vshll.u32 %v440, 16
      %v527 = vor.u32 %v524, %v525
      %v529 = vshrl.u32 %v441, 16
      %v531 = vrot.slane %v529, 7
      %v532 = vshll.u32 %v441, 16
      %v534 = vor.u32 %v531, %v532
      %v536 = vshrl.u32 %v442, 16
      %v538 = vrot.slane %v536, 7
      %v539 = vshll.u32 %v442, 16
      %v541 = vor.u32 %v538, %v539
      %v543 = vshrl.u32 %v443, 16
      %v545 = vrot.slane %v543, 7
      %v546 = vshll.u32 %v443, 16
      %v548 = vor.u32 %v545, %v546
      %v550 = vshrl.u32 %v444, 16
      %v552 = vrot.slane %v550, 7
      %v553 = vshll.u32 %v444, 16
      %v555 = vor.u32 %v552, %v553
      %v557 = vshrl.u32 %v445, 16
      %v559 = vrot.slane %v557, 7
      %v560 = vshll.u32 %v445, 16
      %v562 = vor.u32 %v559, %v560
      %v564 = vshrl.u32 %v446, 16
      %v566 = vrot.slane %v564, 7
      %v567 = vshll.u32 %v446, 16
      %v569 = vor.u32 %v566, %v567
      %v571 = vshrl.u32 %v447, 16
      %v573 = vrot.slane %v571, 7
      %v574 = vshll.u32 %v447, 16
      %v576 = vor.u32 %v573, %v574
      %v578 = vshrl.u32 %v448, 16
      %v580 = vrot.slane %v578, 7
      %v581 = vshll.u32 %v448, 16
      %v583 = vor.u32 %v580, %v581
      %v585 = vshrl.u32 %v449, 16
      %v587 = vrot.slane %v585, 7
      %v588 = vshll.u32 %v449, 16
      %v590 = vor.u32 %v587, %v588
      %v592 = vshrl.u32 %v450, 16
      %v594 = vrot.slane %v592, 7
      %v595 = vshll.u32 %v450, 16
      %v597 = vor.u32 %v594, %v595
      %v599 = vshrl.u32 %v451, 16
      %v601 = vrot.slane %v599, 7
      %v602 = vshll.u32 %v451, 16
      %v604 = vor.u32 %v601, %v602
      %v606 = vshrl.u32 %v452, 16
      %v608 = vrot.slane %v606, 7
      %v609 = vshll.u32 %v452, 16
      %v611 = vor.u32 %v608, %v609
      %s627 = scalar_lea.vmem [#allocation2], 8
      %vm628 = vcmask 31744
      %vm629 = vsmask.f32 7938
      %vm630 = vmand %vm628, %vm629
      %v631 = vld [vmem:[%s627] sm:$0xff]
      %v632 = vsel %vm630, %v513, %v631
      %633 = vst [vmem:[%s627] sm:$0xff] %v632
      %v634 = vld [vmem:[%s627 + $0x8] sm:$0xff]
      %v635 = vsel %vm630, %v520, %v634
      %636 = vst [vmem:[%s627 + $0x8] sm:$0xff] %v635
      %v637 = vld [vmem:[%s627 + $0x10] sm:$0xff]
      %v638 = vsel %vm630, %v527, %v637
      %639 = vst [vmem:[%s627 + $0x10] sm:$0xff] %v638
      %v640 = vld [vmem:[%s627 + $0x18] sm:$0xff]
      %v641 = vsel %vm630, %v534, %v640
      %642 = vst [vmem:[%s627 + $0x18] sm:$0xff] %v641
      %v643 = vld [vmem:[%s627 + $0x20] sm:$0xff]
      %v644 = vsel %vm630, %v541, %v643
      %645 = vst [vmem:[%s627 + $0x20] sm:$0xff] %v644
      %v646 = vld [vmem:[%s627 + $0x28] sm:$0xff]
      %v647 = vsel %vm630, %v548, %v646
      %648 = vst [vmem:[%s627 + $0x28] sm:$0xff] %v647
      %v649 = vld [vmem:[%s627 + $0x30] sm:$0xff]
      %v650 = vsel %vm630, %v555, %v649
      %651 = vst [vmem:[%s627 + $0x30] sm:$0xff] %v650
      %v652 = vld [vmem:[%s627 + $0x38] sm:$0xff]
      %v653 = vsel %vm630, %v562, %v652
      %654 = vst [vmem:[%s627 + $0x38] sm:$0xff] %v653
      %v655 = vld [vmem:[%s627 + $0x40] sm:$0xff]
      %v656 = vsel %vm630, %v569, %v655
      %657 = vst [vmem:[%s627 + $0x40] sm:$0xff] %v656
      %v658 = vld [vmem:[%s627 + $0x48] sm:$0xff]
      %v659 = vsel %vm630, %v576, %v658
      %660 = vst [vmem:[%s627 + $0x48] sm:$0xff] %v659
      %v661 = vld [vmem:[%s627 + $0x50] sm:$0xff]
      %v662 = vsel %vm630, %v583, %v661
      %663 = vst [vmem:[%s627 + $0x50] sm:$0xff] %v662
      %v664 = vld [vmem:[%s627 + $0x58] sm:$0xff]
      %v665 = vsel %vm630, %v590, %v664
      %666 = vst [vmem:[%s627 + $0x58] sm:$0xff] %v665
      %v667 = vld [vmem:[%s627 + $0x60] sm:$0xff]
      %v668 = vsel %vm630, %v597, %v667
      %669 = vst [vmem:[%s627 + $0x60] sm:$0xff] %v668
      %v670 = vld [vmem:[%s627 + $0x68] sm:$0xff]
      %v671 = vsel %vm630, %v604, %v670
      %672 = vst [vmem:[%s627 + $0x68] sm:$0xff] %v671
      %v673 = vld [vmem:[%s627 + $0x70] sm:$0xff]
      %v674 = vsel %vm630, %v611, %v673
      %675 = vst [vmem:[%s627 + $0x70] sm:$0xff] %v674
      %vm676 = vcmask 64544
      %677 = vst.msk [vmem:[#allocation2] sm:$0xff] %vm676, 0
      %693 = vrot.lane.b32.xlu0 %v438, 4
      %v694 = vpop.permute.xlu0 %693
      %695 = vrot.lane.b32.xlu0 %v439, 4
      %v696 = vpop.permute.xlu0 %695
      %697 = vrot.lane.b32.xlu0 %v440, 4
      %v698 = vpop.permute.xlu0 %697
      %699 = vrot.lane.b32.xlu0 %v441, 4
      %v700 = vpop.permute.xlu0 %699
      %701 = vrot.lane.b32.xlu0 %v442, 4
      %v702 = vpop.permute.xlu0 %701
      %703 = vrot.lane.b32.xlu0 %v443, 4
      %v704 = vpop.permute.xlu0 %703
      %705 = vrot.lane.b32.xlu0 %v444, 4
      %v706 = vpop.permute.xlu0 %705
      %707 = vrot.lane.b32.xlu0 %v445, 4
      %v708 = vpop.permute.xlu0 %707
      %709 = vrot.lane.b32.xlu0 %v446, 4
      %v710 = vpop.permute.xlu0 %709
      %711 = vrot.lane.b32.xlu0 %v447, 4
      %v712 = vpop.permute.xlu0 %711
      %713 = vrot.lane.b32.xlu0 %v448, 4
      %v714 = vpop.permute.xlu0 %713
      %715 = vrot.lane.b32.xlu0 %v449, 4
      %v716 = vpop.permute.xlu0 %715
      %717 = vrot.lane.b32.xlu0 %v450, 4
      %v718 = vpop.permute.xlu0 %717
      %719 = vrot.lane.b32.xlu0 %v451, 4
      %v720 = vpop.permute.xlu0 %719
      %721 = vrot.lane.b32.xlu0 %v452, 4
      %v722 = vpop.permute.xlu0 %721
      %738 = vst.msk [vmem:[%s627] sm:$0xff] %vm676, %v694
      %739 = vst.msk [vmem:[%s627 + $0x8] sm:$0xff] %vm676, %v696
      %740 = vst.msk [vmem:[%s627 + $0x10] sm:$0xff] %vm676, %v698
      %741 = vst.msk [vmem:[%s627 + $0x18] sm:$0xff] %vm676, %v700
      %742 = vst.msk [vmem:[%s627 + $0x20] sm:$0xff] %vm676, %v702
      %743 = vst.msk [vmem:[%s627 + $0x28] sm:$0xff] %vm676, %v704
      %744 = vst.msk [vmem:[%s627 + $0x30] sm:$0xff] %vm676, %v706
      %745 = vst.msk [vmem:[%s627 + $0x38] sm:$0xff] %vm676, %v708
      %746 = vst.msk [vmem:[%s627 + $0x40] sm:$0xff] %vm676, %v710
      %747 = vst.msk [vmem:[%s627 + $0x48] sm:$0xff] %vm676, %v712
      %748 = vst.msk [vmem:[%s627 + $0x50] sm:$0xff] %vm676, %v714
      %749 = vst.msk [vmem:[%s627 + $0x58] sm:$0xff] %vm676, %v716
      %750 = vst.msk [vmem:[%s627 + $0x60] sm:$0xff] %vm676, %v718
      %751 = vst.msk [vmem:[%s627 + $0x68] sm:$0xff] %vm676, %v720
      %752 = vst.msk [vmem:[%s627 + $0x70] sm:$0xff] %vm676, %v722
      %vm753 = vcmask 97344
      %754 = vst.msk [vmem:[#allocation2] sm:$0xff] %vm753, 0
      %vm755 = vcmask 97351
      %vm756 = vsmask.f32 7966
      %vm757 = vmand %vm755, %vm756
      %v758 = vld [vmem:[#allocation2] sm:$0x80]
      %v759 = vsel %vm757, 0, %v758
      %760 = vst [vmem:[#allocation2] sm:$0x80] %v759
      %v761 = vld [vmem:[#allocation2 + $0x8] sm:$0x80]
      %v762 = vsel %vm757, 0, %v761
      %763 = vst [vmem:[#allocation2 + $0x8] sm:$0x80] %v762
      %v764 = vld [vmem:[#allocation2 + $0x10] sm:$0x80]
      %v765 = vsel %vm757, 0, %v764
      %766 = vst [vmem:[#allocation2 + $0x10] sm:$0x80] %v765
      %v767 = vld [vmem:[#allocation2 + $0x18] sm:$0x80]
      %v768 = vsel %vm757, 0, %v767
      %769 = vst [vmem:[#allocation2 + $0x18] sm:$0x80] %v768
      %v770 = vld [vmem:[#allocation2 + $0x20] sm:$0x80]
      %v771 = vsel %vm757, 0, %v770
      %772 = vst [vmem:[#allocation2 + $0x20] sm:$0x80] %v771
      %v773 = vld [vmem:[#allocation2 + $0x28] sm:$0x80]
      %v774 = vsel %vm757, 0, %v773
      %775 = vst [vmem:[#allocation2 + $0x28] sm:$0x80] %v774
      %v776 = vld [vmem:[#allocation2 + $0x30] sm:$0x80]
      %v777 = vsel %vm757, 0, %v776
      %778 = vst [vmem:[#allocation2 + $0x30] sm:$0x80] %v777
      %v779 = vld [vmem:[#allocation2 + $0x38] sm:$0x80]
      %v780 = vsel %vm757, 0, %v779
      %781 = vst [vmem:[#allocation2 + $0x38] sm:$0x80] %v780
      %v782 = vld [vmem:[#allocation2 + $0x40] sm:$0x80]
      %v783 = vsel %vm757, 0, %v782
      %784 = vst [vmem:[#allocation2 + $0x40] sm:$0x80] %v783
      %v785 = vld [vmem:[#allocation2 + $0x48] sm:$0x80]
      %v786 = vsel %vm757, 0, %v785
      %787 = vst [vmem:[#allocation2 + $0x48] sm:$0x80] %v786
      %v788 = vld [vmem:[#allocation2 + $0x50] sm:$0x80]
      %v789 = vsel %vm757, 0, %v788
      %790 = vst [vmem:[#allocation2 + $0x50] sm:$0x80] %v789
      %v791 = vld [vmem:[#allocation2 + $0x58] sm:$0x80]
      %v792 = vsel %vm757, 0, %v791
      %793 = vst [vmem:[#allocation2 + $0x58] sm:$0x80] %v792
      %v794 = vld [vmem:[#allocation2 + $0x60] sm:$0x80]
      %v795 = vsel %vm757, 0, %v794
      %796 = vst [vmem:[#allocation2 + $0x60] sm:$0x80] %v795
      %v797 = vld [vmem:[#allocation2 + $0x68] sm:$0x80]
      %v798 = vsel %vm757, 0, %v797
      %799 = vst [vmem:[#allocation2 + $0x68] sm:$0x80] %v798
      %v800 = vld [vmem:[#allocation2 + $0x70] sm:$0x80]
      %v801 = vsel %vm757, 0, %v800
      %802 = vst [vmem:[#allocation2 + $0x70] sm:$0x80] %v801
      %v803 = vld [vmem:[#allocation2 + $0x78] sm:$0x80]
      %v804 = vsel %vm757, 0, %v803
      %805 = vst [vmem:[#allocation2 + $0x78] sm:$0x80] %v804
      %v806 = vrot.slane %v511, 1
      %v807 = vor.u32 %v508, %v806
      %v808 = vrot.slane %v518, 1
      %v809 = vor.u32 %v515, %v808
      %v810 = vrot.slane %v525, 1
      %v811 = vor.u32 %v522, %v810
      %v812 = vrot.slane %v532, 1
      %v813 = vor.u32 %v529, %v812
      %v814 = vrot.slane %v539, 1
      %v815 = vor.u32 %v536, %v814
      %v816 = vrot.slane %v546, 1
      %v817 = vor.u32 %v543, %v816
      %v818 = vrot.slane %v553, 1
      %v819 = vor.u32 %v550, %v818
      %v820 = vrot.slane %v560, 1
      %v821 = vor.u32 %v557, %v820
      %v822 = vrot.slane %v567, 1
      %v823 = vor.u32 %v564, %v822
      %v824 = vrot.slane %v574, 1
      %v825 = vor.u32 %v571, %v824
      %v826 = vrot.slane %v581, 1
      %v827 = vor.u32 %v578, %v826
      %v828 = vrot.slane %v588, 1
      %v829 = vor.u32 %v585, %v828
      %v830 = vrot.slane %v595, 1
      %v831 = vor.u32 %v592, %v830
      %v832 = vrot.slane %v602, 1
      %v833 = vor.u32 %v599, %v832
      %v834 = vrot.slane %v609, 1
      %v835 = vor.u32 %v606, %v834
      %836 = vrot.lane.b32.xlu0 %v807, 8
      %v837 = vpop.permute.xlu0 %836
      %838 = vrot.lane.b32.xlu0 %v809, 8
      %v839 = vpop.permute.xlu0 %838
      %840 = vrot.lane.b32.xlu0 %v811, 8
      %v841 = vpop.permute.xlu0 %840
      %842 = vrot.lane.b32.xlu0 %v813, 8
      %v843 = vpop.permute.xlu0 %842
      %844 = vrot.lane.b32.xlu0 %v815, 8
      %v845 = vpop.permute.xlu0 %844
      %846 = vrot.lane.b32.xlu0 %v817, 8
      %v847 = vpop.permute.xlu0 %846
      %848 = vrot.lane.b32.xlu0 %v819, 8
      %v849 = vpop.permute.xlu0 %848
      %850 = vrot.lane.b32.xlu0 %v821, 8
      %v851 = vpop.permute.xlu0 %850
      %852 = vrot.lane.b32.xlu0 %v823, 8
      %v853 = vpop.permute.xlu0 %852
      %854 = vrot.lane.b32.xlu0 %v825, 8
      %v855 = vpop.permute.xlu0 %854
      %856 = vrot.lane.b32.xlu0 %v827, 8
      %v857 = vpop.permute.xlu0 %856
      %858 = vrot.lane.b32.xlu0 %v829, 8
      %v859 = vpop.permute.xlu0 %858
      %860 = vrot.lane.b32.xlu0 %v831, 8
      %v861 = vpop.permute.xlu0 %860
      %862 = vrot.lane.b32.xlu0 %v833, 8
      %v863 = vpop.permute.xlu0 %862
      %864 = vrot.lane.b32.xlu0 %v835, 8
      %v865 = vpop.permute.xlu0 %864
      %vm881 = vcmask 97344
      %vm882 = vsmask.f32 7424
      %vm883 = vmand %vm881, %vm882
      %v884 = vld [vmem:[%s627] sm:$0xff]
      %v885 = vsel %vm883, %v837, %v884
      %886 = vst [vmem:[%s627] sm:$0xff] %v885
      %v887 = vld [vmem:[%s627 + $0x8] sm:$0xff]
      %v888 = vsel %vm883, %v839, %v887
      %889 = vst [vmem:[%s627 + $0x8] sm:$0xff] %v888
      %v890 = vld [vmem:[%s627 + $0x10] sm:$0xff]
      %v891 = vsel %vm883, %v841, %v890
      %892 = vst [vmem:[%s627 + $0x10] sm:$0xff] %v891
      %v893 = vld [vmem:[%s627 + $0x18] sm:$0xff]
      %v894 = vsel %vm883, %v843, %v893
      %895 = vst [vmem:[%s627 + $0x18] sm:$0xff] %v894
      %v896 = vld [vmem:[%s627 + $0x20] sm:$0xff]
      %v897 = vsel %vm883, %v845, %v896
      %898 = vst [vmem:[%s627 + $0x20] sm:$0xff] %v897
      %v899 = vld [vmem:[%s627 + $0x28] sm:$0xff]
      %v900 = vsel %vm883, %v847, %v899
      %901 = vst [vmem:[%s627 + $0x28] sm:$0xff] %v900
      %v902 = vld [vmem:[%s627 + $0x30] sm:$0xff]
      %v903 = vsel %vm883, %v849, %v902
      %904 = vst [vmem:[%s627 + $0x30] sm:$0xff] %v903
      %v905 = vld [vmem:[%s627 + $0x38] sm:$0xff]
      %v906 = vsel %vm883, %v851, %v905
      %907 = vst [vmem:[%s627 + $0x38] sm:$0xff] %v906
      %v908 = vld [vmem:[%s627 + $0x40] sm:$0xff]
      %v909 = vsel %vm883, %v853, %v908
      %910 = vst [vmem:[%s627 + $0x40] sm:$0xff] %v909
      %v911 = vld [vmem:[%s627 + $0x48] sm:$0xff]
      %v912 = vsel %vm883, %v855, %v911
      %913 = vst [vmem:[%s627 + $0x48] sm:$0xff] %v912
      %v914 = vld [vmem:[%s627 + $0x50] sm:$0xff]
      %v915 = vsel %vm883, %v857, %v914
      %916 = vst [vmem:[%s627 + $0x50] sm:$0xff] %v915
      %v917 = vld [vmem:[%s627 + $0x58] sm:$0xff]
      %v918 = vsel %vm883, %v859, %v917
      %919 = vst [vmem:[%s627 + $0x58] sm:$0xff] %v918
      %v920 = vld [vmem:[%s627 + $0x60] sm:$0xff]
      %v921 = vsel %vm883, %v861, %v920
      %922 = vst [vmem:[%s627 + $0x60] sm:$0xff] %v921
      %v923 = vld [vmem:[%s627 + $0x68] sm:$0xff]
      %v924 = vsel %vm883, %v863, %v923
      %925 = vst [vmem:[%s627 + $0x68] sm:$0xff] %v924
      %v926 = vld [vmem:[%s627 + $0x70] sm:$0xff]
      %v927 = vsel %vm883, %v865, %v926
      %928 = vst [vmem:[%s627 + $0x70] sm:$0xff] %v927
      %vm929 = vcmask 122976
      %vm930 = vmand %vm929, %vm457
      %v931 = vld [vmem:[#allocation2] sm:$0x1]
      %v932 = vsel %vm930, 0, %v931
      %933 = vst [vmem:[#allocation2] sm:$0x1] %v932
      %v934 = vld [vmem:[#allocation2 + $0x8] sm:$0x1]
      %v935 = vsel %vm930, 0, %v934
      %936 = vst [vmem:[#allocation2 + $0x8] sm:$0x1] %v935
      %v937 = vld [vmem:[#allocation2 + $0x10] sm:$0x1]
      %v938 = vsel %vm930, 0, %v937
      %939 = vst [vmem:[#allocation2 + $0x10] sm:$0x1] %v938
      %v940 = vld [vmem:[#allocation2 + $0x18] sm:$0x1]
      %v941 = vsel %vm930, 0, %v940
      %942 = vst [vmem:[#allocation2 + $0x18] sm:$0x1] %v941
      %v943 = vld [vmem:[#allocation2 + $0x20] sm:$0x1]
      %v944 = vsel %vm930, 0, %v943
      %945 = vst [vmem:[#allocation2 + $0x20] sm:$0x1] %v944
      %v946 = vld [vmem:[#allocation2 + $0x28] sm:$0x1]
      %v947 = vsel %vm930, 0, %v946
      %948 = vst [vmem:[#allocation2 + $0x28] sm:$0x1] %v947
      %v949 = vld [vmem:[#allocation2 + $0x30] sm:$0x1]
      %v950 = vsel %vm930, 0, %v949
      %951 = vst [vmem:[#allocation2 + $0x30] sm:$0x1] %v950
      %v952 = vld [vmem:[#allocation2 + $0x38] sm:$0x1]
      %v953 = vsel %vm930, 0, %v952
      %954 = vst [vmem:[#allocation2 + $0x38] sm:$0x1] %v953
      %v955 = vld [vmem:[#allocation2 + $0x40] sm:$0x1]
      %v956 = vsel %vm930, 0, %v955
      %957 = vst [vmem:[#allocation2 + $0x40] sm:$0x1] %v956
      %v958 = vld [vmem:[#allocation2 + $0x48] sm:$0x1]
      %v959 = vsel %vm930, 0, %v958
      %960 = vst [vmem:[#allocation2 + $0x48] sm:$0x1] %v959
      %v961 = vld [vmem:[#allocation2 + $0x50] sm:$0x1]
      %v962 = vsel %vm930, 0, %v961
      %963 = vst [vmem:[#allocation2 + $0x50] sm:$0x1] %v962
      %v964 = vld [vmem:[#allocation2 + $0x58] sm:$0x1]
      %v965 = vsel %vm930, 0, %v964
      %966 = vst [vmem:[#allocation2 + $0x58] sm:$0x1] %v965
      %v967 = vld [vmem:[#allocation2 + $0x60] sm:$0x1]
      %v968 = vsel %vm930, 0, %v967
      %969 = vst [vmem:[#allocation2 + $0x60] sm:$0x1] %v968
      %v970 = vld [vmem:[#allocation2 + $0x68] sm:$0x1]
      %v971 = vsel %vm930, 0, %v970
      %972 = vst [vmem:[#allocation2 + $0x68] sm:$0x1] %v971
      %v973 = vld [vmem:[#allocation2 + $0x70] sm:$0x1]
      %v974 = vsel %vm930, 0, %v973
      %975 = vst [vmem:[#allocation2 + $0x70] sm:$0x1] %v974
      %v976 = vld [vmem:[#allocation2 + $0x78] sm:$0x1]
      %v977 = vsel %vm930, 0, %v976
      %978 = vst [vmem:[#allocation2 + $0x78] sm:$0x1] %v977
      %v980 = vshrl.u32 %v453, 16
      %v982 = vrot.slane %v980, 7
      %v983 = vshll.u32 %v453, 16
      %v985 = vor.u32 %v982, %v983
      %986 = vrot.lane.b32.xlu0 %v513, 12
      %v987 = vpop.permute.xlu0 %986
      %988 = vrot.lane.b32.xlu0 %v520, 12
      %v989 = vpop.permute.xlu0 %988
      %990 = vrot.lane.b32.xlu0 %v527, 12
      %v991 = vpop.permute.xlu0 %990
      %992 = vrot.lane.b32.xlu0 %v534, 12
      %v993 = vpop.permute.xlu0 %992
      %994 = vrot.lane.b32.xlu0 %v541, 12
      %v995 = vpop.permute.xlu0 %994
      %996 = vrot.lane.b32.xlu0 %v548, 12
      %v997 = vpop.permute.xlu0 %996
      %998 = vrot.lane.b32.xlu0 %v555, 12
      %v999 = vpop.permute.xlu0 %998
      %1000 = vrot.lane.b32.xlu0 %v562, 12
      %v1001 = vpop.permute.xlu0 %1000
      %1002 = vrot.lane.b32.xlu0 %v569, 12
      %v1003 = vpop.permute.xlu0 %1002
      %1004 = vrot.lane.b32.xlu0 %v576, 12
      %v1005 = vpop.permute.xlu0 %1004
      %1006 = vrot.lane.b32.xlu0 %v583, 12
      %v1007 = vpop.permute.xlu0 %1006
      %1008 = vrot.lane.b32.xlu0 %v590, 12
      %v1009 = vpop.permute.xlu0 %1008
      %1010 = vrot.lane.b32.xlu0 %v597, 12
      %v1011 = vpop.permute.xlu0 %1010
      %1012 = vrot.lane.b32.xlu0 %v604, 12
      %v1013 = vpop.permute.xlu0 %1012
      %1014 = vrot.lane.b32.xlu0 %v611, 12
      %v1015 = vpop.permute.xlu0 %1014
      %1016 = vrot.lane.b32.xlu0 %v985, 12
      %v1017 = vpop.permute.xlu0 %1016
      %vm1034 = vcmask 130144
      %vm1035 = vmand %vm1034, %vm629
      %v1036 = vld [vmem:[#allocation2] sm:$0xff]
      %v1037 = vsel %vm1035, %v987, %v1036
      %1038 = vst [vmem:[#allocation2] sm:$0xff] %v1037
      %v1039 = vld [vmem:[#allocation2 + $0x8] sm:$0xff]
      %v1040 = vsel %vm1035, %v989, %v1039
      %1041 = vst [vmem:[#allocation2 + $0x8] sm:$0xff] %v1040
      %v1042 = vld [vmem:[#allocation2 + $0x10] sm:$0xff]
      %v1043 = vsel %vm1035, %v991, %v1042
      %1044 = vst [vmem:[#allocation2 + $0x10] sm:$0xff] %v1043
      %v1045 = vld [vmem:[#allocation2 + $0x18] sm:$0xff]
      %v1046 = vsel %vm1035, %v993, %v1045
      %1047 = vst [vmem:[#allocation2 + $0x18] sm:$0xff] %v1046
      %v1048 = vld [vmem:[#allocation2 + $0x20] sm:$0xff]
      %v1049 = vsel %vm1035, %v995, %v1048
      %1050 = vst [vmem:[#allocation2 + $0x20] sm:$0xff] %v1049
      %v1051 = vld [vmem:[#allocation2 + $0x28] sm:$0xff]
      %v1052 = vsel %vm1035, %v997, %v1051
      %1053 = vst [vmem:[#allocation2 + $0x28] sm:$0xff] %v1052
      %v1054 = vld [vmem:[#allocation2 + $0x30] sm:$0xff]
      %v1055 = vsel %vm1035, %v999, %v1054
      %1056 = vst [vmem:[#allocation2 + $0x30] sm:$0xff] %v1055
      %v1057 = vld [vmem:[#allocation2 + $0x38] sm:$0xff]
      %v1058 = vsel %vm1035, %v1001, %v1057
      %1059 = vst [vmem:[#allocation2 + $0x38] sm:$0xff] %v1058
      %v1060 = vld [vmem:[#allocation2 + $0x40] sm:$0xff]
      %v1061 = vsel %vm1035, %v1003, %v1060
      %1062 = vst [vmem:[#allocation2 + $0x40] sm:$0xff] %v1061
      %v1063 = vld [vmem:[#allocation2 + $0x48] sm:$0xff]
      %v1064 = vsel %vm1035, %v1005, %v1063
      %1065 = vst [vmem:[#allocation2 + $0x48] sm:$0xff] %v1064
      %v1066 = vld [vmem:[#allocation2 + $0x50] sm:$0xff]
      %v1067 = vsel %vm1035, %v1007, %v1066
      %1068 = vst [vmem:[#allocation2 + $0x50] sm:$0xff] %v1067
      %v1069 = vld [vmem:[#allocation2 + $0x58] sm:$0xff]
      %v1070 = vsel %vm1035, %v1009, %v1069
      %1071 = vst [vmem:[#allocation2 + $0x58] sm:$0xff] %v1070
      %v1072 = vld [vmem:[#allocation2 + $0x60] sm:$0xff]
      %v1073 = vsel %vm1035, %v1011, %v1072
      %1074 = vst [vmem:[#allocation2 + $0x60] sm:$0xff] %v1073
      %v1075 = vld [vmem:[#allocation2 + $0x68] sm:$0xff]
      %v1076 = vsel %vm1035, %v1013, %v1075
      %1077 = vst [vmem:[#allocation2 + $0x68] sm:$0xff] %v1076
      %v1078 = vld [vmem:[#allocation2 + $0x70] sm:$0xff]
      %v1079 = vsel %vm1035, %v1015, %v1078
      %1080 = vst [vmem:[#allocation2 + $0x70] sm:$0xff] %v1079
      %v1081 = vld [vmem:[#allocation2 + $0x78] sm:$0xff]
      %v1082 = vsel %vm1035, %v1017, %v1081
      %1083 = vst [vmem:[#allocation2 + $0x78] sm:$0xff] %v1082
      %1085 = vrot.lane.b32.xlu0 %v438, 16
      %v1086 = vpop.permute.xlu0 %1085
      %1087 = vrot.lane.b32.xlu0 %v439, 16
      %v1088 = vpop.permute.xlu0 %1087
      %1089 = vrot.lane.b32.xlu0 %v440, 16
      %v1090 = vpop.permute.xlu0 %1089
      %1091 = vrot.lane.b32.xlu0 %v441, 16
      %v1092 = vpop.permute.xlu0 %1091
      %1093 = vrot.lane.b32.xlu0 %v442, 16
      %v1094 = vpop.permute.xlu0 %1093
      %1095 = vrot.lane.b32.xlu0 %v443, 16
      %v1096 = vpop.permute.xlu0 %1095
      %1097 = vrot.lane.b32.xlu0 %v444, 16
      %v1098 = vpop.permute.xlu0 %1097
      %1099 = vrot.lane.b32.xlu0 %v445, 16
      %v1100 = vpop.permute.xlu0 %1099
      %1101 = vrot.lane.b32.xlu0 %v446, 16
      %v1102 = vpop.permute.xlu0 %1101
      %1103 = vrot.lane.b32.xlu0 %v447, 16
      %v1104 = vpop.permute.xlu0 %1103
      %1105 = vrot.lane.b32.xlu0 %v448, 16
      %v1106 = vpop.permute.xlu0 %1105
      %1107 = vrot.lane.b32.xlu0 %v449, 16
      %v1108 = vpop.permute.xlu0 %1107
      %1109 = vrot.lane.b32.xlu0 %v450, 16
      %v1110 = vpop.permute.xlu0 %1109
      %1111 = vrot.lane.b32.xlu0 %v451, 16
      %v1112 = vpop.permute.xlu0 %1111
      %1113 = vrot.lane.b32.xlu0 %v452, 16
      %v1114 = vpop.permute.xlu0 %1113
      %1115 = vrot.lane.b32.xlu0 %v453, 16
      %v1116 = vpop.permute.xlu0 %1115
      %vm1133 = vcmask 162944
      %1134 = vst.msk [vmem:[#allocation2] sm:$0xff] %vm1133, %v1086
      %1135 = vst.msk [vmem:[#allocation2 + $0x8] sm:$0xff] %vm1133, %v1088
      %1136 = vst.msk [vmem:[#allocation2 + $0x10] sm:$0xff] %vm1133, %v1090
      %1137 = vst.msk [vmem:[#allocation2 + $0x18] sm:$0xff] %vm1133, %v1092
      %1138 = vst.msk [vmem:[#allocation2 + $0x20] sm:$0xff] %vm1133, %v1094
      %1139 = vst.msk [vmem:[#allocation2 + $0x28] sm:$0xff] %vm1133, %v1096
      %1140 = vst.msk [vmem:[#allocation2 + $0x30] sm:$0xff] %vm1133, %v1098
      %1141 = vst.msk [vmem:[#allocation2 + $0x38] sm:$0xff] %vm1133, %v1100
      %1142 = vst.msk [vmem:[#allocation2 + $0x40] sm:$0xff] %vm1133, %v1102
      %1143 = vst.msk [vmem:[#allocation2 + $0x48] sm:$0xff] %vm1133, %v1104
      %1144 = vst.msk [vmem:[#allocation2 + $0x50] sm:$0xff] %vm1133, %v1106
      %1145 = vst.msk [vmem:[#allocation2 + $0x58] sm:$0xff] %vm1133, %v1108
      %1146 = vst.msk [vmem:[#allocation2 + $0x60] sm:$0xff] %vm1133, %v1110
      %1147 = vst.msk [vmem:[#allocation2 + $0x68] sm:$0xff] %vm1133, %v1112
      %1148 = vst.msk [vmem:[#allocation2 + $0x70] sm:$0xff] %vm1133, %v1114
      %1149 = vst.msk [vmem:[#allocation2 + $0x78] sm:$0xff] %vm1133, %v1116
      %vm1150 = vcmask 195751
      %vm1151 = vmand %vm1150, %vm756
      %v1152 = vld [vmem:[#allocation2] sm:$0x80]
      %v1153 = vsel %vm1151, 0, %v1152
      %1154 = vst [vmem:[#allocation2] sm:$0x80] %v1153
      %v1155 = vld [vmem:[#allocation2 + $0x8] sm:$0x80]
      %v1156 = vsel %vm1151, 0, %v1155
      %1157 = vst [vmem:[#allocation2 + $0x8] sm:$0x80] %v1156
      %v1158 = vld [vmem:[#allocation2 + $0x10] sm:$0x80]
      %v1159 = vsel %vm1151, 0, %v1158
      %1160 = vst [vmem:[#allocation2 + $0x10] sm:$0x80] %v1159
      %v1161 = vld [vmem:[#allocation2 + $0x18] sm:$0x80]
      %v1162 = vsel %vm1151, 0, %v1161
      %1163 = vst [vmem:[#allocation2 + $0x18] sm:$0x80] %v1162
      %v1164 = vld [vmem:[#allocation2 + $0x20] sm:$0x80]
      %v1165 = vsel %vm1151, 0, %v1164
      %1166 = vst [vmem:[#allocation2 + $0x20] sm:$0x80] %v1165
      %v1167 = vld [vmem:[#allocation2 + $0x28] sm:$0x80]
      %v1168 = vsel %vm1151, 0, %v1167
      %1169 = vst [vmem:[#allocation2 + $0x28] sm:$0x80] %v1168
      %v1170 = vld [vmem:[#allocation2 + $0x30] sm:$0x80]
      %v1171 = vsel %vm1151, 0, %v1170
      %1172 = vst [vmem:[#allocation2 + $0x30] sm:$0x80] %v1171
      %v1173 = vld [vmem:[#allocation2 + $0x38] sm:$0x80]
      %v1174 = vsel %vm1151, 0, %v1173
      %1175 = vst [vmem:[#allocation2 + $0x38] sm:$0x80] %v1174
      %v1176 = vld [vmem:[#allocation2 + $0x40] sm:$0x80]
      %v1177 = vsel %vm1151, 0, %v1176
      %1178 = vst [vmem:[#allocation2 + $0x40] sm:$0x80] %v1177
      %v1179 = vld [vmem:[#allocation2 + $0x48] sm:$0x80]
      %v1180 = vsel %vm1151, 0, %v1179
      %1181 = vst [vmem:[#allocation2 + $0x48] sm:$0x80] %v1180
      %v1182 = vld [vmem:[#allocation2 + $0x50] sm:$0x80]
      %v1183 = vsel %vm1151, 0, %v1182
      %1184 = vst [vmem:[#allocation2 + $0x50] sm:$0x80] %v1183
      %v1185 = vld [vmem:[#allocation2 + $0x58] sm:$0x80]
      %v1186 = vsel %vm1151, 0, %v1185
      %1187 = vst [vmem:[#allocation2 + $0x58] sm:$0x80] %v1186
      %v1188 = vld [vmem:[#allocation2 + $0x60] sm:$0x80]
      %v1189 = vsel %vm1151, 0, %v1188
      %1190 = vst [vmem:[#allocation2 + $0x60] sm:$0x80] %v1189
      %v1191 = vld [vmem:[#allocation2 + $0x68] sm:$0x80]
      %v1192 = vsel %vm1151, 0, %v1191
      %1193 = vst [vmem:[#allocation2 + $0x68] sm:$0x80] %v1192
      %v1194 = vld [vmem:[#allocation2 + $0x70] sm:$0x80]
      %v1195 = vsel %vm1151, 0, %v1194
      %1196 = vst [vmem:[#allocation2 + $0x70] sm:$0x80] %v1195
      %v1197 = vld [vmem:[#allocation2 + $0x78] sm:$0x80]
      %v1198 = vsel %vm1151, 0, %v1197
      %1199 = vst [vmem:[#allocation2 + $0x78] sm:$0x80] %v1198
      %v1200 = vrot.slane %v983, 1
      %v1201 = vor.u32 %v980, %v1200
      %1202 = vrot.lane.b32.xlu0 %v807, 20
      %v1203 = vpop.permute.xlu0 %1202
      %1204 = vrot.lane.b32.xlu0 %v809, 20
      %v1205 = vpop.permute.xlu0 %1204
      %1206 = vrot.lane.b32.xlu0 %v811, 20
      %v1207 = vpop.permute.xlu0 %1206
      %1208 = vrot.lane.b32.xlu0 %v813, 20
      %v1209 = vpop.permute.xlu0 %1208
      %1210 = vrot.lane.b32.xlu0 %v815, 20
      %v1211 = vpop.permute.xlu0 %1210
      %1212 = vrot.lane.b32.xlu0 %v817, 20
      %v1213 = vpop.permute.xlu0 %1212
      %1214 = vrot.lane.b32.xlu0 %v819, 20
      %v1215 = vpop.permute.xlu0 %1214
      %1216 = vrot.lane.b32.xlu0 %v821, 20
      %v1217 = vpop.permute.xlu0 %1216
      %1218 = vrot.lane.b32.xlu0 %v823, 20
      %v1219 = vpop.permute.xlu0 %1218
      %1220 = vrot.lane.b32.xlu0 %v825, 20
      %v1221 = vpop.permute.xlu0 %1220
      %1222 = vrot.lane.b32.xlu0 %v827, 20
      %v1223 = vpop.permute.xlu0 %1222
      %1224 = vrot.lane.b32.xlu0 %v829, 20
      %v1225 = vpop.permute.xlu0 %1224
      %1226 = vrot.lane.b32.xlu0 %v831, 20
      %v1227 = vpop.permute.xlu0 %1226
      %1228 = vrot.lane.b32.xlu0 %v833, 20
      %v1229 = vpop.permute.xlu0 %1228
      %1230 = vrot.lane.b32.xlu0 %v835, 20
      %v1231 = vpop.permute.xlu0 %1230
      %1232 = vrot.lane.b32.xlu0 %v1201, 20
      %v1233 = vpop.permute.xlu0 %1232
      %vm1250 = vcmask 195744
      %vm1251 = vmand %vm1250, %vm882
      %v1252 = vld [vmem:[#allocation2] sm:$0xff]
      %v1253 = vsel %vm1251, %v1203, %v1252
      %1254 = vst [vmem:[#allocation2] sm:$0xff] %v1253
      %v1255 = vld [vmem:[#allocation2 + $0x8] sm:$0xff]
      %v1256 = vsel %vm1251, %v1205, %v1255
      %1257 = vst [vmem:[#allocation2 + $0x8] sm:$0xff] %v1256
      %v1258 = vld [vmem:[#allocation2 + $0x10] sm:$0xff]
      %v1259 = vsel %vm1251, %v1207, %v1258
      %1260 = vst [vmem:[#allocation2 + $0x10] sm:$0xff] %v1259
      %v1261 = vld [vmem:[#allocation2 + $0x18] sm:$0xff]
      %v1262 = vsel %vm1251, %v1209, %v1261
      %1263 = vst [vmem:[#allocation2 + $0x18] sm:$0xff] %v1262
      %v1264 = vld [vmem:[#allocation2 + $0x20] sm:$0xff]
      %v1265 = vsel %vm1251, %v1211, %v1264
      %1266 = vst [vmem:[#allocation2 + $0x20] sm:$0xff] %v1265
      %v1267 = vld [vmem:[#allocation2 + $0x28] sm:$0xff]
      %v1268 = vsel %vm1251, %v1213, %v1267
      %1269 = vst [vmem:[#allocation2 + $0x28] sm:$0xff] %v1268
      %v1270 = vld [vmem:[#allocation2 + $0x30] sm:$0xff]
      %v1271 = vsel %vm1251, %v1215, %v1270
      %1272 = vst [vmem:[#allocation2 + $0x30] sm:$0xff] %v1271
      %v1273 = vld [vmem:[#allocation2 + $0x38] sm:$0xff]
      %v1274 = vsel %vm1251, %v1217, %v1273
      %1275 = vst [vmem:[#allocation2 + $0x38] sm:$0xff] %v1274
      %v1276 = vld [vmem:[#allocation2 + $0x40] sm:$0xff]
      %v1277 = vsel %vm1251, %v1219, %v1276
      %1278 = vst [vmem:[#allocation2 + $0x40] sm:$0xff] %v1277
      %v1279 = vld [vmem:[#allocation2 + $0x48] sm:$0xff]
      %v1280 = vsel %vm1251, %v1221, %v1279
      %1281 = vst [vmem:[#allocation2 + $0x48] sm:$0xff] %v1280
      %v1282 = vld [vmem:[#allocation2 + $0x50] sm:$0xff]
      %v1283 = vsel %vm1251, %v1223, %v1282
      %1284 = vst [vmem:[#allocation2 + $0x50] sm:$0xff] %v1283
      %v1285 = vld [vmem:[#allocation2 + $0x58] sm:$0xff]
      %v1286 = vsel %vm1251, %v1225, %v1285
      %1287 = vst [vmem:[#allocation2 + $0x58] sm:$0xff] %v1286
      %v1288 = vld [vmem:[#allocation2 + $0x60] sm:$0xff]
      %v1289 = vsel %vm1251, %v1227, %v1288
      %1290 = vst [vmem:[#allocation2 + $0x60] sm:$0xff] %v1289
      %v1291 = vld [vmem:[#allocation2 + $0x68] sm:$0xff]
      %v1292 = vsel %vm1251, %v1229, %v1291
      %1293 = vst [vmem:[#allocation2 + $0x68] sm:$0xff] %v1292
      %v1294 = vld [vmem:[#allocation2 + $0x70] sm:$0xff]
      %v1295 = vsel %vm1251, %v1231, %v1294
      %1296 = vst [vmem:[#allocation2 + $0x70] sm:$0xff] %v1295
      %v1297 = vld [vmem:[#allocation2 + $0x78] sm:$0xff]
      %v1298 = vsel %vm1251, %v1233, %v1297
      %1299 = vst [vmem:[#allocation2 + $0x78] sm:$0xff] %v1298
      %s1300 = scalar_lea.vmem [#allocation2], 120
      %vm1301 = vcmask 228544
      %1302 = vst.msk [vmem:[%s1300] sm:$0xff] %vm1301, 0
      %vm1303 = vcmask 221376
      %vm1304 = vmand %vm1303, %vm457
      %v1305 = vld [vmem:[#allocation2] sm:$0x1]
      %v1306 = vsel %vm1304, 0, %v1305
      %1307 = vst [vmem:[#allocation2] sm:$0x1] %v1306
      %v1308 = vld [vmem:[#allocation2 + $0x8] sm:$0x1]
      %v1309 = vsel %vm1304, 0, %v1308
      %1310 = vst [vmem:[#allocation2 + $0x8] sm:$0x1] %v1309
      %v1311 = vld [vmem:[#allocation2 + $0x10] sm:$0x1]
      %v1312 = vsel %vm1304, 0, %v1311
      %1313 = vst [vmem:[#allocation2 + $0x10] sm:$0x1] %v1312
      %v1314 = vld [vmem:[#allocation2 + $0x18] sm:$0x1]
      %v1315 = vsel %vm1304, 0, %v1314
      %1316 = vst [vmem:[#allocation2 + $0x18] sm:$0x1] %v1315
      %v1317 = vld [vmem:[#allocation2 + $0x20] sm:$0x1]
      %v1318 = vsel %vm1304, 0, %v1317
      %1319 = vst [vmem:[#allocation2 + $0x20] sm:$0x1] %v1318
      %v1320 = vld [vmem:[#allocation2 + $0x28] sm:$0x1]
      %v1321 = vsel %vm1304, 0, %v1320
      %1322 = vst [vmem:[#allocation2 + $0x28] sm:$0x1] %v1321
      %v1323 = vld [vmem:[#allocation2 + $0x30] sm:$0x1]
      %v1324 = vsel %vm1304, 0, %v1323
      %1325 = vst [vmem:[#allocation2 + $0x30] sm:$0x1] %v1324
      %v1326 = vld [vmem:[#allocation2 + $0x38] sm:$0x1]
      %v1327 = vsel %vm1304, 0, %v1326
      %1328 = vst [vmem:[#allocation2 + $0x38] sm:$0x1] %v1327
      %v1329 = vld [vmem:[#allocation2 + $0x40] sm:$0x1]
      %v1330 = vsel %vm1304, 0, %v1329
      %1331 = vst [vmem:[#allocation2 + $0x40] sm:$0x1] %v1330
      %v1332 = vld [vmem:[#allocation2 + $0x48] sm:$0x1]
      %v1333 = vsel %vm1304, 0, %v1332
      %1334 = vst [vmem:[#allocation2 + $0x48] sm:$0x1] %v1333
      %v1335 = vld [vmem:[#allocation2 + $0x50] sm:$0x1]
      %v1336 = vsel %vm1304, 0, %v1335
      %1337 = vst [vmem:[#allocation2 + $0x50] sm:$0x1] %v1336
      %v1338 = vld [vmem:[#allocation2 + $0x58] sm:$0x1]
      %v1339 = vsel %vm1304, 0, %v1338
      %1340 = vst [vmem:[#allocation2 + $0x58] sm:$0x1] %v1339
      %v1341 = vld [vmem:[#allocation2 + $0x60] sm:$0x1]
      %v1342 = vsel %vm1304, 0, %v1341
      %1343 = vst [vmem:[#allocation2 + $0x60] sm:$0x1] %v1342
      %v1344 = vld [vmem:[#allocation2 + $0x68] sm:$0x1]
      %v1345 = vsel %vm1304, 0, %v1344
      %1346 = vst [vmem:[#allocation2 + $0x68] sm:$0x1] %v1345
      %v1347 = vld [vmem:[#allocation2 + $0x70] sm:$0x1]
      %v1348 = vsel %vm1304, 0, %v1347
      %1349 = vst [vmem:[#allocation2 + $0x70] sm:$0x1] %v1348
      %v1350 = vld [vmem:[#allocation2 + $0x78] sm:$0x1]
      %v1351 = vsel %vm1304, 0, %v1350
      %1352 = vst [vmem:[#allocation2 + $0x78] sm:$0x1] %v1351
      %1353 = vrot.lane.b32.xlu0 %v520, 24
      %v1354 = vpop.permute.xlu0 %1353
      %1355 = vrot.lane.b32.xlu0 %v527, 24
      %v1356 = vpop.permute.xlu0 %1355
      %1357 = vrot.lane.b32.xlu0 %v534, 24
      %v1358 = vpop.permute.xlu0 %1357
      %1359 = vrot.lane.b32.xlu0 %v541, 24
      %v1360 = vpop.permute.xlu0 %1359
      %1361 = vrot.lane.b32.xlu0 %v548, 24
      %v1362 = vpop.permute.xlu0 %1361
      %1363 = vrot.lane.b32.xlu0 %v555, 24
      %v1364 = vpop.permute.xlu0 %1363
      %1365 = vrot.lane.b32.xlu0 %v562, 24
      %v1366 = vpop.permute.xlu0 %1365
      %1367 = vrot.lane.b32.xlu0 %v569, 24
      %v1368 = vpop.permute.xlu0 %1367
      %1369 = vrot.lane.b32.xlu0 %v576, 24
      %v1370 = vpop.permute.xlu0 %1369
      %1371 = vrot.lane.b32.xlu0 %v583, 24
      %v1372 = vpop.permute.xlu0 %1371
      %1373 = vrot.lane.b32.xlu0 %v590, 24
      %v1374 = vpop.permute.xlu0 %1373
      %1375 = vrot.lane.b32.xlu0 %v597, 24
      %v1376 = vpop.permute.xlu0 %1375
      %1377 = vrot.lane.b32.xlu0 %v604, 24
      %v1378 = vpop.permute.xlu0 %1377
      %1379 = vrot.lane.b32.xlu0 %v611, 24
      %v1380 = vpop.permute.xlu0 %1379
      %1381 = vrot.lane.b32.xlu0 %v985, 24
      %v1382 = vpop.permute.xlu0 %1381
      %vm1398 = vcmask 228544
      %vm1399 = vmand %vm1398, %vm629
      %v1400 = vld [vmem:[#allocation2] sm:$0xff]
      %v1401 = vsel %vm1399, %v1354, %v1400
      %1402 = vst [vmem:[#allocation2] sm:$0xff] %v1401
      %v1403 = vld [vmem:[#allocation2 + $0x8] sm:$0xff]
      %v1404 = vsel %vm1399, %v1356, %v1403
      %1405 = vst [vmem:[#allocation2 + $0x8] sm:$0xff] %v1404
      %v1406 = vld [vmem:[#allocation2 + $0x10] sm:$0xff]
      %v1407 = vsel %vm1399, %v1358, %v1406
      %1408 = vst [vmem:[#allocation2 + $0x10] sm:$0xff] %v1407
      %v1409 = vld [vmem:[#allocation2 + $0x18] sm:$0xff]
      %v1410 = vsel %vm1399, %v1360, %v1409
      %1411 = vst [vmem:[#allocation2 + $0x18] sm:$0xff] %v1410
      %v1412 = vld [vmem:[#allocation2 + $0x20] sm:$0xff]
      %v1413 = vsel %vm1399, %v1362, %v1412
      %1414 = vst [vmem:[#allocation2 + $0x20] sm:$0xff] %v1413
      %v1415 = vld [vmem:[#allocation2 + $0x28] sm:$0xff]
      %v1416 = vsel %vm1399, %v1364, %v1415
      %1417 = vst [vmem:[#allocation2 + $0x28] sm:$0xff] %v1416
      %v1418 = vld [vmem:[#allocation2 + $0x30] sm:$0xff]
      %v1419 = vsel %vm1399, %v1366, %v1418
      %1420 = vst [vmem:[#allocation2 + $0x30] sm:$0xff] %v1419
      %v1421 = vld [vmem:[#allocation2 + $0x38] sm:$0xff]
      %v1422 = vsel %vm1399, %v1368, %v1421
      %1423 = vst [vmem:[#allocation2 + $0x38] sm:$0xff] %v1422
      %v1424 = vld [vmem:[#allocation2 + $0x40] sm:$0xff]
      %v1425 = vsel %vm1399, %v1370, %v1424
      %1426 = vst [vmem:[#allocation2 + $0x40] sm:$0xff] %v1425
      %v1427 = vld [vmem:[#allocation2 + $0x48] sm:$0xff]
      %v1428 = vsel %vm1399, %v1372, %v1427
      %1429 = vst [vmem:[#allocation2 + $0x48] sm:$0xff] %v1428
      %v1430 = vld [vmem:[#allocation2 + $0x50] sm:$0xff]
      %v1431 = vsel %vm1399, %v1374, %v1430
      %1432 = vst [vmem:[#allocation2 + $0x50] sm:$0xff] %v1431
      %v1433 = vld [vmem:[#allocation2 + $0x58] sm:$0xff]
      %v1434 = vsel %vm1399, %v1376, %v1433
      %1435 = vst [vmem:[#allocation2 + $0x58] sm:$0xff] %v1434
      %v1436 = vld [vmem:[#allocation2 + $0x60] sm:$0xff]
      %v1437 = vsel %vm1399, %v1378, %v1436
      %1438 = vst [vmem:[#allocation2 + $0x60] sm:$0xff] %v1437
      %v1439 = vld [vmem:[#allocation2 + $0x68] sm:$0xff]
      %v1440 = vsel %vm1399, %v1380, %v1439
      %1441 = vst [vmem:[#allocation2 + $0x68] sm:$0xff] %v1440
      %v1442 = vld [vmem:[#allocation2 + $0x70] sm:$0xff]
      %v1443 = vsel %vm1399, %v1382, %v1442
      %1444 = vst [vmem:[#allocation2 + $0x70] sm:$0xff] %v1443
      %vm1445 = vcmask 261344
      %1446 = vst.msk [vmem:[%s1300] sm:$0xff] %vm1445, 0
      %1447 = vrot.lane.b32.xlu0 %v439, 28
      %v1448 = vpop.permute.xlu0 %1447
      %1449 = vrot.lane.b32.xlu0 %v440, 28
      %v1450 = vpop.permute.xlu0 %1449
      %1451 = vrot.lane.b32.xlu0 %v441, 28
      %v1452 = vpop.permute.xlu0 %1451
      %1453 = vrot.lane.b32.xlu0 %v442, 28
      %v1454 = vpop.permute.xlu0 %1453
      %1455 = vrot.lane.b32.xlu0 %v443, 28
      %v1456 = vpop.permute.xlu0 %1455
      %1457 = vrot.lane.b32.xlu0 %v444, 28
      %v1458 = vpop.permute.xlu0 %1457
      %1459 = vrot.lane.b32.xlu0 %v445, 28
      %v1460 = vpop.permute.xlu0 %1459
      %1461 = vrot.lane.b32.xlu0 %v446, 28
      %v1462 = vpop.permute.xlu0 %1461
      %1463 = vrot.lane.b32.xlu0 %v447, 28
      %v1464 = vpop.permute.xlu0 %1463
      %1465 = vrot.lane.b32.xlu0 %v448, 28
      %v1466 = vpop.permute.xlu0 %1465
      %1467 = vrot.lane.b32.xlu0 %v449, 28
      %v1468 = vpop.permute.xlu0 %1467
      %1469 = vrot.lane.b32.xlu0 %v450, 28
      %v1470 = vpop.permute.xlu0 %1469
      %1471 = vrot.lane.b32.xlu0 %v451, 28
      %v1472 = vpop.permute.xlu0 %1471
      %1473 = vrot.lane.b32.xlu0 %v452, 28
      %v1474 = vpop.permute.xlu0 %1473
      %1475 = vrot.lane.b32.xlu0 %v453, 28
      %v1476 = vpop.permute.xlu0 %1475
      %1492 = vst.msk [vmem:[#allocation2] sm:$0xff] %vm1445, %v1448
      %1493 = vst.msk [vmem:[#allocation2 + $0x8] sm:$0xff] %vm1445, %v1450
      %1494 = vst.msk [vmem:[#allocation2 + $0x10] sm:$0xff] %vm1445, %v1452
      %1495 = vst.msk [vmem:[#allocation2 + $0x18] sm:$0xff] %vm1445, %v1454
      %1496 = vst.msk [vmem:[#allocation2 + $0x20] sm:$0xff] %vm1445, %v1456
      %1497 = vst.msk [vmem:[#allocation2 + $0x28] sm:$0xff] %vm1445, %v1458
      %1498 = vst.msk [vmem:[#allocation2 + $0x30] sm:$0xff] %vm1445, %v1460
      %1499 = vst.msk [vmem:[#allocation2 + $0x38] sm:$0xff] %vm1445, %v1462
      %1500 = vst.msk [vmem:[#allocation2 + $0x40] sm:$0xff] %vm1445, %v1464
      %1501 = vst.msk [vmem:[#allocation2 + $0x48] sm:$0xff] %vm1445, %v1466
      %1502 = vst.msk [vmem:[#allocation2 + $0x50] sm:$0xff] %vm1445, %v1468
      %1503 = vst.msk [vmem:[#allocation2 + $0x58] sm:$0xff] %vm1445, %v1470
      %1504 = vst.msk [vmem:[#allocation2 + $0x60] sm:$0xff] %vm1445, %v1472
      %1505 = vst.msk [vmem:[#allocation2 + $0x68] sm:$0xff] %vm1445, %v1474
      %1506 = vst.msk [vmem:[#allocation2 + $0x70] sm:$0xff] %vm1445, %v1476
      %vm1507 = vcmask 294144
      %1508 = vst.msk [vmem:[%s1300] sm:$0xff] %vm1507, 0
      %vm1509 = vcmask 294151
      %vm1510 = vmand %vm1509, %vm756
      %v1511 = vld [vmem:[#allocation2] sm:$0x80]
      %v1512 = vsel %vm1510, 0, %v1511
      %1513 = vst [vmem:[#allocation2] sm:$0x80] %v1512
      %v1514 = vld [vmem:[#allocation2 + $0x8] sm:$0x80]
      %v1515 = vsel %vm1510, 0, %v1514
      %1516 = vst [vmem:[#allocation2 + $0x8] sm:$0x80] %v1515
      %v1517 = vld [vmem:[#allocation2 + $0x10] sm:$0x80]
      %v1518 = vsel %vm1510, 0, %v1517
      %1519 = vst [vmem:[#allocation2 + $0x10] sm:$0x80] %v1518
      %v1520 = vld [vmem:[#allocation2 + $0x18] sm:$0x80]
      %v1521 = vsel %vm1510, 0, %v1520
      %1522 = vst [vmem:[#allocation2 + $0x18] sm:$0x80] %v1521
      %v1523 = vld [vmem:[#allocation2 + $0x20] sm:$0x80]
      %v1524 = vsel %vm1510, 0, %v1523
      %1525 = vst [vmem:[#allocation2 + $0x20] sm:$0x80] %v1524
      %v1526 = vld [vmem:[#allocation2 + $0x28] sm:$0x80]
      %v1527 = vsel %vm1510, 0, %v1526
      %1528 = vst [vmem:[#allocation2 + $0x28] sm:$0x80] %v1527
      %v1529 = vld [vmem:[#allocation2 + $0x30] sm:$0x80]
      %v1530 = vsel %vm1510, 0, %v1529
      %1531 = vst [vmem:[#allocation2 + $0x30] sm:$0x80] %v1530
      %v1532 = vld [vmem:[#allocation2 + $0x38] sm:$0x80]
      %v1533 = vsel %vm1510, 0, %v1532
      %1534 = vst [vmem:[#allocation2 + $0x38] sm:$0x80] %v1533
      %v1535 = vld [vmem:[#allocation2 + $0x40] sm:$0x80]
      %v1536 = vsel %vm1510, 0, %v1535
      %1537 = vst [vmem:[#allocation2 + $0x40] sm:$0x80] %v1536
      %v1538 = vld [vmem:[#allocation2 + $0x48] sm:$0x80]
      %v1539 = vsel %vm1510, 0, %v1538
      %1540 = vst [vmem:[#allocation2 + $0x48] sm:$0x80] %v1539
      %v1541 = vld [vmem:[#allocation2 + $0x50] sm:$0x80]
      %v1542 = vsel %vm1510, 0, %v1541
      %1543 = vst [vmem:[#allocation2 + $0x50] sm:$0x80] %v1542
      %v1544 = vld [vmem:[#allocation2 + $0x58] sm:$0x80]
      %v1545 = vsel %vm1510, 0, %v1544
      %1546 = vst [vmem:[#allocation2 + $0x58] sm:$0x80] %v1545
      %v1547 = vld [vmem:[#allocation2 + $0x60] sm:$0x80]
      %v1548 = vsel %vm1510, 0, %v1547
      %1549 = vst [vmem:[#allocation2 + $0x60] sm:$0x80] %v1548
      %v1550 = vld [vmem:[#allocation2 + $0x68] sm:$0x80]
      %v1551 = vsel %vm1510, 0, %v1550
      %1552 = vst [vmem:[#allocation2 + $0x68] sm:$0x80] %v1551
      %v1553 = vld [vmem:[#allocation2 + $0x70] sm:$0x80]
      %v1554 = vsel %vm1510, 0, %v1553
      %1555 = vst [vmem:[#allocation2 + $0x70] sm:$0x80] %v1554
      %v1556 = vld [vmem:[#allocation2 + $0x78] sm:$0x80]
      %v1557 = vsel %vm1510, 0, %v1556
      %1558 = vst [vmem:[#allocation2 + $0x78] sm:$0x80] %v1557
      %1559 = vrot.lane.b32.xlu0 %v809, 32
      %v1560 = vpop.permute.xlu0 %1559
      %1561 = vrot.lane.b32.xlu0 %v811, 32
      %v1562 = vpop.permute.xlu0 %1561
      %1563 = vrot.lane.b32.xlu0 %v813, 32
      %v1564 = vpop.permute.xlu0 %1563
      %1565 = vrot.lane.b32.xlu0 %v815, 32
      %v1566 = vpop.permute.xlu0 %1565
      %1567 = vrot.lane.b32.xlu0 %v817, 32
      %v1568 = vpop.permute.xlu0 %1567
      %1569 = vrot.lane.b32.xlu0 %v819, 32
      %v1570 = vpop.permute.xlu0 %1569
      %1571 = vrot.lane.b32.xlu0 %v821, 32
      %v1572 = vpop.permute.xlu0 %1571
      %1573 = vrot.lane.b32.xlu0 %v823, 32
      %v1574 = vpop.permute.xlu0 %1573
      %1575 = vrot.lane.b32.xlu0 %v825, 32
      %v1576 = vpop.permute.xlu0 %1575
      %1577 = vrot.lane.b32.xlu0 %v827, 32
      %v1578 = vpop.permute.xlu0 %1577
      %1579 = vrot.lane.b32.xlu0 %v829, 32
      %v1580 = vpop.permute.xlu0 %1579
      %1581 = vrot.lane.b32.xlu0 %v831, 32
      %v1582 = vpop.permute.xlu0 %1581
      %1583 = vrot.lane.b32.xlu0 %v833, 32
      %v1584 = vpop.permute.xlu0 %1583
      %1585 = vrot.lane.b32.xlu0 %v835, 32
      %v1586 = vpop.permute.xlu0 %1585
      %1587 = vrot.lane.b32.xlu0 %v1201, 32
      %v1588 = vpop.permute.xlu0 %1587
      %vm1604 = vcmask 294144
      %vm1605 = vmand %vm1604, %vm882
      %v1606 = vld [vmem:[#allocation2] sm:$0xff]
      %v1607 = vsel %vm1605, %v1560, %v1606
      %1608 = vst [vmem:[#allocation2] sm:$0xff] %v1607
      %v1609 = vld [vmem:[#allocation2 + $0x8] sm:$0xff]
      %v1610 = vsel %vm1605, %v1562, %v1609
      %1611 = vst [vmem:[#allocation2 + $0x8] sm:$0xff] %v1610
      %v1612 = vld [vmem:[#allocation2 + $0x10] sm:$0xff]
      %v1613 = vsel %vm1605, %v1564, %v1612
      %1614 = vst [vmem:[#allocation2 + $0x10] sm:$0xff] %v1613
      %v1615 = vld [vmem:[#allocation2 + $0x18] sm:$0xff]
      %v1616 = vsel %vm1605, %v1566, %v1615
      %1617 = vst [vmem:[#allocation2 + $0x18] sm:$0xff] %v1616
      %v1618 = vld [vmem:[#allocation2 + $0x20] sm:$0xff]
      %v1619 = vsel %vm1605, %v1568, %v1618
      %1620 = vst [vmem:[#allocation2 + $0x20] sm:$0xff] %v1619
      %v1621 = vld [vmem:[#allocation2 + $0x28] sm:$0xff]
      %v1622 = vsel %vm1605, %v1570, %v1621
      %1623 = vst [vmem:[#allocation2 + $0x28] sm:$0xff] %v1622
      %v1624 = vld [vmem:[#allocation2 + $0x30] sm:$0xff]
      %v1625 = vsel %vm1605, %v1572, %v1624
      %1626 = vst [vmem:[#allocation2 + $0x30] sm:$0xff] %v1625
      %v1627 = vld [vmem:[#allocation2 + $0x38] sm:$0xff]
      %v1628 = vsel %vm1605, %v1574, %v1627
      %1629 = vst [vmem:[#allocation2 + $0x38] sm:$0xff] %v1628
      %v1630 = vld [vmem:[#allocation2 + $0x40] sm:$0xff]
      %v1631 = vsel %vm1605, %v1576, %v1630
      %1632 = vst [vmem:[#allocation2 + $0x40] sm:$0xff] %v1631
      %v1633 = vld [vmem:[#allocation2 + $0x48] sm:$0xff]
      %v1634 = vsel %vm1605, %v1578, %v1633
      %1635 = vst [vmem:[#allocation2 + $0x48] sm:$0xff] %v1634
      %v1636 = vld [vmem:[#allocation2 + $0x50] sm:$0xff]
      %v1637 = vsel %vm1605, %v1580, %v1636
      %1638 = vst [vmem:[#allocation2 + $0x50] sm:$0xff] %v1637
      %v1639 = vld [vmem:[#allocation2 + $0x58] sm:$0xff]
      %v1640 = vsel %vm1605, %v1582, %v1639
      %1641 = vst [vmem:[#allocation2 + $0x58] sm:$0xff] %v1640
      %v1642 = vld [vmem:[#allocation2 + $0x60] sm:$0xff]
      %v1643 = vsel %vm1605, %v1584, %v1642
      %1644 = vst [vmem:[#allocation2 + $0x60] sm:$0xff] %v1643
      %v1645 = vld [vmem:[#allocation2 + $0x68] sm:$0xff]
      %v1646 = vsel %vm1605, %v1586, %v1645
      %1647 = vst [vmem:[#allocation2 + $0x68] sm:$0xff] %v1646
      %v1648 = vld [vmem:[#allocation2 + $0x70] sm:$0xff]
      %v1649 = vsel %vm1605, %v1588, %v1648
      %1650 = vst [vmem:[#allocation2 + $0x70] sm:$0xff] %v1649
      %v1651 = vld [vmem:[#allocation2] sm:$0xff]
      %v1652 = vld [vmem:[#allocation2 + $0x8] sm:$0xff]
      %v1653 = vld [vmem:[#allocation2 + $0x10] sm:$0xff]
      %v1654 = vld [vmem:[#allocation2 + $0x18] sm:$0xff]
      %v1655 = vld [vmem:[#allocation2 + $0x20] sm:$0xff]
      %v1656 = vld [vmem:[#allocation2 + $0x28] sm:$0xff]
      %v1657 = vld [vmem:[#allocation2 + $0x30] sm:$0xff]
      %v1658 = vld [vmem:[#allocation2 + $0x38] sm:$0xff]
      %v1659 = vld [vmem:[#allocation2 + $0x40] sm:$0xff]
      %v1660 = vld [vmem:[#allocation2 + $0x48] sm:$0xff]
      %v1661 = vld [vmem:[#allocation2 + $0x50] sm:$0xff]
      %v1662 = vld [vmem:[#allocation2 + $0x58] sm:$0xff]
      %v1663 = vld [vmem:[#allocation2 + $0x60] sm:$0xff]
      %v1664 = vld [vmem:[#allocation2 + $0x68] sm:$0xff]
      %v1665 = vld [vmem:[#allocation2 + $0x70] sm:$0xff]
      %v1666 = vld [vmem:[#allocation2 + $0x78] sm:$0xff]
      %v1667 = vld [vmem:[%s3] sm:$0xf]
      %v1668 = vld [vmem:[%s3 + $0x4] sm:$0xf]
      %v1669 = vld [vmem:[%s3 + $0x8] sm:$0xf]
      %v1670 = vld [vmem:[%s3 + $0xc] sm:$0xf]
      %v1671 = vld [vmem:[%s3 + $0x10] sm:$0x3]
      %v1672 = vld [vmem:[%s4] sm:$0x1]
      %v1674 = vlaneseq
      %v1675 = vshrl.u32 %v1674, 7
      %v1676 = vsub.s32 0, %v1675
      %v1677 = vrot.slane %v1672, %v1676
      %v1684 = vunpack.c.l.b16 %v1667
      %v1685 = vunpack.c.l.b16 %v1668
      %v1686 = vunpack.c.l.b16 %v1669
      %v1687 = vunpack.c.l.b16 %v1670
      %v1688 = vunpack.c.l.b16 %v1671
      %v1689 = vpack.c.b16 %v1685, %v1684
      %v1690 = vpack.c.b16 %v1687, %v1686
      %v1691 = vpack.c.b16 %v1688, %v1688
      %vm1694 = vcmask 293888
      %v1696 = vsel %vm1694, %v1651, 0
      %v1699 = vsel %vm1694, %v1652, 0
      %v1702 = vsel %vm1694, %v1653, 0
      %v1705 = vsel %vm1694, %v1654, 0
      %v1708 = vsel %vm1694, %v1655, 0
      %v1711 = vsel %vm1694, %v1656, 0
      %v1714 = vsel %vm1694, %v1657, 0
      %v1717 = vsel %vm1694, %v1658, 0
      %v1720 = vsel %vm1694, %v1659, 0
      %v1723 = vsel %vm1694, %v1660, 0
      %v1726 = vsel %vm1694, %v1661, 0
      %v1729 = vsel %vm1694, %v1662, 0
      %v1732 = vsel %vm1694, %v1663, 0
      %v1735 = vsel %vm1694, %v1664, 0
      %v1738 = vsel %vm1694, %v1665, 0
      %v1741 = vsel %vm1694, %v1666, 0
      %vm1743 = vcmask 1041408
      %v1745 = vsel %vm1743, %v1691, 0
      %1747 = vmatprep.subr.bf16.mxu0 0
      %1748 = vmatpush1.bf16.msra.mxu0 %v1689
      %1749 = vmatprep.subr.bf16.mxu0 0
      %1750 = vmatpush1.bf16.msra.mxu0 %v1690
      %1751 = vmatprep.subr.bf16.mxu0 0
      %1752 = vmatpush1.bf16.msra.mxu0 %v1745
      %1753 = vmatprep.subr.bf16.mxu0 0
      %1754 = vmatpush1.bf16.msra.mxu0 0
      %1755 = vmatprep.subr.bf16.mxu0 0
      %1756 = vmatpush1.bf16.msra.mxu0 0
      %1757 = vmatprep.subr.bf16.mxu0 0
      %1758 = vmatpush1.bf16.msra.mxu0 0
      %1759 = vmatprep.subr.bf16.mxu0 0
      %1760 = vmatpush1.bf16.msra.mxu0 0
      %1761 = vmatprep.subr.bf16.mxu0 0
      %1762 = vmatpush1.bf16.msra.mxu0 0
      %1763 = vmatprep.subr.bf16.mxu0 0
      %1764 = vmatpush1.bf16.msra.mxu0 0
      %1765 = vmatprep.subr.bf16.mxu0 0
      %1766 = vmatpush1.bf16.msra.mxu0 0
      %1767 = vmatprep.subr.bf16.mxu0 0
      %1768 = vmatpush1.bf16.msra.mxu0 0
      %1769 = vmatprep.subr.bf16.mxu0 0
      %1770 = vmatpush1.bf16.msra.mxu0 0
      %1771 = vmatprep.subr.bf16.mxu0 0
      %1772 = vmatpush1.bf16.msra.mxu0 0
      %1773 = vmatprep.subr.bf16.mxu0 0
      %1774 = vmatpush1.bf16.msra.mxu0 0
      %1775 = vmatprep.subr.bf16.mxu0 0
      %1776 = vmatpush1.bf16.msra.mxu0 0
      %1777 = vmatprep.subr.bf16.mxu0 0
      %1778 = vmatpush1.bf16.msra.mxu0 0
      %1779 = vmatprep.mubr.bf16.mxu0 0
      %1780 = vmatmul.mubr.bf16.gmra.mrb[0].mxu0 %v1696
      %v1781 = vpop.f32.mrb[0].mxu0
      %v1782 = vadd.f32 %v1677, %v1781
      %v1783 = vpop.f32.mrb[0].mxu0
      %v1784 = vpop.f32.mrb[0].mxu0
      %v1785 = vadd.f32 %v1677, %v1784
      %v1786 = vpop.f32.mrb[0].mxu0
      %1787 = vmatprep.mubr.bf16.mxu0 0
      %1788 = vmatmul.mubr.bf16.gmra.mrb[0].mxu0 %v1699
      %v1789 = vpop.f32.mrb[0].mxu0
      %v1790 = vadd.f32 %v1677, %v1789
      %v1791 = vpop.f32.mrb[0].mxu0
      %v1792 = vpop.f32.mrb[0].mxu0
      %v1793 = vadd.f32 %v1677, %v1792
      %v1794 = vpop.f32.mrb[0].mxu0
      %1795 = vmatprep.mubr.bf16.mxu0 0
      %1796 = vmatmul.mubr.bf16.gmra.mrb[0].mxu0 %v1702
      %v1797 = vpop.f32.mrb[0].mxu0
      %v1798 = vadd.f32 %v1677, %v1797
      %v1799 = vpop.f32.mrb[0].mxu0
      %v1800 = vpop.f32.mrb[0].mxu0
      %v1801 = vadd.f32 %v1677, %v1800
      %v1802 = vpop.f32.mrb[0].mxu0
      %1803 = vmatprep.mubr.bf16.mxu0 0
      %1804 = vmatmul.mubr.bf16.gmra.mrb[0].mxu0 %v1705
      %v1805 = vpop.f32.mrb[0].mxu0
      %v1806 = vadd.f32 %v1677, %v1805
      %v1807 = vpop.f32.mrb[0].mxu0
      %v1808 = vpop.f32.mrb[0].mxu0
      %v1809 = vadd.f32 %v1677, %v1808
      %v1810 = vpop.f32.mrb[0].mxu0
      %1811 = vmatprep.mubr.bf16.mxu0 0
      %1812 = vmatmul.mubr.bf16.gmra.mrb[0].mxu0 %v1708
      %v1813 = vpop.f32.mrb[0].mxu0
      %v1814 = vadd.f32 %v1677, %v1813
      %v1815 = vpop.f32.mrb[0].mxu0
      %v1816 = vpop.f32.mrb[0].mxu0
      %v1817 = vadd.f32 %v1677, %v1816
      %v1818 = vpop.f32.mrb[0].mxu0
      %1819 = vmatprep.mubr.bf16.mxu0 0
      %1820 = vmatmul.mubr.bf16.gmra.mrb[0].mxu0 %v1711
      %v1821 = vpop.f32.mrb[0].mxu0
      %v1822 = vadd.f32 %v1677, %v1821
      %v1823 = vpop.f32.mrb[0].mxu0
      %v1824 = vpop.f32.mrb[0].mxu0
      %v1825 = vadd.f32 %v1677, %v1824
      %v1826 = vpop.f32.mrb[0].mxu0
      %1827 = vmatprep.mubr.bf16.mxu0 0
      %1828 = vmatmul.mubr.bf16.gmra.mrb[0].mxu0 %v1714
      %v1829 = vpop.f32.mrb[0].mxu0
      %v1830 = vadd.f32 %v1677, %v1829
      %v1831 = vpop.f32.mrb[0].mxu0
      %v1832 = vpop.f32.mrb[0].mxu0
      %v1833 = vadd.f32 %v1677, %v1832
      %v1834 = vpop.f32.mrb[0].mxu0
      %1835 = vmatprep.mubr.bf16.mxu0 0
      %1836 = vmatmul.mubr.bf16.gmra.mrb[0].mxu0 %v1717
      %v1837 = vpop.f32.mrb[0].mxu0
      %v1838 = vadd.f32 %v1677, %v1837
      %v1839 = vpop.f32.mrb[0].mxu0
      %v1840 = vpop.f32.mrb[0].mxu0
      %v1841 = vadd.f32 %v1677, %v1840
      %v1842 = vpop.f32.mrb[0].mxu0
      %1843 = vmatprep.mubr.bf16.mxu0 0
      %1844 = vmatmul.mubr.bf16.gmra.mrb[0].mxu0 %v1720
      %v1845 = vpop.f32.mrb[0].mxu0
      %v1846 = vadd.f32 %v1677, %v1845
      %v1847 = vpop.f32.mrb[0].mxu0
      %v1848 = vpop.f32.mrb[0].mxu0
      %v1849 = vadd.f32 %v1677, %v1848
      %v1850 = vpop.f32.mrb[0].mxu0
      %1851 = vmatprep.mubr.bf16.mxu0 0
      %1852 = vmatmul.mubr.bf16.gmra.mrb[0].mxu0 %v1723
      %v1853 = vpop.f32.mrb[0].mxu0
      %v1854 = vadd.f32 %v1677, %v1853
      %v1855 = vpop.f32.mrb[0].mxu0
      %v1856 = vpop.f32.mrb[0].mxu0
      %v1857 = vadd.f32 %v1677, %v1856
      %v1858 = vpop.f32.mrb[0].mxu0
      %1859 = vmatprep.mubr.bf16.mxu0 0
      %1860 = vmatmul.mubr.bf16.gmra.mrb[0].mxu0 %v1726
      %v1861 = vpop.f32.mrb[0].mxu0
      %v1862 = vadd.f32 %v1677, %v1861
      %v1863 = vpop.f32.mrb[0].mxu0
      %v1864 = vpop.f32.mrb[0].mxu0
      %v1865 = vadd.f32 %v1677, %v1864
      %v1866 = vpop.f32.mrb[0].mxu0
      %1867 = vmatprep.mubr.bf16.mxu0 0
      %1868 = vmatmul.mubr.bf16.gmra.mrb[0].mxu0 %v1729
      %v1869 = vpop.f32.mrb[0].mxu0
      %v1870 = vadd.f32 %v1677, %v1869
      %v1871 = vpop.f32.mrb[0].mxu0
      %v1872 = vpop.f32.mrb[0].mxu0
      %v1873 = vadd.f32 %v1677, %v1872
      %v1874 = vpop.f32.mrb[0].mxu0
      %1875 = vmatprep.mubr.bf16.mxu0 0
      %1876 = vmatmul.mubr.bf16.gmra.mrb[0].mxu0 %v1732
      %v1877 = vpop.f32.mrb[0].mxu0
      %v1878 = vadd.f32 %v1677, %v1877
      %v1879 = vpop.f32.mrb[0].mxu0
      %v1880 = vpop.f32.mrb[0].mxu0
      %v1881 = vadd.f32 %v1677, %v1880
      %v1882 = vpop.f32.mrb[0].mxu0
      %1883 = vmatprep.mubr.bf16.mxu0 0
      %1884 = vmatmul.mubr.bf16.gmra.mrb[0].mxu0 %v1735
      %v1885 = vpop.f32.mrb[0].mxu0
      %v1886 = vadd.f32 %v1677, %v1885
      %v1887 = vpop.f32.mrb[0].mxu0
      %v1888 = vpop.f32.mrb[0].mxu0
      %v1889 = vadd.f32 %v1677, %v1888
      %v1890 = vpop.f32.mrb[0].mxu0
      %1891 = vmatprep.mubr.bf16.mxu0 0
      %1892 = vmatmul.mubr.bf16.gmra.mrb[0].mxu0 %v1738
      %v1893 = vpop.f32.mrb[0].mxu0
      %v1894 = vadd.f32 %v1677, %v1893
      %v1895 = vpop.f32.mrb[0].mxu0
      %v1896 = vpop.f32.mrb[0].mxu0
      %v1897 = vadd.f32 %v1677, %v1896
      %v1898 = vpop.f32.mrb[0].mxu0
      %1899 = vmatprep.mubr.bf16.mxu0 0
      %1900 = vmatmul.mubr.bf16.gmra.mrb[0].mxu0 %v1741
      %v1901 = vpop.f32.mrb[0].mxu0
      %v1902 = vadd.f32 %v1677, %v1901
      %v1903 = vpop.f32.mrb[0].mxu0
      %v1904 = vpop.f32.mrb[0].mxu0
      %v1905 = vadd.f32 %v1677, %v1904
      %v1906 = vpop.f32.mrb[0].mxu0
      %1907 = vdwg.mxu0
      %v1908 = vpack.c.bf16 %v1785, %v1782
      %v1909 = vpack.c.bf16 %v1793, %v1790
      %v1910 = vpack.c.bf16 %v1801, %v1798
      %v1911 = vpack.c.bf16 %v1809, %v1806
      %v1912 = vpack.c.bf16 %v1817, %v1814
      %v1913 = vpack.c.bf16 %v1825, %v1822
      %v1914 = vpack.c.bf16 %v1833, %v1830
      %v1915 = vpack.c.bf16 %v1841, %v1838
      %v1916 = vpack.c.bf16 %v1849, %v1846
      %v1917 = vpack.c.bf16 %v1857, %v1854
      %v1918 = vpack.c.bf16 %v1865, %v1862
      %v1919 = vpack.c.bf16 %v1873, %v1870
      %v1920 = vpack.c.bf16 %v1881, %v1878
      %v1921 = vpack.c.bf16 %v1889, %v1886
      %v1922 = vpack.c.bf16 %v1897, %v1894
      %v1923 = vpack.c.bf16 %v1905, %v1902
      %v1940 = vunpack.c.l.b16 %v1908
      %v1941 = vunpack.c.h.b16 %v1908
      %v1942 = vunpack.c.l.b16 %v1909
      %v1943 = vunpack.c.h.b16 %v1909
      %v1944 = vunpack.c.l.b16 %v1910
      %v1945 = vunpack.c.h.b16 %v1910
      %v1946 = vunpack.c.l.b16 %v1911
      %v1947 = vunpack.c.h.b16 %v1911
      %v1948 = vunpack.c.l.b16 %v1912
      %v1949 = vunpack.c.h.b16 %v1912
      %v1950 = vunpack.c.l.b16 %v1913
      %v1951 = vunpack.c.h.b16 %v1913
      %v1952 = vunpack.c.l.b16 %v1914
      %v1953 = vunpack.c.h.b16 %v1914
      %v1954 = vunpack.c.l.b16 %v1915
      %v1955 = vunpack.c.h.b16 %v1915
      %v1956 = vunpack.c.l.b16 %v1916
      %v1957 = vunpack.c.h.b16 %v1916
      %v1958 = vunpack.c.l.b16 %v1917
      %v1959 = vunpack.c.h.b16 %v1917
      %v1960 = vunpack.c.l.b16 %v1918
      %v1961 = vunpack.c.h.b16 %v1918
      %v1962 = vunpack.c.l.b16 %v1919
      %v1963 = vunpack.c.h.b16 %v1919
      %v1964 = vunpack.c.l.b16 %v1920
      %v1965 = vunpack.c.h.b16 %v1920
      %v1966 = vunpack.c.l.b16 %v1921
      %v1967 = vunpack.c.h.b16 %v1921
      %v1968 = vunpack.c.l.b16 %v1922
      %v1969 = vunpack.c.h.b16 %v1922
      %v1970 = vunpack.c.l.b16 %v1923
      %v1971 = vunpack.c.h.b16 %v1923
      %v1972 = vpack.c.b16 %v1940, %v1940
      %v1973 = vpack.c.b16 %v1941, %v1941
      %v1974 = vpack.c.b16 %v1942, %v1942
      %v1975 = vpack.c.b16 %v1943, %v1943
      %v1976 = vpack.c.b16 %v1944, %v1944
      %v1977 = vpack.c.b16 %v1945, %v1945
      %v1978 = vpack.c.b16 %v1946, %v1946
      %v1979 = vpack.c.b16 %v1947, %v1947
      %v1980 = vpack.c.b16 %v1948, %v1948
      %v1981 = vpack.c.b16 %v1949, %v1949
      %v1982 = vpack.c.b16 %v1950, %v1950
      %v1983 = vpack.c.b16 %v1951, %v1951
      %v1984 = vpack.c.b16 %v1952, %v1952
      %v1985 = vpack.c.b16 %v1953, %v1953
      %v1986 = vpack.c.b16 %v1954, %v1954
      %v1987 = vpack.c.b16 %v1955, %v1955
      %v1988 = vpack.c.b16 %v1956, %v1956
      %v1989 = vpack.c.b16 %v1957, %v1957
      %v1990 = vpack.c.b16 %v1958, %v1958
      %v1991 = vpack.c.b16 %v1959, %v1959
      %v1992 = vpack.c.b16 %v1960, %v1960
      %v1993 = vpack.c.b16 %v1961, %v1961
      %v1994 = vpack.c.b16 %v1962, %v1962
      %v1995 = vpack.c.b16 %v1963, %v1963
      %v1996 = vpack.c.b16 %v1964, %v1964
      %v1997 = vpack.c.b16 %v1965, %v1965
      %v1998 = vpack.c.b16 %v1966, %v1966
      %v1999 = vpack.c.b16 %v1967, %v1967
      %v2000 = vpack.c.b16 %v1968, %v1968
      %v2001 = vpack.c.b16 %v1969, %v1969
      %v2002 = vpack.c.b16 %v1970, %v1970
      %v2003 = vpack.c.b16 %v1971, %v1971
      %vm2036 = vcmask 27648
      %2037 = vst.msk [vmem:[%s258] sm:$0xf] %vm2036, %v1972
      %2038 = vst.msk [vmem:[%s258 + $0x4] sm:$0xf] %vm2036, %v1973
      %2039 = vst.msk [vmem:[%s258 + $0x8] sm:$0xf] %vm2036, %v1974
      %2040 = vst.msk [vmem:[%s258 + $0xc] sm:$0xf] %vm2036, %v1975
      %2041 = vst.msk [vmem:[%s258 + $0x10] sm:$0xf] %vm2036, %v1976
      %2042 = vst.msk [vmem:[%s258 + $0x14] sm:$0xf] %vm2036, %v1977
      %2043 = vst.msk [vmem:[%s258 + $0x18] sm:$0xf] %vm2036, %v1978
      %2044 = vst.msk [vmem:[%s258 + $0x1c] sm:$0xf] %vm2036, %v1979
      %2045 = vst.msk [vmem:[%s258 + $0x20] sm:$0xf] %vm2036, %v1980
      %2046 = vst.msk [vmem:[%s258 + $0x24] sm:$0xf] %vm2036, %v1981
      %2047 = vst.msk [vmem:[%s258 + $0x28] sm:$0xf] %vm2036, %v1982
      %2048 = vst.msk [vmem:[%s258 + $0x2c] sm:$0xf] %vm2036, %v1983
      %2049 = vst.msk [vmem:[%s258 + $0x30] sm:$0xf] %vm2036, %v1984
      %2050 = vst.msk [vmem:[%s258 + $0x34] sm:$0xf] %vm2036, %v1985
      %2051 = vst.msk [vmem:[%s258 + $0x38] sm:$0xf] %vm2036, %v1986
      %2052 = vst.msk [vmem:[%s258 + $0x3c] sm:$0xf] %vm2036, %v1987
      %2053 = vst.msk [vmem:[%s258 + $0x40] sm:$0xf] %vm2036, %v1988
      %2054 = vst.msk [vmem:[%s258 + $0x44] sm:$0xf] %vm2036, %v1989
      %2055 = vst.msk [vmem:[%s258 + $0x48] sm:$0xf] %vm2036, %v1990
      %2056 = vst.msk [vmem:[%s258 + $0x4c] sm:$0xf] %vm2036, %v1991
      %2057 = vst.msk [vmem:[%s258 + $0x50] sm:$0xf] %vm2036, %v1992
      %2058 = vst.msk [vmem:[%s258 + $0x54] sm:$0xf] %vm2036, %v1993
      %2059 = vst.msk [vmem:[%s258 + $0x58] sm:$0xf] %vm2036, %v1994
      %2060 = vst.msk [vmem:[%s258 + $0x5c] sm:$0xf] %vm2036, %v1995
      %2061 = vst.msk [vmem:[%s258 + $0x60] sm:$0xf] %vm2036, %v1996
      %2062 = vst.msk [vmem:[%s258 + $0x64] sm:$0xf] %vm2036, %v1997
      %2063 = vst.msk [vmem:[%s258 + $0x68] sm:$0xf] %vm2036, %v1998
      %2064 = vst.msk [vmem:[%s258 + $0x6c] sm:$0xf] %vm2036, %v1999
      %2065 = vst.msk [vmem:[%s258 + $0x70] sm:$0xf] %vm2036, %v2000
      %2066 = vst.msk [vmem:[%s258 + $0x74] sm:$0xf] %vm2036, %v2001
      %2067 = vst.msk [vmem:[%s258 + $0x78] sm:$0xf] %vm2036, %v2002
      %2068 = vst.msk [vmem:[%s258 + $0x7c] sm:$0xf] %vm2036, %v2003
      %v2069 = vsel %vm454, %v1782, 0.0
      %v2070 = vsel %vm454, %v1785, 0.0
      %v2071 = vadd.f32 %v2069, %v2070
      %v2072 = vsel %vm454, %v1790, 0.0
      %v2073 = vadd.f32 %v2071, %v2072
      %v2074 = vsel %vm454, %v1793, 0.0
      %v2075 = vadd.f32 %v2073, %v2074
      %v2076 = vsel %vm454, %v1798, 0.0
      %v2077 = vadd.f32 %v2075, %v2076
      %v2078 = vsel %vm454, %v1801, 0.0
      %v2079 = vadd.f32 %v2077, %v2078
      %v2080 = vsel %vm454, %v1806, 0.0
      %v2081 = vadd.f32 %v2079, %v2080
      %v2082 = vsel %vm454, %v1809, 0.0
      %v2083 = vadd.f32 %v2081, %v2082
      %v2084 = vsel %vm454, %v1814, 0.0
      %v2085 = vadd.f32 %v2083, %v2084
      %v2086 = vsel %vm454, %v1817, 0.0
      %v2087 = vadd.f32 %v2085, %v2086
      %v2088 = vsel %vm454, %v1822, 0.0
      %v2089 = vadd.f32 %v2087, %v2088
      %v2090 = vsel %vm454, %v1825, 0.0
      %v2091 = vadd.f32 %v2089, %v2090
      %v2092 = vsel %vm454, %v1830, 0.0
      %v2093 = vadd.f32 %v2091, %v2092
      %v2094 = vsel %vm454, %v1833, 0.0
      %v2095 = vadd.f32 %v2093, %v2094
      %v2096 = vsel %vm454, %v1838, 0.0
      %v2097 = vadd.f32 %v2095, %v2096
      %v2098 = vsel %vm454, %v1841, 0.0
      %v2099 = vadd.f32 %v2097, %v2098
      %v2100 = vsel %vm454, %v1846, 0.0
      %v2101 = vadd.f32 %v2099, %v2100
      %v2102 = vsel %vm454, %v1849, 0.0
      %v2103 = vadd.f32 %v2101, %v2102
      %v2104 = vsel %vm454, %v1854, 0.0
      %v2105 = vadd.f32 %v2103, %v2104
      %v2106 = vsel %vm454, %v1857, 0.0
      %v2107 = vadd.f32 %v2105, %v2106
      %v2108 = vsel %vm454, %v1862, 0.0
      %v2109 = vadd.f32 %v2107, %v2108
      %v2110 = vsel %vm454, %v1865, 0.0
      %v2111 = vadd.f32 %v2109, %v2110
      %v2112 = vsel %vm454, %v1870, 0.0
      %v2113 = vadd.f32 %v2111, %v2112
      %v2114 = vsel %vm454, %v1873, 0.0
      %v2115 = vadd.f32 %v2113, %v2114
      %v2116 = vsel %vm454, %v1878, 0.0
      %v2117 = vadd.f32 %v2115, %v2116
      %v2118 = vsel %vm454, %v1881, 0.0
      %v2119 = vadd.f32 %v2117, %v2118
      %v2120 = vsel %vm454, %v1886, 0.0
      %v2121 = vadd.f32 %v2119, %v2120
      %v2122 = vsel %vm454, %v1889, 0.0
      %v2123 = vadd.f32 %v2121, %v2122
      %v2124 = vsel %vm454, %v1894, 0.0
      %v2125 = vadd.f32 %v2123, %v2124
      %v2126 = vsel %vm454, %v1897, 0.0
      %v2127 = vadd.f32 %v2125, %v2126
      %v2128 = vsel %vm454, %v1902, 0.0
      %v2129 = vadd.f32 %v2127, %v2128
      %v2130 = vsel %vm454, %v1905, 0.0
      %v2131 = vadd.f32 %v2129, %v2130
      %v2132 = vrot.slane %v2131, 4
      %v2133 = vadd.f32 %v2131, %v2132
      %v2134 = vrot.slane %v2133, 2
      %v2135 = vadd.f32 %v2133, %v2134
      %v2136 = vrot.slane %v2135, 1
      %v2137 = vadd.f32 %v2135, %v2136
      %vm2138 = vcmask 24576
      %2139 = vst.msk [vmem:[%s262] sm:$0x1] %vm2138, %v2137
      %v2140 = vmul.f32 %v1782, %v1782
      %v2141 = vmul.f32 %v1785, %v1785
      %v2142 = vmul.f32 %v1790, %v1790
      %v2143 = vmul.f32 %v1793, %v1793
      %v2144 = vmul.f32 %v1798, %v1798
      %v2145 = vmul.f32 %v1801, %v1801
      %v2146 = vmul.f32 %v1806, %v1806
      %v2147 = vmul.f32 %v1809, %v1809
      %v2148 = vmul.f32 %v1814, %v1814
      %v2149 = vmul.f32 %v1817, %v1817
      %v2150 = vmul.f32 %v1822, %v1822
      %v2151 = vmul.f32 %v1825, %v1825
      %v2152 = vmul.f32 %v1830, %v1830
      %v2153 = vmul.f32 %v1833, %v1833
      %v2154 = vmul.f32 %v1838, %v1838
      %v2155 = vmul.f32 %v1841, %v1841
      %v2156 = vmul.f32 %v1846, %v1846
      %v2157 = vmul.f32 %v1849, %v1849
      %v2158 = vmul.f32 %v1854, %v1854
      %v2159 = vmul.f32 %v1857, %v1857
      %v2160 = vmul.f32 %v1862, %v1862
      %v2161 = vmul.f32 %v1865, %v1865
      %v2162 = vmul.f32 %v1870, %v1870
      %v2163 = vmul.f32 %v1873, %v1873
      %v2164 = vmul.f32 %v1878, %v1878
      %v2165 = vmul.f32 %v1881, %v1881
      %v2166 = vmul.f32 %v1886, %v1886
      %v2167 = vmul.f32 %v1889, %v1889
      %v2168 = vmul.f32 %v1894, %v1894
      %v2169 = vmul.f32 %v1897, %v1897
      %v2170 = vmul.f32 %v1902, %v1902
      %v2171 = vmul.f32 %v1905, %v1905
      %v2172 = vsel %vm454, %v2140, 0.0
      %v2173 = vsel %vm454, %v2141, 0.0
      %v2174 = vadd.f32 %v2172, %v2173
      %v2175 = vsel %vm454, %v2142, 0.0
      %v2176 = vadd.f32 %v2174, %v2175
      %v2177 = vsel %vm454, %v2143, 0.0
      %v2178 = vadd.f32 %v2176, %v2177
      %v2179 = vsel %vm454, %v2144, 0.0
      %v2180 = vadd.f32 %v2178, %v2179
      %v2181 = vsel %vm454, %v2145, 0.0
      %v2182 = vadd.f32 %v2180, %v2181
      %v2183 = vsel %vm454, %v2146, 0.0
      %v2184 = vadd.f32 %v2182, %v2183
      %v2185 = vsel %vm454, %v2147, 0.0
      %v2186 = vadd.f32 %v2184, %v2185
      %v2187 = vsel %vm454, %v2148, 0.0
      %v2188 = vadd.f32 %v2186, %v2187
      %v2189 = vsel %vm454, %v2149, 0.0
      %v2190 = vadd.f32 %v2188, %v2189
      %v2191 = vsel %vm454, %v2150, 0.0
      %v2192 = vadd.f32 %v2190, %v2191
      %v2193 = vsel %vm454, %v2151, 0.0
      %v2194 = vadd.f32 %v2192, %v2193
      %v2195 = vsel %vm454, %v2152, 0.0
      %v2196 = vadd.f32 %v2194, %v2195
      %v2197 = vsel %vm454, %v2153, 0.0
      %v2198 = vadd.f32 %v2196, %v2197
      %v2199 = vsel %vm454, %v2154, 0.0
      %v2200 = vadd.f32 %v2198, %v2199
      %v2201 = vsel %vm454, %v2155, 0.0
      %v2202 = vadd.f32 %v2200, %v2201
      %v2203 = vsel %vm454, %v2156, 0.0
      %v2204 = vadd.f32 %v2202, %v2203
      %v2205 = vsel %vm454, %v2157, 0.0
      %v2206 = vadd.f32 %v2204, %v2205
      %v2207 = vsel %vm454, %v2158, 0.0
      %v2208 = vadd.f32 %v2206, %v2207
      %v2209 = vsel %vm454, %v2159, 0.0
      %v2210 = vadd.f32 %v2208, %v2209
      %v2211 = vsel %vm454, %v2160, 0.0
      %v2212 = vadd.f32 %v2210, %v2211
      %v2213 = vsel %vm454, %v2161, 0.0
      %v2214 = vadd.f32 %v2212, %v2213
      %v2215 = vsel %vm454, %v2162, 0.0
      %v2216 = vadd.f32 %v2214, %v2215
      %v2217 = vsel %vm454, %v2163, 0.0
      %v2218 = vadd.f32 %v2216, %v2217
      %v2219 = vsel %vm454, %v2164, 0.0
      %v2220 = vadd.f32 %v2218, %v2219
      %v2221 = vsel %vm454, %v2165, 0.0
      %v2222 = vadd.f32 %v2220, %v2221
      %v2223 = vsel %vm454, %v2166, 0.0
      %v2224 = vadd.f32 %v2222, %v2223
      %v2225 = vsel %vm454, %v2167, 0.0
      %v2226 = vadd.f32 %v2224, %v2225
      %v2227 = vsel %vm454, %v2168, 0.0
      %v2228 = vadd.f32 %v2226, %v2227
      %v2229 = vsel %vm454, %v2169, 0.0
      %v2230 = vadd.f32 %v2228, %v2229
      %v2231 = vsel %vm454, %v2170, 0.0
      %v2232 = vadd.f32 %v2230, %v2231
      %v2233 = vsel %vm454, %v2171, 0.0
      %v2234 = vadd.f32 %v2232, %v2233
      %v2235 = vrot.slane %v2234, 4
      %v2236 = vadd.f32 %v2234, %v2235
      %v2237 = vrot.slane %v2236, 2
      %v2238 = vadd.f32 %v2236, %v2237
      %v2239 = vrot.slane %v2238, 1
      %v2240 = vadd.f32 %v2238, %v2239
      %2241 = vst.msk [vmem:[%s262 + $0x1] sm:$0x1] %vm2138, %v2240
      %p2242 = scmp.lt.s32.totalorder %s18, 1
      %s2243 = scalar_select %p2242, %s18, 1
      %s2244 = smul.addr %s2243, 32
      %s2245 = smul.addr %s2244, 4
      %s2246 = scalar_lea.vmem %s5, %s2245
      %p2247 = scmp.lt.s32.totalorder %s18, 1
      %s2248 = scalar_select %p2247, %s18, 1
      %s2249 = smul.addr %s2248, 2
      %s2250 = scalar_lea.vmem %s6, %s2249
      // Predicated region
      $region41: #{up_forward.6} parent=39 // pred_check
        %p2251 = pneg %p146
      $region42: #{up_forward.6} parent=39 // pred_check_branch
        %2253 = sbr.rel (%p2251) target = $region44
      $region43: #{up_forward.6} parent=39 // pred_region
        _
      $region44: #{up_forward.6} parent=39 // pred_fallthru
        _
      // Predicated region
      $region45: #{up_forward.6} parent=39 // pred_check
        %p2254 = pneg %p172
      $region46: #{up_forward.6} parent=39 // pred_check_branch
        %2256 = sbr.rel (%p2254) target = $region48
      $region47: #{up_forward.6} parent=39 // pred_region
        _
      $region48: #{up_forward.6} parent=39 // pred_fallthru
        _
    $region40: #{up_forward.6} parent=5 // pred_fallthru
      _
    %p2257 = scmp.le.s32.totalorder 2, %s13
    // Predicated region
    $region49: #{up_forward.6} parent=5 // pred_check
      %p2258 = pneg %p2257
    $region50: #{up_forward.6} parent=5 // pred_check_branch
      %2260 = sbr.rel (%p2258) target = $region52
    $region51: #{up_forward.6} parent=5 // pred_region
      %s2261 = ssub.s32 %s13, 2
      // Predicated region
      $region53: #{up_forward.6} parent=51 // pred_check
        %p2262 = pneg %p152
      $region54: #{up_forward.6} parent=51 // pred_check_branch
        %2264 = sbr.rel (%p2262) target = $region56
      $region55: #{up_forward.6} parent=51 // pred_region
        %p2265 = scmp.lt.s32.totalorder %s19, 1
        %s2266 = scalar_select %p2265, %s19, 1
        %s2267 = smul.addr %s2266, 32
        %s2268 = smul.addr %s2267, 4
        %s2269 = scalar_lea.vmem %s5, %s2268
      $region56: #{up_forward.6} parent=51 // pred_fallthru
        _
      // Predicated region
      $region57: #{up_forward.6} parent=51 // pred_check
        %p2270 = pneg %p178
      $region58: #{up_forward.6} parent=51 // pred_check_branch
        %2272 = sbr.rel (%p2270) target = $region60
      $region59: #{up_forward.6} parent=51 // pred_region
        %p2273 = scmp.lt.s32.totalorder %s19, 1
        %s2274 = scalar_select %p2273, %s19, 1
        %s2275 = smul.addr %s2274, 2
        %s2276 = scalar_lea.vmem %s6, %s2275
      $region60: #{up_forward.6} parent=51 // pred_fallthru
        _
    $region52: #{up_forward.6} parent=5 // pred_fallthru
      _
  $region6: #{up_forward.6} parent=0 // loop_footer
    %s17 = sadd.s32 1, %s13
  $region7: #{up_forward.6} parent=0 // loop_footer_branch
    %12 = sbr.rel target = $region3
  $region8: #{up_forward.6} parent=0 // loop_exit
    _

// kernel: up_forward.5
$region0: #{up_forward.5}
  #allocation0 [shape = 'u32[]', space=smem, size = 0x4, offset = 0x4, fixed_abs, tag = 'smem constant byte address 0x4 - core index']
  #allocation1 [shape = 'u32[144,128]{1,0:T(1,128)}', space=vmem, size = 0x12000, scoped, tag = 'internal scratch']
  #allocation2 [shape = 'bf16[16,16,18]{2,1,0:T(16,128)(2,1)}', space=vmem, size = 0x10000, scoped, tag = 'scratch operand']
  #allocation3 [shape = 'bf16[16,16,18]{2,1,0:T(16,128)(2,1)}', space=vmem, size = 0x10000, scoped, tag = 'scratch operand']
  %s0 = inlined_call_operand.vmem [shape: f32[2,16,16,2], index: 0, kind: input, shape index: {}]
  %s1 = inlined_call_operand.vmem [shape: bf16[2,16,16,2], index: 1, kind: input, shape index: {}]
  %s2 = inlined_call_operand.vmem [shape: bf16[18,4], index: 2, kind: input, shape index: {}]
  %s3 = inlined_call_operand.vmem [shape: bf16[18,4], index: 3, kind: input, shape index: {}]
  %s4 = inlined_call_operand.vmem [shape: f32[1,4], index: 4, kind: input, shape index: {}]
  %s5 = inlined_call_operand.vmem [shape: bf16[2,16,16,4], index: 5, kind: output, shape index: {0}]
  %s6 = inlined_call_operand.vmem [shape: f32[2,2,4], index: 6, kind: output, shape index: {1}]
  %7 = xla_tuple %s5, %s6
  %s8 = sld [smem:[#allocation0]]
  $region61: #{up_forward.5} parent=0
    _
  %s10 = ssub.s32 1, %s8
  %s11 = scalar_select 0, %s10, %s8
  loop: start=0, step=1, limit=4
  $region2: #{up_forward.5} parent=0 // loop_pre_header
    _
  $region3: #{up_forward.5} parent=0 // loop_header
    %s13 = sphi 0, %s17
    %p14 = scmp.ge.s32.totalorder %s13, 4
    %s23 = sphi 0, %s25
    %s26 = sphi 0, %s23
    %s27 = sphi 0, %s26
    %s43 = sphi 0, %s27
    %s49 = sphi 0, %s51
    %s52 = sphi 0, %s49
    %s53 = sphi 0, %s52
    %s69 = sphi 0, %s53
    %s73 = sphi 0, %s73
    %s75 = sphi 0, %s73
    %s76 = sphi 0, %s75
    %s90 = sphi 0, %s76
    %s94 = sphi 0, %s94
    %s96 = sphi 0, %s94
    %s97 = sphi 0, %s96
    %s111 = sphi 0, %s97
    %s115 = sphi 0, %s115
    %s117 = sphi 0, %s115
    %s118 = sphi 0, %s117
    %s132 = sphi 0, %s118
    %s138 = sphi 0, %s140
    %s141 = sphi 0, %s138
    %s142 = sphi 0, %s141
    %s158 = sphi 0, %s142
    %s164 = sphi 0, %s166
    %s167 = sphi 0, %s164
    %s168 = sphi 0, %s167
    %s184 = sphi 0, %s168
  $region4: #{up_forward.5} parent=0 // loop_header_branch
    %16 = sbr.rel (%p14) target = $region8
  $region5: #{up_forward.5} parent=0 // loop_body
    %s18 = ssub.s32 %s13, 1
    %s19 = ssub.s32 %s13, 2
    %s20 = sadd.s32 %s13, 1
    %s21 = ssub.s32 %s13, %s20
    %p22 = scmp.eq.s32.totalorder %s21, 0
    %s24 = sadd.s32 %s23, 1
    %s25 = scalar_select %p22, %s23, %s24
    %p28 = pneg %p22
    %p29 = scmp.eq.s32.totalorder %s13, 1
    %p30 = por %p28, %p29
    %p31 = scmp.ne.s32.totalorder %s23, %s26
    %p32 = scmp.eq.s32.totalorder %s13, 0
    %p33 = por %p31, %p32
    %p34 = scmp.ne.s32.totalorder %s23, %s26
    %p35 = scmp.eq.s32.totalorder %s18, 1
    %p36 = por %p34, %p35
    %p37 = scmp.ne.s32.totalorder %s26, %s27
    %p38 = scmp.eq.s32.totalorder %s18, 0
    %p39 = por %p37, %p38
    %p40 = scmp.ne.s32.totalorder %s26, %s27
    %p41 = scmp.eq.s32.totalorder %s19, 1
    %p42 = por %p40, %p41
    %p44 = scmp.ne.s32.totalorder %s27, %s43
    %p45 = scmp.eq.s32.totalorder %s19, 0
    %p46 = por %p44, %p45
    %s47 = ssub.s32 %s13, %s20
    %p48 = scmp.eq.s32.totalorder %s47, 0
    %s50 = sadd.s32 %s49, 1
    %s51 = scalar_select %p48, %s49, %s50
    %p54 = pneg %p48
    %p55 = scmp.eq.s32.totalorder %s13, 1
    %p56 = por %p54, %p55
    %p57 = scmp.ne.s32.totalorder %s49, %s52
    %p58 = scmp.eq.s32.totalorder %s13, 0
    %p59 = por %p57, %p58
    %p60 = scmp.ne.s32.totalorder %s49, %s52
    %p61 = scmp.eq.s32.totalorder %s18, 1
    %p62 = por %p60, %p61
    %p63 = scmp.ne.s32.totalorder %s52, %s53
    %p64 = scmp.eq.s32.totalorder %s18, 0
    %p65 = por %p63, %p64
    %p66 = scmp.ne.s32.totalorder %s52, %s53
    %p67 = scmp.eq.s32.totalorder %s19, 1
    %p68 = por %p66, %p67
    %p70 = scmp.ne.s32.totalorder %s53, %s69
    %p71 = scmp.eq.s32.totalorder %s19, 0
    %p72 = por %p70, %p71
    %s74 = sadd.s32 %s73, 1
    %p77 = scmp.eq.s32.totalorder %s13, 1
    %p78 = scmp.ne.s32.totalorder %s73, %s75
    %p79 = scmp.eq.s32.totalorder %s13, 0
    %p80 = por %p78, %p79
    %p81 = scmp.ne.s32.totalorder %s73, %s75
    %p82 = scmp.eq.s32.totalorder %s18, 1
    %p83 = por %p81, %p82
    %p84 = scmp.ne.s32.totalorder %s75, %s76
    %p85 = scmp.eq.s32.totalorder %s18, 0
    %p86 = por %p84, %p85
    %p87 = scmp.ne.s32.totalorder %s75, %s76
    %p88 = scmp.eq.s32.totalorder %s19, 1
    %p89 = por %p87, %p88
    %p91 = scmp.ne.s32.totalorder %s76, %s90
    %p92 = scmp.eq.s32.totalorder %s19, 0
    %p93 = por %p91, %p92
    %s95 = sadd.s32 %s94, 1
    %p98 = scmp.eq.s32.totalorder %s13, 1
    %p99 = scmp.ne.s32.totalorder %s94, %s96
    %p100 = scmp.eq.s32.totalorder %s13, 0
    %p101 = por %p99, %p100
    %p102 = scmp.ne.s32.totalorder %s94, %s96
    %p103 = scmp.eq.s32.totalorder %s18, 1
    %p104 = por %p102, %p103
    %p105 = scmp.ne.s32.totalorder %s96, %s97
    %p106 = scmp.eq.s32.totalorder %s18, 0
    %p107 = por %p105, %p106
    %p108 = scmp.ne.s32.totalorder %s96, %s97
    %p109 = scmp.eq.s32.totalorder %s19, 1
    %p110 = por %p108, %p109
    %p112 = scmp.ne.s32.totalorder %s97, %s111
    %p113 = scmp.eq.s32.totalorder %s19, 0
    %p114 = por %p112, %p113
    %s116 = sadd.s32 %s115, 1
    %p119 = scmp.eq.s32.totalorder %s13, 1
    %p120 = scmp.ne.s32.totalorder %s115, %s117
    %p121 = scmp.eq.s32.totalorder %s13, 0
    %p122 = por %p120, %p121
    %p123 = scmp.ne.s32.totalorder %s115, %s117
    %p124 = scmp.eq.s32.totalorder %s18, 1
    %p125 = por %p123, %p124
    %p126 = scmp.ne.s32.totalorder %s117, %s118
    %p127 = scmp.eq.s32.totalorder %s18, 0
    %p128 = por %p126, %p127
    %p129 = scmp.ne.s32.totalorder %s117, %s118
    %p130 = scmp.eq.s32.totalorder %s19, 1
    %p131 = por %p129, %p130
    %p133 = scmp.ne.s32.totalorder %s118, %s132
    %p134 = scmp.eq.s32.totalorder %s19, 0
    %p135 = por %p133, %p134
    %s136 = ssub.s32 %s13, %s20
    %p137 = scmp.eq.s32.totalorder %s136, 0
    %s139 = sadd.s32 %s138, 1
    %s140 = scalar_select %p137, %s138, %s139
    %p143 = pneg %p137
    %p144 = scmp.eq.s32.totalorder %s13, 1
    %p145 = por %p143, %p144
    %p146 = scmp.ne.s32.totalorder %s138, %s141
    %p147 = scmp.eq.s32.totalorder %s13, 0
    %p148 = por %p146, %p147
    %p149 = scmp.ne.s32.totalorder %s138, %s141
    %p150 = scmp.eq.s32.totalorder %s18, 1
    %p151 = por %p149, %p150
    %p152 = scmp.ne.s32.totalorder %s141, %s142
    %p153 = scmp.eq.s32.totalorder %s18, 0
    %p154 = por %p152, %p153
    %p155 = scmp.ne.s32.totalorder %s141, %s142
    %p156 = scmp.eq.s32.totalorder %s19, 1
    %p157 = por %p155, %p156
    %p159 = scmp.ne.s32.totalorder %s142, %s158
    %p160 = scmp.eq.s32.totalorder %s19, 0
    %p161 = por %p159, %p160
    %s162 = ssub.s32 %s13, %s20
    %p163 = scmp.eq.s32.totalorder %s162, 0
    %s165 = sadd.s32 %s164, 1
    %s166 = scalar_select %p163, %s164, %s165
    %p169 = pneg %p163
    %p170 = scmp.eq.s32.totalorder %s13, 1
    %p171 = por %p169, %p170
    %p172 = scmp.ne.s32.totalorder %s164, %s167
    %p173 = scmp.eq.s32.totalorder %s13, 0
    %p174 = por %p172, %p173
    %p175 = scmp.ne.s32.totalorder %s164, %s167
    %p176 = scmp.eq.s32.totalorder %s18, 1
    %p177 = por %p175, %p176
    %p178 = scmp.ne.s32.totalorder %s167, %s168
    %p179 = scmp.eq.s32.totalorder %s18, 0
    %p180 = por %p178, %p179
    %p181 = scmp.ne.s32.totalorder %s167, %s168
    %p182 = scmp.eq.s32.totalorder %s19, 1
    %p183 = por %p181, %p182
    %p185 = scmp.ne.s32.totalorder %s168, %s184
    %p186 = scmp.eq.s32.totalorder %s19, 0
    %p187 = por %p185, %p186
    %p188 = scmp.le.s32.totalorder 1, %s13
    %p189 = scmp.lt.s32.totalorder %s13, 3
    %p190 = pnand %p188, %p189
    %p191 = pneg %p190
    // Predicated region
    $region9: #{up_forward.5} parent=5 // pred_check
      _
    $region10: #{up_forward.5} parent=5 // pred_check_branch
      %193 = sbr.rel (%p190) target = $region12
    $region11: #{up_forward.5} parent=5 // pred_region
      %s194 = ssub.s32 %s13, 1
      // Predicated region
      $region13: #{up_forward.5} parent=11 // pred_check
        %p195 = pneg %p86
      $region14: #{up_forward.5} parent=11 // pred_check_branch
        %197 = sbr.rel (%p195) target = $region16
      $region15: #{up_forward.5} parent=11 // pred_region
        _
      $region16: #{up_forward.5} parent=11 // pred_fallthru
        _
      // Predicated region
      $region17: #{up_forward.5} parent=11 // pred_check
        %p198 = pneg %p107
      $region18: #{up_forward.5} parent=11 // pred_check_branch
        %200 = sbr.rel (%p198) target = $region20
      $region19: #{up_forward.5} parent=11 // pred_region
        _
      $region20: #{up_forward.5} parent=11 // pred_fallthru
        _
      // Predicated region
      $region21: #{up_forward.5} parent=11 // pred_check
        %p201 = pneg %p128
      $region22: #{up_forward.5} parent=11 // pred_check_branch
        %203 = sbr.rel (%p201) target = $region24
      $region23: #{up_forward.5} parent=11 // pred_region
        _
      $region24: #{up_forward.5} parent=11 // pred_fallthru
        _
    $region12: #{up_forward.5} parent=5 // pred_fallthru
      _
    %p204 = scmp.lt.s32.totalorder %s13, 2
    // Predicated region
    $region25: #{up_forward.5} parent=5 // pred_check
      %p205 = pneg %p204
    $region26: #{up_forward.5} parent=5 // pred_check_branch
      %207 = sbr.rel (%p205) target = $region28
    $region27: #{up_forward.5} parent=5 // pred_region
      // Predicated region
      $region29: #{up_forward.5} parent=27 // pred_check
        %p208 = pneg %p33
      $region30: #{up_forward.5} parent=27 // pred_check_branch
        %210 = sbr.rel (%p208) target = $region32
      $region31: #{up_forward.5} parent=27 // pred_region
        %p211 = scmp.lt.s32.totalorder %s13, 1
        %s212 = scalar_select %p211, %s13, 1
        %s213 = smul.addr %s212, 32
        %s214 = smul.addr %s213, 8
        %s215 = scalar_lea.vmem %s0, %s214
      $region32: #{up_forward.5} parent=27 // pred_fallthru
        _
      // Predicated region
      $region33: #{up_forward.5} parent=27 // pred_check
        %p216 = pneg %p59
      $region34: #{up_forward.5} parent=27 // pred_check_branch
        %218 = sbr.rel (%p216) target = $region36
      $region35: #{up_forward.5} parent=27 // pred_region
        %p219 = scmp.lt.s32.totalorder %s13, 1
        %s220 = scalar_select %p219, %s13, 1
        %s221 = smul.addr %s220, 32
        %s222 = smul.addr %s221, 4
        %s223 = scalar_lea.vmem %s1, %s222
      $region36: #{up_forward.5} parent=27 // pred_fallthru
        _
    $region28: #{up_forward.5} parent=5 // pred_fallthru
      _
    %p224 = scmp.le.s32.totalorder 1, %s13
    %p225 = scmp.lt.s32.totalorder %s13, 3
    %p226 = pnand %p224, %p225
    %p227 = pneg %p226
    // Predicated region
    $region37: #{up_forward.5} parent=5 // pred_check
      _
    $region38: #{up_forward.5} parent=5 // pred_check_branch
      %229 = sbr.rel (%p226) target = $region40
    $region39: #{up_forward.5} parent=5 // pred_region
      %s230 = ssub.s32 %s13, 1
      %p231 = scmp.lt.s32.totalorder %s18, 1
      %s232 = scalar_select %p231, %s18, 1
      %s233 = smul.addr %s232, 32
      %s234 = smul.addr %s233, 8
      %s235 = scalar_lea.vmem %s0, %s234
      %p236 = pneg %p39
      %p237 = pneg %p36
      %p238 = scmp.lt.s32.totalorder %s18, 1
      %s239 = scalar_select %p238, %s18, 1
      %s240 = smul.addr %s239, 32
      %s241 = smul.addr %s240, 4
      %s242 = scalar_lea.vmem %s1, %s241
      %p243 = pneg %p65
      %p244 = pneg %p62
      %p245 = pneg %p86
      %p246 = pneg %p83
      %p247 = pneg %p107
      %p248 = pneg %p104
      %p249 = pneg %p128
      %p250 = pneg %p125
      %p251 = pneg %p154
      %p252 = pneg %p151
      %p253 = scmp.lt.s32.totalorder %s18, 1
      %s254 = scalar_select %p253, %s18, 1
      %s255 = smul.addr %s254, 32
      %s256 = smul.addr %s255, 4
      %s257 = scalar_lea.vmem %s5, %s256
      %p258 = pneg %p180
      %p259 = pneg %p177
      %p260 = scmp.lt.s32.totalorder %s18, 1
      %s261 = scalar_select %p260, %s18, 1
      %s262 = smul.addr %s261, 2
      %s263 = scalar_lea.vmem %s6, %s262
      %p264 = scmp.lt.s32.totalorder %s18, 1
      %s265 = scalar_select %p264, %s18, 1
      %s266 = smul.addr %s265, 32
      %s267 = smul.addr %s266, 8
      %s268 = scalar_lea.vmem %s0, %s267
      %p269 = scmp.lt.s32.totalorder %s18, 1
      %s270 = scalar_select %p269, %s18, 1
      %s271 = smul.addr %s270, 32
      %s272 = smul.addr %s271, 4
      %s273 = scalar_lea.vmem %s1, %s272
      %p274 = scmp.lt.s32.totalorder %s18, 1
      %s275 = scalar_select %p274, %s18, 1
      %s276 = smul.addr %s275, 32
      %s277 = smul.addr %s276, 4
      %s278 = scalar_lea.vmem %s5, %s277
      %p279 = scmp.lt.s32.totalorder %s18, 1
      %s280 = scalar_select %p279, %s18, 1
      %s281 = smul.addr %s280, 2
      %s282 = scalar_lea.vmem %s6, %s281
      %v284 = vld [vmem:[%s268] sm:$0xff]
      %v285 = vld [vmem:[%s268 + $0x8] sm:$0xff]
      %v286 = vld [vmem:[%s268 + $0x10] sm:$0xff]
      %v287 = vld [vmem:[%s268 + $0x18] sm:$0xff]
      %v288 = vld [vmem:[%s268 + $0x20] sm:$0xff]
      %v289 = vld [vmem:[%s268 + $0x28] sm:$0xff]
      %v290 = vld [vmem:[%s268 + $0x30] sm:$0xff]
      %v291 = vld [vmem:[%s268 + $0x38] sm:$0xff]
      %v292 = vld [vmem:[%s268 + $0x40] sm:$0xff]
      %v293 = vld [vmem:[%s268 + $0x48] sm:$0xff]
      %v294 = vld [vmem:[%s268 + $0x50] sm:$0xff]
      %v295 = vld [vmem:[%s268 + $0x58] sm:$0xff]
      %v296 = vld [vmem:[%s268 + $0x60] sm:$0xff]
      %v297 = vld [vmem:[%s268 + $0x68] sm:$0xff]
      %v298 = vld [vmem:[%s268 + $0x70] sm:$0xff]
      %v299 = vld [vmem:[%s268 + $0x78] sm:$0xff]
      %v300 = vld [vmem:[%s268 + $0x80] sm:$0xff]
      %v301 = vld [vmem:[%s268 + $0x88] sm:$0xff]
      %v302 = vld [vmem:[%s268 + $0x90] sm:$0xff]
      %v303 = vld [vmem:[%s268 + $0x98] sm:$0xff]
      %v304 = vld [vmem:[%s268 + $0xa0] sm:$0xff]
      %v305 = vld [vmem:[%s268 + $0xa8] sm:$0xff]
      %v306 = vld [vmem:[%s268 + $0xb0] sm:$0xff]
      %v307 = vld [vmem:[%s268 + $0xb8] sm:$0xff]
      %v308 = vld [vmem:[%s268 + $0xc0] sm:$0xff]
      %v309 = vld [vmem:[%s268 + $0xc8] sm:$0xff]
      %v310 = vld [vmem:[%s268 + $0xd0] sm:$0xff]
      %v311 = vld [vmem:[%s268 + $0xd8] sm:$0xff]
      %v312 = vld [vmem:[%s268 + $0xe0] sm:$0xff]
      %v313 = vld [vmem:[%s268 + $0xe8] sm:$0xff]
      %v314 = vld [vmem:[%s268 + $0xf0] sm:$0xff]
      %v315 = vld [vmem:[%s268 + $0xf8] sm:$0xff]
      %v316 = vpack.c.bf16 %v285, %v284
      %v317 = vpack.c.bf16 %v287, %v286
      %v318 = vpack.c.bf16 %v289, %v288
      %v319 = vpack.c.bf16 %v291, %v290
      %v320 = vpack.c.bf16 %v293, %v292
      %v321 = vpack.c.bf16 %v295, %v294
      %v322 = vpack.c.bf16 %v297, %v296
      %v323 = vpack.c.bf16 %v299, %v298
      %v324 = vpack.c.bf16 %v301, %v300
      %v325 = vpack.c.bf16 %v303, %v302
      %v326 = vpack.c.bf16 %v305, %v304
      %v327 = vpack.c.bf16 %v307, %v306
      %v328 = vpack.c.bf16 %v309, %v308
      %v329 = vpack.c.bf16 %v311, %v310
      %v330 = vpack.c.bf16 %v313, %v312
      %v331 = vpack.c.bf16 %v315, %v314
      %vm332 = vcmask 15360
      %333 = vst.msk [vmem:[#allocation2] sm:$0xff] %vm332, 0
      %vm334 = vcmask 8192
      %vm335 = vsmask.f32 256
      %vm336 = vmand %vm334, %vm335
      %v337 = vld [vmem:[#allocation2] sm:$0x1]
      %v338 = vsel %vm336, 0, %v337
      %339 = vst [vmem:[#allocation2] sm:$0x1] %v338
      %v340 = vld [vmem:[#allocation2 + $0x8] sm:$0x1]
      %v341 = vsel %vm336, 0, %v340
      %342 = vst [vmem:[#allocation2 + $0x8] sm:$0x1] %v341
      %v343 = vld [vmem:[#allocation2 + $0x10] sm:$0x1]
      %v344 = vsel %vm336, 0, %v343
      %345 = vst [vmem:[#allocation2 + $0x10] sm:$0x1] %v344
      %v346 = vld [vmem:[#allocation2 + $0x18] sm:$0x1]
      %v347 = vsel %vm336, 0, %v346
      %348 = vst [vmem:[#allocation2 + $0x18] sm:$0x1] %v347
      %v349 = vld [vmem:[#allocation2 + $0x20] sm:$0x1]
      %v350 = vsel %vm336, 0, %v349
      %351 = vst [vmem:[#allocation2 + $0x20] sm:$0x1] %v350
      %v352 = vld [vmem:[#allocation2 + $0x28] sm:$0x1]
      %v353 = vsel %vm336, 0, %v352
      %354 = vst [vmem:[#allocation2 + $0x28] sm:$0x1] %v353
      %v355 = vld [vmem:[#allocation2 + $0x30] sm:$0x1]
      %v356 = vsel %vm336, 0, %v355
      %357 = vst [vmem:[#allocation2 + $0x30] sm:$0x1] %v356
      %v358 = vld [vmem:[#allocation2 + $0x38] sm:$0x1]
      %v359 = vsel %vm336, 0, %v358
      %360 = vst [vmem:[#allocation2 + $0x38] sm:$0x1] %v359
      %v361 = vld [vmem:[#allocation2 + $0x40] sm:$0x1]
      %v362 = vsel %vm336, 0, %v361
      %363 = vst [vmem:[#allocation2 + $0x40] sm:$0x1] %v362
      %v364 = vld [vmem:[#allocation2 + $0x48] sm:$0x1]
      %v365 = vsel %vm336, 0, %v364
      %366 = vst [vmem:[#allocation2 + $0x48] sm:$0x1] %v365
      %v367 = vld [vmem:[#allocation2 + $0x50] sm:$0x1]
      %v368 = vsel %vm336, 0, %v367
      %369 = vst [vmem:[#allocation2 + $0x50] sm:$0x1] %v368
      %v370 = vld [vmem:[#allocation2 + $0x58] sm:$0x1]
      %v371 = vsel %vm336, 0, %v370
      %372 = vst [vmem:[#allocation2 + $0x58] sm:$0x1] %v371
      %v373 = vld [vmem:[#allocation2 + $0x60] sm:$0x1]
      %v374 = vsel %vm336, 0, %v373
      %375 = vst [vmem:[#allocation2 + $0x60] sm:$0x1] %v374
      %v376 = vld [vmem:[#allocation2 + $0x68] sm:$0x1]
      %v377 = vsel %vm336, 0, %v376
      %378 = vst [vmem:[#allocation2 + $0x68] sm:$0x1] %v377
      %v379 = vld [vmem:[#allocation2 + $0x70] sm:$0x1]
      %v380 = vsel %vm336, 0, %v379
      %381 = vst [vmem:[#allocation2 + $0x70] sm:$0x1] %v380
      %v382 = vld [vmem:[#allocation2 + $0x78] sm:$0x1]
      %v383 = vsel %vm336, 0, %v382
      %384 = vst [vmem:[#allocation2 + $0x78] sm:$0x1] %v383
      %v386 = vshrl.u32 %v316, 16
      %v388 = vrot.slane %v386, 7
      %v389 = vshll.u32 %v316, 16
      %v391 = vor.u32 %v388, %v389
      %v393 = vshrl.u32 %v317, 16
      %v395 = vrot.slane %v393, 7
      %v396 = vshll.u32 %v317, 16
      %v398 = vor.u32 %v395, %v396
      %v400 = vshrl.u32 %v318, 16
      %v402 = vrot.slane %v400, 7
      %v403 = vshll.u32 %v318, 16
      %v405 = vor.u32 %v402, %v403
      %v407 = vshrl.u32 %v319, 16
      %v409 = vrot.slane %v407, 7
      %v410 = vshll.u32 %v319, 16
      %v412 = vor.u32 %v409, %v410
      %v414 = vshrl.u32 %v320, 16
      %v416 = vrot.slane %v414, 7
      %v417 = vshll.u32 %v320, 16
      %v419 = vor.u32 %v416, %v417
      %v421 = vshrl.u32 %v321, 16
      %v423 = vrot.slane %v421, 7
      %v424 = vshll.u32 %v321, 16
      %v426 = vor.u32 %v423, %v424
      %v428 = vshrl.u32 %v322, 16
      %v430 = vrot.slane %v428, 7
      %v431 = vshll.u32 %v322, 16
      %v433 = vor.u32 %v430, %v431
      %v435 = vshrl.u32 %v323, 16
      %v437 = vrot.slane %v435, 7
      %v438 = vshll.u32 %v323, 16
      %v440 = vor.u32 %v437, %v438
      %v442 = vshrl.u32 %v324, 16
      %v444 = vrot.slane %v442, 7
      %v445 = vshll.u32 %v324, 16
      %v447 = vor.u32 %v444, %v445
      %v449 = vshrl.u32 %v325, 16
      %v451 = vrot.slane %v449, 7
      %v452 = vshll.u32 %v325, 16
      %v454 = vor.u32 %v451, %v452
      %v456 = vshrl.u32 %v326, 16
      %v458 = vrot.slane %v456, 7
      %v459 = vshll.u32 %v326, 16
      %v461 = vor.u32 %v458, %v459
      %v463 = vshrl.u32 %v327, 16
      %v465 = vrot.slane %v463, 7
      %v466 = vshll.u32 %v327, 16
      %v468 = vor.u32 %v465, %v466
      %v470 = vshrl.u32 %v328, 16
      %v472 = vrot.slane %v470, 7
      %v473 = vshll.u32 %v328, 16
      %v475 = vor.u32 %v472, %v473
      %v477 = vshrl.u32 %v329, 16
      %v479 = vrot.slane %v477, 7
      %v480 = vshll.u32 %v329, 16
      %v482 = vor.u32 %v479, %v480
      %v484 = vshrl.u32 %v330, 16
      %v486 = vrot.slane %v484, 7
      %v487 = vshll.u32 %v330, 16
      %v489 = vor.u32 %v486, %v487
      %s505 = scalar_lea.vmem [#allocation2], 8
      %vm506 = vcmask 15360
      %vm507 = vsmask.f32 7938
      %vm508 = vmand %vm506, %vm507
      %v509 = vld [vmem:[%s505] sm:$0xff]
      %v510 = vsel %vm508, %v391, %v509
      %511 = vst [vmem:[%s505] sm:$0xff] %v510
      %v512 = vld [vmem:[%s505 + $0x8] sm:$0xff]
      %v513 = vsel %vm508, %v398, %v512
      %514 = vst [vmem:[%s505 + $0x8] sm:$0xff] %v513
      %v515 = vld [vmem:[%s505 + $0x10] sm:$0xff]
      %v516 = vsel %vm508, %v405, %v515
      %517 = vst [vmem:[%s505 + $0x10] sm:$0xff] %v516
      %v518 = vld [vmem:[%s505 + $0x18] sm:$0xff]
      %v519 = vsel %vm508, %v412, %v518
      %520 = vst [vmem:[%s505 + $0x18] sm:$0xff] %v519
      %v521 = vld [vmem:[%s505 + $0x20] sm:$0xff]
      %v522 = vsel %vm508, %v419, %v521
      %523 = vst [vmem:[%s505 + $0x20] sm:$0xff] %v522
      %v524 = vld [vmem:[%s505 + $0x28] sm:$0xff]
      %v525 = vsel %vm508, %v426, %v524
      %526 = vst [vmem:[%s505 + $0x28] sm:$0xff] %v525
      %v527 = vld [vmem:[%s505 + $0x30] sm:$0xff]
      %v528 = vsel %vm508, %v433, %v527
      %529 = vst [vmem:[%s505 + $0x30] sm:$0xff] %v528
      %v530 = vld [vmem:[%s505 + $0x38] sm:$0xff]
      %v531 = vsel %vm508, %v440, %v530
      %532 = vst [vmem:[%s505 + $0x38] sm:$0xff] %v531
      %v533 = vld [vmem:[%s505 + $0x40] sm:$0xff]
      %v534 = vsel %vm508, %v447, %v533
      %535 = vst [vmem:[%s505 + $0x40] sm:$0xff] %v534
      %v536 = vld [vmem:[%s505 + $0x48] sm:$0xff]
      %v537 = vsel %vm508, %v454, %v536
      %538 = vst [vmem:[%s505 + $0x48] sm:$0xff] %v537
      %v539 = vld [vmem:[%s505 + $0x50] sm:$0xff]
      %v540 = vsel %vm508, %v461, %v539
      %541 = vst [vmem:[%s505 + $0x50] sm:$0xff] %v540
      %v542 = vld [vmem:[%s505 + $0x58] sm:$0xff]
      %v543 = vsel %vm508, %v468, %v542
      %544 = vst [vmem:[%s505 + $0x58] sm:$0xff] %v543
      %v545 = vld [vmem:[%s505 + $0x60] sm:$0xff]
      %v546 = vsel %vm508, %v475, %v545
      %547 = vst [vmem:[%s505 + $0x60] sm:$0xff] %v546
      %v548 = vld [vmem:[%s505 + $0x68] sm:$0xff]
      %v549 = vsel %vm508, %v482, %v548
      %550 = vst [vmem:[%s505 + $0x68] sm:$0xff] %v549
      %v551 = vld [vmem:[%s505 + $0x70] sm:$0xff]
      %v552 = vsel %vm508, %v489, %v551
      %553 = vst [vmem:[%s505 + $0x70] sm:$0xff] %v552
      %vm554 = vcmask 31760
      %555 = vst.msk [vmem:[#allocation2] sm:$0xff] %vm554, 0
      %571 = vrot.lane.b32.xlu0 %v316, 2
      %v572 = vpop.permute.xlu0 %571
      %573 = vrot.lane.b32.xlu0 %v317, 2
      %v574 = vpop.permute.xlu0 %573
      %575 = vrot.lane.b32.xlu0 %v318, 2
      %v576 = vpop.permute.xlu0 %575
      %577 = vrot.lane.b32.xlu0 %v319, 2
      %v578 = vpop.permute.xlu0 %577
      %579 = vrot.lane.b32.xlu0 %v320, 2
      %v580 = vpop.permute.xlu0 %579
      %581 = vrot.lane.b32.xlu0 %v321, 2
      %v582 = vpop.permute.xlu0 %581
      %583 = vrot.lane.b32.xlu0 %v322, 2
      %v584 = vpop.permute.xlu0 %583
      %585 = vrot.lane.b32.xlu0 %v323, 2
      %v586 = vpop.permute.xlu0 %585
      %587 = vrot.lane.b32.xlu0 %v324, 2
      %v588 = vpop.permute.xlu0 %587
      %589 = vrot.lane.b32.xlu0 %v325, 2
      %v590 = vpop.permute.xlu0 %589
      %591 = vrot.lane.b32.xlu0 %v326, 2
      %v592 = vpop.permute.xlu0 %591
      %593 = vrot.lane.b32.xlu0 %v327, 2
      %v594 = vpop.permute.xlu0 %593
      %595 = vrot.lane.b32.xlu0 %v328, 2
      %v596 = vpop.permute.xlu0 %595
      %597 = vrot.lane.b32.xlu0 %v329, 2
      %v598 = vpop.permute.xlu0 %597
      %599 = vrot.lane.b32.xlu0 %v330, 2
      %v600 = vpop.permute.xlu0 %599
      %616 = vst.msk [vmem:[%s505] sm:$0xff] %vm554, %v572
      %617 = vst.msk [vmem:[%s505 + $0x8] sm:$0xff] %vm554, %v574
      %618 = vst.msk [vmem:[%s505 + $0x10] sm:$0xff] %vm554, %v576
      %619 = vst.msk [vmem:[%s505 + $0x18] sm:$0xff] %vm554, %v578
      %620 = vst.msk [vmem:[%s505 + $0x20] sm:$0xff] %vm554, %v580
      %621 = vst.msk [vmem:[%s505 + $0x28] sm:$0xff] %vm554, %v582
      %622 = vst.msk [vmem:[%s505 + $0x30] sm:$0xff] %vm554, %v584
      %623 = vst.msk [vmem:[%s505 + $0x38] sm:$0xff] %vm554, %v586
      %624 = vst.msk [vmem:[%s505 + $0x40] sm:$0xff] %vm554, %v588
      %625 = vst.msk [vmem:[%s505 + $0x48] sm:$0xff] %vm554, %v590
      %626 = vst.msk [vmem:[%s505 + $0x50] sm:$0xff] %vm554, %v592
      %627 = vst.msk [vmem:[%s505 + $0x58] sm:$0xff] %vm554, %v594
      %628 = vst.msk [vmem:[%s505 + $0x60] sm:$0xff] %vm554, %v596
      %629 = vst.msk [vmem:[%s505 + $0x68] sm:$0xff] %vm554, %v598
      %630 = vst.msk [vmem:[%s505 + $0x70] sm:$0xff] %vm554, %v600
      %vm631 = vcmask 48160
      %632 = vst.msk [vmem:[#allocation2] sm:$0xff] %vm631, 0
      %vm633 = vcmask 48167
      %vm634 = vsmask.f32 7966
      %vm635 = vmand %vm633, %vm634
      %v636 = vld [vmem:[#allocation2] sm:$0x80]
      %v637 = vsel %vm635, 0, %v636
      %638 = vst [vmem:[#allocation2] sm:$0x80] %v637
      %v639 = vld [vmem:[#allocation2 + $0x8] sm:$0x80]
      %v640 = vsel %vm635, 0, %v639
      %641 = vst [vmem:[#allocation2 + $0x8] sm:$0x80] %v640
      %v642 = vld [vmem:[#allocation2 + $0x10] sm:$0x80]
      %v643 = vsel %vm635, 0, %v642
      %644 = vst [vmem:[#allocation2 + $0x10] sm:$0x80] %v643
      %v645 = vld [vmem:[#allocation2 + $0x18] sm:$0x80]
      %v646 = vsel %vm635, 0, %v645
      %647 = vst [vmem:[#allocation2 + $0x18] sm:$0x80] %v646
      %v648 = vld [vmem:[#allocation2 + $0x20] sm:$0x80]
      %v649 = vsel %vm635, 0, %v648
      %650 = vst [vmem:[#allocation2 + $0x20] sm:$0x80] %v649
      %v651 = vld [vmem:[#allocation2 + $0x28] sm:$0x80]
      %v652 = vsel %vm635, 0, %v651
      %653 = vst [vmem:[#allocation2 + $0x28] sm:$0x80] %v652
      %v654 = vld [vmem:[#allocation2 + $0x30] sm:$0x80]
      %v655 = vsel %vm635, 0, %v654
      %656 = vst [vmem:[#allocation2 + $0x30] sm:$0x80] %v655
      %v657 = vld [vmem:[#allocation2 + $0x38] sm:$0x80]
      %v658 = vsel %vm635, 0, %v657
      %659 = vst [vmem:[#allocation2 + $0x38] sm:$0x80] %v658
      %v660 = vld [vmem:[#allocation2 + $0x40] sm:$0x80]
      %v661 = vsel %vm635, 0, %v660
      %662 = vst [vmem:[#allocation2 + $0x40] sm:$0x80] %v661
      %v663 = vld [vmem:[#allocation2 + $0x48] sm:$0x80]
      %v664 = vsel %vm635, 0, %v663
      %665 = vst [vmem:[#allocation2 + $0x48] sm:$0x80] %v664
      %v666 = vld [vmem:[#allocation2 + $0x50] sm:$0x80]
      %v667 = vsel %vm635, 0, %v666
      %668 = vst [vmem:[#allocation2 + $0x50] sm:$0x80] %v667
      %v669 = vld [vmem:[#allocation2 + $0x58] sm:$0x80]
      %v670 = vsel %vm635, 0, %v669
      %671 = vst [vmem:[#allocation2 + $0x58] sm:$0x80] %v670
      %v672 = vld [vmem:[#allocation2 + $0x60] sm:$0x80]
      %v673 = vsel %vm635, 0, %v672
      %674 = vst [vmem:[#allocation2 + $0x60] sm:$0x80] %v673
      %v675 = vld [vmem:[#allocation2 + $0x68] sm:$0x80]
      %v676 = vsel %vm635, 0, %v675
      %677 = vst [vmem:[#allocation2 + $0x68] sm:$0x80] %v676
      %v678 = vld [vmem:[#allocation2 + $0x70] sm:$0x80]
      %v679 = vsel %vm635, 0, %v678
      %680 = vst [vmem:[#allocation2 + $0x70] sm:$0x80] %v679
      %v681 = vld [vmem:[#allocation2 + $0x78] sm:$0x80]
      %v682 = vsel %vm635, 0, %v681
      %683 = vst [vmem:[#allocation2 + $0x78] sm:$0x80] %v682
      %v684 = vrot.slane %v389, 1
      %v685 = vor.u32 %v386, %v684
      %v686 = vrot.slane %v396, 1
      %v687 = vor.u32 %v393, %v686
      %v688 = vrot.slane %v403, 1
      %v689 = vor.u32 %v400, %v688
      %v690 = vrot.slane %v410, 1
      %v691 = vor.u32 %v407, %v690
      %v692 = vrot.slane %v417, 1
      %v693 = vor.u32 %v414, %v692
      %v694 = vrot.slane %v424, 1
      %v695 = vor.u32 %v421, %v694
      %v696 = vrot.slane %v431, 1
      %v697 = vor.u32 %v428, %v696
      %v698 = vrot.slane %v438, 1
      %v699 = vor.u32 %v435, %v698
      %v700 = vrot.slane %v445, 1
      %v701 = vor.u32 %v442, %v700
      %v702 = vrot.slane %v452, 1
      %v703 = vor.u32 %v449, %v702
      %v704 = vrot.slane %v459, 1
      %v705 = vor.u32 %v456, %v704
      %v706 = vrot.slane %v466, 1
      %v707 = vor.u32 %v463, %v706
      %v708 = vrot.slane %v473, 1
      %v709 = vor.u32 %v470, %v708
      %v710 = vrot.slane %v480, 1
      %v711 = vor.u32 %v477, %v710
      %v712 = vrot.slane %v487, 1
      %v713 = vor.u32 %v484, %v712
      %714 = vrot.lane.b32.xlu0 %v685, 4
      %v715 = vpop.permute.xlu0 %714
      %716 = vrot.lane.b32.xlu0 %v687, 4
      %v717 = vpop.permute.xlu0 %716
      %718 = vrot.lane.b32.xlu0 %v689, 4
      %v719 = vpop.permute.xlu0 %718
      %720 = vrot.lane.b32.xlu0 %v691, 4
      %v721 = vpop.permute.xlu0 %720
      %722 = vrot.lane.b32.xlu0 %v693, 4
      %v723 = vpop.permute.xlu0 %722
      %724 = vrot.lane.b32.xlu0 %v695, 4
      %v725 = vpop.permute.xlu0 %724
      %726 = vrot.lane.b32.xlu0 %v697, 4
      %v727 = vpop.permute.xlu0 %726
      %728 = vrot.lane.b32.xlu0 %v699, 4
      %v729 = vpop.permute.xlu0 %728
      %730 = vrot.lane.b32.xlu0 %v701, 4
      %v731 = vpop.permute.xlu0 %730
      %732 = vrot.lane.b32.xlu0 %v703, 4
      %v733 = vpop.permute.xlu0 %732
      %734 = vrot.lane.b32.xlu0 %v705, 4
      %v735 = vpop.permute.xlu0 %734
      %736 = vrot.lane.b32.xlu0 %v707, 4
      %v737 = vpop.permute.xlu0 %736
      %738 = vrot.lane.b32.xlu0 %v709, 4
      %v739 = vpop.permute.xlu0 %738
      %740 = vrot.lane.b32.xlu0 %v711, 4
      %v741 = vpop.permute.xlu0 %740
      %742 = vrot.lane.b32.xlu0 %v713, 4
      %v743 = vpop.permute.xlu0 %742
      %vm759 = vcmask 48160
      %vm760 = vsmask.f32 7424
      %vm761 = vmand %vm759, %vm760
      %v762 = vld [vmem:[%s505] sm:$0xff]
      %v763 = vsel %vm761, %v715, %v762
      %764 = vst [vmem:[%s505] sm:$0xff] %v763
      %v765 = vld [vmem:[%s505 + $0x8] sm:$0xff]
      %v766 = vsel %vm761, %v717, %v765
      %767 = vst [vmem:[%s505 + $0x8] sm:$0xff] %v766
      %v768 = vld [vmem:[%s505 + $0x10] sm:$0xff]
      %v769 = vsel %vm761, %v719, %v768
      %770 = vst [vmem:[%s505 + $0x10] sm:$0xff] %v769
      %v771 = vld [vmem:[%s505 + $0x18] sm:$0xff]
      %v772 = vsel %vm761, %v721, %v771
      %773 = vst [vmem:[%s505 + $0x18] sm:$0xff] %v772
      %v774 = vld [vmem:[%s505 + $0x20] sm:$0xff]
      %v775 = vsel %vm761, %v723, %v774
      %776 = vst [vmem:[%s505 + $0x20] sm:$0xff] %v775
      %v777 = vld [vmem:[%s505 + $0x28] sm:$0xff]
      %v778 = vsel %vm761, %v725, %v777
      %779 = vst [vmem:[%s505 + $0x28] sm:$0xff] %v778
      %v780 = vld [vmem:[%s505 + $0x30] sm:$0xff]
      %v781 = vsel %vm761, %v727, %v780
      %782 = vst [vmem:[%s505 + $0x30] sm:$0xff] %v781
      %v783 = vld [vmem:[%s505 + $0x38] sm:$0xff]
      %v784 = vsel %vm761, %v729, %v783
      %785 = vst [vmem:[%s505 + $0x38] sm:$0xff] %v784
      %v786 = vld [vmem:[%s505 + $0x40] sm:$0xff]
      %v787 = vsel %vm761, %v731, %v786
      %788 = vst [vmem:[%s505 + $0x40] sm:$0xff] %v787
      %v789 = vld [vmem:[%s505 + $0x48] sm:$0xff]
      %v790 = vsel %vm761, %v733, %v789
      %791 = vst [vmem:[%s505 + $0x48] sm:$0xff] %v790
      %v792 = vld [vmem:[%s505 + $0x50] sm:$0xff]
      %v793 = vsel %vm761, %v735, %v792
      %794 = vst [vmem:[%s505 + $0x50] sm:$0xff] %v793
      %v795 = vld [vmem:[%s505 + $0x58] sm:$0xff]
      %v796 = vsel %vm761, %v737, %v795
      %797 = vst [vmem:[%s505 + $0x58] sm:$0xff] %v796
      %v798 = vld [vmem:[%s505 + $0x60] sm:$0xff]
      %v799 = vsel %vm761, %v739, %v798
      %800 = vst [vmem:[%s505 + $0x60] sm:$0xff] %v799
      %v801 = vld [vmem:[%s505 + $0x68] sm:$0xff]
      %v802 = vsel %vm761, %v741, %v801
      %803 = vst [vmem:[%s505 + $0x68] sm:$0xff] %v802
      %v804 = vld [vmem:[%s505 + $0x70] sm:$0xff]
      %v805 = vsel %vm761, %v743, %v804
      %806 = vst [vmem:[%s505 + $0x70] sm:$0xff] %v805
      %vm807 = vcmask 57392
      %vm808 = vmand %vm807, %vm335
      %v809 = vld [vmem:[#allocation2] sm:$0x1]
      %v810 = vsel %vm808, 0, %v809
      %811 = vst [vmem:[#allocation2] sm:$0x1] %v810
      %v812 = vld [vmem:[#allocation2 + $0x8] sm:$0x1]
      %v813 = vsel %vm808, 0, %v812
      %814 = vst [vmem:[#allocation2 + $0x8] sm:$0x1] %v813
      %v815 = vld [vmem:[#allocation2 + $0x10] sm:$0x1]
      %v816 = vsel %vm808, 0, %v815
      %817 = vst [vmem:[#allocation2 + $0x10] sm:$0x1] %v816
      %v818 = vld [vmem:[#allocation2 + $0x18] sm:$0x1]
      %v819 = vsel %vm808, 0, %v818
      %820 = vst [vmem:[#allocation2 + $0x18] sm:$0x1] %v819
      %v821 = vld [vmem:[#allocation2 + $0x20] sm:$0x1]
      %v822 = vsel %vm808, 0, %v821
      %823 = vst [vmem:[#allocation2 + $0x20] sm:$0x1] %v822
      %v824 = vld [vmem:[#allocation2 + $0x28] sm:$0x1]
      %v825 = vsel %vm808, 0, %v824
      %826 = vst [vmem:[#allocation2 + $0x28] sm:$0x1] %v825
      %v827 = vld [vmem:[#allocation2 + $0x30] sm:$0x1]
      %v828 = vsel %vm808, 0, %v827
      %829 = vst [vmem:[#allocation2 + $0x30] sm:$0x1] %v828
      %v830 = vld [vmem:[#allocation2 + $0x38] sm:$0x1]
      %v831 = vsel %vm808, 0, %v830
      %832 = vst [vmem:[#allocation2 + $0x38] sm:$0x1] %v831
      %v833 = vld [vmem:[#allocation2 + $0x40] sm:$0x1]
      %v834 = vsel %vm808, 0, %v833
      %835 = vst [vmem:[#allocation2 + $0x40] sm:$0x1] %v834
      %v836 = vld [vmem:[#allocation2 + $0x48] sm:$0x1]
      %v837 = vsel %vm808, 0, %v836
      %838 = vst [vmem:[#allocation2 + $0x48] sm:$0x1] %v837
      %v839 = vld [vmem:[#allocation2 + $0x50] sm:$0x1]
      %v840 = vsel %vm808, 0, %v839
      %841 = vst [vmem:[#allocation2 + $0x50] sm:$0x1] %v840
      %v842 = vld [vmem:[#allocation2 + $0x58] sm:$0x1]
      %v843 = vsel %vm808, 0, %v842
      %844 = vst [vmem:[#allocation2 + $0x58] sm:$0x1] %v843
      %v845 = vld [vmem:[#allocation2 + $0x60] sm:$0x1]
      %v846 = vsel %vm808, 0, %v845
      %847 = vst [vmem:[#allocation2 + $0x60] sm:$0x1] %v846
      %v848 = vld [vmem:[#allocation2 + $0x68] sm:$0x1]
      %v849 = vsel %vm808, 0, %v848
      %850 = vst [vmem:[#allocation2 + $0x68] sm:$0x1] %v849
      %v851 = vld [vmem:[#allocation2 + $0x70] sm:$0x1]
      %v852 = vsel %vm808, 0, %v851
      %853 = vst [vmem:[#allocation2 + $0x70] sm:$0x1] %v852
      %v854 = vld [vmem:[#allocation2 + $0x78] sm:$0x1]
      %v855 = vsel %vm808, 0, %v854
      %856 = vst [vmem:[#allocation2 + $0x78] sm:$0x1] %v855
      %v858 = vshrl.u32 %v331, 16
      %v860 = vrot.slane %v858, 7
      %v861 = vshll.u32 %v331, 16
      %v863 = vor.u32 %v860, %v861
      %864 = vrot.lane.b32.xlu0 %v391, 6
      %v865 = vpop.permute.xlu0 %864
      %866 = vrot.lane.b32.xlu0 %v398, 6
      %v867 = vpop.permute.xlu0 %866
      %868 = vrot.lane.b32.xlu0 %v405, 6
      %v869 = vpop.permute.xlu0 %868
      %870 = vrot.lane.b32.xlu0 %v412, 6
      %v871 = vpop.permute.xlu0 %870
      %872 = vrot.lane.b32.xlu0 %v419, 6
      %v873 = vpop.permute.xlu0 %872
      %874 = vrot.lane.b32.xlu0 %v426, 6
      %v875 = vpop.permute.xlu0 %874
      %876 = vrot.lane.b32.xlu0 %v433, 6
      %v877 = vpop.permute.xlu0 %876
      %878 = vrot.lane.b32.xlu0 %v440, 6
      %v879 = vpop.permute.xlu0 %878
      %880 = vrot.lane.b32.xlu0 %v447, 6
      %v881 = vpop.permute.xlu0 %880
      %882 = vrot.lane.b32.xlu0 %v454, 6
      %v883 = vpop.permute.xlu0 %882
      %884 = vrot.lane.b32.xlu0 %v461, 6
      %v885 = vpop.permute.xlu0 %884
      %886 = vrot.lane.b32.xlu0 %v468, 6
      %v887 = vpop.permute.xlu0 %886
      %888 = vrot.lane.b32.xlu0 %v475, 6
      %v889 = vpop.permute.xlu0 %888
      %890 = vrot.lane.b32.xlu0 %v482, 6
      %v891 = vpop.permute.xlu0 %890
      %892 = vrot.lane.b32.xlu0 %v489, 6
      %v893 = vpop.permute.xlu0 %892
      %894 = vrot.lane.b32.xlu0 %v863, 6
      %v895 = vpop.permute.xlu0 %894
      %vm912 = vcmask 64560
      %vm913 = vmand %vm912, %vm507
      %v914 = vld [vmem:[#allocation2] sm:$0xff]
      %v915 = vsel %vm913, %v865, %v914
      %916 = vst [vmem:[#allocation2] sm:$0xff] %v915
      %v917 = vld [vmem:[#allocation2 + $0x8] sm:$0xff]
      %v918 = vsel %vm913, %v867, %v917
      %919 = vst [vmem:[#allocation2 + $0x8] sm:$0xff] %v918
      %v920 = vld [vmem:[#allocation2 + $0x10] sm:$0xff]
      %v921 = vsel %vm913, %v869, %v920
      %922 = vst [vmem:[#allocation2 + $0x10] sm:$0xff] %v921
      %v923 = vld [vmem:[#allocation2 + $0x18] sm:$0xff]
      %v924 = vsel %vm913, %v871, %v923
      %925 = vst [vmem:[#allocation2 + $0x18] sm:$0xff] %v924
      %v926 = vld [vmem:[#allocation2 + $0x20] sm:$0xff]
      %v927 = vsel %vm913, %v873, %v926
      %928 = vst [vmem:[#allocation2 + $0x20] sm:$0xff] %v927
      %v929 = vld [vmem:[#allocation2 + $0x28] sm:$0xff]
      %v930 = vsel %vm913, %v875, %v929
      %931 = vst [vmem:[#allocation2 + $0x28] sm:$0xff] %v930
      %v932 = vld [vmem:[#allocation2 + $0x30] sm:$0xff]
      %v933 = vsel %vm913, %v877, %v932
      %934 = vst [vmem:[#allocation2 + $0x30] sm:$0xff] %v933
      %v935 = vld [vmem:[#allocation2 + $0x38] sm:$0xff]
      %v936 = vsel %vm913, %v879, %v935
      %937 = vst [vmem:[#allocation2 + $0x38] sm:$0xff] %v936
      %v938 = vld [vmem:[#allocation2 + $0x40] sm:$0xff]
      %v939 = vsel %vm913, %v881, %v938
      %940 = vst [vmem:[#allocation2 + $0x40] sm:$0xff] %v939
      %v941 = vld [vmem:[#allocation2 + $0x48] sm:$0xff]
      %v942 = vsel %vm913, %v883, %v941
      %943 = vst [vmem:[#allocation2 + $0x48] sm:$0xff] %v942
      %v944 = vld [vmem:[#allocation2 + $0x50] sm:$0xff]
      %v945 = vsel %vm913, %v885, %v944
      %946 = vst [vmem:[#allocation2 + $0x50] sm:$0xff] %v945
      %v947 = vld [vmem:[#allocation2 + $0x58] sm:$0xff]
      %v948 = vsel %vm913, %v887, %v947
      %949 = vst [vmem:[#allocation2 + $0x58] sm:$0xff] %v948
      %v950 = vld [vmem:[#allocation2 + $0x60] sm:$0xff]
      %v951 = vsel %vm913, %v889, %v950
      %952 = vst [vmem:[#allocation2 + $0x60] sm:$0xff] %v951
      %v953 = vld [vmem:[#allocation2 + $0x68] sm:$0xff]
      %v954 = vsel %vm913, %v891, %v953
      %955 = vst [vmem:[#allocation2 + $0x68] sm:$0xff] %v954
      %v956 = vld [vmem:[#allocation2 + $0x70] sm:$0xff]
      %v957 = vsel %vm913, %v893, %v956
      %958 = vst [vmem:[#allocation2 + $0x70] sm:$0xff] %v957
      %v959 = vld [vmem:[#allocation2 + $0x78] sm:$0xff]
      %v960 = vsel %vm913, %v895, %v959
      %961 = vst [vmem:[#allocation2 + $0x78] sm:$0xff] %v960
      %963 = vrot.lane.b32.xlu0 %v316, 8
      %v964 = vpop.permute.xlu0 %963
      %965 = vrot.lane.b32.xlu0 %v317, 8
      %v966 = vpop.permute.xlu0 %965
      %967 = vrot.lane.b32.xlu0 %v318, 8
      %v968 = vpop.permute.xlu0 %967
      %969 = vrot.lane.b32.xlu0 %v319, 8
      %v970 = vpop.permute.xlu0 %969
      %971 = vrot.lane.b32.xlu0 %v320, 8
      %v972 = vpop.permute.xlu0 %971
      %973 = vrot.lane.b32.xlu0 %v321, 8
      %v974 = vpop.permute.xlu0 %973
      %975 = vrot.lane.b32.xlu0 %v322, 8
      %v976 = vpop.permute.xlu0 %975
      %977 = vrot.lane.b32.xlu0 %v323, 8
      %v978 = vpop.permute.xlu0 %977
      %979 = vrot.lane.b32.xlu0 %v324, 8
      %v980 = vpop.permute.xlu0 %979
      %981 = vrot.lane.b32.xlu0 %v325, 8
      %v982 = vpop.permute.xlu0 %981
      %983 = vrot.lane.b32.xlu0 %v326, 8
      %v984 = vpop.permute.xlu0 %983
      %985 = vrot.lane.b32.xlu0 %v327, 8
      %v986 = vpop.permute.xlu0 %985
      %987 = vrot.lane.b32.xlu0 %v328, 8
      %v988 = vpop.permute.xlu0 %987
      %989 = vrot.lane.b32.xlu0 %v329, 8
      %v990 = vpop.permute.xlu0 %989
      %991 = vrot.lane.b32.xlu0 %v330, 8
      %v992 = vpop.permute.xlu0 %991
      %993 = vrot.lane.b32.xlu0 %v331, 8
      %v994 = vpop.permute.xlu0 %993
      %vm1011 = vcmask 80960
      %1012 = vst.msk [vmem:[#allocation2] sm:$0xff] %vm1011, %v964
      %1013 = vst.msk [vmem:[#allocation2 + $0x8] sm:$0xff] %vm1011, %v966
      %1014 = vst.msk [vmem:[#allocation2 + $0x10] sm:$0xff] %vm1011, %v968
      %1015 = vst.msk [vmem:[#allocation2 + $0x18] sm:$0xff] %vm1011, %v970
      %1016 = vst.msk [vmem:[#allocation2 + $0x20] sm:$0xff] %vm1011, %v972
      %1017 = vst.msk [vmem:[#allocation2 + $0x28] sm:$0xff] %vm1011, %v974
      %1018 = vst.msk [vmem:[#allocation2 + $0x30] sm:$0xff] %vm1011, %v976
      %1019 = vst.msk [vmem:[#allocation2 + $0x38] sm:$0xff] %vm1011, %v978
      %1020 = vst.msk [vmem:[#allocation2 + $0x40] sm:$0xff] %vm1011, %v980
      %1021 = vst.msk [vmem:[#allocation2 + $0x48] sm:$0xff] %vm1011, %v982
      %1022 = vst.msk [vmem:[#allocation2 + $0x50] sm:$0xff] %vm1011, %v984
      %1023 = vst.msk [vmem:[#allocation2 + $0x58] sm:$0xff] %vm1011, %v986
      %1024 = vst.msk [vmem:[#allocation2 + $0x60] sm:$0xff] %vm1011, %v988
      %1025 = vst.msk [vmem:[#allocation2 + $0x68] sm:$0xff] %vm1011, %v990
      %1026 = vst.msk [vmem:[#allocation2 + $0x70] sm:$0xff] %vm1011, %v992
      %1027 = vst.msk [vmem:[#allocation2 + $0x78] sm:$0xff] %vm1011, %v994
      %vm1028 = vcmask 97367
      %vm1029 = vmand %vm1028, %vm634
      %v1030 = vld [vmem:[#allocation2] sm:$0x80]
      %v1031 = vsel %vm1029, 0, %v1030
      %1032 = vst [vmem:[#allocation2] sm:$0x80] %v1031
      %v1033 = vld [vmem:[#allocation2 + $0x8] sm:$0x80]
      %v1034 = vsel %vm1029, 0, %v1033
      %1035 = vst [vmem:[#allocation2 + $0x8] sm:$0x80] %v1034
      %v1036 = vld [vmem:[#allocation2 + $0x10] sm:$0x80]
      %v1037 = vsel %vm1029, 0, %v1036
      %1038 = vst [vmem:[#allocation2 + $0x10] sm:$0x80] %v1037
      %v1039 = vld [vmem:[#allocation2 + $0x18] sm:$0x80]
      %v1040 = vsel %vm1029, 0, %v1039
      %1041 = vst [vmem:[#allocation2 + $0x18] sm:$0x80] %v1040
      %v1042 = vld [vmem:[#allocation2 + $0x20] sm:$0x80]
      %v1043 = vsel %vm1029, 0, %v1042
      %1044 = vst [vmem:[#allocation2 + $0x20] sm:$0x80] %v1043
      %v1045 = vld [vmem:[#allocation2 + $0x28] sm:$0x80]
      %v1046 = vsel %vm1029, 0, %v1045
      %1047 = vst [vmem:[#allocation2 + $0x28] sm:$0x80] %v1046
      %v1048 = vld [vmem:[#allocation2 + $0x30] sm:$0x80]
      %v1049 = vsel %vm1029, 0, %v1048
      %1050 = vst [vmem:[#allocation2 + $0x30] sm:$0x80] %v1049
      %v1051 = vld [vmem:[#allocation2 + $0x38] sm:$0x80]
      %v1052 = vsel %vm1029, 0, %v1051
      %1053 = vst [vmem:[#allocation2 + $0x38] sm:$0x80] %v1052
      %v1054 = vld [vmem:[#allocation2 + $0x40] sm:$0x80]
      %v1055 = vsel %vm1029, 0, %v1054
      %1056 = vst [vmem:[#allocation2 + $0x40] sm:$0x80] %v1055
      %v1057 = vld [vmem:[#allocation2 + $0x48] sm:$0x80]
      %v1058 = vsel %vm1029, 0, %v1057
      %1059 = vst [vmem:[#allocation2 + $0x48] sm:$0x80] %v1058
      %v1060 = vld [vmem:[#allocation2 + $0x50] sm:$0x80]
      %v1061 = vsel %vm1029, 0, %v1060
      %1062 = vst [vmem:[#allocation2 + $0x50] sm:$0x80] %v1061
      %v1063 = vld [vmem:[#allocation2 + $0x58] sm:$0x80]
      %v1064 = vsel %vm1029, 0, %v1063
      %1065 = vst [vmem:[#allocation2 + $0x58] sm:$0x80] %v1064
      %v1066 = vld [vmem:[#allocation2 + $0x60] sm:$0x80]
      %v1067 = vsel %vm1029, 0, %v1066
      %1068 = vst [vmem:[#allocation2 + $0x60] sm:$0x80] %v1067
      %v1069 = vld [vmem:[#allocation2 + $0x68] sm:$0x80]
      %v1070 = vsel %vm1029, 0, %v1069
      %1071 = vst [vmem:[#allocation2 + $0x68] sm:$0x80] %v1070
      %v1072 = vld [vmem:[#allocation2 + $0x70] sm:$0x80]
      %v1073 = vsel %vm1029, 0, %v1072
      %1074 = vst [vmem:[#allocation2 + $0x70] sm:$0x80] %v1073
      %v1075 = vld [vmem:[#allocation2 + $0x78] sm:$0x80]
      %v1076 = vsel %vm1029, 0, %v1075
      %1077 = vst [vmem:[#allocation2 + $0x78] sm:$0x80] %v1076
      %v1078 = vrot.slane %v861, 1
      %v1079 = vor.u32 %v858, %v1078
      %1080 = vrot.lane.b32.xlu0 %v685, 10
      %v1081 = vpop.permute.xlu0 %1080
      %1082 = vrot.lane.b32.xlu0 %v687, 10
      %v1083 = vpop.permute.xlu0 %1082
      %1084 = vrot.lane.b32.xlu0 %v689, 10
      %v1085 = vpop.permute.xlu0 %1084
      %1086 = vrot.lane.b32.xlu0 %v691, 10
      %v1087 = vpop.permute.xlu0 %1086
      %1088 = vrot.lane.b32.xlu0 %v693, 10
      %v1089 = vpop.permute.xlu0 %1088
      %1090 = vrot.lane.b32.xlu0 %v695, 10
      %v1091 = vpop.permute.xlu0 %1090
      %1092 = vrot.lane.b32.xlu0 %v697, 10
      %v1093 = vpop.permute.xlu0 %1092
      %1094 = vrot.lane.b32.xlu0 %v699, 10
      %v1095 = vpop.permute.xlu0 %1094
      %1096 = vrot.lane.b32.xlu0 %v701, 10
      %v1097 = vpop.permute.xlu0 %1096
      %1098 = vrot.lane.b32.xlu0 %v703, 10
      %v1099 = vpop.permute.xlu0 %1098
      %1100 = vrot.lane.b32.xlu0 %v705, 10
      %v1101 = vpop.permute.xlu0 %1100
      %1102 = vrot.lane.b32.xlu0 %v707, 10
      %v1103 = vpop.permute.xlu0 %1102
      %1104 = vrot.lane.b32.xlu0 %v709, 10
      %v1105 = vpop.permute.xlu0 %1104
      %1106 = vrot.lane.b32.xlu0 %v711, 10
      %v1107 = vpop.permute.xlu0 %1106
      %1108 = vrot.lane.b32.xlu0 %v713, 10
      %v1109 = vpop.permute.xlu0 %1108
      %1110 = vrot.lane.b32.xlu0 %v1079, 10
      %v1111 = vpop.permute.xlu0 %1110
      %vm1128 = vcmask 97360
      %vm1129 = vmand %vm1128, %vm760
      %v1130 = vld [vmem:[#allocation2] sm:$0xff]
      %v1131 = vsel %vm1129, %v1081, %v1130
      %1132 = vst [vmem:[#allocation2] sm:$0xff] %v1131
      %v1133 = vld [vmem:[#allocation2 + $0x8] sm:$0xff]
      %v1134 = vsel %vm1129, %v1083, %v1133
      %1135 = vst [vmem:[#allocation2 + $0x8] sm:$0xff] %v1134
      %v1136 = vld [vmem:[#allocation2 + $0x10] sm:$0xff]
      %v1137 = vsel %vm1129, %v1085, %v1136
      %1138 = vst [vmem:[#allocation2 + $0x10] sm:$0xff] %v1137
      %v1139 = vld [vmem:[#allocation2 + $0x18] sm:$0xff]
      %v1140 = vsel %vm1129, %v1087, %v1139
      %1141 = vst [vmem:[#allocation2 + $0x18] sm:$0xff] %v1140
      %v1142 = vld [vmem:[#allocation2 + $0x20] sm:$0xff]
      %v1143 = vsel %vm1129, %v1089, %v1142
      %1144 = vst [vmem:[#allocation2 + $0x20] sm:$0xff] %v1143
      %v1145 = vld [vmem:[#allocation2 + $0x28] sm:$0xff]
      %v1146 = vsel %vm1129, %v1091, %v1145
      %1147 = vst [vmem:[#allocation2 + $0x28] sm:$0xff] %v1146
      %v1148 = vld [vmem:[#allocation2 + $0x30] sm:$0xff]
      %v1149 = vsel %vm1129, %v1093, %v1148
      %1150 = vst [vmem:[#allocation2 + $0x30] sm:$0xff] %v1149
      %v1151 = vld [vmem:[#allocation2 + $0x38] sm:$0xff]
      %v1152 = vsel %vm1129, %v1095, %v1151
      %1153 = vst [vmem:[#allocation2 + $0x38] sm:$0xff] %v1152
      %v1154 = vld [vmem:[#allocation2 + $0x40] sm:$0xff]
      %v1155 = vsel %vm1129, %v1097, %v1154
      %1156 = vst [vmem:[#allocation2 + $0x40] sm:$0xff] %v1155
      %v1157 = vld [vmem:[#allocation2 + $0x48] sm:$0xff]
      %v1158 = vsel %vm1129, %v1099, %v1157
      %1159 = vst [vmem:[#allocation2 + $0x48] sm:$0xff] %v1158
      %v1160 = vld [vmem:[#allocation2 + $0x50] sm:$0xff]
      %v1161 = vsel %vm1129, %v1101, %v1160
      %1162 = vst [vmem:[#allocation2 + $0x50] sm:$0xff] %v1161
      %v1163 = vld [vmem:[#allocation2 + $0x58] sm:$0xff]
      %v1164 = vsel %vm1129, %v1103, %v1163
      %1165 = vst [vmem:[#allocation2 + $0x58] sm:$0xff] %v1164
      %v1166 = vld [vmem:[#allocation2 + $0x60] sm:$0xff]
      %v1167 = vsel %vm1129, %v1105, %v1166
      %1168 = vst [vmem:[#allocation2 + $0x60] sm:$0xff] %v1167
      %v1169 = vld [vmem:[#allocation2 + $0x68] sm:$0xff]
      %v1170 = vsel %vm1129, %v1107, %v1169
      %1171 = vst [vmem:[#allocation2 + $0x68] sm:$0xff] %v1170
      %v1172 = vld [vmem:[#allocation2 + $0x70] sm:$0xff]
      %v1173 = vsel %vm1129, %v1109, %v1172
      %1174 = vst [vmem:[#allocation2 + $0x70] sm:$0xff] %v1173
      %v1175 = vld [vmem:[#allocation2 + $0x78] sm:$0xff]
      %v1176 = vsel %vm1129, %v1111, %v1175
      %1177 = vst [vmem:[#allocation2 + $0x78] sm:$0xff] %v1176
      %s1178 = scalar_lea.vmem [#allocation2], 120
      %vm1179 = vcmask 113760
      %1180 = vst.msk [vmem:[%s1178] sm:$0xff] %vm1179, 0
      %vm1181 = vcmask 106592
      %vm1182 = vmand %vm1181, %vm335
      %v1183 = vld [vmem:[#allocation2] sm:$0x1]
      %v1184 = vsel %vm1182, 0, %v1183
      %1185 = vst [vmem:[#allocation2] sm:$0x1] %v1184
      %v1186 = vld [vmem:[#allocation2 + $0x8] sm:$0x1]
      %v1187 = vsel %vm1182, 0, %v1186
      %1188 = vst [vmem:[#allocation2 + $0x8] sm:$0x1] %v1187
      %v1189 = vld [vmem:[#allocation2 + $0x10] sm:$0x1]
      %v1190 = vsel %vm1182, 0, %v1189
      %1191 = vst [vmem:[#allocation2 + $0x10] sm:$0x1] %v1190
      %v1192 = vld [vmem:[#allocation2 + $0x18] sm:$0x1]
      %v1193 = vsel %vm1182, 0, %v1192
      %1194 = vst [vmem:[#allocation2 + $0x18] sm:$0x1] %v1193
      %v1195 = vld [vmem:[#allocation2 + $0x20] sm:$0x1]
      %v1196 = vsel %vm1182, 0, %v1195
      %1197 = vst [vmem:[#allocation2 + $0x20] sm:$0x1] %v1196
      %v1198 = vld [vmem:[#allocation2 + $0x28] sm:$0x1]
      %v1199 = vsel %vm1182, 0, %v1198
      %1200 = vst [vmem:[#allocation2 + $0x28] sm:$0x1] %v1199
      %v1201 = vld [vmem:[#allocation2 + $0x30] sm:$0x1]
      %v1202 = vsel %vm1182, 0, %v1201
      %1203 = vst [vmem:[#allocation2 + $0x30] sm:$0x1] %v1202
      %v1204 = vld [vmem:[#allocation2 + $0x38] sm:$0x1]
      %v1205 = vsel %vm1182, 0, %v1204
      %1206 = vst [vmem:[#allocation2 + $0x38] sm:$0x1] %v1205
      %v1207 = vld [vmem:[#allocation2 + $0x40] sm:$0x1]
      %v1208 = vsel %vm1182, 0, %v1207
      %1209 = vst [vmem:[#allocation2 + $0x40] sm:$0x1] %v1208
      %v1210 = vld [vmem:[#allocation2 + $0x48] sm:$0x1]
      %v1211 = vsel %vm1182, 0, %v1210
      %1212 = vst [vmem:[#allocation2 + $0x48] sm:$0x1] %v1211
      %v1213 = vld [vmem:[#allocation2 + $0x50] sm:$0x1]
      %v1214 = vsel %vm1182, 0, %v1213
      %1215 = vst [vmem:[#allocation2 + $0x50] sm:$0x1] %v1214
      %v1216 = vld [vmem:[#allocation2 + $0x58] sm:$0x1]
      %v1217 = vsel %vm1182, 0, %v1216
      %1218 = vst [vmem:[#allocation2 + $0x58] sm:$0x1] %v1217
      %v1219 = vld [vmem:[#allocation2 + $0x60] sm:$0x1]
      %v1220 = vsel %vm1182, 0, %v1219
      %1221 = vst [vmem:[#allocation2 + $0x60] sm:$0x1] %v1220
      %v1222 = vld [vmem:[#allocation2 + $0x68] sm:$0x1]
      %v1223 = vsel %vm1182, 0, %v1222
      %1224 = vst [vmem:[#allocation2 + $0x68] sm:$0x1] %v1223
      %v1225 = vld [vmem:[#allocation2 + $0x70] sm:$0x1]
      %v1226 = vsel %vm1182, 0, %v1225
      %1227 = vst [vmem:[#allocation2 + $0x70] sm:$0x1] %v1226
      %v1228 = vld [vmem:[#allocation2 + $0x78] sm:$0x1]
      %v1229 = vsel %vm1182, 0, %v1228
      %1230 = vst [vmem:[#allocation2 + $0x78] sm:$0x1] %v1229
      %1231 = vrot.lane.b32.xlu0 %v398, 12
      %v1232 = vpop.permute.xlu0 %1231
      %1233 = vrot.lane.b32.xlu0 %v405, 12
      %v1234 = vpop.permute.xlu0 %1233
      %1235 = vrot.lane.b32.xlu0 %v412, 12
      %v1236 = vpop.permute.xlu0 %1235
      %1237 = vrot.lane.b32.xlu0 %v419, 12
      %v1238 = vpop.permute.xlu0 %1237
      %1239 = vrot.lane.b32.xlu0 %v426, 12
      %v1240 = vpop.permute.xlu0 %1239
      %1241 = vrot.lane.b32.xlu0 %v433, 12
      %v1242 = vpop.permute.xlu0 %1241
      %1243 = vrot.lane.b32.xlu0 %v440, 12
      %v1244 = vpop.permute.xlu0 %1243
      %1245 = vrot.lane.b32.xlu0 %v447, 12
      %v1246 = vpop.permute.xlu0 %1245
      %1247 = vrot.lane.b32.xlu0 %v454, 12
      %v1248 = vpop.permute.xlu0 %1247
      %1249 = vrot.lane.b32.xlu0 %v461, 12
      %v1250 = vpop.permute.xlu0 %1249
      %1251 = vrot.lane.b32.xlu0 %v468, 12
      %v1252 = vpop.permute.xlu0 %1251
      %1253 = vrot.lane.b32.xlu0 %v475, 12
      %v1254 = vpop.permute.xlu0 %1253
      %1255 = vrot.lane.b32.xlu0 %v482, 12
      %v1256 = vpop.permute.xlu0 %1255
      %1257 = vrot.lane.b32.xlu0 %v489, 12
      %v1258 = vpop.permute.xlu0 %1257
      %1259 = vrot.lane.b32.xlu0 %v863, 12
      %v1260 = vpop.permute.xlu0 %1259
      %vm1276 = vcmask 113760
      %vm1277 = vmand %vm1276, %vm507
      %v1278 = vld [vmem:[#allocation2] sm:$0xff]
      %v1279 = vsel %vm1277, %v1232, %v1278
      %1280 = vst [vmem:[#allocation2] sm:$0xff] %v1279
      %v1281 = vld [vmem:[#allocation2 + $0x8] sm:$0xff]
      %v1282 = vsel %vm1277, %v1234, %v1281
      %1283 = vst [vmem:[#allocation2 + $0x8] sm:$0xff] %v1282
      %v1284 = vld [vmem:[#allocation2 + $0x10] sm:$0xff]
      %v1285 = vsel %vm1277, %v1236, %v1284
      %1286 = vst [vmem:[#allocation2 + $0x10] sm:$0xff] %v1285
      %v1287 = vld [vmem:[#allocation2 + $0x18] sm:$0xff]
      %v1288 = vsel %vm1277, %v1238, %v1287
      %1289 = vst [vmem:[#allocation2 + $0x18] sm:$0xff] %v1288
      %v1290 = vld [vmem:[#allocation2 + $0x20] sm:$0xff]
      %v1291 = vsel %vm1277, %v1240, %v1290
      %1292 = vst [vmem:[#allocation2 + $0x20] sm:$0xff] %v1291
      %v1293 = vld [vmem:[#allocation2 + $0x28] sm:$0xff]
      %v1294 = vsel %vm1277, %v1242, %v1293
      %1295 = vst [vmem:[#allocation2 + $0x28] sm:$0xff] %v1294
      %v1296 = vld [vmem:[#allocation2 + $0x30] sm:$0xff]
      %v1297 = vsel %vm1277, %v1244, %v1296
      %1298 = vst [vmem:[#allocation2 + $0x30] sm:$0xff] %v1297
      %v1299 = vld [vmem:[#allocation2 + $0x38] sm:$0xff]
      %v1300 = vsel %vm1277, %v1246, %v1299
      %1301 = vst [vmem:[#allocation2 + $0x38] sm:$0xff] %v1300
      %v1302 = vld [vmem:[#allocation2 + $0x40] sm:$0xff]
      %v1303 = vsel %vm1277, %v1248, %v1302
      %1304 = vst [vmem:[#allocation2 + $0x40] sm:$0xff] %v1303
      %v1305 = vld [vmem:[#allocation2 + $0x48] sm:$0xff]
      %v1306 = vsel %vm1277, %v1250, %v1305
      %1307 = vst [vmem:[#allocation2 + $0x48] sm:$0xff] %v1306
      %v1308 = vld [vmem:[#allocation2 + $0x50] sm:$0xff]
      %v1309 = vsel %vm1277, %v1252, %v1308
      %1310 = vst [vmem:[#allocation2 + $0x50] sm:$0xff] %v1309
      %v1311 = vld [vmem:[#allocation2 + $0x58] sm:$0xff]
      %v1312 = vsel %vm1277, %v1254, %v1311
      %1313 = vst [vmem:[#allocation2 + $0x58] sm:$0xff] %v1312
      %v1314 = vld [vmem:[#allocation2 + $0x60] sm:$0xff]
      %v1315 = vsel %vm1277, %v1256, %v1314
      %1316 = vst [vmem:[#allocation2 + $0x60] sm:$0xff] %v1315
      %v1317 = vld [vmem:[#allocation2 + $0x68] sm:$0xff]
      %v1318 = vsel %vm1277, %v1258, %v1317
      %1319 = vst [vmem:[#allocation2 + $0x68] sm:$0xff] %v1318
      %v1320 = vld [vmem:[#allocation2 + $0x70] sm:$0xff]
      %v1321 = vsel %vm1277, %v1260, %v1320
      %1322 = vst [vmem:[#allocation2 + $0x70] sm:$0xff] %v1321
      %vm1323 = vcmask 130160
      %1324 = vst.msk [vmem:[%s1178] sm:$0xff] %vm1323, 0
      %1325 = vrot.lane.b32.xlu0 %v317, 14
      %v1326 = vpop.permute.xlu0 %1325
      %1327 = vrot.lane.b32.xlu0 %v318, 14
      %v1328 = vpop.permute.xlu0 %1327
      %1329 = vrot.lane.b32.xlu0 %v319, 14
      %v1330 = vpop.permute.xlu0 %1329
      %1331 = vrot.lane.b32.xlu0 %v320, 14
      %v1332 = vpop.permute.xlu0 %1331
      %1333 = vrot.lane.b32.xlu0 %v321, 14
      %v1334 = vpop.permute.xlu0 %1333
      %1335 = vrot.lane.b32.xlu0 %v322, 14
      %v1336 = vpop.permute.xlu0 %1335
      %1337 = vrot.lane.b32.xlu0 %v323, 14
      %v1338 = vpop.permute.xlu0 %1337
      %1339 = vrot.lane.b32.xlu0 %v324, 14
      %v1340 = vpop.permute.xlu0 %1339
      %1341 = vrot.lane.b32.xlu0 %v325, 14
      %v1342 = vpop.permute.xlu0 %1341
      %1343 = vrot.lane.b32.xlu0 %v326, 14
      %v1344 = vpop.permute.xlu0 %1343
      %1345 = vrot.lane.b32.xlu0 %v327, 14
      %v1346 = vpop.permute.xlu0 %1345
      %1347 = vrot.lane.b32.xlu0 %v328, 14
      %v1348 = vpop.permute.xlu0 %1347
      %1349 = vrot.lane.b32.xlu0 %v329, 14
      %v1350 = vpop.permute.xlu0 %1349
      %1351 = vrot.lane.b32.xlu0 %v330, 14
      %v1352 = vpop.permute.xlu0 %1351
      %1353 = vrot.lane.b32.xlu0 %v331, 14
      %v1354 = vpop.permute.xlu0 %1353
      %1370 = vst.msk [vmem:[#allocation2] sm:$0xff] %vm1323, %v1326
      %1371 = vst.msk [vmem:[#allocation2 + $0x8] sm:$0xff] %vm1323, %v1328
      %1372 = vst.msk [vmem:[#allocation2 + $0x10] sm:$0xff] %vm1323, %v1330
      %1373 = vst.msk [vmem:[#allocation2 + $0x18] sm:$0xff] %vm1323, %v1332
      %1374 = vst.msk [vmem:[#allocation2 + $0x20] sm:$0xff] %vm1323, %v1334
      %1375 = vst.msk [vmem:[#allocation2 + $0x28] sm:$0xff] %vm1323, %v1336
      %1376 = vst.msk [vmem:[#allocation2 + $0x30] sm:$0xff] %vm1323, %v1338
      %1377 = vst.msk [vmem:[#allocation2 + $0x38] sm:$0xff] %vm1323, %v1340
      %1378 = vst.msk [vmem:[#allocation2 + $0x40] sm:$0xff] %vm1323, %v1342
      %1379 = vst.msk [vmem:[#allocation2 + $0x48] sm:$0xff] %vm1323, %v1344
      %1380 = vst.msk [vmem:[#allocation2 + $0x50] sm:$0xff] %vm1323, %v1346
      %1381 = vst.msk [vmem:[#allocation2 + $0x58] sm:$0xff] %vm1323, %v1348
      %1382 = vst.msk [vmem:[#allocation2 + $0x60] sm:$0xff] %vm1323, %v1350
      %1383 = vst.msk [vmem:[#allocation2 + $0x68] sm:$0xff] %vm1323, %v1352
      %1384 = vst.msk [vmem:[#allocation2 + $0x70] sm:$0xff] %vm1323, %v1354
      %vm1385 = vcmask 146560
      %1386 = vst.msk [vmem:[%s1178] sm:$0xff] %vm1385, 0
      %vm1387 = vcmask 146567
      %vm1388 = vmand %vm1387, %vm634
      %v1389 = vld [vmem:[#allocation2] sm:$0x80]
      %v1390 = vsel %vm1388, 0, %v1389
      %1391 = vst [vmem:[#allocation2] sm:$0x80] %v1390
      %v1392 = vld [vmem:[#allocation2 + $0x8] sm:$0x80]
      %v1393 = vsel %vm1388, 0, %v1392
      %1394 = vst [vmem:[#allocation2 + $0x8] sm:$0x80] %v1393
      %v1395 = vld [vmem:[#allocation2 + $0x10] sm:$0x80]
      %v1396 = vsel %vm1388, 0, %v1395
      %1397 = vst [vmem:[#allocation2 + $0x10] sm:$0x80] %v1396
      %v1398 = vld [vmem:[#allocation2 + $0x18] sm:$0x80]
      %v1399 = vsel %vm1388, 0, %v1398
      %1400 = vst [vmem:[#allocation2 + $0x18] sm:$0x80] %v1399
      %v1401 = vld [vmem:[#allocation2 + $0x20] sm:$0x80]
      %v1402 = vsel %vm1388, 0, %v1401
      %1403 = vst [vmem:[#allocation2 + $0x20] sm:$0x80] %v1402
      %v1404 = vld [vmem:[#allocation2 + $0x28] sm:$0x80]
      %v1405 = vsel %vm1388, 0, %v1404
      %1406 = vst [vmem:[#allocation2 + $0x28] sm:$0x80] %v1405
      %v1407 = vld [vmem:[#allocation2 + $0x30] sm:$0x80]
      %v1408 = vsel %vm1388, 0, %v1407
      %1409 = vst [vmem:[#allocation2 + $0x30] sm:$0x80] %v1408
      %v1410 = vld [vmem:[#allocation2 + $0x38] sm:$0x80]
      %v1411 = vsel %vm1388, 0, %v1410
      %1412 = vst [vmem:[#allocation2 + $0x38] sm:$0x80] %v1411
      %v1413 = vld [vmem:[#allocation2 + $0x40] sm:$0x80]
      %v1414 = vsel %vm1388, 0, %v1413
      %1415 = vst [vmem:[#allocation2 + $0x40] sm:$0x80] %v1414
      %v1416 = vld [vmem:[#allocation2 + $0x48] sm:$0x80]
      %v1417 = vsel %vm1388, 0, %v1416
      %1418 = vst [vmem:[#allocation2 + $0x48] sm:$0x80] %v1417
      %v1419 = vld [vmem:[#allocation2 + $0x50] sm:$0x80]
      %v1420 = vsel %vm1388, 0, %v1419
      %1421 = vst [vmem:[#allocation2 + $0x50] sm:$0x80] %v1420
      %v1422 = vld [vmem:[#allocation2 + $0x58] sm:$0x80]
      %v1423 = vsel %vm1388, 0, %v1422
      %1424 = vst [vmem:[#allocation2 + $0x58] sm:$0x80] %v1423
      %v1425 = vld [vmem:[#allocation2 + $0x60] sm:$0x80]
      %v1426 = vsel %vm1388, 0, %v1425
      %1427 = vst [vmem:[#allocation2 + $0x60] sm:$0x80] %v1426
      %v1428 = vld [vmem:[#allocation2 + $0x68] sm:$0x80]
      %v1429 = vsel %vm1388, 0, %v1428
      %1430 = vst [vmem:[#allocation2 + $0x68] sm:$0x80] %v1429
      %v1431 = vld [vmem:[#allocation2 + $0x70] sm:$0x80]
      %v1432 = vsel %vm1388, 0, %v1431
      %1433 = vst [vmem:[#allocation2 + $0x70] sm:$0x80] %v1432
      %v1434 = vld [vmem:[#allocation2 + $0x78] sm:$0x80]
      %v1435 = vsel %vm1388, 0, %v1434
      %1436 = vst [vmem:[#allocation2 + $0x78] sm:$0x80] %v1435
      %1437 = vrot.lane.b32.xlu0 %v687, 16
      %v1438 = vpop.permute.xlu0 %1437
      %1439 = vrot.lane.b32.xlu0 %v689, 16
      %v1440 = vpop.permute.xlu0 %1439
      %1441 = vrot.lane.b32.xlu0 %v691, 16
      %v1442 = vpop.permute.xlu0 %1441
      %1443 = vrot.lane.b32.xlu0 %v693, 16
      %v1444 = vpop.permute.xlu0 %1443
      %1445 = vrot.lane.b32.xlu0 %v695, 16
      %v1446 = vpop.permute.xlu0 %1445
      %1447 = vrot.lane.b32.xlu0 %v697, 16
      %v1448 = vpop.permute.xlu0 %1447
      %1449 = vrot.lane.b32.xlu0 %v699, 16
      %v1450 = vpop.permute.xlu0 %1449
      %1451 = vrot.lane.b32.xlu0 %v701, 16
      %v1452 = vpop.permute.xlu0 %1451
      %1453 = vrot.lane.b32.xlu0 %v703, 16
      %v1454 = vpop.permute.xlu0 %1453
      %1455 = vrot.lane.b32.xlu0 %v705, 16
      %v1456 = vpop.permute.xlu0 %1455
      %1457 = vrot.lane.b32.xlu0 %v707, 16
      %v1458 = vpop.permute.xlu0 %1457
      %1459 = vrot.lane.b32.xlu0 %v709, 16
      %v1460 = vpop.permute.xlu0 %1459
      %1461 = vrot.lane.b32.xlu0 %v711, 16
      %v1462 = vpop.permute.xlu0 %1461
      %1463 = vrot.lane.b32.xlu0 %v713, 16
      %v1464 = vpop.permute.xlu0 %1463
      %1465 = vrot.lane.b32.xlu0 %v1079, 16
      %v1466 = vpop.permute.xlu0 %1465
      %vm1482 = vcmask 146560
      %vm1483 = vmand %vm1482, %vm760
      %v1484 = vld [vmem:[#allocation2] sm:$0xff]
      %v1485 = vsel %vm1483, %v1438, %v1484
      %1486 = vst [vmem:[#allocation2] sm:$0xff] %v1485
      %v1487 = vld [vmem:[#allocation2 + $0x8] sm:$0xff]
      %v1488 = vsel %vm1483, %v1440, %v1487
      %1489 = vst [vmem:[#allocation2 + $0x8] sm:$0xff] %v1488
      %v1490 = vld [vmem:[#allocation2 + $0x10] sm:$0xff]
      %v1491 = vsel %vm1483, %v1442, %v1490
      %1492 = vst [vmem:[#allocation2 + $0x10] sm:$0xff] %v1491
      %v1493 = vld [vmem:[#allocation2 + $0x18] sm:$0xff]
      %v1494 = vsel %vm1483, %v1444, %v1493
      %1495 = vst [vmem:[#allocation2 + $0x18] sm:$0xff] %v1494
      %v1496 = vld [vmem:[#allocation2 + $0x20] sm:$0xff]
      %v1497 = vsel %vm1483, %v1446, %v1496
      %1498 = vst [vmem:[#allocation2 + $0x20] sm:$0xff] %v1497
      %v1499 = vld [vmem:[#allocation2 + $0x28] sm:$0xff]
      %v1500 = vsel %vm1483, %v1448, %v1499
      %1501 = vst [vmem:[#allocation2 + $0x28] sm:$0xff] %v1500
      %v1502 = vld [vmem:[#allocation2 + $0x30] sm:$0xff]
      %v1503 = vsel %vm1483, %v1450, %v1502
      %1504 = vst [vmem:[#allocation2 + $0x30] sm:$0xff] %v1503
      %v1505 = vld [vmem:[#allocation2 + $0x38] sm:$0xff]
      %v1506 = vsel %vm1483, %v1452, %v1505
      %1507 = vst [vmem:[#allocation2 + $0x38] sm:$0xff] %v1506
      %v1508 = vld [vmem:[#allocation2 + $0x40] sm:$0xff]
      %v1509 = vsel %vm1483, %v1454, %v1508
      %1510 = vst [vmem:[#allocation2 + $0x40] sm:$0xff] %v1509
      %v1511 = vld [vmem:[#allocation2 + $0x48] sm:$0xff]
      %v1512 = vsel %vm1483, %v1456, %v1511
      %1513 = vst [vmem:[#allocation2 + $0x48] sm:$0xff] %v1512
      %v1514 = vld [vmem:[#allocation2 + $0x50] sm:$0xff]
      %v1515 = vsel %vm1483, %v1458, %v1514
      %1516 = vst [vmem:[#allocation2 + $0x50] sm:$0xff] %v1515
      %v1517 = vld [vmem:[#allocation2 + $0x58] sm:$0xff]
      %v1518 = vsel %vm1483, %v1460, %v1517
      %1519 = vst [vmem:[#allocation2 + $0x58] sm:$0xff] %v1518
      %v1520 = vld [vmem:[#allocation2 + $0x60] sm:$0xff]
      %v1521 = vsel %vm1483, %v1462, %v1520
      %1522 = vst [vmem:[#allocation2 + $0x60] sm:$0xff] %v1521
      %v1523 = vld [vmem:[#allocation2 + $0x68] sm:$0xff]
      %v1524 = vsel %vm1483, %v1464, %v1523
      %1525 = vst [vmem:[#allocation2 + $0x68] sm:$0xff] %v1524
      %v1526 = vld [vmem:[#allocation2 + $0x70] sm:$0xff]
      %v1527 = vsel %vm1483, %v1466, %v1526
      %1528 = vst [vmem:[#allocation2 + $0x70] sm:$0xff] %v1527
      %v1529 = vld [vmem:[#allocation2] sm:$0xff]
      %v1530 = vld [vmem:[#allocation2 + $0x8] sm:$0xff]
      %v1531 = vld [vmem:[#allocation2 + $0x10] sm:$0xff]
      %v1532 = vld [vmem:[#allocation2 + $0x18] sm:$0xff]
      %v1533 = vld [vmem:[#allocation2 + $0x20] sm:$0xff]
      %v1534 = vld [vmem:[#allocation2 + $0x28] sm:$0xff]
      %v1535 = vld [vmem:[#allocation2 + $0x30] sm:$0xff]
      %v1536 = vld [vmem:[#allocation2 + $0x38] sm:$0xff]
      %v1537 = vld [vmem:[#allocation2 + $0x40] sm:$0xff]
      %v1538 = vld [vmem:[#allocation2 + $0x48] sm:$0xff]
      %v1539 = vld [vmem:[#allocation2 + $0x50] sm:$0xff]
      %v1540 = vld [vmem:[#allocation2 + $0x58] sm:$0xff]
      %v1541 = vld [vmem:[#allocation2 + $0x60] sm:$0xff]
      %v1542 = vld [vmem:[#allocation2 + $0x68] sm:$0xff]
      %v1543 = vld [vmem:[#allocation2 + $0x70] sm:$0xff]
      %v1544 = vld [vmem:[#allocation2 + $0x78] sm:$0xff]
      %v1545 = vld [vmem:[%s2] sm:$0xf]
      %v1546 = vld [vmem:[%s2 + $0x4] sm:$0xf]
      %v1547 = vld [vmem:[%s2 + $0x8] sm:$0x1]
      %v1548 = vld [vmem:[%s273] sm:$0xf]
      %v1549 = vld [vmem:[%s273 + $0x4] sm:$0xf]
      %v1550 = vld [vmem:[%s273 + $0x8] sm:$0xf]
      %v1551 = vld [vmem:[%s273 + $0xc] sm:$0xf]
      %v1552 = vld [vmem:[%s273 + $0x10] sm:$0xf]
      %v1553 = vld [vmem:[%s273 + $0x14] sm:$0xf]
      %v1554 = vld [vmem:[%s273 + $0x18] sm:$0xf]
      %v1555 = vld [vmem:[%s273 + $0x1c] sm:$0xf]
      %v1556 = vld [vmem:[%s273 + $0x20] sm:$0xf]
      %v1557 = vld [vmem:[%s273 + $0x24] sm:$0xf]
      %v1558 = vld [vmem:[%s273 + $0x28] sm:$0xf]
      %v1559 = vld [vmem:[%s273 + $0x2c] sm:$0xf]
      %v1560 = vld [vmem:[%s273 + $0x30] sm:$0xf]
      %v1561 = vld [vmem:[%s273 + $0x34] sm:$0xf]
      %v1562 = vld [vmem:[%s273 + $0x38] sm:$0xf]
      %v1563 = vld [vmem:[%s273 + $0x3c] sm:$0xf]
      %v1564 = vld [vmem:[%s273 + $0x40] sm:$0xf]
      %v1565 = vld [vmem:[%s273 + $0x44] sm:$0xf]
      %v1566 = vld [vmem:[%s273 + $0x48] sm:$0xf]
      %v1567 = vld [vmem:[%s273 + $0x4c] sm:$0xf]
      %v1568 = vld [vmem:[%s273 + $0x50] sm:$0xf]
      %v1569 = vld [vmem:[%s273 + $0x54] sm:$0xf]
      %v1570 = vld [vmem:[%s273 + $0x58] sm:$0xf]
      %v1571 = vld [vmem:[%s273 + $0x5c] sm:$0xf]
      %v1572 = vld [vmem:[%s273 + $0x60] sm:$0xf]
      %v1573 = vld [vmem:[%s273 + $0x64] sm:$0xf]
      %v1574 = vld [vmem:[%s273 + $0x68] sm:$0xf]
      %v1575 = vld [vmem:[%s273 + $0x6c] sm:$0xf]
      %v1576 = vld [vmem:[%s273 + $0x70] sm:$0xf]
      %v1577 = vld [vmem:[%s273 + $0x74] sm:$0xf]
      %v1578 = vld [vmem:[%s273 + $0x78] sm:$0xf]
      %v1579 = vld [vmem:[%s273 + $0x7c] sm:$0xf]
      %1580 = vst.msk [vmem:[#allocation3] sm:$0xff] %vm332, 0
      %v1581 = vld [vmem:[#allocation3] sm:$0x1]
      %v1582 = vsel %vm336, 0, %v1581
      %1583 = vst [vmem:[#allocation3] sm:$0x1] %v1582
      %v1584 = vld [vmem:[#allocation3 + $0x8] sm:$0x1]
      %v1585 = vsel %vm336, 0, %v1584
      %1586 = vst [vmem:[#allocation3 + $0x8] sm:$0x1] %v1585
      %v1587 = vld [vmem:[#allocation3 + $0x10] sm:$0x1]
      %v1588 = vsel %vm336, 0, %v1587
      %1589 = vst [vmem:[#allocation3 + $0x10] sm:$0x1] %v1588
      %v1590 = vld [vmem:[#allocation3 + $0x18] sm:$0x1]
      %v1591 = vsel %vm336, 0, %v1590
      %1592 = vst [vmem:[#allocation3 + $0x18] sm:$0x1] %v1591
      %v1593 = vld [vmem:[#allocation3 + $0x20] sm:$0x1]
      %v1594 = vsel %vm336, 0, %v1593
      %1595 = vst [vmem:[#allocation3 + $0x20] sm:$0x1] %v1594
      %v1596 = vld [vmem:[#allocation3 + $0x28] sm:$0x1]
      %v1597 = vsel %vm336, 0, %v1596
      %1598 = vst [vmem:[#allocation3 + $0x28] sm:$0x1] %v1597
      %v1599 = vld [vmem:[#allocation3 + $0x30] sm:$0x1]
      %v1600 = vsel %vm336, 0, %v1599
      %1601 = vst [vmem:[#allocation3 + $0x30] sm:$0x1] %v1600
      %v1602 = vld [vmem:[#allocation3 + $0x38] sm:$0x1]
      %v1603 = vsel %vm336, 0, %v1602
      %1604 = vst [vmem:[#allocation3 + $0x38] sm:$0x1] %v1603
      %v1605 = vld [vmem:[#allocation3 + $0x40] sm:$0x1]
      %v1606 = vsel %vm336, 0, %v1605
      %1607 = vst [vmem:[#allocation3 + $0x40] sm:$0x1] %v1606
      %v1608 = vld [vmem:[#allocation3 + $0x48] sm:$0x1]
      %v1609 = vsel %vm336, 0, %v1608
      %1610 = vst [vmem:[#allocation3 + $0x48] sm:$0x1] %v1609
      %v1611 = vld [vmem:[#allocation3 + $0x50] sm:$0x1]
      %v1612 = vsel %vm336, 0, %v1611
      %1613 = vst [vmem:[#allocation3 + $0x50] sm:$0x1] %v1612
      %v1614 = vld [vmem:[#allocation3 + $0x58] sm:$0x1]
      %v1615 = vsel %vm336, 0, %v1614
      %1616 = vst [vmem:[#allocation3 + $0x58] sm:$0x1] %v1615
      %v1617 = vld [vmem:[#allocation3 + $0x60] sm:$0x1]
      %v1618 = vsel %vm336, 0, %v1617
      %1619 = vst [vmem:[#allocation3 + $0x60] sm:$0x1] %v1618
      %v1620 = vld [vmem:[#allocation3 + $0x68] sm:$0x1]
      %v1621 = vsel %vm336, 0, %v1620
      %1622 = vst [vmem:[#allocation3 + $0x68] sm:$0x1] %v1621
      %v1623 = vld [vmem:[#allocation3 + $0x70] sm:$0x1]
      %v1624 = vsel %vm336, 0, %v1623
      %1625 = vst [vmem:[#allocation3 + $0x70] sm:$0x1] %v1624
      %v1626 = vld [vmem:[#allocation3 + $0x78] sm:$0x1]
      %v1627 = vsel %vm336, 0, %v1626
      %1628 = vst [vmem:[#allocation3 + $0x78] sm:$0x1] %v1627
      %v1659 = vunpack.c.l.b16 %v1548
      %v1660 = vunpack.c.l.b16 %v1549
      %v1661 = vunpack.c.l.b16 %v1550
      %v1662 = vunpack.c.l.b16 %v1551
      %v1663 = vunpack.c.l.b16 %v1552
      %v1664 = vunpack.c.l.b16 %v1553
      %v1665 = vunpack.c.l.b16 %v1554
      %v1666 = vunpack.c.l.b16 %v1555
      %v1667 = vunpack.c.l.b16 %v1556
      %v1668 = vunpack.c.l.b16 %v1557
      %v1669 = vunpack.c.l.b16 %v1558
      %v1670 = vunpack.c.l.b16 %v1559
      %v1671 = vunpack.c.l.b16 %v1560
      %v1672 = vunpack.c.l.b16 %v1561
      %v1673 = vunpack.c.l.b16 %v1562
      %v1674 = vunpack.c.l.b16 %v1563
      %v1675 = vunpack.c.l.b16 %v1564
      %v1676 = vunpack.c.l.b16 %v1565
      %v1677 = vunpack.c.l.b16 %v1566
      %v1678 = vunpack.c.l.b16 %v1567
      %v1679 = vunpack.c.l.b16 %v1568
      %v1680 = vunpack.c.l.b16 %v1569
      %v1681 = vunpack.c.l.b16 %v1570
      %v1682 = vunpack.c.l.b16 %v1571
      %v1683 = vunpack.c.l.b16 %v1572
      %v1684 = vunpack.c.l.b16 %v1573
      %v1685 = vunpack.c.l.b16 %v1574
      %v1686 = vunpack.c.l.b16 %v1575
      %v1687 = vunpack.c.l.b16 %v1576
      %v1688 = vunpack.c.l.b16 %v1577
      %v1689 = vpack.c.b16 %v1660, %v1659
      %v1690 = vpack.c.b16 %v1662, %v1661
      %v1691 = vpack.c.b16 %v1664, %v1663
      %v1692 = vpack.c.b16 %v1666, %v1665
      %v1693 = vpack.c.b16 %v1668, %v1667
      %v1694 = vpack.c.b16 %v1670, %v1669
      %v1695 = vpack.c.b16 %v1672, %v1671
      %v1696 = vpack.c.b16 %v1674, %v1673
      %v1697 = vpack.c.b16 %v1676, %v1675
      %v1698 = vpack.c.b16 %v1678, %v1677
      %v1699 = vpack.c.b16 %v1680, %v1679
      %v1700 = vpack.c.b16 %v1682, %v1681
      %v1701 = vpack.c.b16 %v1684, %v1683
      %v1702 = vpack.c.b16 %v1686, %v1685
      %v1703 = vpack.c.b16 %v1688, %v1687
      %v1705 = vshrl.u32 %v1689, 16
      %v1707 = vrot.slane %v1705, 7
      %v1708 = vshll.u32 %v1689, 16
      %v1710 = vor.u32 %v1707, %v1708
      %v1712 = vshrl.u32 %v1690, 16
      %v1714 = vrot.slane %v1712, 7
      %v1715 = vshll.u32 %v1690, 16
      %v1717 = vor.u32 %v1714, %v1715
      %v1719 = vshrl.u32 %v1691, 16
      %v1721 = vrot.slane %v1719, 7
      %v1722 = vshll.u32 %v1691, 16
      %v1724 = vor.u32 %v1721, %v1722
      %v1726 = vshrl.u32 %v1692, 16
      %v1728 = vrot.slane %v1726, 7
      %v1729 = vshll.u32 %v1692, 16
      %v1731 = vor.u32 %v1728, %v1729
      %v1733 = vshrl.u32 %v1693, 16
      %v1735 = vrot.slane %v1733, 7
      %v1736 = vshll.u32 %v1693, 16
      %v1738 = vor.u32 %v1735, %v1736
      %v1740 = vshrl.u32 %v1694, 16
      %v1742 = vrot.slane %v1740, 7
      %v1743 = vshll.u32 %v1694, 16
      %v1745 = vor.u32 %v1742, %v1743
      %v1747 = vshrl.u32 %v1695, 16
      %v1749 = vrot.slane %v1747, 7
      %v1750 = vshll.u32 %v1695, 16
      %v1752 = vor.u32 %v1749, %v1750
      %v1754 = vshrl.u32 %v1696, 16
      %v1756 = vrot.slane %v1754, 7
      %v1757 = vshll.u32 %v1696, 16
      %v1759 = vor.u32 %v1756, %v1757
      %v1761 = vshrl.u32 %v1697, 16
      %v1763 = vrot.slane %v1761, 7
      %v1764 = vshll.u32 %v1697, 16
      %v1766 = vor.u32 %v1763, %v1764
      %v1768 = vshrl.u32 %v1698, 16
      %v1770 = vrot.slane %v1768, 7
      %v1771 = vshll.u32 %v1698, 16
      %v1773 = vor.u32 %v1770, %v1771
      %v1775 = vshrl.u32 %v1699, 16
      %v1777 = vrot.slane %v1775, 7
      %v1778 = vshll.u32 %v1699, 16
      %v1780 = vor.u32 %v1777, %v1778
      %v1782 = vshrl.u32 %v1700, 16
      %v1784 = vrot.slane %v1782, 7
      %v1785 = vshll.u32 %v1700, 16
      %v1787 = vor.u32 %v1784, %v1785
      %v1789 = vshrl.u32 %v1701, 16
      %v1791 = vrot.slane %v1789, 7
      %v1792 = vshll.u32 %v1701, 16
      %v1794 = vor.u32 %v1791, %v1792
      %v1796 = vshrl.u32 %v1702, 16
      %v1798 = vrot.slane %v1796, 7
      %v1799 = vshll.u32 %v1702, 16
      %v1801 = vor.u32 %v1798, %v1799
      %v1803 = vshrl.u32 %v1703, 16
      %v1805 = vrot.slane %v1803, 7
      %v1806 = vshll.u32 %v1703, 16
      %v1808 = vor.u32 %v1805, %v1806
      %s1824 = scalar_lea.vmem [#allocation3], 8
      %v1825 = vld [vmem:[%s1824] sm:$0xff]
      %v1826 = vsel %vm508, %v1710, %v1825
      %1827 = vst [vmem:[%s1824] sm:$0xff] %v1826
      %v1828 = vld [vmem:[%s1824 + $0x8] sm:$0xff]
      %v1829 = vsel %vm508, %v1717, %v1828
      %1830 = vst [vmem:[%s1824 + $0x8] sm:$0xff] %v1829
      %v1831 = vld [vmem:[%s1824 + $0x10] sm:$0xff]
      %v1832 = vsel %vm508, %v1724, %v1831
      %1833 = vst [vmem:[%s1824 + $0x10] sm:$0xff] %v1832
      %v1834 = vld [vmem:[%s1824 + $0x18] sm:$0xff]
      %v1835 = vsel %vm508, %v1731, %v1834
      %1836 = vst [vmem:[%s1824 + $0x18] sm:$0xff] %v1835
      %v1837 = vld [vmem:[%s1824 + $0x20] sm:$0xff]
      %v1838 = vsel %vm508, %v1738, %v1837
      %1839 = vst [vmem:[%s1824 + $0x20] sm:$0xff] %v1838
      %v1840 = vld [vmem:[%s1824 + $0x28] sm:$0xff]
      %v1841 = vsel %vm508, %v1745, %v1840
      %1842 = vst [vmem:[%s1824 + $0x28] sm:$0xff] %v1841
      %v1843 = vld [vmem:[%s1824 + $0x30] sm:$0xff]
      %v1844 = vsel %vm508, %v1752, %v1843
      %1845 = vst [vmem:[%s1824 + $0x30] sm:$0xff] %v1844
      %v1846 = vld [vmem:[%s1824 + $0x38] sm:$0xff]
      %v1847 = vsel %vm508, %v1759, %v1846
      %1848 = vst [vmem:[%s1824 + $0x38] sm:$0xff] %v1847
      %v1849 = vld [vmem:[%s1824 + $0x40] sm:$0xff]
      %v1850 = vsel %vm508, %v1766, %v1849
      %1851 = vst [vmem:[%s1824 + $0x40] sm:$0xff] %v1850
      %v1852 = vld [vmem:[%s1824 + $0x48] sm:$0xff]
      %v1853 = vsel %vm508, %v1773, %v1852
      %1854 = vst [vmem:[%s1824 + $0x48] sm:$0xff] %v1853
      %v1855 = vld [vmem:[%s1824 + $0x50] sm:$0xff]
      %v1856 = vsel %vm508, %v1780, %v1855
      %1857 = vst [vmem:[%s1824 + $0x50] sm:$0xff] %v1856
      %v1858 = vld [vmem:[%s1824 + $0x58] sm:$0xff]
      %v1859 = vsel %vm508, %v1787, %v1858
      %1860 = vst [vmem:[%s1824 + $0x58] sm:$0xff] %v1859
      %v1861 = vld [vmem:[%s1824 + $0x60] sm:$0xff]
      %v1862 = vsel %vm508, %v1794, %v1861
      %1863 = vst [vmem:[%s1824 + $0x60] sm:$0xff] %v1862
      %v1864 = vld [vmem:[%s1824 + $0x68] sm:$0xff]
      %v1865 = vsel %vm508, %v1801, %v1864
      %1866 = vst [vmem:[%s1824 + $0x68] sm:$0xff] %v1865
      %v1867 = vld [vmem:[%s1824 + $0x70] sm:$0xff]
      %v1868 = vsel %vm508, %v1808, %v1867
      %1869 = vst [vmem:[%s1824 + $0x70] sm:$0xff] %v1868
      %1870 = vst.msk [vmem:[#allocation3] sm:$0xff] %vm554, 0
      %1871 = vrot.lane.b32.xlu0 %v1689, 2
      %v1872 = vpop.permute.xlu0 %1871
      %1873 = vrot.lane.b32.xlu0 %v1690, 2
      %v1874 = vpop.permute.xlu0 %1873
      %1875 = vrot.lane.b32.xlu0 %v1691, 2
      %v1876 = vpop.permute.xlu0 %1875
      %1877 = vrot.lane.b32.xlu0 %v1692, 2
      %v1878 = vpop.permute.xlu0 %1877
      %1879 = vrot.lane.b32.xlu0 %v1693, 2
      %v1880 = vpop.permute.xlu0 %1879
      %1881 = vrot.lane.b32.xlu0 %v1694, 2
      %v1882 = vpop.permute.xlu0 %1881
      %1883 = vrot.lane.b32.xlu0 %v1695, 2
      %v1884 = vpop.permute.xlu0 %1883
      %1885 = vrot.lane.b32.xlu0 %v1696, 2
      %v1886 = vpop.permute.xlu0 %1885
      %1887 = vrot.lane.b32.xlu0 %v1697, 2
      %v1888 = vpop.permute.xlu0 %1887
      %1889 = vrot.lane.b32.xlu0 %v1698, 2
      %v1890 = vpop.permute.xlu0 %1889
      %1891 = vrot.lane.b32.xlu0 %v1699, 2
      %v1892 = vpop.permute.xlu0 %1891
      %1893 = vrot.lane.b32.xlu0 %v1700, 2
      %v1894 = vpop.permute.xlu0 %1893
      %1895 = vrot.lane.b32.xlu0 %v1701, 2
      %v1896 = vpop.permute.xlu0 %1895
      %1897 = vrot.lane.b32.xlu0 %v1702, 2
      %v1898 = vpop.permute.xlu0 %1897
      %1899 = vrot.lane.b32.xlu0 %v1703, 2
      %v1900 = vpop.permute.xlu0 %1899
      %1916 = vst.msk [vmem:[%s1824] sm:$0xff] %vm554, %v1872
      %1917 = vst.msk [vmem:[%s1824 + $0x8] sm:$0xff] %vm554, %v1874
      %1918 = vst.msk [vmem:[%s1824 + $0x10] sm:$0xff] %vm554, %v1876
      %1919 = vst.msk [vmem:[%s1824 + $0x18] sm:$0xff] %vm554, %v1878
      %1920 = vst.msk [vmem:[%s1824 + $0x20] sm:$0xff] %vm554, %v1880
      %1921 = vst.msk [vmem:[%s1824 + $0x28] sm:$0xff] %vm554, %v1882
      %1922 = vst.msk [vmem:[%s1824 + $0x30] sm:$0xff] %vm554, %v1884
      %1923 = vst.msk [vmem:[%s1824 + $0x38] sm:$0xff] %vm554, %v1886
      %1924 = vst.msk [vmem:[%s1824 + $0x40] sm:$0xff] %vm554, %v1888
      %1925 = vst.msk [vmem:[%s1824 + $0x48] sm:$0xff] %vm554, %v1890
      %1926 = vst.msk [vmem:[%s1824 + $0x50] sm:$0xff] %vm554, %v1892
      %1927 = vst.msk [vmem:[%s1824 + $0x58] sm:$0xff] %vm554, %v1894
      %1928 = vst.msk [vmem:[%s1824 + $0x60] sm:$0xff] %vm554, %v1896
      %1929 = vst.msk [vmem:[%s1824 + $0x68] sm:$0xff] %vm554, %v1898
      %1930 = vst.msk [vmem:[%s1824 + $0x70] sm:$0xff] %vm554, %v1900
      %1931 = vst.msk [vmem:[#allocation3] sm:$0xff] %vm631, 0
      %v1932 = vld [vmem:[#allocation3] sm:$0x80]
      %v1933 = vsel %vm635, 0, %v1932
      %1934 = vst [vmem:[#allocation3] sm:$0x80] %v1933
      %v1935 = vld [vmem:[#allocation3 + $0x8] sm:$0x80]
      %v1936 = vsel %vm635, 0, %v1935
      %1937 = vst [vmem:[#allocation3 + $0x8] sm:$0x80] %v1936
      %v1938 = vld [vmem:[#allocation3 + $0x10] sm:$0x80]
      %v1939 = vsel %vm635, 0, %v1938
      %1940 = vst [vmem:[#allocation3 + $0x10] sm:$0x80] %v1939
      %v1941 = vld [vmem:[#allocation3 + $0x18] sm:$0x80]
      %v1942 = vsel %vm635, 0, %v1941
      %1943 = vst [vmem:[#allocation3 + $0x18] sm:$0x80] %v1942
      %v1944 = vld [vmem:[#allocation3 + $0x20] sm:$0x80]
      %v1945 = vsel %vm635, 0, %v1944
      %1946 = vst [vmem:[#allocation3 + $0x20] sm:$0x80] %v1945
      %v1947 = vld [vmem:[#allocation3 + $0x28] sm:$0x80]
      %v1948 = vsel %vm635, 0, %v1947
      %1949 = vst [vmem:[#allocation3 + $0x28] sm:$0x80] %v1948
      %v1950 = vld [vmem:[#allocation3 + $0x30] sm:$0x80]
      %v1951 = vsel %vm635, 0, %v1950
      %1952 = vst [vmem:[#allocation3 + $0x30] sm:$0x80] %v1951
      %v1953 = vld [vmem:[#allocation3 + $0x38] sm:$0x80]
      %v1954 = vsel %vm635, 0, %v1953
      %1955 = vst [vmem:[#allocation3 + $0x38] sm:$0x80] %v1954
      %v1956 = vld [vmem:[#allocation3 + $0x40] sm:$0x80]
      %v1957 = vsel %vm635, 0, %v1956
      %1958 = vst [vmem:[#allocation3 + $0x40] sm:$0x80] %v1957
      %v1959 = vld [vmem:[#allocation3 + $0x48] sm:$0x80]
      %v1960 = vsel %vm635, 0, %v1959
      %1961 = vst [vmem:[#allocation3 + $0x48] sm:$0x80] %v1960
      %v1962 = vld [vmem:[#allocation3 + $0x50] sm:$0x80]
      %v1963 = vsel %vm635, 0, %v1962
      %1964 = vst [vmem:[#allocation3 + $0x50] sm:$0x80] %v1963
      %v1965 = vld [vmem:[#allocation3 + $0x58] sm:$0x80]
      %v1966 = vsel %vm635, 0, %v1965
      %1967 = vst [vmem:[#allocation3 + $0x58] sm:$0x80] %v1966
      %v1968 = vld [vmem:[#allocation3 + $0x60] sm:$0x80]
      %v1969 = vsel %vm635, 0, %v1968
      %1970 = vst [vmem:[#allocation3 + $0x60] sm:$0x80] %v1969
      %v1971 = vld [vmem:[#allocation3 + $0x68] sm:$0x80]
      %v1972 = vsel %vm635, 0, %v1971
      %1973 = vst [vmem:[#allocation3 + $0x68] sm:$0x80] %v1972
      %v1974 = vld [vmem:[#allocation3 + $0x70] sm:$0x80]
      %v1975 = vsel %vm635, 0, %v1974
      %1976 = vst [vmem:[#allocation3 + $0x70] sm:$0x80] %v1975
      %v1977 = vld [vmem:[#allocation3 + $0x78] sm:$0x80]
      %v1978 = vsel %vm635, 0, %v1977
      %1979 = vst [vmem:[#allocation3 + $0x78] sm:$0x80] %v1978
      %v1980 = vrot.slane %v1708, 1
      %v1981 = vor.u32 %v1705, %v1980
      %v1982 = vrot.slane %v1715, 1
      %v1983 = vor.u32 %v1712, %v1982
      %v1984 = vrot.slane %v1722, 1
      %v1985 = vor.u32 %v1719, %v1984
      %v1986 = vrot.slane %v1729, 1
      %v1987 = vor.u32 %v1726, %v1986
      %v1988 = vrot.slane %v1736, 1
      %v1989 = vor.u32 %v1733, %v1988
      %v1990 = vrot.slane %v1743, 1
      %v1991 = vor.u32 %v1740, %v1990
      %v1992 = vrot.slane %v1750, 1
      %v1993 = vor.u32 %v1747, %v1992
      %v1994 = vrot.slane %v1757, 1
      %v1995 = vor.u32 %v1754, %v1994
      %v1996 = vrot.slane %v1764, 1
      %v1997 = vor.u32 %v1761, %v1996
      %v1998 = vrot.slane %v1771, 1
      %v1999 = vor.u32 %v1768, %v1998
      %v2000 = vrot.slane %v1778, 1
      %v2001 = vor.u32 %v1775, %v2000
      %v2002 = vrot.slane %v1785, 1
      %v2003 = vor.u32 %v1782, %v2002
      %v2004 = vrot.slane %v1792, 1
      %v2005 = vor.u32 %v1789, %v2004
      %v2006 = vrot.slane %v1799, 1
      %v2007 = vor.u32 %v1796, %v2006
      %v2008 = vrot.slane %v1806, 1
      %v2009 = vor.u32 %v1803, %v2008
      %2010 = vrot.lane.b32.xlu0 %v1981, 4
      %v2011 = vpop.permute.xlu0 %2010
      %2012 = vrot.lane.b32.xlu0 %v1983, 4
      %v2013 = vpop.permute.xlu0 %2012
      %2014 = vrot.lane.b32.xlu0 %v1985, 4
      %v2015 = vpop.permute.xlu0 %2014
      %2016 = vrot.lane.b32.xlu0 %v1987, 4
      %v2017 = vpop.permute.xlu0 %2016
      %2018 = vrot.lane.b32.xlu0 %v1989, 4
      %v2019 = vpop.permute.xlu0 %2018
      %2020 = vrot.lane.b32.xlu0 %v1991, 4
      %v2021 = vpop.permute.xlu0 %2020
      %2022 = vrot.lane.b32.xlu0 %v1993, 4
      %v2023 = vpop.permute.xlu0 %2022
      %2024 = vrot.lane.b32.xlu0 %v1995, 4
      %v2025 = vpop.permute.xlu0 %2024
      %2026 = vrot.lane.b32.xlu0 %v1997, 4
      %v2027 = vpop.permute.xlu0 %2026
      %2028 = vrot.lane.b32.xlu0 %v1999, 4
      %v2029 = vpop.permute.xlu0 %2028
      %2030 = vrot.lane.b32.xlu0 %v2001, 4
      %v2031 = vpop.permute.xlu0 %2030
      %2032 = vrot.lane.b32.xlu0 %v2003, 4
      %v2033 = vpop.permute.xlu0 %2032
      %2034 = vrot.lane.b32.xlu0 %v2005, 4
      %v2035 = vpop.permute.xlu0 %2034
      %2036 = vrot.lane.b32.xlu0 %v2007, 4
      %v2037 = vpop.permute.xlu0 %2036
      %2038 = vrot.lane.b32.xlu0 %v2009, 4
      %v2039 = vpop.permute.xlu0 %2038
      %v2055 = vld [vmem:[%s1824] sm:$0xff]
      %v2056 = vsel %vm761, %v2011, %v2055
      %2057 = vst [vmem:[%s1824] sm:$0xff] %v2056
      %v2058 = vld [vmem:[%s1824 + $0x8] sm:$0xff]
      %v2059 = vsel %vm761, %v2013, %v2058
      %2060 = vst [vmem:[%s1824 + $0x8] sm:$0xff] %v2059
      %v2061 = vld [vmem:[%s1824 + $0x10] sm:$0xff]
      %v2062 = vsel %vm761, %v2015, %v2061
      %2063 = vst [vmem:[%s1824 + $0x10] sm:$0xff] %v2062
      %v2064 = vld [vmem:[%s1824 + $0x18] sm:$0xff]
      %v2065 = vsel %vm761, %v2017, %v2064
      %2066 = vst [vmem:[%s1824 + $0x18] sm:$0xff] %v2065
      %v2067 = vld [vmem:[%s1824 + $0x20] sm:$0xff]
      %v2068 = vsel %vm761, %v2019, %v2067
      %2069 = vst [vmem:[%s1824 + $0x20] sm:$0xff] %v2068
      %v2070 = vld [vmem:[%s1824 + $0x28] sm:$0xff]
      %v2071 = vsel %vm761, %v2021, %v2070
      %2072 = vst [vmem:[%s1824 + $0x28] sm:$0xff] %v2071
      %v2073 = vld [vmem:[%s1824 + $0x30] sm:$0xff]
      %v2074 = vsel %vm761, %v2023, %v2073
      %2075 = vst [vmem:[%s1824 + $0x30] sm:$0xff] %v2074
      %v2076 = vld [vmem:[%s1824 + $0x38] sm:$0xff]
      %v2077 = vsel %vm761, %v2025, %v2076
      %2078 = vst [vmem:[%s1824 + $0x38] sm:$0xff] %v2077
      %v2079 = vld [vmem:[%s1824 + $0x40] sm:$0xff]
      %v2080 = vsel %vm761, %v2027, %v2079
      %2081 = vst [vmem:[%s1824 + $0x40] sm:$0xff] %v2080
      %v2082 = vld [vmem:[%s1824 + $0x48] sm:$0xff]
      %v2083 = vsel %vm761, %v2029, %v2082
      %2084 = vst [vmem:[%s1824 + $0x48] sm:$0xff] %v2083
      %v2085 = vld [vmem:[%s1824 + $0x50] sm:$0xff]
      %v2086 = vsel %vm761, %v2031, %v2085
      %2087 = vst [vmem:[%s1824 + $0x50] sm:$0xff] %v2086
      %v2088 = vld [vmem:[%s1824 + $0x58] sm:$0xff]
      %v2089 = vsel %vm761, %v2033, %v2088
      %2090 = vst [vmem:[%s1824 + $0x58] sm:$0xff] %v2089
      %v2091 = vld [vmem:[%s1824 + $0x60] sm:$0xff]
      %v2092 = vsel %vm761, %v2035, %v2091
      %2093 = vst [vmem:[%s1824 + $0x60] sm:$0xff] %v2092
      %v2094 = vld [vmem:[%s1824 + $0x68] sm:$0xff]
      %v2095 = vsel %vm761, %v2037, %v2094
      %2096 = vst [vmem:[%s1824 + $0x68] sm:$0xff] %v2095
      %v2097 = vld [vmem:[%s1824 + $0x70] sm:$0xff]
      %v2098 = vsel %vm761, %v2039, %v2097
      %2099 = vst [vmem:[%s1824 + $0x70] sm:$0xff] %v2098
      %v2100 = vld [vmem:[#allocation3] sm:$0x1]
      %v2101 = vsel %vm808, 0, %v2100
      %2102 = vst [vmem:[#allocation3] sm:$0x1] %v2101
      %v2103 = vld [vmem:[#allocation3 + $0x8] sm:$0x1]
      %v2104 = vsel %vm808, 0, %v2103
      %2105 = vst [vmem:[#allocation3 + $0x8] sm:$0x1] %v2104
      %v2106 = vld [vmem:[#allocation3 + $0x10] sm:$0x1]
      %v2107 = vsel %vm808, 0, %v2106
      %2108 = vst [vmem:[#allocation3 + $0x10] sm:$0x1] %v2107
      %v2109 = vld [vmem:[#allocation3 + $0x18] sm:$0x1]
      %v2110 = vsel %vm808, 0, %v2109
      %2111 = vst [vmem:[#allocation3 + $0x18] sm:$0x1] %v2110
      %v2112 = vld [vmem:[#allocation3 + $0x20] sm:$0x1]
      %v2113 = vsel %vm808, 0, %v2112
      %2114 = vst [vmem:[#allocation3 + $0x20] sm:$0x1] %v2113
      %v2115 = vld [vmem:[#allocation3 + $0x28] sm:$0x1]
      %v2116 = vsel %vm808, 0, %v2115
      %2117 = vst [vmem:[#allocation3 + $0x28] sm:$0x1] %v2116
      %v2118 = vld [vmem:[#allocation3 + $0x30] sm:$0x1]
      %v2119 = vsel %vm808, 0, %v2118
      %2120 = vst [vmem:[#allocation3 + $0x30] sm:$0x1] %v2119
      %v2121 = vld [vmem:[#allocation3 + $0x38] sm:$0x1]
      %v2122 = vsel %vm808, 0, %v2121
      %2123 = vst [vmem:[#allocation3 + $0x38] sm:$0x1] %v2122
      %v2124 = vld [vmem:[#allocation3 + $0x40] sm:$0x1]
      %v2125 = vsel %vm808, 0, %v2124
      %2126 = vst [vmem:[#allocation3 + $0x40] sm:$0x1] %v2125
      %v2127 = vld [vmem:[#allocation3 + $0x48] sm:$0x1]
      %v2128 = vsel %vm808, 0, %v2127
      %2129 = vst [vmem:[#allocation3 + $0x48] sm:$0x1] %v2128
      %v2130 = vld [vmem:[#allocation3 + $0x50] sm:$0x1]
      %v2131 = vsel %vm808, 0, %v2130
      %2132 = vst [vmem:[#allocation3 + $0x50] sm:$0x1] %v2131
      %v2133 = vld [vmem:[#allocation3 + $0x58] sm:$0x1]
      %v2134 = vsel %vm808, 0, %v2133
      %2135 = vst [vmem:[#allocation3 + $0x58] sm:$0x1] %v2134
      %v2136 = vld [vmem:[#allocation3 + $0x60] sm:$0x1]
      %v2137 = vsel %vm808, 0, %v2136
      %2138 = vst [vmem:[#allocation3 + $0x60] sm:$0x1] %v2137
      %v2139 = vld [vmem:[#allocation3 + $0x68] sm:$0x1]
      %v2140 = vsel %vm808, 0, %v2139
      %2141 = vst [vmem:[#allocation3 + $0x68] sm:$0x1] %v2140
      %v2142 = vld [vmem:[#allocation3 + $0x70] sm:$0x1]
      %v2143 = vsel %vm808, 0, %v2142
      %2144 = vst [vmem:[#allocation3 + $0x70] sm:$0x1] %v2143
      %v2145 = vld [vmem:[#allocation3 + $0x78] sm:$0x1]
      %v2146 = vsel %vm808, 0, %v2145
      %2147 = vst [vmem:[#allocation3 + $0x78] sm:$0x1] %v2146
      %v2150 = vunpack.c.l.b16 %v1578
      %v2151 = vunpack.c.l.b16 %v1579
      %v2152 = vpack.c.b16 %v2151, %v2150
      %v2154 = vshrl.u32 %v2152, 16
      %v2156 = vrot.slane %v2154, 7
      %v2157 = vshll.u32 %v2152, 16
      %v2159 = vor.u32 %v2156, %v2157
      %2160 = vrot.lane.b32.xlu0 %v1710, 6
      %v2161 = vpop.permute.xlu0 %2160
      %2162 = vrot.lane.b32.xlu0 %v1717, 6
      %v2163 = vpop.permute.xlu0 %2162
      %2164 = vrot.lane.b32.xlu0 %v1724, 6
      %v2165 = vpop.permute.xlu0 %2164
      %2166 = vrot.lane.b32.xlu0 %v1731, 6
      %v2167 = vpop.permute.xlu0 %2166
      %2168 = vrot.lane.b32.xlu0 %v1738, 6
      %v2169 = vpop.permute.xlu0 %2168
      %2170 = vrot.lane.b32.xlu0 %v1745, 6
      %v2171 = vpop.permute.xlu0 %2170
      %2172 = vrot.lane.b32.xlu0 %v1752, 6
      %v2173 = vpop.permute.xlu0 %2172
      %2174 = vrot.lane.b32.xlu0 %v1759, 6
      %v2175 = vpop.permute.xlu0 %2174
      %2176 = vrot.lane.b32.xlu0 %v1766, 6
      %v2177 = vpop.permute.xlu0 %2176
      %2178 = vrot.lane.b32.xlu0 %v1773, 6
      %v2179 = vpop.permute.xlu0 %2178
      %2180 = vrot.lane.b32.xlu0 %v1780, 6
      %v2181 = vpop.permute.xlu0 %2180
      %2182 = vrot.lane.b32.xlu0 %v1787, 6
      %v2183 = vpop.permute.xlu0 %2182
      %2184 = vrot.lane.b32.xlu0 %v1794, 6
      %v2185 = vpop.permute.xlu0 %2184
      %2186 = vrot.lane.b32.xlu0 %v1801, 6
      %v2187 = vpop.permute.xlu0 %2186
      %2188 = vrot.lane.b32.xlu0 %v1808, 6
      %v2189 = vpop.permute.xlu0 %2188
      %2190 = vrot.lane.b32.xlu0 %v2159, 6
      %v2191 = vpop.permute.xlu0 %2190
      %v2208 = vld [vmem:[#allocation3] sm:$0xff]
      %v2209 = vsel %vm913, %v2161, %v2208
      %2210 = vst [vmem:[#allocation3] sm:$0xff] %v2209
      %v2211 = vld [vmem:[#allocation3 + $0x8] sm:$0xff]
      %v2212 = vsel %vm913, %v2163, %v2211
      %2213 = vst [vmem:[#allocation3 + $0x8] sm:$0xff] %v2212
      %v2214 = vld [vmem:[#allocation3 + $0x10] sm:$0xff]
      %v2215 = vsel %vm913, %v2165, %v2214
      %2216 = vst [vmem:[#allocation3 + $0x10] sm:$0xff] %v2215
      %v2217 = vld [vmem:[#allocation3 + $0x18] sm:$0xff]
      %v2218 = vsel %vm913, %v2167, %v2217
      %2219 = vst [vmem:[#allocation3 + $0x18] sm:$0xff] %v2218
      %v2220 = vld [vmem:[#allocation3 + $0x20] sm:$0xff]
      %v2221 = vsel %vm913, %v2169, %v2220
      %2222 = vst [vmem:[#allocation3 + $0x20] sm:$0xff] %v2221
      %v2223 = vld [vmem:[#allocation3 + $0x28] sm:$0xff]
      %v2224 = vsel %vm913, %v2171, %v2223
      %2225 = vst [vmem:[#allocation3 + $0x28] sm:$0xff] %v2224
      %v2226 = vld [vmem:[#allocation3 + $0x30] sm:$0xff]
      %v2227 = vsel %vm913, %v2173, %v2226
      %2228 = vst [vmem:[#allocation3 + $0x30] sm:$0xff] %v2227
      %v2229 = vld [vmem:[#allocation3 + $0x38] sm:$0xff]
      %v2230 = vsel %vm913, %v2175, %v2229
      %2231 = vst [vmem:[#allocation3 + $0x38] sm:$0xff] %v2230
      %v2232 = vld [vmem:[#allocation3 + $0x40] sm:$0xff]
      %v2233 = vsel %vm913, %v2177, %v2232
      %2234 = vst [vmem:[#allocation3 + $0x40] sm:$0xff] %v2233
      %v2235 = vld [vmem:[#allocation3 + $0x48] sm:$0xff]
      %v2236 = vsel %vm913, %v2179, %v2235
      %2237 = vst [vmem:[#allocation3 + $0x48] sm:$0xff] %v2236
      %v2238 = vld [vmem:[#allocation3 + $0x50] sm:$0xff]
      %v2239 = vsel %vm913, %v2181, %v2238
      %2240 = vst [vmem:[#allocation3 + $0x50] sm:$0xff] %v2239
      %v2241 = vld [vmem:[#allocation3 + $0x58] sm:$0xff]
      %v2242 = vsel %vm913, %v2183, %v2241
      %2243 = vst [vmem:[#allocation3 + $0x58] sm:$0xff] %v2242
      %v2244 = vld [vmem:[#allocation3 + $0x60] sm:$0xff]
      %v2245 = vsel %vm913, %v2185, %v2244
      %2246 = vst [vmem:[#allocation3 + $0x60] sm:$0xff] %v2245
      %v2247 = vld [vmem:[#allocation3 + $0x68] sm:$0xff]
      %v2248 = vsel %vm913, %v2187, %v2247
      %2249 = vst [vmem:[#allocation3 + $0x68] sm:$0xff] %v2248
      %v2250 = vld [vmem:[#allocation3 + $0x70] sm:$0xff]
      %v2251 = vsel %vm913, %v2189, %v2250
      %2252 = vst [vmem:[#allocation3 + $0x70] sm:$0xff] %v2251
      %v2253 = vld [vmem:[#allocation3 + $0x78] sm:$0xff]
      %v2254 = vsel %vm913, %v2191, %v2253
      %2255 = vst [vmem:[#allocation3 + $0x78] sm:$0xff] %v2254
      %2256 = vrot.lane.b32.xlu0 %v1689, 8
      %v2257 = vpop.permute.xlu0 %2256
      %2258 = vrot.lane.b32.xlu0 %v1690, 8
      %v2259 = vpop.permute.xlu0 %2258
      %2260 = vrot.lane.b32.xlu0 %v1691, 8
      %v2261 = vpop.permute.xlu0 %2260
      %2262 = vrot.lane.b32.xlu0 %v1692, 8
      %v2263 = vpop.permute.xlu0 %2262
      %2264 = vrot.lane.b32.xlu0 %v1693, 8
      %v2265 = vpop.permute.xlu0 %2264
      %2266 = vrot.lane.b32.xlu0 %v1694, 8
      %v2267 = vpop.permute.xlu0 %2266
      %2268 = vrot.lane.b32.xlu0 %v1695, 8
      %v2269 = vpop.permute.xlu0 %2268
      %2270 = vrot.lane.b32.xlu0 %v1696, 8
      %v2271 = vpop.permute.xlu0 %2270
      %2272 = vrot.lane.b32.xlu0 %v1697, 8
      %v2273 = vpop.permute.xlu0 %2272
      %2274 = vrot.lane.b32.xlu0 %v1698, 8
      %v2275 = vpop.permute.xlu0 %2274
      %2276 = vrot.lane.b32.xlu0 %v1699, 8
      %v2277 = vpop.permute.xlu0 %2276
      %2278 = vrot.lane.b32.xlu0 %v1700, 8
      %v2279 = vpop.permute.xlu0 %2278
      %2280 = vrot.lane.b32.xlu0 %v1701, 8
      %v2281 = vpop.permute.xlu0 %2280
      %2282 = vrot.lane.b32.xlu0 %v1702, 8
      %v2283 = vpop.permute.xlu0 %2282
      %2284 = vrot.lane.b32.xlu0 %v1703, 8
      %v2285 = vpop.permute.xlu0 %2284
      %2286 = vrot.lane.b32.xlu0 %v2152, 8
      %v2287 = vpop.permute.xlu0 %2286
      %2304 = vst.msk [vmem:[#allocation3] sm:$0xff] %vm1011, %v2257
      %2305 = vst.msk [vmem:[#allocation3 + $0x8] sm:$0xff] %vm1011, %v2259
      %2306 = vst.msk [vmem:[#allocation3 + $0x10] sm:$0xff] %vm1011, %v2261
      %2307 = vst.msk [vmem:[#allocation3 + $0x18] sm:$0xff] %vm1011, %v2263
      %2308 = vst.msk [vmem:[#allocation3 + $0x20] sm:$0xff] %vm1011, %v2265
      %2309 = vst.msk [vmem:[#allocation3 + $0x28] sm:$0xff] %vm1011, %v2267
      %2310 = vst.msk [vmem:[#allocation3 + $0x30] sm:$0xff] %vm1011, %v2269
      %2311 = vst.msk [vmem:[#allocation3 + $0x38] sm:$0xff] %vm1011, %v2271
      %2312 = vst.msk [vmem:[#allocation3 + $0x40] sm:$0xff] %vm1011, %v2273
      %2313 = vst.msk [vmem:[#allocation3 + $0x48] sm:$0xff] %vm1011, %v2275
      %2314 = vst.msk [vmem:[#allocation3 + $0x50] sm:$0xff] %vm1011, %v2277
      %2315 = vst.msk [vmem:[#allocation3 + $0x58] sm:$0xff] %vm1011, %v2279
      %2316 = vst.msk [vmem:[#allocation3 + $0x60] sm:$0xff] %vm1011, %v2281
      %2317 = vst.msk [vmem:[#allocation3 + $0x68] sm:$0xff] %vm1011, %v2283
      %2318 = vst.msk [vmem:[#allocation3 + $0x70] sm:$0xff] %vm1011, %v2285
      %2319 = vst.msk [vmem:[#allocation3 + $0x78] sm:$0xff] %vm1011, %v2287
      %v2320 = vld [vmem:[#allocation3] sm:$0x80]
      %v2321 = vsel %vm1029, 0, %v2320
      %2322 = vst [vmem:[#allocation3] sm:$0x80] %v2321
      %v2323 = vld [vmem:[#allocation3 + $0x8] sm:$0x80]
      %v2324 = vsel %vm1029, 0, %v2323
      %2325 = vst [vmem:[#allocation3 + $0x8] sm:$0x80] %v2324
      %v2326 = vld [vmem:[#allocation3 + $0x10] sm:$0x80]
      %v2327 = vsel %vm1029, 0, %v2326
      %2328 = vst [vmem:[#allocation3 + $0x10] sm:$0x80] %v2327
      %v2329 = vld [vmem:[#allocation3 + $0x18] sm:$0x80]
      %v2330 = vsel %vm1029, 0, %v2329
      %2331 = vst [vmem:[#allocation3 + $0x18] sm:$0x80] %v2330
      %v2332 = vld [vmem:[#allocation3 + $0x20] sm:$0x80]
      %v2333 = vsel %vm1029, 0, %v2332
      %2334 = vst [vmem:[#allocation3 + $0x20] sm:$0x80] %v2333
      %v2335 = vld [vmem:[#allocation3 + $0x28] sm:$0x80]
      %v2336 = vsel %vm1029, 0, %v2335
      %2337 = vst [vmem:[#allocation3 + $0x28] sm:$0x80] %v2336
      %v2338 = vld [vmem:[#allocation3 + $0x30] sm:$0x80]
      %v2339 = vsel %vm1029, 0, %v2338
      %2340 = vst [vmem:[#allocation3 + $0x30] sm:$0x80] %v2339
      %v2341 = vld [vmem:[#allocation3 + $0x38] sm:$0x80]
      %v2342 = vsel %vm1029, 0, %v2341
      %2343 = vst [vmem:[#allocation3 + $0x38] sm:$0x80] %v2342
      %v2344 = vld [vmem:[#allocation3 + $0x40] sm:$0x80]
      %v2345 = vsel %vm1029, 0, %v2344
      %2346 = vst [vmem:[#allocation3 + $0x40] sm:$0x80] %v2345
      %v2347 = vld [vmem:[#allocation3 + $0x48] sm:$0x80]
      %v2348 = vsel %vm1029, 0, %v2347
      %2349 = vst [vmem:[#allocation3 + $0x48] sm:$0x80] %v2348
      %v2350 = vld [vmem:[#allocation3 + $0x50] sm:$0x80]
      %v2351 = vsel %vm1029, 0, %v2350
      %2352 = vst [vmem:[#allocation3 + $0x50] sm:$0x80] %v2351
      %v2353 = vld [vmem:[#allocation3 + $0x58] sm:$0x80]
      %v2354 = vsel %vm1029, 0, %v2353
      %2355 = vst [vmem:[#allocation3 + $0x58] sm:$0x80] %v2354
      %v2356 = vld [vmem:[#allocation3 + $0x60] sm:$0x80]
      %v2357 = vsel %vm1029, 0, %v2356
      %2358 = vst [vmem:[#allocation3 + $0x60] sm:$0x80] %v2357
      %v2359 = vld [vmem:[#allocation3 + $0x68] sm:$0x80]
      %v2360 = vsel %vm1029, 0, %v2359
      %2361 = vst [vmem:[#allocation3 + $0x68] sm:$0x80] %v2360
      %v2362 = vld [vmem:[#allocation3 + $0x70] sm:$0x80]
      %v2363 = vsel %vm1029, 0, %v2362
      %2364 = vst [vmem:[#allocation3 + $0x70] sm:$0x80] %v2363
      %v2365 = vld [vmem:[#allocation3 + $0x78] sm:$0x80]
      %v2366 = vsel %vm1029, 0, %v2365
      %2367 = vst [vmem:[#allocation3 + $0x78] sm:$0x80] %v2366
      %v2368 = vrot.slane %v2157, 1
      %v2369 = vor.u32 %v2154, %v2368
      %2370 = vrot.lane.b32.xlu0 %v1981, 10
      %v2371 = vpop.permute.xlu0 %2370
      %2372 = vrot.lane.b32.xlu0 %v1983, 10
      %v2373 = vpop.permute.xlu0 %2372
      %2374 = vrot.lane.b32.xlu0 %v1985, 10
      %v2375 = vpop.permute.xlu0 %2374
      %2376 = vrot.lane.b32.xlu0 %v1987, 10
      %v2377 = vpop.permute.xlu0 %2376
      %2378 = vrot.lane.b32.xlu0 %v1989, 10
      %v2379 = vpop.permute.xlu0 %2378
      %2380 = vrot.lane.b32.xlu0 %v1991, 10
      %v2381 = vpop.permute.xlu0 %2380
      %2382 = vrot.lane.b32.xlu0 %v1993, 10
      %v2383 = vpop.permute.xlu0 %2382
      %2384 = vrot.lane.b32.xlu0 %v1995, 10
      %v2385 = vpop.permute.xlu0 %2384
      %2386 = vrot.lane.b32.xlu0 %v1997, 10
      %v2387 = vpop.permute.xlu0 %2386
      %2388 = vrot.lane.b32.xlu0 %v1999, 10
      %v2389 = vpop.permute.xlu0 %2388
      %2390 = vrot.lane.b32.xlu0 %v2001, 10
      %v2391 = vpop.permute.xlu0 %2390
      %2392 = vrot.lane.b32.xlu0 %v2003, 10
      %v2393 = vpop.permute.xlu0 %2392
      %2394 = vrot.lane.b32.xlu0 %v2005, 10
      %v2395 = vpop.permute.xlu0 %2394
      %2396 = vrot.lane.b32.xlu0 %v2007, 10
      %v2397 = vpop.permute.xlu0 %2396
      %2398 = vrot.lane.b32.xlu0 %v2009, 10
      %v2399 = vpop.permute.xlu0 %2398
      %2400 = vrot.lane.b32.xlu0 %v2369, 10
      %v2401 = vpop.permute.xlu0 %2400
      %v2418 = vld [vmem:[#allocation3] sm:$0xff]
      %v2419 = vsel %vm1129, %v2371, %v2418
      %2420 = vst [vmem:[#allocation3] sm:$0xff] %v2419
      %v2421 = vld [vmem:[#allocation3 + $0x8] sm:$0xff]
      %v2422 = vsel %vm1129, %v2373, %v2421
      %2423 = vst [vmem:[#allocation3 + $0x8] sm:$0xff] %v2422
      %v2424 = vld [vmem:[#allocation3 + $0x10] sm:$0xff]
      %v2425 = vsel %vm1129, %v2375, %v2424
      %2426 = vst [vmem:[#allocation3 + $0x10] sm:$0xff] %v2425
      %v2427 = vld [vmem:[#allocation3 + $0x18] sm:$0xff]
      %v2428 = vsel %vm1129, %v2377, %v2427
      %2429 = vst [vmem:[#allocation3 + $0x18] sm:$0xff] %v2428
      %v2430 = vld [vmem:[#allocation3 + $0x20] sm:$0xff]
      %v2431 = vsel %vm1129, %v2379, %v2430
      %2432 = vst [vmem:[#allocation3 + $0x20] sm:$0xff] %v2431
      %v2433 = vld [vmem:[#allocation3 + $0x28] sm:$0xff]
      %v2434 = vsel %vm1129, %v2381, %v2433
      %2435 = vst [vmem:[#allocation3 + $0x28] sm:$0xff] %v2434
      %v2436 = vld [vmem:[#allocation3 + $0x30] sm:$0xff]
      %v2437 = vsel %vm1129, %v2383, %v2436
      %2438 = vst [vmem:[#allocation3 + $0x30] sm:$0xff] %v2437
      %v2439 = vld [vmem:[#allocation3 + $0x38] sm:$0xff]
      %v2440 = vsel %vm1129, %v2385, %v2439
      %2441 = vst [vmem:[#allocation3 + $0x38] sm:$0xff] %v2440
      %v2442 = vld [vmem:[#allocation3 + $0x40] sm:$0xff]
      %v2443 = vsel %vm1129, %v2387, %v2442
      %2444 = vst [vmem:[#allocation3 + $0x40] sm:$0xff] %v2443
      %v2445 = vld [vmem:[#allocation3 + $0x48] sm:$0xff]
      %v2446 = vsel %vm1129, %v2389, %v2445
      %2447 = vst [vmem:[#allocation3 + $0x48] sm:$0xff] %v2446
      %v2448 = vld [vmem:[#allocation3 + $0x50] sm:$0xff]
      %v2449 = vsel %vm1129, %v2391, %v2448
      %2450 = vst [vmem:[#allocation3 + $0x50] sm:$0xff] %v2449
      %v2451 = vld [vmem:[#allocation3 + $0x58] sm:$0xff]
      %v2452 = vsel %vm1129, %v2393, %v2451
      %2453 = vst [vmem:[#allocation3 + $0x58] sm:$0xff] %v2452
      %v2454 = vld [vmem:[#allocation3 + $0x60] sm:$0xff]
      %v2455 = vsel %vm1129, %v2395, %v2454
      %2456 = vst [vmem:[#allocation3 + $0x60] sm:$0xff] %v2455
      %v2457 = vld [vmem:[#allocation3 + $0x68] sm:$0xff]
      %v2458 = vsel %vm1129, %v2397, %v2457
      %2459 = vst [vmem:[#allocation3 + $0x68] sm:$0xff] %v2458
      %v2460 = vld [vmem:[#allocation3 + $0x70] sm:$0xff]
      %v2461 = vsel %vm1129, %v2399, %v2460
      %2462 = vst [vmem:[#allocation3 + $0x70] sm:$0xff] %v2461
      %v2463 = vld [vmem:[#allocation3 + $0x78] sm:$0xff]
      %v2464 = vsel %vm1129, %v2401, %v2463
      %2465 = vst [vmem:[#allocation3 + $0x78] sm:$0xff] %v2464
      %s2466 = scalar_lea.vmem [#allocation3], 120
      %2467 = vst.msk [vmem:[%s2466] sm:$0xff] %vm1179, 0
      %v2468 = vld [vmem:[#allocation3] sm:$0x1]
      %v2469 = vsel %vm1182, 0, %v2468
      %2470 = vst [vmem:[#allocation3] sm:$0x1] %v2469
      %v2471 = vld [vmem:[#allocation3 + $0x8] sm:$0x1]
      %v2472 = vsel %vm1182, 0, %v2471
      %2473 = vst [vmem:[#allocation3 + $0x8] sm:$0x1] %v2472
      %v2474 = vld [vmem:[#allocation3 + $0x10] sm:$0x1]
      %v2475 = vsel %vm1182, 0, %v2474
      %2476 = vst [vmem:[#allocation3 + $0x10] sm:$0x1] %v2475
      %v2477 = vld [vmem:[#allocation3 + $0x18] sm:$0x1]
      %v2478 = vsel %vm1182, 0, %v2477
      %2479 = vst [vmem:[#allocation3 + $0x18] sm:$0x1] %v2478
      %v2480 = vld [vmem:[#allocation3 + $0x20] sm:$0x1]
      %v2481 = vsel %vm1182, 0, %v2480
      %2482 = vst [vmem:[#allocation3 + $0x20] sm:$0x1] %v2481
      %v2483 = vld [vmem:[#allocation3 + $0x28] sm:$0x1]
      %v2484 = vsel %vm1182, 0, %v2483
      %2485 = vst [vmem:[#allocation3 + $0x28] sm:$0x1] %v2484
      %v2486 = vld [vmem:[#allocation3 + $0x30] sm:$0x1]
      %v2487 = vsel %vm1182, 0, %v2486
      %2488 = vst [vmem:[#allocation3 + $0x30] sm:$0x1] %v2487
      %v2489 = vld [vmem:[#allocation3 + $0x38] sm:$0x1]
      %v2490 = vsel %vm1182, 0, %v2489
      %2491 = vst [vmem:[#allocation3 + $0x38] sm:$0x1] %v2490
      %v2492 = vld [vmem:[#allocation3 + $0x40] sm:$0x1]
      %v2493 = vsel %vm1182, 0, %v2492
      %2494 = vst [vmem:[#allocation3 + $0x40] sm:$0x1] %v2493
      %v2495 = vld [vmem:[#allocation3 + $0x48] sm:$0x1]
      %v2496 = vsel %vm1182, 0, %v2495
      %2497 = vst [vmem:[#allocation3 + $0x48] sm:$0x1] %v2496
      %v2498 = vld [vmem:[#allocation3 + $0x50] sm:$0x1]
      %v2499 = vsel %vm1182, 0, %v2498
      %2500 = vst [vmem:[#allocation3 + $0x50] sm:$0x1] %v2499
      %v2501 = vld [vmem:[#allocation3 + $0x58] sm:$0x1]
      %v2502 = vsel %vm1182, 0, %v2501
      %2503 = vst [vmem:[#allocation3 + $0x58] sm:$0x1] %v2502
      %v2504 = vld [vmem:[#allocation3 + $0x60] sm:$0x1]
      %v2505 = vsel %vm1182, 0, %v2504
      %2506 = vst [vmem:[#allocation3 + $0x60] sm:$0x1] %v2505
      %v2507 = vld [vmem:[#allocation3 + $0x68] sm:$0x1]
      %v2508 = vsel %vm1182, 0, %v2507
      %2509 = vst [vmem:[#allocation3 + $0x68] sm:$0x1] %v2508
      %v2510 = vld [vmem:[#allocation3 + $0x70] sm:$0x1]
      %v2511 = vsel %vm1182, 0, %v2510
      %2512 = vst [vmem:[#allocation3 + $0x70] sm:$0x1] %v2511
      %v2513 = vld [vmem:[#allocation3 + $0x78] sm:$0x1]
      %v2514 = vsel %vm1182, 0, %v2513
      %2515 = vst [vmem:[#allocation3 + $0x78] sm:$0x1] %v2514
      %2516 = vrot.lane.b32.xlu0 %v1717, 12
      %v2517 = vpop.permute.xlu0 %2516
      %2518 = vrot.lane.b32.xlu0 %v1724, 12
      %v2519 = vpop.permute.xlu0 %2518
      %2520 = vrot.lane.b32.xlu0 %v1731, 12
      %v2521 = vpop.permute.xlu0 %2520
      %2522 = vrot.lane.b32.xlu0 %v1738, 12
      %v2523 = vpop.permute.xlu0 %2522
      %2524 = vrot.lane.b32.xlu0 %v1745, 12
      %v2525 = vpop.permute.xlu0 %2524
      %2526 = vrot.lane.b32.xlu0 %v1752, 12
      %v2527 = vpop.permute.xlu0 %2526
      %2528 = vrot.lane.b32.xlu0 %v1759, 12
      %v2529 = vpop.permute.xlu0 %2528
      %2530 = vrot.lane.b32.xlu0 %v1766, 12
      %v2531 = vpop.permute.xlu0 %2530
      %2532 = vrot.lane.b32.xlu0 %v1773, 12
      %v2533 = vpop.permute.xlu0 %2532
      %2534 = vrot.lane.b32.xlu0 %v1780, 12
      %v2535 = vpop.permute.xlu0 %2534
      %2536 = vrot.lane.b32.xlu0 %v1787, 12
      %v2537 = vpop.permute.xlu0 %2536
      %2538 = vrot.lane.b32.xlu0 %v1794, 12
      %v2539 = vpop.permute.xlu0 %2538
      %2540 = vrot.lane.b32.xlu0 %v1801, 12
      %v2541 = vpop.permute.xlu0 %2540
      %2542 = vrot.lane.b32.xlu0 %v1808, 12
      %v2543 = vpop.permute.xlu0 %2542
      %2544 = vrot.lane.b32.xlu0 %v2159, 12
      %v2545 = vpop.permute.xlu0 %2544
      %v2561 = vld [vmem:[#allocation3] sm:$0xff]
      %v2562 = vsel %vm1277, %v2517, %v2561
      %2563 = vst [vmem:[#allocation3] sm:$0xff] %v2562
      %v2564 = vld [vmem:[#allocation3 + $0x8] sm:$0xff]
      %v2565 = vsel %vm1277, %v2519, %v2564
      %2566 = vst [vmem:[#allocation3 + $0x8] sm:$0xff] %v2565
      %v2567 = vld [vmem:[#allocation3 + $0x10] sm:$0xff]
      %v2568 = vsel %vm1277, %v2521, %v2567
      %2569 = vst [vmem:[#allocation3 + $0x10] sm:$0xff] %v2568
      %v2570 = vld [vmem:[#allocation3 + $0x18] sm:$0xff]
      %v2571 = vsel %vm1277, %v2523, %v2570
      %2572 = vst [vmem:[#allocation3 + $0x18] sm:$0xff] %v2571
      %v2573 = vld [vmem:[#allocation3 + $0x20] sm:$0xff]
      %v2574 = vsel %vm1277, %v2525, %v2573
      %2575 = vst [vmem:[#allocation3 + $0x20] sm:$0xff] %v2574
      %v2576 = vld [vmem:[#allocation3 + $0x28] sm:$0xff]
      %v2577 = vsel %vm1277, %v2527, %v2576
      %2578 = vst [vmem:[#allocation3 + $0x28] sm:$0xff] %v2577
      %v2579 = vld [vmem:[#allocation3 + $0x30] sm:$0xff]
      %v2580 = vsel %vm1277, %v2529, %v2579
      %2581 = vst [vmem:[#allocation3 + $0x30] sm:$0xff] %v2580
      %v2582 = vld [vmem:[#allocation3 + $0x38] sm:$0xff]
      %v2583 = vsel %vm1277, %v2531, %v2582
      %2584 = vst [vmem:[#allocation3 + $0x38] sm:$0xff] %v2583
      %v2585 = vld [vmem:[#allocation3 + $0x40] sm:$0xff]
      %v2586 = vsel %vm1277, %v2533, %v2585
      %2587 = vst [vmem:[#allocation3 + $0x40] sm:$0xff] %v2586
      %v2588 = vld [vmem:[#allocation3 + $0x48] sm:$0xff]
      %v2589 = vsel %vm1277, %v2535, %v2588
      %2590 = vst [vmem:[#allocation3 + $0x48] sm:$0xff] %v2589
      %v2591 = vld [vmem:[#allocation3 + $0x50] sm:$0xff]
      %v2592 = vsel %vm1277, %v2537, %v2591
      %2593 = vst [vmem:[#allocation3 + $0x50] sm:$0xff] %v2592
      %v2594 = vld [vmem:[#allocation3 + $0x58] sm:$0xff]
      %v2595 = vsel %vm1277, %v2539, %v2594
      %2596 = vst [vmem:[#allocation3 + $0x58] sm:$0xff] %v2595
      %v2597 = vld [vmem:[#allocation3 + $0x60] sm:$0xff]
      %v2598 = vsel %vm1277, %v2541, %v2597
      %2599 = vst [vmem:[#allocation3 + $0x60] sm:$0xff] %v2598
      %v2600 = vld [vmem:[#allocation3 + $0x68] sm:$0xff]
      %v2601 = vsel %vm1277, %v2543, %v2600
      %2602 = vst [vmem:[#allocation3 + $0x68] sm:$0xff] %v2601
      %v2603 = vld [vmem:[#allocation3 + $0x70] sm:$0xff]
      %v2604 = vsel %vm1277, %v2545, %v2603
      %2605 = vst [vmem:[#allocation3 + $0x70] sm:$0xff] %v2604
      %2606 = vst.msk [vmem:[%s2466] sm:$0xff] %vm1323, 0
      %2607 = vrot.lane.b32.xlu0 %v1690, 14
      %v2608 = vpop.permute.xlu0 %2607
      %2609 = vrot.lane.b32.xlu0 %v1691, 14
      %v2610 = vpop.permute.xlu0 %2609
      %2611 = vrot.lane.b32.xlu0 %v1692, 14
      %v2612 = vpop.permute.xlu0 %2611
      %2613 = vrot.lane.b32.xlu0 %v1693, 14
      %v2614 = vpop.permute.xlu0 %2613
      %2615 = vrot.lane.b32.xlu0 %v1694, 14
      %v2616 = vpop.permute.xlu0 %2615
      %2617 = vrot.lane.b32.xlu0 %v1695, 14
      %v2618 = vpop.permute.xlu0 %2617
      %2619 = vrot.lane.b32.xlu0 %v1696, 14
      %v2620 = vpop.permute.xlu0 %2619
      %2621 = vrot.lane.b32.xlu0 %v1697, 14
      %v2622 = vpop.permute.xlu0 %2621
      %2623 = vrot.lane.b32.xlu0 %v1698, 14
      %v2624 = vpop.permute.xlu0 %2623
      %2625 = vrot.lane.b32.xlu0 %v1699, 14
      %v2626 = vpop.permute.xlu0 %2625
      %2627 = vrot.lane.b32.xlu0 %v1700, 14
      %v2628 = vpop.permute.xlu0 %2627
      %2629 = vrot.lane.b32.xlu0 %v1701, 14
      %v2630 = vpop.permute.xlu0 %2629
      %2631 = vrot.lane.b32.xlu0 %v1702, 14
      %v2632 = vpop.permute.xlu0 %2631
      %2633 = vrot.lane.b32.xlu0 %v1703, 14
      %v2634 = vpop.permute.xlu0 %2633
      %2635 = vrot.lane.b32.xlu0 %v2152, 14
      %v2636 = vpop.permute.xlu0 %2635
      %2652 = vst.msk [vmem:[#allocation3] sm:$0xff] %vm1323, %v2608
      %2653 = vst.msk [vmem:[#allocation3 + $0x8] sm:$0xff] %vm1323, %v2610
      %2654 = vst.msk [vmem:[#allocation3 + $0x10] sm:$0xff] %vm1323, %v2612
      %2655 = vst.msk [vmem:[#allocation3 + $0x18] sm:$0xff] %vm1323, %v2614
      %2656 = vst.msk [vmem:[#allocation3 + $0x20] sm:$0xff] %vm1323, %v2616
      %2657 = vst.msk [vmem:[#allocation3 + $0x28] sm:$0xff] %vm1323, %v2618
      %2658 = vst.msk [vmem:[#allocation3 + $0x30] sm:$0xff] %vm1323, %v2620
      %2659 = vst.msk [vmem:[#allocation3 + $0x38] sm:$0xff] %vm1323, %v2622
      %2660 = vst.msk [vmem:[#allocation3 + $0x40] sm:$0xff] %vm1323, %v2624
      %2661 = vst.msk [vmem:[#allocation3 + $0x48] sm:$0xff] %vm1323, %v2626
      %2662 = vst.msk [vmem:[#allocation3 + $0x50] sm:$0xff] %vm1323, %v2628
      %2663 = vst.msk [vmem:[#allocation3 + $0x58] sm:$0xff] %vm1323, %v2630
      %2664 = vst.msk [vmem:[#allocation3 + $0x60] sm:$0xff] %vm1323, %v2632
      %2665 = vst.msk [vmem:[#allocation3 + $0x68] sm:$0xff] %vm1323, %v2634
      %2666 = vst.msk [vmem:[#allocation3 + $0x70] sm:$0xff] %vm1323, %v2636
      %2667 = vst.msk [vmem:[%s2466] sm:$0xff] %vm1385, 0
      %v2668 = vld [vmem:[#allocation3] sm:$0x80]
      %v2669 = vsel %vm1388, 0, %v2668
      %2670 = vst [vmem:[#allocation3] sm:$0x80] %v2669
      %v2671 = vld [vmem:[#allocation3 + $0x8] sm:$0x80]
      %v2672 = vsel %vm1388, 0, %v2671
      %2673 = vst [vmem:[#allocation3 + $0x8] sm:$0x80] %v2672
      %v2674 = vld [vmem:[#allocation3 + $0x10] sm:$0x80]
      %v2675 = vsel %vm1388, 0, %v2674
      %2676 = vst [vmem:[#allocation3 + $0x10] sm:$0x80] %v2675
      %v2677 = vld [vmem:[#allocation3 + $0x18] sm:$0x80]
      %v2678 = vsel %vm1388, 0, %v2677
      %2679 = vst [vmem:[#allocation3 + $0x18] sm:$0x80] %v2678
      %v2680 = vld [vmem:[#allocation3 + $0x20] sm:$0x80]
      %v2681 = vsel %vm1388, 0, %v2680
      %2682 = vst [vmem:[#allocation3 + $0x20] sm:$0x80] %v2681
      %v2683 = vld [vmem:[#allocation3 + $0x28] sm:$0x80]
      %v2684 = vsel %vm1388, 0, %v2683
      %2685 = vst [vmem:[#allocation3 + $0x28] sm:$0x80] %v2684
      %v2686 = vld [vmem:[#allocation3 + $0x30] sm:$0x80]
      %v2687 = vsel %vm1388, 0, %v2686
      %2688 = vst [vmem:[#allocation3 + $0x30] sm:$0x80] %v2687
      %v2689 = vld [vmem:[#allocation3 + $0x38] sm:$0x80]
      %v2690 = vsel %vm1388, 0, %v2689
      %2691 = vst [vmem:[#allocation3 + $0x38] sm:$0x80] %v2690
      %v2692 = vld [vmem:[#allocation3 + $0x40] sm:$0x80]
      %v2693 = vsel %vm1388, 0, %v2692
      %2694 = vst [vmem:[#allocation3 + $0x40] sm:$0x80] %v2693
      %v2695 = vld [vmem:[#allocation3 + $0x48] sm:$0x80]
      %v2696 = vsel %vm1388, 0, %v2695
      %2697 = vst [vmem:[#allocation3 + $0x48] sm:$0x80] %v2696
      %v2698 = vld [vmem:[#allocation3 + $0x50] sm:$0x80]
      %v2699 = vsel %vm1388, 0, %v2698
      %2700 = vst [vmem:[#allocation3 + $0x50] sm:$0x80] %v2699
      %v2701 = vld [vmem:[#allocation3 + $0x58] sm:$0x80]
      %v2702 = vsel %vm1388, 0, %v2701
      %2703 = vst [vmem:[#allocation3 + $0x58] sm:$0x80] %v2702
      %v2704 = vld [vmem:[#allocation3 + $0x60] sm:$0x80]
      %v2705 = vsel %vm1388, 0, %v2704
      %2706 = vst [vmem:[#allocation3 + $0x60] sm:$0x80] %v2705
      %v2707 = vld [vmem:[#allocation3 + $0x68] sm:$0x80]
      %v2708 = vsel %vm1388, 0, %v2707
      %2709 = vst [vmem:[#allocation3 + $0x68] sm:$0x80] %v2708
      %v2710 = vld [vmem:[#allocation3 + $0x70] sm:$0x80]
      %v2711 = vsel %vm1388, 0, %v2710
      %2712 = vst [vmem:[#allocation3 + $0x70] sm:$0x80] %v2711
      %v2713 = vld [vmem:[#allocation3 + $0x78] sm:$0x80]
      %v2714 = vsel %vm1388, 0, %v2713
      %2715 = vst [vmem:[#allocation3 + $0x78] sm:$0x80] %v2714
      %2716 = vrot.lane.b32.xlu0 %v1983, 16
      %v2717 = vpop.permute.xlu0 %2716
      %2718 = vrot.lane.b32.xlu0 %v1985, 16
      %v2719 = vpop.permute.xlu0 %2718
      %2720 = vrot.lane.b32.xlu0 %v1987, 16
      %v2721 = vpop.permute.xlu0 %2720
      %2722 = vrot.lane.b32.xlu0 %v1989, 16
      %v2723 = vpop.permute.xlu0 %2722
      %2724 = vrot.lane.b32.xlu0 %v1991, 16
      %v2725 = vpop.permute.xlu0 %2724
      %2726 = vrot.lane.b32.xlu0 %v1993, 16
      %v2727 = vpop.permute.xlu0 %2726
      %2728 = vrot.lane.b32.xlu0 %v1995, 16
      %v2729 = vpop.permute.xlu0 %2728
      %2730 = vrot.lane.b32.xlu0 %v1997, 16
      %v2731 = vpop.permute.xlu0 %2730
      %2732 = vrot.lane.b32.xlu0 %v1999, 16
      %v2733 = vpop.permute.xlu0 %2732
      %2734 = vrot.lane.b32.xlu0 %v2001, 16
      %v2735 = vpop.permute.xlu0 %2734
      %2736 = vrot.lane.b32.xlu0 %v2003, 16
      %v2737 = vpop.permute.xlu0 %2736
      %2738 = vrot.lane.b32.xlu0 %v2005, 16
      %v2739 = vpop.permute.xlu0 %2738
      %2740 = vrot.lane.b32.xlu0 %v2007, 16
      %v2741 = vpop.permute.xlu0 %2740
      %2742 = vrot.lane.b32.xlu0 %v2009, 16
      %v2743 = vpop.permute.xlu0 %2742
      %2744 = vrot.lane.b32.xlu0 %v2369, 16
      %v2745 = vpop.permute.xlu0 %2744
      %v2761 = vld [vmem:[#allocation3] sm:$0xff]
      %v2762 = vsel %vm1483, %v2717, %v2761
      %2763 = vst [vmem:[#allocation3] sm:$0xff] %v2762
      %v2764 = vld [vmem:[#allocation3 + $0x8] sm:$0xff]
      %v2765 = vsel %vm1483, %v2719, %v2764
      %2766 = vst [vmem:[#allocation3 + $0x8] sm:$0xff] %v2765
      %v2767 = vld [vmem:[#allocation3 + $0x10] sm:$0xff]
      %v2768 = vsel %vm1483, %v2721, %v2767
      %2769 = vst [vmem:[#allocation3 + $0x10] sm:$0xff] %v2768
      %v2770 = vld [vmem:[#allocation3 + $0x18] sm:$0xff]
      %v2771 = vsel %vm1483, %v2723, %v2770
      %2772 = vst [vmem:[#allocation3 + $0x18] sm:$0xff] %v2771
      %v2773 = vld [vmem:[#allocation3 + $0x20] sm:$0xff]
      %v2774 = vsel %vm1483, %v2725, %v2773
      %2775 = vst [vmem:[#allocation3 + $0x20] sm:$0xff] %v2774
      %v2776 = vld [vmem:[#allocation3 + $0x28] sm:$0xff]
      %v2777 = vsel %vm1483, %v2727, %v2776
      %2778 = vst [vmem:[#allocation3 + $0x28] sm:$0xff] %v2777
      %v2779 = vld [vmem:[#allocation3 + $0x30] sm:$0xff]
      %v2780 = vsel %vm1483, %v2729, %v2779
      %2781 = vst [vmem:[#allocation3 + $0x30] sm:$0xff] %v2780
      %v2782 = vld [vmem:[#allocation3 + $0x38] sm:$0xff]
      %v2783 = vsel %vm1483, %v2731, %v2782
      %2784 = vst [vmem:[#allocation3 + $0x38] sm:$0xff] %v2783
      %v2785 = vld [vmem:[#allocation3 + $0x40] sm:$0xff]
      %v2786 = vsel %vm1483, %v2733, %v2785
      %2787 = vst [vmem:[#allocation3 + $0x40] sm:$0xff] %v2786
      %v2788 = vld [vmem:[#allocation3 + $0x48] sm:$0xff]
      %v2789 = vsel %vm1483, %v2735, %v2788
      %2790 = vst [vmem:[#allocation3 + $0x48] sm:$0xff] %v2789
      %v2791 = vld [vmem:[#allocation3 + $0x50] sm:$0xff]
      %v2792 = vsel %vm1483, %v2737, %v2791
      %2793 = vst [vmem:[#allocation3 + $0x50] sm:$0xff] %v2792
      %v2794 = vld [vmem:[#allocation3 + $0x58] sm:$0xff]
      %v2795 = vsel %vm1483, %v2739, %v2794
      %2796 = vst [vmem:[#allocation3 + $0x58] sm:$0xff] %v2795
      %v2797 = vld [vmem:[#allocation3 + $0x60] sm:$0xff]
      %v2798 = vsel %vm1483, %v2741, %v2797
      %2799 = vst [vmem:[#allocation3 + $0x60] sm:$0xff] %v2798
      %v2800 = vld [vmem:[#allocation3 + $0x68] sm:$0xff]
      %v2801 = vsel %vm1483, %v2743, %v2800
      %2802 = vst [vmem:[#allocation3 + $0x68] sm:$0xff] %v2801
      %v2803 = vld [vmem:[#allocation3 + $0x70] sm:$0xff]
      %v2804 = vsel %vm1483, %v2745, %v2803
      %2805 = vst [vmem:[#allocation3 + $0x70] sm:$0xff] %v2804
      %v2806 = vld [vmem:[#allocation3] sm:$0xff]
      %v2807 = vld [vmem:[#allocation3 + $0x8] sm:$0xff]
      %v2808 = vld [vmem:[#allocation3 + $0x10] sm:$0xff]
      %v2809 = vld [vmem:[#allocation3 + $0x18] sm:$0xff]
      %v2810 = vld [vmem:[#allocation3 + $0x20] sm:$0xff]
      %v2811 = vld [vmem:[#allocation3 + $0x28] sm:$0xff]
      %v2812 = vld [vmem:[#allocation3 + $0x30] sm:$0xff]
      %v2813 = vld [vmem:[#allocation3 + $0x38] sm:$0xff]
      %v2814 = vld [vmem:[#allocation3 + $0x40] sm:$0xff]
      %v2815 = vld [vmem:[#allocation3 + $0x48] sm:$0xff]
      %v2816 = vld [vmem:[#allocation3 + $0x50] sm:$0xff]
      %v2817 = vld [vmem:[#allocation3 + $0x58] sm:$0xff]
      %v2818 = vld [vmem:[#allocation3 + $0x60] sm:$0xff]
      %v2819 = vld [vmem:[#allocation3 + $0x68] sm:$0xff]
      %v2820 = vld [vmem:[#allocation3 + $0x70] sm:$0xff]
      %v2821 = vld [vmem:[#allocation3 + $0x78] sm:$0xff]
      %v2822 = vld [vmem:[%s3] sm:$0xf]
      %v2823 = vld [vmem:[%s3 + $0x4] sm:$0xf]
      %v2824 = vld [vmem:[%s3 + $0x8] sm:$0x1]
      %v2828 = vunpack.c.l.b16 %v2822
      %v2829 = vunpack.c.l.b16 %v2823
      %v2830 = vunpack.c.l.b16 %v2824
      %v2831 = vpack.c.b16 %v2829, %v2828
      %v2832 = vpack.c.b16 %v2830, %v2830
      %vm2834 = vcmask 146432
      %v2836 = vsel %vm2834, %v2806, 0
      %v2839 = vsel %vm2834, %v2807, 0
      %v2842 = vsel %vm2834, %v2808, 0
      %v2845 = vsel %vm2834, %v2809, 0
      %v2848 = vsel %vm2834, %v2810, 0
      %v2851 = vsel %vm2834, %v2811, 0
      %v2854 = vsel %vm2834, %v2812, 0
      %v2857 = vsel %vm2834, %v2813, 0
      %v2860 = vsel %vm2834, %v2814, 0
      %v2863 = vsel %vm2834, %v2815, 0
      %v2866 = vsel %vm2834, %v2816, 0
      %v2869 = vsel %vm2834, %v2817, 0
      %v2872 = vsel %vm2834, %v2818, 0
      %v2875 = vsel %vm2834, %v2819, 0
      %v2878 = vsel %vm2834, %v2820, 0
      %v2881 = vsel %vm2834, %v2821, 0
      %vm2883 = vcmask 1040384
      %v2885 = vsel %vm2883, %v2832, 0
      %2887 = vmatprep.subr.bf16.mxu0 0
      %2888 = vmatpush1.bf16.msra.mxu0 %v2831
      %2889 = vmatprep.subr.bf16.mxu0 0
      %2890 = vmatpush1.bf16.msra.mxu0 %v2885
      %2891 = vmatprep.subr.bf16.mxu0 0
      %2892 = vmatpush1.bf16.msra.mxu0 0
      %2893 = vmatprep.subr.bf16.mxu0 0
      %2894 = vmatpush1.bf16.msra.mxu0 0
      %2895 = vmatprep.subr.bf16.mxu0 0
      %2896 = vmatpush1.bf16.msra.mxu0 0
      %2897 = vmatprep.subr.bf16.mxu0 0
      %2898 = vmatpush1.bf16.msra.mxu0 0
      %2899 = vmatprep.subr.bf16.mxu0 0
      %2900 = vmatpush1.bf16.msra.mxu0 0
      %2901 = vmatprep.subr.bf16.mxu0 0
      %2902 = vmatpush1.bf16.msra.mxu0 0
      %2903 = vmatprep.subr.bf16.mxu0 0
      %2904 = vmatpush1.bf16.msra.mxu0 0
      %2905 = vmatprep.subr.bf16.mxu0 0
      %2906 = vmatpush1.bf16.msra.mxu0 0
      %2907 = vmatprep.subr.bf16.mxu0 0
      %2908 = vmatpush1.bf16.msra.mxu0 0
      %2909 = vmatprep.subr.bf16.mxu0 0
      %2910 = vmatpush1.bf16.msra.mxu0 0
      %2911 = vmatprep.subr.bf16.mxu0 0
      %2912 = vmatpush1.bf16.msra.mxu0 0
      %2913 = vmatprep.subr.bf16.mxu0 0
      %2914 = vmatpush1.bf16.msra.mxu0 0
      %2915 = vmatprep.subr.bf16.mxu0 0
      %2916 = vmatpush1.bf16.msra.mxu0 0
      %2917 = vmatprep.subr.bf16.mxu0 0
      %2918 = vmatpush1.bf16.msra.mxu0 0
      %2919 = vmatprep.mubr.bf16.mxu0 0
      %2920 = vmatmul.mubr.bf16.gmra.mrb[0].mxu0 %v2836
      %v2921 = vpop.f32.mrb[0].mxu0
      %v2922 = vadd.f32 0.0, %v2921
      %v2923 = vpop.f32.mrb[0].mxu0
      %v2924 = vpop.f32.mrb[0].mxu0
      %v2925 = vadd.f32 0.0, %v2924
      %v2926 = vpop.f32.mrb[0].mxu0
      %2927 = vmatprep.mubr.bf16.mxu0 0
      %2928 = vmatmul.mubr.bf16.gmra.mrb[0].mxu0 %v2839
      %v2929 = vpop.f32.mrb[0].mxu0
      %v2930 = vadd.f32 0.0, %v2929
      %v2931 = vpop.f32.mrb[0].mxu0
      %v2932 = vpop.f32.mrb[0].mxu0
      %v2933 = vadd.f32 0.0, %v2932
      %v2934 = vpop.f32.mrb[0].mxu0
      %2935 = vmatprep.mubr.bf16.mxu0 0
      %2936 = vmatmul.mubr.bf16.gmra.mrb[0].mxu0 %v2842
      %v2937 = vpop.f32.mrb[0].mxu0
      %v2938 = vadd.f32 0.0, %v2937
      %v2939 = vpop.f32.mrb[0].mxu0
      %v2940 = vpop.f32.mrb[0].mxu0
      %v2941 = vadd.f32 0.0, %v2940
      %v2942 = vpop.f32.mrb[0].mxu0
      %2943 = vmatprep.mubr.bf16.mxu0 0
      %2944 = vmatmul.mubr.bf16.gmra.mrb[0].mxu0 %v2845
      %v2945 = vpop.f32.mrb[0].mxu0
      %v2946 = vadd.f32 0.0, %v2945
      %v2947 = vpop.f32.mrb[0].mxu0
      %v2948 = vpop.f32.mrb[0].mxu0
      %v2949 = vadd.f32 0.0, %v2948
      %v2950 = vpop.f32.mrb[0].mxu0
      %2951 = vmatprep.mubr.bf16.mxu0 0
      %2952 = vmatmul.mubr.bf16.gmra.mrb[0].mxu0 %v2848
      %v2953 = vpop.f32.mrb[0].mxu0
      %v2954 = vadd.f32 0.0, %v2953
      %v2955 = vpop.f32.mrb[0].mxu0
      %v2956 = vpop.f32.mrb[0].mxu0
      %v2957 = vadd.f32 0.0, %v2956
      %v2958 = vpop.f32.mrb[0].mxu0
      %2959 = vmatprep.mubr.bf16.mxu0 0
      %2960 = vmatmul.mubr.bf16.gmra.mrb[0].mxu0 %v2851
      %v2961 = vpop.f32.mrb[0].mxu0
      %v2962 = vadd.f32 0.0, %v2961
      %v2963 = vpop.f32.mrb[0].mxu0
      %v2964 = vpop.f32.mrb[0].mxu0
      %v2965 = vadd.f32 0.0, %v2964
      %v2966 = vpop.f32.mrb[0].mxu0
      %2967 = vmatprep.mubr.bf16.mxu0 0
      %2968 = vmatmul.mubr.bf16.gmra.mrb[0].mxu0 %v2854
      %v2969 = vpop.f32.mrb[0].mxu0
      %v2970 = vadd.f32 0.0, %v2969
      %v2971 = vpop.f32.mrb[0].mxu0
      %v2972 = vpop.f32.mrb[0].mxu0
      %v2973 = vadd.f32 0.0, %v2972
      %v2974 = vpop.f32.mrb[0].mxu0
      %2975 = vmatprep.mubr.bf16.mxu0 0
      %2976 = vmatmul.mubr.bf16.gmra.mrb[0].mxu0 %v2857
      %v2977 = vpop.f32.mrb[0].mxu0
      %v2978 = vadd.f32 0.0, %v2977
      %v2979 = vpop.f32.mrb[0].mxu0
      %v2980 = vpop.f32.mrb[0].mxu0
      %v2981 = vadd.f32 0.0, %v2980
      %v2982 = vpop.f32.mrb[0].mxu0
      %2983 = vmatprep.mubr.bf16.mxu0 0
      %2984 = vmatmul.mubr.bf16.gmra.mrb[0].mxu0 %v2860
      %v2985 = vpop.f32.mrb[0].mxu0
      %v2986 = vadd.f32 0.0, %v2985
      %v2987 = vpop.f32.mrb[0].mxu0
      %v2988 = vpop.f32.mrb[0].mxu0
      %v2989 = vadd.f32 0.0, %v2988
      %v2990 = vpop.f32.mrb[0].mxu0
      %2991 = vmatprep.mubr.bf16.mxu0 0
      %2992 = vmatmul.mubr.bf16.gmra.mrb[0].mxu0 %v2863
      %v2993 = vpop.f32.mrb[0].mxu0
      %v2994 = vadd.f32 0.0, %v2993
      %v2995 = vpop.f32.mrb[0].mxu0
      %v2996 = vpop.f32.mrb[0].mxu0
      %v2997 = vadd.f32 0.0, %v2996
      %v2998 = vpop.f32.mrb[0].mxu0
      %2999 = vmatprep.mubr.bf16.mxu0 0
      %3000 = vmatmul.mubr.bf16.gmra.mrb[0].mxu0 %v2866
      %v3001 = vpop.f32.mrb[0].mxu0
      %v3002 = vadd.f32 0.0, %v3001
      %v3003 = vpop.f32.mrb[0].mxu0
      %v3004 = vpop.f32.mrb[0].mxu0
      %v3005 = vadd.f32 0.0, %v3004
      %v3006 = vpop.f32.mrb[0].mxu0
      %3007 = vmatprep.mubr.bf16.mxu0 0
      %3008 = vmatmul.mubr.bf16.gmra.mrb[0].mxu0 %v2869
      %v3009 = vpop.f32.mrb[0].mxu0
      %v3010 = vadd.f32 0.0, %v3009
      %v3011 = vpop.f32.mrb[0].mxu0
      %v3012 = vpop.f32.mrb[0].mxu0
      %v3013 = vadd.f32 0.0, %v3012
      %v3014 = vpop.f32.mrb[0].mxu0
      %3015 = vmatprep.mubr.bf16.mxu0 0
      %3016 = vmatmul.mubr.bf16.gmra.mrb[0].mxu0 %v2872
      %v3017 = vpop.f32.mrb[0].mxu0
      %v3018 = vadd.f32 0.0, %v3017
      %v3019 = vpop.f32.mrb[0].mxu0
      %v3020 = vpop.f32.mrb[0].mxu0
      %v3021 = vadd.f32 0.0, %v3020
      %v3022 = vpop.f32.mrb[0].mxu0
      %3023 = vmatprep.mubr.bf16.mxu0 0
      %3024 = vmatmul.mubr.bf16.gmra.mrb[0].mxu0 %v2875
      %v3025 = vpop.f32.mrb[0].mxu0
      %v3026 = vadd.f32 0.0, %v3025
      %v3027 = vpop.f32.mrb[0].mxu0
      %v3028 = vpop.f32.mrb[0].mxu0
      %v3029 = vadd.f32 0.0, %v3028
      %v3030 = vpop.f32.mrb[0].mxu0
      %3031 = vmatprep.mubr.bf16.mxu0 0
      %3032 = vmatmul.mubr.bf16.gmra.mrb[0].mxu0 %v2878
      %v3033 = vpop.f32.mrb[0].mxu0
      %v3034 = vadd.f32 0.0, %v3033
      %v3035 = vpop.f32.mrb[0].mxu0
      %v3036 = vpop.f32.mrb[0].mxu0
      %v3037 = vadd.f32 0.0, %v3036
      %v3038 = vpop.f32.mrb[0].mxu0
      %3039 = vmatprep.mubr.bf16.mxu0 0
      %3040 = vmatmul.mubr.bf16.gmra.mrb[0].mxu0 %v2881
      %v3041 = vpop.f32.mrb[0].mxu0
      %v3042 = vadd.f32 0.0, %v3041
      %v3043 = vpop.f32.mrb[0].mxu0
      %v3044 = vpop.f32.mrb[0].mxu0
      %v3045 = vadd.f32 0.0, %v3044
      %v3046 = vpop.f32.mrb[0].mxu0
      %3047 = vdwg.mxu0
      %v3051 = vunpack.c.l.b16 %v1545
      %v3052 = vunpack.c.l.b16 %v1546
      %v3053 = vunpack.c.l.b16 %v1547
      %v3054 = vpack.c.b16 %v3052, %v3051
      %v3055 = vpack.c.b16 %v3053, %v3053
      %v3058 = vsel %vm2834, %v1529, 0
      %v3061 = vsel %vm2834, %v1530, 0
      %v3064 = vsel %vm2834, %v1531, 0
      %v3067 = vsel %vm2834, %v1532, 0
      %v3070 = vsel %vm2834, %v1533, 0
      %v3073 = vsel %vm2834, %v1534, 0
      %v3076 = vsel %vm2834, %v1535, 0
      %v3079 = vsel %vm2834, %v1536, 0
      %v3082 = vsel %vm2834, %v1537, 0
      %v3085 = vsel %vm2834, %v1538, 0
      %v3088 = vsel %vm2834, %v1539, 0
      %v3091 = vsel %vm2834, %v1540, 0
      %v3094 = vsel %vm2834, %v1541, 0
      %v3097 = vsel %vm2834, %v1542, 0
      %v3100 = vsel %vm2834, %v1543, 0
      %v3103 = vsel %vm2834, %v1544, 0
      %v3106 = vsel %vm2883, %v3055, 0
      %3108 = vmatprep.subr.bf16.mxu0 0
      %3109 = vmatpush1.bf16.msra.mxu0 %v3054
      %3110 = vmatprep.subr.bf16.mxu0 0
      %3111 = vmatpush1.bf16.msra.mxu0 %v3106
      %3112 = vmatprep.subr.bf16.mxu0 0
      %3113 = vmatpush1.bf16.msra.mxu0 0
      %3114 = vmatprep.subr.bf16.mxu0 0
      %3115 = vmatpush1.bf16.msra.mxu0 0
      %3116 = vmatprep.subr.bf16.mxu0 0
      %3117 = vmatpush1.bf16.msra.mxu0 0
      %3118 = vmatprep.subr.bf16.mxu0 0
      %3119 = vmatpush1.bf16.msra.mxu0 0
      %3120 = vmatprep.subr.bf16.mxu0 0
      %3121 = vmatpush1.bf16.msra.mxu0 0
      %3122 = vmatprep.subr.bf16.mxu0 0
      %3123 = vmatpush1.bf16.msra.mxu0 0
      %3124 = vmatprep.subr.bf16.mxu0 0
      %3125 = vmatpush1.bf16.msra.mxu0 0
      %3126 = vmatprep.subr.bf16.mxu0 0
      %3127 = vmatpush1.bf16.msra.mxu0 0
      %3128 = vmatprep.subr.bf16.mxu0 0
      %3129 = vmatpush1.bf16.msra.mxu0 0
      %3130 = vmatprep.subr.bf16.mxu0 0
      %3131 = vmatpush1.bf16.msra.mxu0 0
      %3132 = vmatprep.subr.bf16.mxu0 0
      %3133 = vmatpush1.bf16.msra.mxu0 0
      %3134 = vmatprep.subr.bf16.mxu0 0
      %3135 = vmatpush1.bf16.msra.mxu0 0
      %3136 = vmatprep.subr.bf16.mxu0 0
      %3137 = vmatpush1.bf16.msra.mxu0 0
      %3138 = vmatprep.subr.bf16.mxu0 0
      %3139 = vmatpush1.bf16.msra.mxu0 0
      %3140 = vmatprep.mubr.bf16.mxu0 0
      %3141 = vmatmul.mubr.bf16.gmra.mrb[0].mxu0 %v3058
      %v3142 = vpop.f32.mrb[0].mxu0
      %v3143 = vadd.f32 %v2922, %v3142
      %v3144 = vpop.f32.mrb[0].mxu0
      %v3145 = vpop.f32.mrb[0].mxu0
      %v3146 = vadd.f32 %v2925, %v3145
      %v3147 = vpop.f32.mrb[0].mxu0
      %3148 = vmatprep.mubr.bf16.mxu0 0
      %3149 = vmatmul.mubr.bf16.gmra.mrb[0].mxu0 %v3061
      %v3150 = vpop.f32.mrb[0].mxu0
      %v3151 = vadd.f32 %v2930, %v3150
      %v3152 = vpop.f32.mrb[0].mxu0
      %v3153 = vpop.f32.mrb[0].mxu0
      %v3154 = vadd.f32 %v2933, %v3153
      %v3155 = vpop.f32.mrb[0].mxu0
      %3156 = vmatprep.mubr.bf16.mxu0 0
      %3157 = vmatmul.mubr.bf16.gmra.mrb[0].mxu0 %v3064
      %v3158 = vpop.f32.mrb[0].mxu0
      %v3159 = vadd.f32 %v2938, %v3158
      %v3160 = vpop.f32.mrb[0].mxu0
      %v3161 = vpop.f32.mrb[0].mxu0
      %v3162 = vadd.f32 %v2941, %v3161
      %v3163 = vpop.f32.mrb[0].mxu0
      %3164 = vmatprep.mubr.bf16.mxu0 0
      %3165 = vmatmul.mubr.bf16.gmra.mrb[0].mxu0 %v3067
      %v3166 = vpop.f32.mrb[0].mxu0
      %v3167 = vadd.f32 %v2946, %v3166
      %v3168 = vpop.f32.mrb[0].mxu0
      %v3169 = vpop.f32.mrb[0].mxu0
      %v3170 = vadd.f32 %v2949, %v3169
      %v3171 = vpop.f32.mrb[0].mxu0
      %3172 = vmatprep.mubr.bf16.mxu0 0
      %3173 = vmatmul.mubr.bf16.gmra.mrb[0].mxu0 %v3070
      %v3174 = vpop.f32.mrb[0].mxu0
      %v3175 = vadd.f32 %v2954, %v3174
      %v3176 = vpop.f32.mrb[0].mxu0
      %v3177 = vpop.f32.mrb[0].mxu0
      %v3178 = vadd.f32 %v2957, %v3177
      %v3179 = vpop.f32.mrb[0].mxu0
      %3180 = vmatprep.mubr.bf16.mxu0 0
      %3181 = vmatmul.mubr.bf16.gmra.mrb[0].mxu0 %v3073
      %v3182 = vpop.f32.mrb[0].mxu0
      %v3183 = vadd.f32 %v2962, %v3182
      %v3184 = vpop.f32.mrb[0].mxu0
      %v3185 = vpop.f32.mrb[0].mxu0
      %v3186 = vadd.f32 %v2965, %v3185
      %v3187 = vpop.f32.mrb[0].mxu0
      %3188 = vmatprep.mubr.bf16.mxu0 0
      %3189 = vmatmul.mubr.bf16.gmra.mrb[0].mxu0 %v3076
      %v3190 = vpop.f32.mrb[0].mxu0
      %v3191 = vadd.f32 %v2970, %v3190
      %v3192 = vpop.f32.mrb[0].mxu0
      %v3193 = vpop.f32.mrb[0].mxu0
      %v3194 = vadd.f32 %v2973, %v3193
      %v3195 = vpop.f32.mrb[0].mxu0
      %3196 = vmatprep.mubr.bf16.mxu0 0
      %3197 = vmatmul.mubr.bf16.gmra.mrb[0].mxu0 %v3079
      %v3198 = vpop.f32.mrb[0].mxu0
      %v3199 = vadd.f32 %v2978, %v3198
      %v3200 = vpop.f32.mrb[0].mxu0
      %v3201 = vpop.f32.mrb[0].mxu0
      %v3202 = vadd.f32 %v2981, %v3201
      %v3203 = vpop.f32.mrb[0].mxu0
      %3204 = vmatprep.mubr.bf16.mxu0 0
      %3205 = vmatmul.mubr.bf16.gmra.mrb[0].mxu0 %v3082
      %v3206 = vpop.f32.mrb[0].mxu0
      %v3207 = vadd.f32 %v2986, %v3206
      %v3208 = vpop.f32.mrb[0].mxu0
      %v3209 = vpop.f32.mrb[0].mxu0
      %v3210 = vadd.f32 %v2989, %v3209
      %v3211 = vpop.f32.mrb[0].mxu0
      %3212 = vmatprep.mubr.bf16.mxu0 0
      %3213 = vmatmul.mubr.bf16.gmra.mrb[0].mxu0 %v3085
      %v3214 = vpop.f32.mrb[0].mxu0
      %v3215 = vadd.f32 %v2994, %v3214
      %v3216 = vpop.f32.mrb[0].mxu0
      %v3217 = vpop.f32.mrb[0].mxu0
      %v3218 = vadd.f32 %v2997, %v3217
      %v3219 = vpop.f32.mrb[0].mxu0
      %3220 = vmatprep.mubr.bf16.mxu0 0
      %3221 = vmatmul.mubr.bf16.gmra.mrb[0].mxu0 %v3088
      %v3222 = vpop.f32.mrb[0].mxu0
      %v3223 = vadd.f32 %v3002, %v3222
      %v3224 = vpop.f32.mrb[0].mxu0
      %v3225 = vpop.f32.mrb[0].mxu0
      %v3226 = vadd.f32 %v3005, %v3225
      %v3227 = vpop.f32.mrb[0].mxu0
      %3228 = vmatprep.mubr.bf16.mxu0 0
      %3229 = vmatmul.mubr.bf16.gmra.mrb[0].mxu0 %v3091
      %v3230 = vpop.f32.mrb[0].mxu0
      %v3231 = vadd.f32 %v3010, %v3230
      %v3232 = vpop.f32.mrb[0].mxu0
      %v3233 = vpop.f32.mrb[0].mxu0
      %v3234 = vadd.f32 %v3013, %v3233
      %v3235 = vpop.f32.mrb[0].mxu0
      %3236 = vmatprep.mubr.bf16.mxu0 0
      %3237 = vmatmul.mubr.bf16.gmra.mrb[0].mxu0 %v3094
      %v3238 = vpop.f32.mrb[0].mxu0
      %v3239 = vadd.f32 %v3018, %v3238
      %v3240 = vpop.f32.mrb[0].mxu0
      %v3241 = vpop.f32.mrb[0].mxu0
      %v3242 = vadd.f32 %v3021, %v3241
      %v3243 = vpop.f32.mrb[0].mxu0
      %3244 = vmatprep.mubr.bf16.mxu0 0
      %3245 = vmatmul.mubr.bf16.gmra.mrb[0].mxu0 %v3097
      %v3246 = vpop.f32.mrb[0].mxu0
      %v3247 = vadd.f32 %v3026, %v3246
      %v3248 = vpop.f32.mrb[0].mxu0
      %v3249 = vpop.f32.mrb[0].mxu0
      %v3250 = vadd.f32 %v3029, %v3249
      %v3251 = vpop.f32.mrb[0].mxu0
      %3252 = vmatprep.mubr.bf16.mxu0 0
      %3253 = vmatmul.mubr.bf16.gmra.mrb[0].mxu0 %v3100
      %v3254 = vpop.f32.mrb[0].mxu0
      %v3255 = vadd.f32 %v3034, %v3254
      %v3256 = vpop.f32.mrb[0].mxu0
      %v3257 = vpop.f32.mrb[0].mxu0
      %v3258 = vadd.f32 %v3037, %v3257
      %v3259 = vpop.f32.mrb[0].mxu0
      %3260 = vmatprep.mubr.bf16.mxu0 0
      %3261 = vmatmul.mubr.bf16.gmra.mrb[0].mxu0 %v3103
      %v3262 = vpop.f32.mrb[0].mxu0
      %v3263 = vadd.f32 %v3042, %v3262
      %v3264 = vpop.f32.mrb[0].mxu0
      %v3265 = vpop.f32.mrb[0].mxu0
      %v3266 = vadd.f32 %v3045, %v3265
      %v3267 = vpop.f32.mrb[0].mxu0
      %3268 = vdwg.mxu0
      %v3269 = vld [vmem:[%s4] sm:$0x1]
      %v3271 = vlaneseq
      %v3272 = vshrl.u32 %v3271, 7
      %v3273 = vsub.s32 0, %v3272
      %v3274 = vrot.slane %v3269, %v3273
      %v3276 = vadd.f32 %v3143, %v3274
      %v3277 = vadd.f32 %v3146, %v3274
      %v3278 = vadd.f32 %v3151, %v3274
      %v3279 = vadd.f32 %v3154, %v3274
      %v3280 = vadd.f32 %v3159, %v3274
      %v3281 = vadd.f32 %v3162, %v3274
      %v3282 = vadd.f32 %v3167, %v3274
      %v3283 = vadd.f32 %v3170, %v3274
      %v3284 = vadd.f32 %v3175, %v3274
      %v3285 = vadd.f32 %v3178, %v3274
      %v3286 = vadd.f32 %v3183, %v3274
      %v3287 = vadd.f32 %v3186, %v3274
      %v3288 = vadd.f32 %v3191, %v3274
      %v3289 = vadd.f32 %v3194, %v3274
      %v3290 = vadd.f32 %v3199, %v3274
      %v3291 = vadd.f32 %v3202, %v3274
      %v3292 = vadd.f32 %v3207, %v3274
      %v3293 = vadd.f32 %v3210, %v3274
      %v3294 = vadd.f32 %v3215, %v3274
      %v3295 = vadd.f32 %v3218, %v3274
      %v3296 = vadd.f32 %v3223, %v3274
      %v3297 = vadd.f32 %v3226, %v3274
      %v3298 = vadd.f32 %v3231, %v3274
      %v3299 = vadd.f32 %v3234, %v3274
      %v3300 = vadd.f32 %v3239, %v3274
      %v3301 = vadd.f32 %v3242, %v3274
      %v3302 = vadd.f32 %v3247, %v3274
      %v3303 = vadd.f32 %v3250, %v3274
      %v3304 = vadd.f32 %v3255, %v3274
      %v3305 = vadd.f32 %v3258, %v3274
      %v3306 = vadd.f32 %v3263, %v3274
      %v3307 = vadd.f32 %v3266, %v3274
      %v3308 = vpack.c.bf16 %v3277, %v3276
      %v3309 = vpack.c.bf16 %v3279, %v3278
      %v3310 = vpack.c.bf16 %v3281, %v3280
      %v3311 = vpack.c.bf16 %v3283, %v3282
      %v3312 = vpack.c.bf16 %v3285, %v3284
      %v3313 = vpack.c.bf16 %v3287, %v3286
      %v3314 = vpack.c.bf16 %v3289, %v3288
      %v3315 = vpack.c.bf16 %v3291, %v3290
      %v3316 = vpack.c.bf16 %v3293, %v3292
      %v3317 = vpack.c.bf16 %v3295, %v3294
      %v3318 = vpack.c.bf16 %v3297, %v3296
      %v3319 = vpack.c.bf16 %v3299, %v3298
      %v3320 = vpack.c.bf16 %v3301, %v3300
      %v3321 = vpack.c.bf16 %v3303, %v3302
      %v3322 = vpack.c.bf16 %v3305, %v3304
      %v3323 = vpack.c.bf16 %v3307, %v3306
      %v3340 = vunpack.c.l.b16 %v3308
      %v3341 = vunpack.c.h.b16 %v3308
      %v3342 = vunpack.c.l.b16 %v3309
      %v3343 = vunpack.c.h.b16 %v3309
      %v3344 = vunpack.c.l.b16 %v3310
      %v3345 = vunpack.c.h.b16 %v3310
      %v3346 = vunpack.c.l.b16 %v3311
      %v3347 = vunpack.c.h.b16 %v3311
      %v3348 = vunpack.c.l.b16 %v3312
      %v3349 = vunpack.c.h.b16 %v3312
      %v3350 = vunpack.c.l.b16 %v3313
      %v3351 = vunpack.c.h.b16 %v3313
      %v3352 = vunpack.c.l.b16 %v3314
      %v3353 = vunpack.c.h.b16 %v3314
      %v3354 = vunpack.c.l.b16 %v3315
      %v3355 = vunpack.c.h.b16 %v3315
      %v3356 = vunpack.c.l.b16 %v3316
      %v3357 = vunpack.c.h.b16 %v3316
      %v3358 = vunpack.c.l.b16 %v3317
      %v3359 = vunpack.c.h.b16 %v3317
      %v3360 = vunpack.c.l.b16 %v3318
      %v3361 = vunpack.c.h.b16 %v3318
      %v3362 = vunpack.c.l.b16 %v3319
      %v3363 = vunpack.c.h.b16 %v3319
      %v3364 = vunpack.c.l.b16 %v3320
      %v3365 = vunpack.c.h.b16 %v3320
      %v3366 = vunpack.c.l.b16 %v3321
      %v3367 = vunpack.c.h.b16 %v3321
      %v3368 = vunpack.c.l.b16 %v3322
      %v3369 = vunpack.c.h.b16 %v3322
      %v3370 = vunpack.c.l.b16 %v3323
      %v3371 = vunpack.c.h.b16 %v3323
      %v3372 = vpack.c.b16 %v3340, %v3340
      %v3373 = vpack.c.b16 %v3341, %v3341
      %v3374 = vpack.c.b16 %v3342, %v3342
      %v3375 = vpack.c.b16 %v3343, %v3343
      %v3376 = vpack.c.b16 %v3344, %v3344
      %v3377 = vpack.c.b16 %v3345, %v3345
      %v3378 = vpack.c.b16 %v3346, %v3346
      %v3379 = vpack.c.b16 %v3347, %v3347
      %v3380 = vpack.c.b16 %v3348, %v3348
      %v3381 = vpack.c.b16 %v3349, %v3349
      %v3382 = vpack.c.b16 %v3350, %v3350
      %v3383 = vpack.c.b16 %v3351, %v3351
      %v3384 = vpack.c.b16 %v3352, %v3352
      %v3385 = vpack.c.b16 %v3353, %v3353
      %v3386 = vpack.c.b16 %v3354, %v3354
      %v3387 = vpack.c.b16 %v3355, %v3355
      %v3388 = vpack.c.b16 %v3356, %v3356
      %v3389 = vpack.c.b16 %v3357, %v3357
      %v3390 = vpack.c.b16 %v3358, %v3358
      %v3391 = vpack.c.b16 %v3359, %v3359
      %v3392 = vpack.c.b16 %v3360, %v3360
      %v3393 = vpack.c.b16 %v3361, %v3361
      %v3394 = vpack.c.b16 %v3362, %v3362
      %v3395 = vpack.c.b16 %v3363, %v3363
      %v3396 = vpack.c.b16 %v3364, %v3364
      %v3397 = vpack.c.b16 %v3365, %v3365
      %v3398 = vpack.c.b16 %v3366, %v3366
      %v3399 = vpack.c.b16 %v3367, %v3367
      %v3400 = vpack.c.b16 %v3368, %v3368
      %v3401 = vpack.c.b16 %v3369, %v3369
      %v3402 = vpack.c.b16 %v3370, %v3370
      %v3403 = vpack.c.b16 %v3371, %v3371
      %vm3436 = vcmask 27648
      %3437 = vst.msk [vmem:[%s278] sm:$0xf] %vm3436, %v3372
      %3438 = vst.msk [vmem:[%s278 + $0x4] sm:$0xf] %vm3436, %v3373
      %3439 = vst.msk [vmem:[%s278 + $0x8] sm:$0xf] %vm3436, %v3374
      %3440 = vst.msk [vmem:[%s278 + $0xc] sm:$0xf] %vm3436, %v3375
      %3441 = vst.msk [vmem:[%s278 + $0x10] sm:$0xf] %vm3436, %v3376
      %3442 = vst.msk [vmem:[%s278 + $0x14] sm:$0xf] %vm3436, %v3377
      %3443 = vst.msk [vmem:[%s278 + $0x18] sm:$0xf] %vm3436, %v3378
      %3444 = vst.msk [vmem:[%s278 + $0x1c] sm:$0xf] %vm3436, %v3379
      %3445 = vst.msk [vmem:[%s278 + $0x20] sm:$0xf] %vm3436, %v3380
      %3446 = vst.msk [vmem:[%s278 + $0x24] sm:$0xf] %vm3436, %v3381
      %3447 = vst.msk [vmem:[%s278 + $0x28] sm:$0xf] %vm3436, %v3382
      %3448 = vst.msk [vmem:[%s278 + $0x2c] sm:$0xf] %vm3436, %v3383
      %3449 = vst.msk [vmem:[%s278 + $0x30] sm:$0xf] %vm3436, %v3384
      %3450 = vst.msk [vmem:[%s278 + $0x34] sm:$0xf] %vm3436, %v3385
      %3451 = vst.msk [vmem:[%s278 + $0x38] sm:$0xf] %vm3436, %v3386
      %3452 = vst.msk [vmem:[%s278 + $0x3c] sm:$0xf] %vm3436, %v3387
      %3453 = vst.msk [vmem:[%s278 + $0x40] sm:$0xf] %vm3436, %v3388
      %3454 = vst.msk [vmem:[%s278 + $0x44] sm:$0xf] %vm3436, %v3389
      %3455 = vst.msk [vmem:[%s278 + $0x48] sm:$0xf] %vm3436, %v3390
      %3456 = vst.msk [vmem:[%s278 + $0x4c] sm:$0xf] %vm3436, %v3391
      %3457 = vst.msk [vmem:[%s278 + $0x50] sm:$0xf] %vm3436, %v3392
      %3458 = vst.msk [vmem:[%s278 + $0x54] sm:$0xf] %vm3436, %v3393
      %3459 = vst.msk [vmem:[%s278 + $0x58] sm:$0xf] %vm3436, %v3394
      %3460 = vst.msk [vmem:[%s278 + $0x5c] sm:$0xf] %vm3436, %v3395
      %3461 = vst.msk [vmem:[%s278 + $0x60] sm:$0xf] %vm3436, %v3396
      %3462 = vst.msk [vmem:[%s278 + $0x64] sm:$0xf] %vm3436, %v3397
      %3463 = vst.msk [vmem:[%s278 + $0x68] sm:$0xf] %vm3436, %v3398
      %3464 = vst.msk [vmem:[%s278 + $0x6c] sm:$0xf] %vm3436, %v3399
      %3465 = vst.msk [vmem:[%s278 + $0x70] sm:$0xf] %vm3436, %v3400
      %3466 = vst.msk [vmem:[%s278 + $0x74] sm:$0xf] %vm3436, %v3401
      %3467 = vst.msk [vmem:[%s278 + $0x78] sm:$0xf] %vm3436, %v3402
      %3468 = vst.msk [vmem:[%s278 + $0x7c] sm:$0xf] %vm3436, %v3403
      %vm3469 = vcmask 31744
      %v3470 = vsel %vm3469, %v3276, 0.0
      %v3471 = vsel %vm3469, %v3277, 0.0
      %v3472 = vadd.f32 %v3470, %v3471
      %v3473 = vsel %vm3469, %v3278, 0.0
      %v3474 = vadd.f32 %v3472, %v3473
      %v3475 = vsel %vm3469, %v3279, 0.0
      %v3476 = vadd.f32 %v3474, %v3475
      %v3477 = vsel %vm3469, %v3280, 0.0
      %v3478 = vadd.f32 %v3476, %v3477
      %v3479 = vsel %vm3469, %v3281, 0.0
      %v3480 = vadd.f32 %v3478, %v3479
      %v3481 = vsel %vm3469, %v3282, 0.0
      %v3482 = vadd.f32 %v3480, %v3481
      %v3483 = vsel %vm3469, %v3283, 0.0
      %v3484 = vadd.f32 %v3482, %v3483
      %v3485 = vsel %vm3469, %v3284, 0.0
      %v3486 = vadd.f32 %v3484, %v3485
      %v3487 = vsel %vm3469, %v3285, 0.0
      %v3488 = vadd.f32 %v3486, %v3487
      %v3489 = vsel %vm3469, %v3286, 0.0
      %v3490 = vadd.f32 %v3488, %v3489
      %v3491 = vsel %vm3469, %v3287, 0.0
      %v3492 = vadd.f32 %v3490, %v3491
      %v3493 = vsel %vm3469, %v3288, 0.0
      %v3494 = vadd.f32 %v3492, %v3493
      %v3495 = vsel %vm3469, %v3289, 0.0
      %v3496 = vadd.f32 %v3494, %v3495
      %v3497 = vsel %vm3469, %v3290, 0.0
      %v3498 = vadd.f32 %v3496, %v3497
      %v3499 = vsel %vm3469, %v3291, 0.0
      %v3500 = vadd.f32 %v3498, %v3499
      %v3501 = vsel %vm3469, %v3292, 0.0
      %v3502 = vadd.f32 %v3500, %v3501
      %v3503 = vsel %vm3469, %v3293, 0.0
      %v3504 = vadd.f32 %v3502, %v3503
      %v3505 = vsel %vm3469, %v3294, 0.0
      %v3506 = vadd.f32 %v3504, %v3505
      %v3507 = vsel %vm3469, %v3295, 0.0
      %v3508 = vadd.f32 %v3506, %v3507
      %v3509 = vsel %vm3469, %v3296, 0.0
      %v3510 = vadd.f32 %v3508, %v3509
      %v3511 = vsel %vm3469, %v3297, 0.0
      %v3512 = vadd.f32 %v3510, %v3511
      %v3513 = vsel %vm3469, %v3298, 0.0
      %v3514 = vadd.f32 %v3512, %v3513
      %v3515 = vsel %vm3469, %v3299, 0.0
      %v3516 = vadd.f32 %v3514, %v3515
      %v3517 = vsel %vm3469, %v3300, 0.0
      %v3518 = vadd.f32 %v3516, %v3517
      %v3519 = vsel %vm3469, %v3301, 0.0
      %v3520 = vadd.f32 %v3518, %v3519
      %v3521 = vsel %vm3469, %v3302, 0.0
      %v3522 = vadd.f32 %v3520, %v3521
      %v3523 = vsel %vm3469, %v3303, 0.0
      %v3524 = vadd.f32 %v3522, %v3523
      %v3525 = vsel %vm3469, %v3304, 0.0
      %v3526 = vadd.f32 %v3524, %v3525
      %v3527 = vsel %vm3469, %v3305, 0.0
      %v3528 = vadd.f32 %v3526, %v3527
      %v3529 = vsel %vm3469, %v3306, 0.0
      %v3530 = vadd.f32 %v3528, %v3529
      %v3531 = vsel %vm3469, %v3307, 0.0
      %v3532 = vadd.f32 %v3530, %v3531
      %v3533 = vrot.slane %v3532, 4
      %v3534 = vadd.f32 %v3532, %v3533
      %v3535 = vrot.slane %v3534, 2
      %v3536 = vadd.f32 %v3534, %v3535
      %v3537 = vrot.slane %v3536, 1
      %v3538 = vadd.f32 %v3536, %v3537
      %vm3539 = vcmask 24576
      %3540 = vst.msk [vmem:[%s282] sm:$0x1] %vm3539, %v3538
      %v3541 = vmul.f32 %v3276, %v3276
      %v3542 = vmul.f32 %v3277, %v3277
      %v3543 = vmul.f32 %v3278, %v3278
      %v3544 = vmul.f32 %v3279, %v3279
      %v3545 = vmul.f32 %v3280, %v3280
      %v3546 = vmul.f32 %v3281, %v3281
      %v3547 = vmul.f32 %v3282, %v3282
      %v3548 = vmul.f32 %v3283, %v3283
      %v3549 = vmul.f32 %v3284, %v3284
      %v3550 = vmul.f32 %v3285, %v3285
      %v3551 = vmul.f32 %v3286, %v3286
      %v3552 = vmul.f32 %v3287, %v3287
      %v3553 = vmul.f32 %v3288, %v3288
      %v3554 = vmul.f32 %v3289, %v3289
      %v3555 = vmul.f32 %v3290, %v3290
      %v3556 = vmul.f32 %v3291, %v3291
      %v3557 = vmul.f32 %v3292, %v3292
      %v3558 = vmul.f32 %v3293, %v3293
      %v3559 = vmul.f32 %v3294, %v3294
      %v3560 = vmul.f32 %v3295, %v3295
      %v3561 = vmul.f32 %v3296, %v3296
      %v3562 = vmul.f32 %v3297, %v3297
      %v3563 = vmul.f32 %v3298, %v3298
      %v3564 = vmul.f32 %v3299, %v3299
      %v3565 = vmul.f32 %v3300, %v3300
      %v3566 = vmul.f32 %v3301, %v3301
      %v3567 = vmul.f32 %v3302, %v3302
      %v3568 = vmul.f32 %v3303, %v3303
      %v3569 = vmul.f32 %v3304, %v3304
      %v3570 = vmul.f32 %v3305, %v3305
      %v3571 = vmul.f32 %v3306, %v3306
      %v3572 = vmul.f32 %v3307, %v3307
      %v3573 = vsel %vm3469, %v3541, 0.0
      %v3574 = vsel %vm3469, %v3542, 0.0
      %v3575 = vadd.f32 %v3573, %v3574
      %v3576 = vsel %vm3469, %v3543, 0.0
      %v3577 = vadd.f32 %v3575, %v3576
      %v3578 = vsel %vm3469, %v3544, 0.0
      %v3579 = vadd.f32 %v3577, %v3578
      %v3580 = vsel %vm3469, %v3545, 0.0
      %v3581 = vadd.f32 %v3579, %v3580
      %v3582 = vsel %vm3469, %v3546, 0.0
      %v3583 = vadd.f32 %v3581, %v3582
      %v3584 = vsel %vm3469, %v3547, 0.0
      %v3585 = vadd.f32 %v3583, %v3584
      %v3586 = vsel %vm3469, %v3548, 0.0
      %v3587 = vadd.f32 %v3585, %v3586
      %v3588 = vsel %vm3469, %v3549, 0.0
      %v3589 = vadd.f32 %v3587, %v3588
      %v3590 = vsel %vm3469, %v3550, 0.0
      %v3591 = vadd.f32 %v3589, %v3590
      %v3592 = vsel %vm3469, %v3551, 0.0
      %v3593 = vadd.f32 %v3591, %v3592
      %v3594 = vsel %vm3469, %v3552, 0.0
      %v3595 = vadd.f32 %v3593, %v3594
      %v3596 = vsel %vm3469, %v3553, 0.0
      %v3597 = vadd.f32 %v3595, %v3596
      %v3598 = vsel %vm3469, %v3554, 0.0
      %v3599 = vadd.f32 %v3597, %v3598
      %v3600 = vsel %vm3469, %v3555, 0.0
      %v3601 = vadd.f32 %v3599, %v3600
      %v3602 = vsel %vm3469, %v3556, 0.0
      %v3603 = vadd.f32 %v3601, %v3602
      %v3604 = vsel %vm3469, %v3557, 0.0
      %v3605 = vadd.f32 %v3603, %v3604
      %v3606 = vsel %vm3469, %v3558, 0.0
      %v3607 = vadd.f32 %v3605, %v3606
      %v3608 = vsel %vm3469, %v3559, 0.0
      %v3609 = vadd.f32 %v3607, %v3608
      %v3610 = vsel %vm3469, %v3560, 0.0
      %v3611 = vadd.f32 %v3609, %v3610
      %v3612 = vsel %vm3469, %v3561, 0.0
      %v3613 = vadd.f32 %v3611, %v3612
      %v3614 = vsel %vm3469, %v3562, 0.0
      %v3615 = vadd.f32 %v3613, %v3614
      %v3616 = vsel %vm3469, %v3563, 0.0
      %v3617 = vadd.f32 %v3615, %v3616
      %v3618 = vsel %vm3469, %v3564, 0.0
      %v3619 = vadd.f32 %v3617, %v3618
      %v3620 = vsel %vm3469, %v3565, 0.0
      %v3621 = vadd.f32 %v3619, %v3620
      %v3622 = vsel %vm3469, %v3566, 0.0
      %v3623 = vadd.f32 %v3621, %v3622
      %v3624 = vsel %vm3469, %v3567, 0.0
      %v3625 = vadd.f32 %v3623, %v3624
      %v3626 = vsel %vm3469, %v3568, 0.0
      %v3627 = vadd.f32 %v3625, %v3626
      %v3628 = vsel %vm3469, %v3569, 0.0
      %v3629 = vadd.f32 %v3627, %v3628
      %v3630 = vsel %vm3469, %v3570, 0.0
      %v3631 = vadd.f32 %v3629, %v3630
      %v3632 = vsel %vm3469, %v3571, 0.0
      %v3633 = vadd.f32 %v3631, %v3632
      %v3634 = vsel %vm3469, %v3572, 0.0
      %v3635 = vadd.f32 %v3633, %v3634
      %v3636 = vrot.slane %v3635, 4
      %v3637 = vadd.f32 %v3635, %v3636
      %v3638 = vrot.slane %v3637, 2
      %v3639 = vadd.f32 %v3637, %v3638
      %v3640 = vrot.slane %v3639, 1
      %v3641 = vadd.f32 %v3639, %v3640
      %3642 = vst.msk [vmem:[%s282 + $0x1] sm:$0x1] %vm3539, %v3641
      %p3643 = scmp.lt.s32.totalorder %s18, 1
      %s3644 = scalar_select %p3643, %s18, 1
      %s3645 = smul.addr %s3644, 32
      %s3646 = smul.addr %s3645, 4
      %s3647 = scalar_lea.vmem %s5, %s3646
      %p3648 = scmp.lt.s32.totalorder %s18, 1
      %s3649 = scalar_select %p3648, %s18, 1
      %s3650 = smul.addr %s3649, 2
      %s3651 = scalar_lea.vmem %s6, %s3650
      // Predicated region
      $region41: #{up_forward.5} parent=39 // pred_check
        %p3652 = pneg %p151
      $region42: #{up_forward.5} parent=39 // pred_check_branch
        %3654 = sbr.rel (%p3652) target = $region44
      $region43: #{up_forward.5} parent=39 // pred_region
        _
      $region44: #{up_forward.5} parent=39 // pred_fallthru
        _
      // Predicated region
      $region45: #{up_forward.5} parent=39 // pred_check
        %p3655 = pneg %p177
      $region46: #{up_forward.5} parent=39 // pred_check_branch
        %3657 = sbr.rel (%p3655) target = $region48
      $region47: #{up_forward.5} parent=39 // pred_region
        _
      $region48: #{up_forward.5} parent=39 // pred_fallthru
        _
    $region40: #{up_forward.5} parent=5 // pred_fallthru
      _
    %p3658 = scmp.le.s32.totalorder 2, %s13
    // Predicated region
    $region49: #{up_forward.5} parent=5 // pred_check
      %p3659 = pneg %p3658
    $region50: #{up_forward.5} parent=5 // pred_check_branch
      %3661 = sbr.rel (%p3659) target = $region52
    $region51: #{up_forward.5} parent=5 // pred_region
      %s3662 = ssub.s32 %s13, 2
      // Predicated region
      $region53: #{up_forward.5} parent=51 // pred_check
        %p3663 = pneg %p157
      $region54: #{up_forward.5} parent=51 // pred_check_branch
        %3665 = sbr.rel (%p3663) target = $region56
      $region55: #{up_forward.5} parent=51 // pred_region
        %p3666 = scmp.lt.s32.totalorder %s19, 1
        %s3667 = scalar_select %p3666, %s19, 1
        %s3668 = smul.addr %s3667, 32
        %s3669 = smul.addr %s3668, 4
        %s3670 = scalar_lea.vmem %s5, %s3669
      $region56: #{up_forward.5} parent=51 // pred_fallthru
        _
      // Predicated region
      $region57: #{up_forward.5} parent=51 // pred_check
        %p3671 = pneg %p183
      $region58: #{up_forward.5} parent=51 // pred_check_branch
        %3673 = sbr.rel (%p3671) target = $region60
      $region59: #{up_forward.5} parent=51 // pred_region
        %p3674 = scmp.lt.s32.totalorder %s19, 1
        %s3675 = scalar_select %p3674, %s19, 1
        %s3676 = smul.addr %s3675, 2
        %s3677 = scalar_lea.vmem %s6, %s3676
      $region60: #{up_forward.5} parent=51 // pred_fallthru
        _
    $region52: #{up_forward.5} parent=5 // pred_fallthru
      _
  $region6: #{up_forward.5} parent=0 // loop_footer
    %s17 = sadd.s32 1, %s13
  $region7: #{up_forward.5} parent=0 // loop_footer_branch
    %12 = sbr.rel target = $region3
  $region8: #{up_forward.5} parent=0 // loop_exit
    _

</llo_original>
